<compile_context>
chip_gen: v6e
topology: v6e:2x2x1
jax: 0.10.0
libtpu: 0.0.40
codegen_flags: <defaults>
</compile_context>

<pallas_src>
import functools

import jax
import jax.numpy as jnp
from jax.experimental import pallas as pl
from jax.experimental.pallas import tpu as pltpu

# ----------------------------- model config -----------------------------
GROWTH_RATE = 8
BLOCK_CONFIG = (2, 2, 2, 2)
NUM_INIT_FEATURES = 16
BN_SIZE = 4
NUM_CLASSES = 3
BN_EPS = 1e-5

# matmul tile budget (see perf notes above).  At v7x keep >=2 blocks on a
# parallel axis when shapes allow; at this reduced config everything is a
# single tiny tile anyway.
_TM_SINGLE = 1024          # largest single M tile
_TM = 512                  # M tile when M exceeds _TM_SINGLE
_TN = 512                  # max N tile (full padded N when it fits)
_TK = 512                  # max K tile (single K tile when padded K fits)
_VMEM_LIMIT = 32 * 1024 * 1024

_VMEM_SPEC = pl.BlockSpec(memory_space=pltpu.MemorySpace.VMEM)


def _round_up(x, m):
    return ((x + m - 1) // m) * m


def _row(v, size):
    v = v.astype(jnp.float32).reshape(-1)
    if v.shape[0] != size:
        v = jnp.pad(v, (0, size - v.shape[0]))
    return v.reshape(1, size)


# ----------------------------- fused (affine ->) matmul (-> bias/relu) kernel -----------------------------
def _make_matmul_kernel(*, has_prologue, prelu, has_bias, erelu, multi_k):
    """Builds a kernel specialised to exactly the work it needs (no identity
    affines, no accumulator scratch when there is a single K tile)."""

    def kernel(*refs):
        idx = 0
        x_ref = refs[idx]; idx += 1
        w_ref = refs[idx]; idx += 1
        if has_prologue:
            ps_ref = refs[idx]
            pb_ref = refs[idx + 1]
            idx += 2
        if has_bias:
            b_ref = refs[idx]; idx += 1
        o_ref = refs[idx]; idx += 1
        acc_ref = refs[idx] if multi_k else None

        if has_prologue:
            # per-K-column affine (folded BatchNorm) + optional ReLU, in f32.
            xv = x_ref[...].astype(jnp.float32) * ps_ref[...] + pb_ref[...]
            if prelu:
                xv = jnp.maximum(xv, 0.0)
            xv = xv.astype(jnp.bfloat16)
        else:
            xv = x_ref[...]
        part = jnp.dot(xv, w_ref[...], preferred_element_type=jnp.float32)

        def _finalize(y):
            if has_bias:
                y = y + b_ref[...]
            if erelu:
                y = jnp.maximum(y, 0.0)
            o_ref[...] = y.astype(o_ref.dtype)

        if multi_k:
            kk = pl.program_id(2)

            @pl.when(kk == 0)
            def _():
                acc_ref[...] = part

            @pl.when(kk > 0)
            def _():
                acc_ref[...] += part

            @pl.when(kk == pl.num_programs(2) - 1)
            def _():
                _finalize(acc_ref[...])
        else:
            _finalize(part)

    return kernel


def fused_matmul(x, w, *, prologue=None, out_scale=None, out_bias=None,
                 out_relu=False, out_dtype=jnp.bfloat16, keep_padded_n=False):
    """y = epilogue( prologue(x) @ (w * out_scale) ).

    prologue = (scale, bias, relu): per-input-column affine (folded BN) + ReLU.
    out_scale: per-output-column scale, folded into the bf16 weights here.
    out_bias / out_relu: epilogue bias add + ReLU on the f32 result.
    """
    m, k = x.shape
    k2, n = w.shape
    assert k2 == k

    # ---- tile selection: biggest tiles that fit comfortably in VMEM ----
    k_pad = _round_up(k, 128)
    if k_pad <= _TK:
        tk = k_pad
    else:
        tk = _TK
        k_pad = _round_up(k, _TK)
    n_pad = _round_up(n, 128)
    if n_pad <= _TN:
        tn = n_pad
    else:
        tn = _TN
        n_pad = _round_up(n, _TN)
    if m <= _TM_SINGLE:
        m_pad = _round_up(m, 8)
        tm = m_pad
    else:
        tm = _TM
        m_pad = _round_up(m, _TM)
    multi_k = (k_pad // tk) > 1

    # ---- operand prep (epilogue scale folded into the weights) ----
    wm = w.astype(jnp.float32)
    if out_scale is not None:
        wm = wm * out_scale.astype(jnp.float32)[None, :]
    if (k_pad, n_pad) != (k, n):
        wm = jnp.pad(wm, ((0, k_pad - k), (0, n_pad - n)))
    wm = wm.astype(jnp.bfloat16)

    xp = x.astype(jnp.bfloat16)
    if (m_pad, k_pad) != (m, k):
        xp = jnp.pad(xp, ((0, m_pad - m), (0, k_pad - k)))

    has_prologue = prologue is not None
    prelu = False
    has_bias = out_bias is not None

    if multi_k:
        grid = (m_pad // tm, n_pad // tn, k_pad // tk)
        x_spec = pl.BlockSpec((tm, tk), lambda i, j, kk: (i, kk))
        w_spec = pl.BlockSpec((tk, tn), lambda i, j, kk: (kk, j))
        kvec_spec = pl.BlockSpec((1, tk), lambda i, j, kk: (0, kk))
        nvec_spec = pl.BlockSpec((1, tn), lambda i, j, kk: (0, j))
        out_spec = pl.BlockSpec((tm, tn), lambda i, j, kk: (i, j))
        scratch = [pltpu.VMEM((tm, tn), jnp.float32)]
        sem = ("parallel", "parallel", "arbitrary")
    else:
        grid = (m_pad // tm, n_pad // tn)
        x_spec = pl.BlockSpec((tm, tk), lambda i, j: (i, 0))
        w_spec = pl.BlockSpec((tk, tn), lambda i, j: (0, j))
        kvec_spec = pl.BlockSpec((1, tk), lambda i, j: (0, 0))
        nvec_spec = pl.BlockSpec((1, tn), lambda i, j: (0, j))
        out_spec = pl.BlockSpec((tm, tn), lambda i, j: (i, j))
        scratch = []
        sem = ("parallel", "parallel")

    args = [xp, wm]
    in_specs = [x_spec, w_spec]
    if has_prologue:
        ps, pb, prelu = prologue
        args += [_row(ps, k_pad), _row(pb, k_pad)]
        in_specs += [kvec_spec, kvec_spec]
    if has_bias:
        args += [_row(out_bias, n_pad)]
        in_specs += [nvec_spec]

    kernel = _make_matmul_kernel(has_prologue=has_prologue, prelu=prelu,
                                 has_bias=has_bias, erelu=out_relu,
                                 multi_k=multi_k)
    out = pl.pallas_call(
        kernel,
        out_shape=jax.ShapeDtypeStruct((m_pad, n_pad), out_dtype),
        grid_spec=pltpu.PrefetchScalarGridSpec(
            num_scalar_prefetch=0, grid=grid,
            in_specs=in_specs, out_specs=out_spec,
            scratch_shapes=scratch),
        compiler_params=pltpu.CompilerParams(
            dimension_semantics=sem, vmem_limit_bytes=_VMEM_LIMIT),
    )(*args)

    if m_pad != m:
        out = out[:m]
    if (not keep_padded_n) and n_pad != n:
        out = out[:, :n]
    return out


# ----------------------------- in-kernel 3x3 conv (tap accumulation) -----------------------------
def _conv3x3_kernel(x_ref, w_ref, o_ref, *, cp, wrow):
    # x_ref: (1, Lin, Cp) flat padded image rows (bf16, one extra zero row).
    # w_ref: (9*Cp, Cout) bf16, tap-major rows.
    # o_ref: (1, Lout, Cout) where Lout = H * Wp (garbage columns x>=W discarded
    #        by the wrapper slice).
    lout = o_ref.shape[1]
    cout = o_ref.shape[2]
    acc = jnp.zeros((lout, cout), jnp.float32)
    for di in range(3):
        for dj in range(3):
            t = di * 3 + dj
            s = di * wrow + dj
            patch = x_ref[0, s:s + lout, :]                  # (Lout, Cp)
            acc = acc + jnp.dot(patch, w_ref[t * cp:(t + 1) * cp, :],
                                preferred_element_type=jnp.float32)
    o_ref[0] = acc.astype(o_ref.dtype)


def conv3x3_s1_p1(x, w):
    """3x3 stride-1 pad-1 conv (bias-free), taps accumulated in-kernel.

    x may carry zero-padded channels (Cp >= Cin); weight rows are zero-padded
    to match, so results are exact.  One pallas_call per call, grid over batch.
    TODO(synk): tile over output rows for very large spatial sizes.
    """
    n, h, wd, cp = x.shape
    kh, kw, cin, cout = w.shape
    assert (kh, kw) == (3, 3) and cin <= cp
    hp, wpp = h + 2, wd + 2
    xpad = jnp.pad(x.astype(jnp.bfloat16), ((0, 0), (1, 1), (1, 1), (0, 0)))
    xflat = xpad.reshape(n, hp * wpp, cp)
    # one extra zero row so every shifted window of length h*wpp stays in range
    xflat = jnp.pad(xflat, ((0, 0), (0, wpp), (0, 0)))
    lin = (hp + 1) * wpp
    lout = h * wpp

    wt = w
    if cin != cp:
        wt = jnp.pad(w, ((0, 0), (0, 0), (0, cp - cin), (0, 0)))
    wt = wt.reshape(9 * cp, cout).astype(jnp.bfloat16)

    out = pl.pallas_call(
        functools.partial(_conv3x3_kernel, cp=cp, wrow=wpp),
        out_shape=jax.ShapeDtypeStruct((n, lout, cout), jnp.bfloat16),
        grid_spec=pltpu.PrefetchScalarGridSpec(
            num_scalar_prefetch=0, grid=(n,),
            in_specs=[pl.BlockSpec((1, lin, cp), lambda b: (b, 0, 0)),
                      pl.BlockSpec((9 * cp, cout), lambda b: (0, 0))],
            out_specs=pl.BlockSpec((1, lout, cout), lambda b: (b, 0, 0))),
        compiler_params=pltpu.CompilerParams(
            dimension_semantics=("parallel",), vmem_limit_bytes=_VMEM_LIMIT),
    )(xflat, wt)
    return out.reshape(n, h, wpp, cout)[:, :, :wd, :]


# ----------------------------- pooling kernels -----------------------------
def _pool_kernel(x_ref, o_ref, *, op):
    x = x_ref[...].astype(jnp.float32)
    if op == "max":
        r = jnp.max(x, axis=0)
    else:
        r = jnp.sum(x, axis=0) * (1.0 / x_ref.shape[0])
    o_ref[...] = r.astype(o_ref.dtype)


def _pool_tile(m):
    for t in (1024, 512, 256, 128, 64, 32, 16):
        if m % t == 0:
            return t
    return m


def pallas_pool(patches, op):
    # patches: (K, M, C) -> (M, C), max or mean over the K pooling taps.
    # TODO(synk): the tap stack is built in plain JAX (k-fold HBM write); an
    # in-kernel shifted-window accumulation would remove that traffic.
    k, m, c = patches.shape
    tm = _pool_tile(m)
    return pl.pallas_call(
        functools.partial(_pool_kernel, op=op),
        out_shape=jax.ShapeDtypeStruct((m, c), patches.dtype),
        grid_spec=pltpu.PrefetchScalarGridSpec(
            num_scalar_prefetch=0,
            grid=(m // tm,),
            in_specs=[pl.BlockSpec((k, tm, c), lambda i: (0, i, 0))],
            out_specs=pl.BlockSpec((tm, c), lambda i: (i, 0)),
        ),
        compiler_params=pltpu.CompilerParams(
            dimension_semantics=("parallel",), vmem_limit_bytes=_VMEM_LIMIT),
    )(patches)


def maxpool_3x3_s2_p1(x):
    n, h, w, c = x.shape
    xp = jnp.pad(x, ((0, 0), (1, 1), (1, 1), (0, 0)),
                 constant_values=-jnp.inf)
    ho = (h + 2 - 3) // 2 + 1
    wo = (w + 2 - 3) // 2 + 1
    pats = jnp.stack(
        [xp[:, i:i + 2 * (ho - 1) + 1:2, j:j + 2 * (wo - 1) + 1:2, :]
         .reshape(n * ho * wo, c)
         for i in range(3) for j in range(3)], axis=0)
    return pallas_pool(pats, "max").reshape(n, ho, wo, c)


def avgpool_2x2_s2(x):
    n, h, w, c = x.shape
    ho, wo = h // 2, w // 2   # floors odd sizes, like torch avg_pool2d(2,2)
    pats = jnp.stack(
        [x[:, i:2 * ho:2, j:2 * wo:2, :].reshape(n * ho * wo, c)
         for i in range(2) for j in range(2)], axis=0)
    return pallas_pool(pats, "mean").reshape(n, ho, wo, c)


# ----------------------------- fused head: norm5 + relu + GAP + classifier -----------------------------
def _head_kernel(x_ref, s_ref, b_ref, wc_ref, bc_ref, o_ref):
    x = x_ref[...].astype(jnp.float32) * s_ref[...] + b_ref[...]
    x = jnp.maximum(x, 0.0)
    pooled = jnp.mean(x, axis=1)                              # (N, C) f32
    logits = jnp.dot(pooled.astype(jnp.bfloat16), wc_ref[...],
                     preferred_element_type=jnp.float32)
    o_ref[...] = logits + bc_ref[...]


def pallas_head(x, scale, bias, wc, bc):
    # norm5 + relu + adaptive_avg_pool2d(1) + flatten + Linear, fused.
    n, h, w, c = x.shape
    ncls = wc.shape[1]
    return pl.pallas_call(
        _head_kernel,
        out_shape=jax.ShapeDtypeStruct((n, ncls), jnp.float32),
        in_specs=[_VMEM_SPEC] * 5,
        out_specs=_VMEM_SPEC,
        compiler_params=pltpu.CompilerParams(vmem_limit_bytes=_VMEM_LIMIT),
    )(x.reshape(n, h * w, c),
      scale.reshape(1, 1, c).astype(jnp.float32),
      bias.reshape(1, 1, c).astype(jnp.float32),
      wc.astype(jnp.bfloat16),
      bc.reshape(1, ncls).astype(jnp.float32))


# ----------------------------- conv wrappers -----------------------------
def _fold_bn(bn):
    scale = bn["gamma"] * jax.lax.rsqrt(bn["var"] + BN_EPS)
    bias = bn["beta"] - bn["mean"] * scale
    return scale, bias


def conv1x1(x, w, *, prologue=None, out_scale=None, out_bias=None,
            out_relu=False, keep_padded_cout=False):
    """1x1 stride-1 conv as a fused matmul (BN prologue / epilogue folded)."""
    n, h, wd, cin = x.shape
    cout = w.shape[-1]
    a = x.reshape(n * h * wd, cin)
    wm = w.reshape(cin, cout)
    y = fused_matmul(a, wm, prologue=prologue, out_scale=out_scale,
                     out_bias=out_bias, out_relu=out_relu,
                     keep_padded_n=keep_padded_cout)
    return y.reshape(n, h, wd, y.shape[-1])


def conv0_7x7_s2_p3(x, w, scale, bias):
    """Stem 7x7/2 pad-3 conv with norm0+relu0 folded in (scale -> weights)."""
    # TODO(synk): wrapper-side im2col (49 taps) — cheap here (3-channel input)
    # but could also move to in-kernel tap accumulation like the 3x3 path.
    n, h, wd, cin = x.shape
    kh = kw = 7
    stride, padding = 2, 3
    cout = w.shape[-1]
    xp = jnp.pad(x, ((0, 0), (padding, padding), (padding, padding), (0, 0)))
    ho = (h + 2 * padding - kh) // stride + 1
    wo = (wd + 2 * padding - kw) // stride + 1
    cols = [xp[:, i:i + stride * (ho - 1) + 1:stride,
               j:j + stride * (wo - 1) + 1:stride, :]
            for i in range(kh) for j in range(kw)]
    a = jnp.concatenate(cols, axis=-1).reshape(n * ho * wo, kh * kw * cin)
    wm = w.reshape(kh * kw * cin, cout)
    y = fused_matmul(a, wm, out_scale=scale, out_bias=bias, out_relu=True)
    return y.reshape(n, ho, wo, cout)


# ----------------------------- parameter init (deterministic, synthetic) -----------------------------
def _conv_init(key, kh, kw, cin, cout):
    std = (2.0 / (kh * kw * cin)) ** 0.5
    w = std * jax.random.normal(key, (kh, kw, cin, cout), jnp.float32)
    return w.astype(jnp.bfloat16)   # weights stored MXU-native bf16


def _bn_init(key, c):
    k1, k2, k3, k4 = jax.random.split(key, 4)
    return dict(
        gamma=1.0 + 0.1 * jax.random.normal(k1, (c,), jnp.float32),
        beta=0.1 * jax.random.normal(k2, (c,), jnp.float32),
        mean=0.1 * jax.random.normal(k3, (c,), jnp.float32),
        var=1.0 + 0.1 * jax.random.uniform(k4, (c,), jnp.float32),
    )


def init_params(key):
    ks = iter(list(jax.random.split(key, 256)))
    p = {}
    p["conv0"] = _conv_init(next(ks), 7, 7, 3, NUM_INIT_FEATURES)
    p["norm0"] = _bn_init(next(ks), NUM_INIT_FEATURES)
    num_features = NUM_INIT_FEATURES
    blocks = []
    for bi, num_layers in enumerate(BLOCK_CONFIG):
        layers = []
        for li in range(num_layers):
            cin = num_features + li * GROWTH_RATE
            layers.append(dict(
                norm1=_bn_init(next(ks), cin),
                conv1=_conv_init(next(ks), 1, 1, cin, BN_SIZE * GROWTH_RATE),
                norm2=_bn_init(next(ks), BN_SIZE * GROWTH_RATE),
                conv2=_conv_init(next(ks), 3, 3, BN_SIZE * GROWTH_RATE, GROWTH_RATE),
            ))
        num_features = num_features + num_layers * GROWTH_RATE
        block = dict(layers=layers)
        if bi != len(BLOCK_CONFIG) - 1:
            block["transition"] = dict(
                norm=_bn_init(next(ks), num_features),
                conv=_conv_init(next(ks), 1, 1, num_features, num_features // 2),
            )
            num_features = num_features // 2
        blocks.append(block)
    p["blocks"] = blocks
    p["norm5"] = _bn_init(next(ks), num_features)
    kw_, kb = jax.random.split(next(ks))
    std = (1.0 / num_features) ** 0.5
    # NOTE: classifier weights carried bf16 for the MXU (torch keeps f32).
    p["classifier_w"] = (std * jax.random.normal(
        kw_, (num_features, NUM_CLASSES), jnp.float32)).astype(jnp.bfloat16)
    p["classifier_b"] = std * jax.random.normal(kb, (NUM_CLASSES,), jnp.float32)
    return p


# ----------------------------- forward pass -----------------------------
def dense_layer(x_cat, lp):
    s1, b1 = _fold_bn(lp["norm1"])
    s2, b2 = _fold_bn(lp["norm2"])
    # norm1+relu -> conv1(1x1) -> norm2+relu : ONE fused Pallas call; output
    # kept channel-padded to 128 lanes (lane-dense store, no slice/re-pad).
    y = conv1x1(x_cat, lp["conv1"], prologue=(s1, b1, True),
                out_scale=s2, out_bias=b2, out_relu=True,
                keep_padded_cout=True)
    # conv2 3x3 pad 1 (zero-pads the post-ReLU activation, like PyTorch);
    # taps accumulated in-kernel, padded channels hit zero weight rows.
    return conv3x3_s1_p1(y, lp["conv2"])


def densenet_forward(params, x_nchw):
    # layout: input NCHW (PyTorch convention) -> NHWC bf16 for TPU kernels.
    x = jnp.transpose(x_nchw, (0, 2, 3, 1)).astype(jnp.bfloat16)
    s0, b0 = _fold_bn(params["norm0"])
    x = conv0_7x7_s2_p3(x, params["conv0"], s0, b0)        # conv0+norm0+relu0
    x = maxpool_3x3_s2_p1(x)                               # pool0
    for block in params["blocks"]:
        # TODO(synk): running concat still re-copies the accumulated feature
        # map each layer; a preallocated 128-aligned slab with channel-offset
        # BlockSpec writes + input_output_aliases would remove those copies.
        for lp in block["layers"]:
            new_feat = dense_layer(x, lp)
            x = jnp.concatenate([x, new_feat], axis=-1)    # torch.cat(prev, dim=C)
        if "transition" in block:
            t = block["transition"]
            st, bt = _fold_bn(t["norm"])
            # transition norm+relu fused into the 1x1 conv prologue.
            x = conv1x1(x, t["conv"], prologue=(st, bt, True))
            x = avgpool_2x2_s2(x)
    s5, b5 = _fold_bn(params["norm5"])
    preds = pallas_head(x, s5, b5, params["classifier_w"],
                        params["classifier_b"])             # norm5+relu+gap+fc
    # preds.squeeze(-1): only removes the last dim when num_classes == 1
    if preds.shape[-1] == 1:
        preds = preds[..., 0]
    return preds


if __name__ == "__main__":
    key = jax.random.PRNGKey(0)
    kp, kx = jax.random.split(key)
    params = init_params(kp)
    x = jax.random.normal(kx, (2, 3, 32, 32), jnp.float32)  # NCHW like PyTorch
    fwd = jax.jit(densenet_forward)
    out = fwd(params, x)
    jax.block_until_ready(out)
    assert out.shape == (2, NUM_CLASSES), out.shape
    assert bool(jnp.all(jnp.isfinite(out)))
    print("KERNEL_OK")
</pallas_src>

<mosaic_0001>
module attributes {stable_mosaic.version = 11 : i64} {
  func.func @kernel(%arg0: i32, %arg1: i32, %arg2: memref<512x256xbf16, #tpu.memory_space<vmem>>, %arg3: memref<256x128xbf16, #tpu.memory_space<vmem>>, %arg4: memref<1x128xf32, #tpu.memory_space<vmem>>, %arg5: memref<512x128xbf16, #tpu.memory_space<vmem>>) attributes {dimension_semantics = [#tpu.dimension_semantics<parallel>, #tpu.dimension_semantics<parallel>], iteration_bounds = array<i64: 1, 1>, scalar_prefetch = 0 : i64, scratch_operands = 0 : i64, tpu.core_type = #tpu.core_type<tc>, window_params = [{transform_indices = @transform_0, window_bounds = array<i64: 512, 256>}, {transform_indices = @transform_1, window_bounds = array<i64: 256, 128>}, {transform_indices = @transform_2, window_bounds = array<i64: 1, 128>}, {transform_indices = @transform_3, window_bounds = array<i64: 512, 128>}]} {
    %c0 = arith.constant 0 : index
    %c0_0 = arith.constant 0 : index
    %0 = vector.load %arg2[%c0, %c0_0] : memref<512x256xbf16, #tpu.memory_space<vmem>>, vector<512x256xbf16>
    %c0_1 = arith.constant 0 : index
    %c0_2 = arith.constant 0 : index
    %1 = vector.load %arg3[%c0_1, %c0_2] : memref<256x128xbf16, #tpu.memory_space<vmem>>, vector<256x128xbf16>
    %cst = arith.constant dense<0.000000e+00> : vector<512x128xf32>
    %2 = tpu.matmul %0, %1, %cst {dimension_numbers = #tpu.dot_dimension_numbers<[1], [0], [0], [1], [0, 0, 1, 1], [], []>} : vector<512x256xbf16>, vector<256x128xbf16>, vector<512x128xf32> -> vector<512x128xf32>
    %c0_3 = arith.constant 0 : index
    %c0_4 = arith.constant 0 : index
    %3 = vector.load %arg4[%c0_3, %c0_4] : memref<1x128xf32, #tpu.memory_space<vmem>>, vector<1x128xf32>
    %4 = vector.broadcast %3 : vector<1x128xf32> to vector<512x128xf32>
    %5 = arith.addf %2, %4 : vector<512x128xf32>
    %cst_5 = arith.constant 0.000000e+00 : f32
    %6 = vector.broadcast %cst_5 : f32 to vector<512x128xf32>
    %7 = arith.maximumf %5, %6 : vector<512x128xf32>
    %8 = arith.truncf %7 : vector<512x128xf32> to vector<512x128xbf16>
    %c0_6 = arith.constant 0 : index
    %c0_7 = arith.constant 0 : index
    %9 = vector.load %arg5[%c0_6, %c0_7] : memref<512x128xbf16, #tpu.memory_space<vmem>>, vector<512x128xbf16>
    tpu.vector_store %arg5[%c0_6, %c0_7], %8 {strides = array<i32>} : memref<512x128xbf16, #tpu.memory_space<vmem>>, vector<512x128xbf16>,
    return
  }
  func.func @transform_0(%arg0: i32, %arg1: i32) -> (i32, i32) {
    %c0_i32 = arith.constant 0 : i32
    %c0_i32_0 = arith.constant 0 : i32
    return %arg0, %c0_i32 : i32, i32
  }
  func.func @transform_1(%arg0: i32, %arg1: i32) -> (i32, i32) {
    %c0_i32 = arith.constant 0 : i32
    %c0_i32_0 = arith.constant 0 : i32
    return %c0_i32, %arg1 : i32, i32
  }
  func.func @transform_2(%arg0: i32, %arg1: i32) -> (i32, i32) {
    %c0_i32 = arith.constant 0 : i32
    %c0_i32_0 = arith.constant 0 : i32
    return %c0_i32, %arg1 : i32, i32
  }
  func.func @transform_3(%arg0: i32, %arg1: i32) -> (i32, i32) {
    %c0_i32 = arith.constant 0 : i32
    return %arg0, %arg1 : i32, i32
  }
}

module attributes {stable_mosaic.version = 11 : i64} {
  func.func @_pool_kernel(%arg0: i32, %arg1: memref<9x128x16xbf16, #tpu.memory_space<vmem>>, %arg2: memref<128x16xbf16, #tpu.memory_space<vmem>>) attributes {dimension_semantics = [#tpu.dimension_semantics<parallel>], iteration_bounds = array<i64: 1>, scalar_prefetch = 0 : i64, scratch_operands = 0 : i64, tpu.core_type = #tpu.core_type<tc>, window_params = [{transform_indices = @transform_0, window_bounds = array<i64: 9, 128, 16>}, {transform_indices = @transform_1, window_bounds = array<i64: 128, 16>}]} {
    %c0 = arith.constant 0 : index
    %c0_0 = arith.constant 0 : index
    %c0_1 = arith.constant 0 : index
    %0 = vector.load %arg1[%c0, %c0_0, %c0_1] : memref<9x128x16xbf16, #tpu.memory_space<vmem>>, vector<9x128x16xbf16>
    %1 = arith.extf %0 : vector<9x128x16xbf16> to vector<9x128x16xf32>
    %cst = arith.constant dense<0xFF800000> : vector<128x16xf32>
    %2 = vector.multi_reduction <maximumf>, %1, %cst [0] : vector<9x128x16xf32> to vector<128x16xf32>
    %3 = arith.truncf %2 : vector<128x16xf32> to vector<128x16xbf16>
    %c0_2 = arith.constant 0 : index
    %c0_3 = arith.constant 0 : index
    %4 = vector.load %arg2[%c0_2, %c0_3] : memref<128x16xbf16, #tpu.memory_space<vmem>>, vector<128x16xbf16>
    tpu.vector_store %arg2[%c0_2, %c0_3], %3 {strides = array<i32>} : memref<128x16xbf16, #tpu.memory_space<vmem>>, vector<128x16xbf16>,
    return
  }
  func.func @transform_0(%arg0: i32) -> (i32, i32, i32) {
    %c0_i32 = arith.constant 0 : i32
    %c0_i32_0 = arith.constant 0 : i32
    %c0_i32_1 = arith.constant 0 : i32
    return %c0_i32, %arg0, %c0_i32_0 : i32, i32, i32
  }
  func.func @transform_1(%arg0: i32) -> (i32, i32) {
    %c0_i32 = arith.constant 0 : i32
    %c0_i32_0 = arith.constant 0 : i32
    return %arg0, %c0_i32 : i32, i32
  }
}

module attributes {stable_mosaic.version = 11 : i64} {
  func.func @kernel(%arg0: i32, %arg1: i32, %arg2: memref<128x128xbf16, #tpu.memory_space<vmem>>, %arg3: memref<128x128xbf16, #tpu.memory_space<vmem>>, %arg4: memref<1x128xf32, #tpu.memory_space<vmem>>, %arg5: memref<1x128xf32, #tpu.memory_space<vmem>>, %arg6: memref<1x128xf32, #tpu.memory_space<vmem>>, %arg7: memref<128x128xbf16, #tpu.memory_space<vmem>>) attributes {dimension_semantics = [#tpu.dimension_semantics<parallel>, #tpu.dimension_semantics<parallel>], iteration_bounds = array<i64: 1, 1>, scalar_prefetch = 0 : i64, scratch_operands = 0 : i64, tpu.core_type = #tpu.core_type<tc>, window_params = [{transform_indices = @transform_0, window_bounds = array<i64: 128, 128>}, {transform_indices = @transform_1, window_bounds = array<i64: 128, 128>}, {pipeline_mode = #tpu.pipeline_mode<synchronous>, transform_indices = @transform_2, window_bounds = array<i64: 1, 128>}, {pipeline_mode = #tpu.pipeline_mode<synchronous>, transform_indices = @transform_3, window_bounds = array<i64: 1, 128>}, {transform_indices = @transform_4, window_bounds = array<i64: 1, 128>}, {transform_indices = @transform_5, window_bounds = array<i64: 128, 128>}]} {
    %c0 = arith.constant 0 : index
    %c0_0 = arith.constant 0 : index
    %0 = vector.load %arg2[%c0, %c0_0] : memref<128x128xbf16, #tpu.memory_space<vmem>>, vector<128x128xbf16>
    %1 = arith.extf %0 : vector<128x128xbf16> to vector<128x128xf32>
    %c0_1 = arith.constant 0 : index
    %c0_2 = arith.constant 0 : index
    %2 = vector.load %arg4[%c0_1, %c0_2] : memref<1x128xf32, #tpu.memory_space<vmem>>, vector<1x128xf32>
    %3 = vector.broadcast %2 : vector<1x128xf32> to vector<128x128xf32>
    %4 = arith.mulf %1, %3 : vector<128x128xf32>
    %c0_3 = arith.constant 0 : index
    %c0_4 = arith.constant 0 : index
    %5 = vector.load %arg5[%c0_3, %c0_4] : memref<1x128xf32, #tpu.memory_space<vmem>>, vector<1x128xf32>
    %6 = vector.broadcast %5 : vector<1x128xf32> to vector<128x128xf32>
    %7 = arith.addf %4, %6 : vector<128x128xf32>
    %cst = arith.constant 0.000000e+00 : f32
    %8 = vector.broadcast %cst : f32 to vector<128x128xf32>
    %9 = arith.maximumf %7, %8 : vector<128x128xf32>
    %10 = arith.truncf %9 : vector<128x128xf32> to vector<128x128xbf16>
    %c0_5 = arith.constant 0 : index
    %c0_6 = arith.constant 0 : index
    %11 = vector.load %arg3[%c0_5, %c0_6] : memref<128x128xbf16, #tpu.memory_space<vmem>>, vector<128x128xbf16>
    %cst_7 = arith.constant dense<0.000000e+00> : vector<128x128xf32>
    %12 = tpu.matmul %10, %11, %cst_7 {dimension_numbers = #tpu.dot_dimension_numbers<[1], [0], [0], [1], [0, 0, 1, 1], [], []>} : vector<128x128xbf16>, vector<128x128xbf16>, vector<128x128xf32> -> vector<128x128xf32>
    %c0_8 = arith.constant 0 : index
    %c0_9 = arith.constant 0 : index
    %13 = vector.load %arg6[%c0_8, %c0_9] : memref<1x128xf32, #tpu.memory_space<vmem>>, vector<1x128xf32>
    %14 = vector.broadcast %13 : vector<1x128xf32> to vector<128x128xf32>
    %15 = arith.addf %12, %14 : vector<128x128xf32>
    %cst_10 = arith.constant 0.000000e+00 : f32
    %16 = vector.broadcast %cst_10 : f32 to vector<128x128xf32>
    %17 = arith.maximumf %15, %16 : vector<128x128xf32>
    %18 = arith.truncf %17 : vector<128x128xf32> to vector<128x128xbf16>
    %c0_11 = arith.constant 0 : index
    %c0_12 = arith.constant 0 : index
    %19 = vector.load %arg7[%c0_11, %c0_12] : memref<128x128xbf16, #tpu.memory_space<vmem>>, vector<128x128xbf16>
    tpu.vector_store %arg7[%c0_11, %c0_12], %18 {strides = array<i32>} : memref<128x128xbf16, #tpu.memory_space<vmem>>, vector<128x128xbf16>,
    return
  }
  func.func @transform_0(%arg0: i32, %arg1: i32) -> (i32, i32) {
    %c0_i32 = arith.constant 0 : i32
    %c0_i32_0 = arith.constant 0 : i32
    return %arg0, %c0_i32 : i32, i32
  }
  func.func @transform_1(%arg0: i32, %arg1: i32) -> (i32, i32) {
    %c0_i32 = arith.constant 0 : i32
    %c0_i32_0 = arith.constant 0 : i32
    return %c0_i32, %arg1 : i32, i32
  }
  func.func @transform_2(%arg0: i32, %arg1: i32) -> (i32, i32) {
    %c0_i32 = arith.constant 0 : i32
    %c0_i32_0 = arith.constant 0 : i32
    %c0_i32_1 = arith.constant 0 : i32
    return %c0_i32, %c0_i32_0 : i32, i32
  }
  func.func @transform_3(%arg0: i32, %arg1: i32) -> (i32, i32) {
    %c0_i32 = arith.constant 0 : i32
    %c0_i32_0 = arith.constant 0 : i32
    %c0_i32_1 = arith.constant 0 : i32
    return %c0_i32, %c0_i32_0 : i32, i32
  }
  func.func @transform_4(%arg0: i32, %arg1: i32) -> (i32, i32) {
    %c0_i32 = arith.constant 0 : i32
    %c0_i32_0 = arith.constant 0 : i32
    return %c0_i32, %arg1 : i32, i32
  }
  func.func @transform_5(%arg0: i32, %arg1: i32) -> (i32, i32) {
    %c0_i32 = arith.constant 0 : i32
    return %arg0, %arg1 : i32, i32
  }
}

module attributes {stable_mosaic.version = 11 : i64} {
  func.func @_conv3x3_kernel(%arg0: i32, %arg1: memref<1x110x128xbf16, #tpu.memory_space<vmem>>, %arg2: memref<1152x8xbf16, #tpu.memory_space<vmem>>, %arg3: memref<1x80x8xbf16, #tpu.memory_space<vmem>>) attributes {dimension_semantics = [#tpu.dimension_semantics<parallel>], iteration_bounds = array<i64: 2>, scalar_prefetch = 0 : i64, scratch_operands = 0 : i64, tpu.core_type = #tpu.core_type<tc>, window_params = [{transform_indices = @transform_0, window_bounds = array<i64: 1, 110, 128>}, {pipeline_mode = #tpu.pipeline_mode<synchronous>, transform_indices = @transform_1, window_bounds = array<i64: 1152, 8>}, {transform_indices = @transform_2, window_bounds = array<i64: 1, 80, 8>}]} {
    %cst = arith.constant 0.000000e+00 : f32
    %0 = vector.broadcast %cst : f32 to vector<80x8xf32>
    %c0 = arith.constant 0 : index
    %c0_0 = arith.constant 0 : index
    %c0_1 = arith.constant 0 : index
    %1 = vector.load %arg1[%c0, %c0_0, %c0_1] : memref<1x110x128xbf16, #tpu.memory_space<vmem>>, vector<1x80x128xbf16>
    %2 = vector.shape_cast %1 : vector<1x80x128xbf16> to vector<80x128xbf16>
    %c0_2 = arith.constant 0 : index
    %c0_3 = arith.constant 0 : index
    %3 = vector.load %arg2[%c0_2, %c0_3] : memref<1152x8xbf16, #tpu.memory_space<vmem>>, vector<128x8xbf16>
    %cst_4 = arith.constant dense<0.000000e+00> : vector<80x8xf32>
    %4 = tpu.matmul %2, %3, %cst_4 {dimension_numbers = #tpu.dot_dimension_numbers<[1], [0], [0], [1], [0, 0, 1, 1], [], []>} : vector<80x128xbf16>, vector<128x8xbf16>, vector<80x8xf32> -> vector<80x8xf32>
    %5 = arith.addf %0, %4 : vector<80x8xf32>
    %c0_5 = arith.constant 0 : index
    %c1 = arith.constant 1 : index
    %c0_6 = arith.constant 0 : index
    %6 = vector.load %arg1[%c0_5, %c1, %c0_6] : memref<1x110x128xbf16, #tpu.memory_space<vmem>>, vector<1x80x128xbf16>
    %7 = vector.shape_cast %6 : vector<1x80x128xbf16> to vector<80x128xbf16>
    %c128 = arith.constant 128 : index
    %c0_7 = arith.constant 0 : index
    %8 = vector.load %arg2[%c128, %c0_7] : memref<1152x8xbf16, #tpu.memory_space<vmem>>, vector<128x8xbf16>
    %cst_8 = arith.constant dense<0.000000e+00> : vector<80x8xf32>
    %9 = tpu.matmul %7, %8, %cst_8 {dimension_numbers = #tpu.dot_dimension_numbers<[1], [0], [0], [1], [0, 0, 1, 1], [], []>} : vector<80x128xbf16>, vector<128x8xbf16>, vector<80x8xf32> -> vector<80x8xf32>
    %10 = arith.addf %5, %9 : vector<80x8xf32>
    %c0_9 = arith.constant 0 : index
    %c2 = arith.constant 2 : index
    %c0_10 = arith.constant 0 : index
    %11 = vector.load %arg1[%c0_9, %c2, %c0_10] : memref<1x110x128xbf16, #tpu.memory_space<vmem>>, vector<1x80x128xbf16>
    %12 = vector.shape_cast %11 : vector<1x80x128xbf16> to vector<80x128xbf16>
    %c256 = arith.constant 256 : index
    %c0_11 = arith.constant 0 : index
    %13 = vector.load %arg2[%c256, %c0_11] : memref<1152x8xbf16, #tpu.memory_space<vmem>>, vector<128x8xbf16>
    %cst_12 = arith.constant dense<0.000000e+00> : vector<80x8xf32>
    %14 = tpu.matmul %12, %13, %cst_12 {dimension_numbers = #tpu.dot_dimension_numbers<[1], [0], [0], [1], [0, 0, 1, 1], [], []>} : vector<80x128xbf16>, vector<128x8xbf16>, vector<80x8xf32> -> vector<80x8xf32>
    %15 = arith.addf %10, %14 : vector<80x8xf32>
    %c0_13 = arith.constant 0 : index
    %c10 = arith.constant 10 : index
    %c0_14 = arith.constant 0 : index
    %16 = vector.load %arg1[%c0_13, %c10, %c0_14] : memref<1x110x128xbf16, #tpu.memory_space<vmem>>, vector<1x80x128xbf16>
    %17 = vector.shape_cast %16 : vector<1x80x128xbf16> to vector<80x128xbf16>
    %c384 = arith.constant 384 : index
    %c0_15 = arith.constant 0 : index
    %18 = vector.load %arg2[%c384, %c0_15] : memref<1152x8xbf16, #tpu.memory_space<vmem>>, vector<128x8xbf16>
    %cst_16 = arith.constant dense<0.000000e+00> : vector<80x8xf32>
    %19 = tpu.matmul %17, %18, %cst_16 {dimension_numbers = #tpu.dot_dimension_numbers<[1], [0], [0], [1], [0, 0, 1, 1], [], []>} : vector<80x128xbf16>, vector<128x8xbf16>, vector<80x8xf32> -> vector<80x8xf32>
    %20 = arith.addf %15, %19 : vector<80x8xf32>
    %c0_17 = arith.constant 0 : index
    %c11 = arith.constant 11 : index
    %c0_18 = arith.constant 0 : index
    %21 = vector.load %arg1[%c0_17, %c11, %c0_18] : memref<1x110x128xbf16, #tpu.memory_space<vmem>>, vector<1x80x128xbf16>
    %22 = vector.shape_cast %21 : vector<1x80x128xbf16> to vector<80x128xbf16>
    %c512 = arith.constant 512 : index
    %c0_19 = arith.constant 0 : index
    %23 = vector.load %arg2[%c512, %c0_19] : memref<1152x8xbf16, #tpu.memory_space<vmem>>, vector<128x8xbf16>
    %cst_20 = arith.constant dense<0.000000e+00> : vector<80x8xf32>
    %24 = tpu.matmul %22, %23, %cst_20 {dimension_numbers = #tpu.dot_dimension_numbers<[1], [0], [0], [1], [0, 0, 1, 1], [], []>} : vector<80x128xbf16>, vector<128x8xbf16>, vector<80x8xf32> -> vector<80x8xf32>
    %25 = arith.addf %20, %24 : vector<80x8xf32>
    %c0_21 = arith.constant 0 : index
    %c12 = arith.constant 12 : index
    %c0_22 = arith.constant 0 : index
    %26 = vector.load %arg1[%c0_21, %c12, %c0_22] : memref<1x110x128xbf16, #tpu.memory_space<vmem>>, vector<1x80x128xbf16>
    %27 = vector.shape_cast %26 : vector<1x80x128xbf16> to vector<80x128xbf16>
    %c640 = arith.constant 640 : index
    %c0_23 = arith.constant 0 : index
    %28 = vector.load %arg2[%c640, %c0_23] : memref<1152x8xbf16, #tpu.memory_space<vmem>>, vector<128x8xbf16>
    %cst_24 = arith.constant dense<0.000000e+00> : vector<80x8xf32>
    %29 = tpu.matmul %27, %28, %cst_24 {dimension_numbers = #tpu.dot_dimension_numbers<[1], [0], [0], [1], [0, 0, 1, 1], [], []>} : vector<80x128xbf16>, vector<128x8xbf16>, vector<80x8xf32> -> vector<80x8xf32>
    %30 = arith.addf %25, %29 : vector<80x8xf32>
    %c0_25 = arith.constant 0 : index
    %c20 = arith.constant 20 : index
    %c0_26 = arith.constant 0 : index
    %31 = vector.load %arg1[%c0_25, %c20, %c0_26] : memref<1x110x128xbf16, #tpu.memory_space<vmem>>, vector<1x80x128xbf16>
    %32 = vector.shape_cast %31 : vector<1x80x128xbf16> to vector<80x128xbf16>
    %c768 = arith.constant 768 : index
    %c0_27 = arith.constant 0 : index
    %33 = vector.load %arg2[%c768, %c0_27] : memref<1152x8xbf16, #tpu.memory_space<vmem>>, vector<128x8xbf16>
    %cst_28 = arith.constant dense<0.000000e+00> : vector<80x8xf32>
    %34 = tpu.matmul %32, %33, %cst_28 {dimension_numbers = #tpu.dot_dimension_numbers<[1], [0], [0], [1], [0, 0, 1, 1], [], []>} : vector<80x128xbf16>, vector<128x8xbf16>, vector<80x8xf32> -> vector<80x8xf32>
    %35 = arith.addf %30, %34 : vector<80x8xf32>
    %c0_29 = arith.constant 0 : index
    %c21 = arith.constant 21 : index
    %c0_30 = arith.constant 0 : index
    %36 = vector.load %arg1[%c0_29, %c21, %c0_30] : memref<1x110x128xbf16, #tpu.memory_space<vmem>>, vector<1x80x128xbf16>
    %37 = vector.shape_cast %36 : vector<1x80x128xbf16> to vector<80x128xbf16>
    %c896 = arith.constant 896 : index
    %c0_31 = arith.constant 0 : index
    %38 = vector.load %arg2[%c896, %c0_31] : memref<1152x8xbf16, #tpu.memory_space<vmem>>, vector<128x8xbf16>
    %cst_32 = arith.constant dense<0.000000e+00> : vector<80x8xf32>
    %39 = tpu.matmul %37, %38, %cst_32 {dimension_numbers = #tpu.dot_dimension_numbers<[1], [0], [0], [1], [0, 0, 1, 1], [], []>} : vector<80x128xbf16>, vector<128x8xbf16>, vector<80x8xf32> -> vector<80x8xf32>
    %40 = arith.addf %35, %39 : vector<80x8xf32>
    %c0_33 = arith.constant 0 : index
    %c22 = arith.constant 22 : index
    %c0_34 = arith.constant 0 : index
    %41 = vector.load %arg1[%c0_33, %c22, %c0_34] : memref<1x110x128xbf16, #tpu.memory_space<vmem>>, vector<1x80x128xbf16>
    %42 = vector.shape_cast %41 : vector<1x80x128xbf16> to vector<80x128xbf16>
    %c1024 = arith.constant 1024 : index
    %c0_35 = arith.constant 0 : index
    %43 = vector.load %arg2[%c1024, %c0_35] : memref<1152x8xbf16, #tpu.memory_space<vmem>>, vector<128x8xbf16>
    %cst_36 = arith.constant dense<0.000000e+00> : vector<80x8xf32>
    %44 = tpu.matmul %42, %43, %cst_36 {dimension_numbers = #tpu.dot_dimension_numbers<[1], [0], [0], [1], [0, 0, 1, 1], [], []>} : vector<80x128xbf16>, vector<128x8xbf16>, vector<80x8xf32> -> vector<80x8xf32>
    %45 = arith.addf %40, %44 : vector<80x8xf32>
    %46 = arith.truncf %45 : vector<80x8xf32> to vector<80x8xbf16>
    %c0_37 = arith.constant 0 : index
    %c0_38 = arith.constant 0 : index
    %c0_39 = arith.constant 0 : index
    %47 = vector.load %arg3[%c0_37, %c0_38, %c0_39] : memref<1x80x8xbf16, #tpu.memory_space<vmem>>, vector<1x80x8xbf16>
    %48 = vector.shape_cast %47 : vector<1x80x8xbf16> to vector<80x8xbf16>
    %49 = vector.shape_cast %46 : vector<80x8xbf16> to vector<1x80x8xbf16>
    tpu.vector_store %arg3[%c0_37, %c0_38, %c0_39], %49 {strides = array<i32>} : memref<1x80x8xbf16, #tpu.memory_space<vmem>>, vector<1x80x8xbf16>,
    return
  }
  func.func @transform_0(%arg0: i32) -> (i32, i32, i32) {
    %c0_i32 = arith.constant 0 : i32
    %c0_i32_0 = arith.constant 0 : i32
    %c0_i32_1 = arith.constant 0 : i32
    return %arg0, %c0_i32, %c0_i32_0 : i32, i32, i32
  }
  func.func @transform_1(%arg0: i32) -> (i32, i32) {
    %c0_i32 = arith.constant 0 : i32
    %c0_i32_0 = arith.constant 0 : i32
    %c0_i32_1 = arith.constant 0 : i32
    return %c0_i32, %c0_i32_0 : i32, i32
  }
  func.func @transform_2(%arg0: i32) -> (i32, i32, i32) {
    %c0_i32 = arith.constant 0 : i32
    %c0_i32_0 = arith.constant 0 : i32
    %c0_i32_1 = arith.constant 0 : i32
    return %arg0, %c0_i32, %c0_i32_0 : i32, i32, i32
  }
}

module attributes {stable_mosaic.version = 11 : i64} {
  func.func @kernel(%arg0: i32, %arg1: i32, %arg2: memref<128x128xbf16, #tpu.memory_space<vmem>>, %arg3: memref<128x128xbf16, #tpu.memory_space<vmem>>, %arg4: memref<1x128xf32, #tpu.memory_space<vmem>>, %arg5: memref<1x128xf32, #tpu.memory_space<vmem>>, %arg6: memref<128x128xbf16, #tpu.memory_space<vmem>>) attributes {dimension_semantics = [#tpu.dimension_semantics<parallel>, #tpu.dimension_semantics<parallel>], iteration_bounds = array<i64: 1, 1>, scalar_prefetch = 0 : i64, scratch_operands = 0 : i64, tpu.core_type = #tpu.core_type<tc>, window_params = [{transform_indices = @transform_0, window_bounds = array<i64: 128, 128>}, {transform_indices = @transform_1, window_bounds = array<i64: 128, 128>}, {pipeline_mode = #tpu.pipeline_mode<synchronous>, transform_indices = @transform_2, window_bounds = array<i64: 1, 128>}, {pipeline_mode = #tpu.pipeline_mode<synchronous>, transform_indices = @transform_3, window_bounds = array<i64: 1, 128>}, {transform_indices = @transform_4, window_bounds = array<i64: 128, 128>}]} {
    %c0 = arith.constant 0 : index
    %c0_0 = arith.constant 0 : index
    %0 = vector.load %arg2[%c0, %c0_0] : memref<128x128xbf16, #tpu.memory_space<vmem>>, vector<128x128xbf16>
    %1 = arith.extf %0 : vector<128x128xbf16> to vector<128x128xf32>
    %c0_1 = arith.constant 0 : index
    %c0_2 = arith.constant 0 : index
    %2 = vector.load %arg4[%c0_1, %c0_2] : memref<1x128xf32, #tpu.memory_space<vmem>>, vector<1x128xf32>
    %3 = vector.broadcast %2 : vector<1x128xf32> to vector<128x128xf32>
    %4 = arith.mulf %1, %3 : vector<128x128xf32>
    %c0_3 = arith.constant 0 : index
    %c0_4 = arith.constant 0 : index
    %5 = vector.load %arg5[%c0_3, %c0_4] : memref<1x128xf32, #tpu.memory_space<vmem>>, vector<1x128xf32>
    %6 = vector.broadcast %5 : vector<1x128xf32> to vector<128x128xf32>
    %7 = arith.addf %4, %6 : vector<128x128xf32>
    %cst = arith.constant 0.000000e+00 : f32
    %8 = vector.broadcast %cst : f32 to vector<128x128xf32>
    %9 = arith.maximumf %7, %8 : vector<128x128xf32>
    %10 = arith.truncf %9 : vector<128x128xf32> to vector<128x128xbf16>
    %c0_5 = arith.constant 0 : index
    %c0_6 = arith.constant 0 : index
    %11 = vector.load %arg3[%c0_5, %c0_6] : memref<128x128xbf16, #tpu.memory_space<vmem>>, vector<128x128xbf16>
    %cst_7 = arith.constant dense<0.000000e+00> : vector<128x128xf32>
    %12 = tpu.matmul %10, %11, %cst_7 {dimension_numbers = #tpu.dot_dimension_numbers<[1], [0], [0], [1], [0, 0, 1, 1], [], []>} : vector<128x128xbf16>, vector<128x128xbf16>, vector<128x128xf32> -> vector<128x128xf32>
    %13 = arith.truncf %12 : vector<128x128xf32> to vector<128x128xbf16>
    %c0_8 = arith.constant 0 : index
    %c0_9 = arith.constant 0 : index
    %14 = vector.load %arg6[%c0_8, %c0_9] : memref<128x128xbf16, #tpu.memory_space<vmem>>, vector<128x128xbf16>
    tpu.vector_store %arg6[%c0_8, %c0_9], %13 {strides = array<i32>} : memref<128x128xbf16, #tpu.memory_space<vmem>>, vector<128x128xbf16>,
    return
  }
  func.func @transform_0(%arg0: i32, %arg1: i32) -> (i32, i32) {
    %c0_i32 = arith.constant 0 : i32
    %c0_i32_0 = arith.constant 0 : i32
    return %arg0, %c0_i32 : i32, i32
  }
  func.func @transform_1(%arg0: i32, %arg1: i32) -> (i32, i32) {
    %c0_i32 = arith.constant 0 : i32
    %c0_i32_0 = arith.constant 0 : i32
    return %c0_i32, %arg1 : i32, i32
  }
  func.func @transform_2(%arg0: i32, %arg1: i32) -> (i32, i32) {
    %c0_i32 = arith.constant 0 : i32
    %c0_i32_0 = arith.constant 0 : i32
    %c0_i32_1 = arith.constant 0 : i32
    return %c0_i32, %c0_i32_0 : i32, i32
  }
  func.func @transform_3(%arg0: i32, %arg1: i32) -> (i32, i32) {
    %c0_i32 = arith.constant 0 : i32
    %c0_i32_0 = arith.constant 0 : i32
    %c0_i32_1 = arith.constant 0 : i32
    return %c0_i32, %c0_i32_0 : i32, i32
  }
  func.func @transform_4(%arg0: i32, %arg1: i32) -> (i32, i32) {
    %c0_i32 = arith.constant 0 : i32
    return %arg0, %arg1 : i32, i32
  }
}

module attributes {stable_mosaic.version = 11 : i64} {
  func.func @_pool_kernel(%arg0: i32, %arg1: memref<4x32x16xbf16, #tpu.memory_space<vmem>>, %arg2: memref<32x16xbf16, #tpu.memory_space<vmem>>) attributes {dimension_semantics = [#tpu.dimension_semantics<parallel>], iteration_bounds = array<i64: 1>, scalar_prefetch = 0 : i64, scratch_operands = 0 : i64, tpu.core_type = #tpu.core_type<tc>, window_params = [{transform_indices = @transform_0, window_bounds = array<i64: 4, 32, 16>}, {transform_indices = @transform_1, window_bounds = array<i64: 32, 16>}]} {
    %c0 = arith.constant 0 : index
    %c0_0 = arith.constant 0 : index
    %c0_1 = arith.constant 0 : index
    %0 = vector.load %arg1[%c0, %c0_0, %c0_1] : memref<4x32x16xbf16, #tpu.memory_space<vmem>>, vector<4x32x16xbf16>
    %1 = arith.extf %0 : vector<4x32x16xbf16> to vector<4x32x16xf32>
    %cst = arith.constant dense<0.000000e+00> : vector<32x16xf32>
    %2 = vector.multi_reduction <add>, %1, %cst [0] : vector<4x32x16xf32> to vector<32x16xf32>
    %cst_2 = arith.constant 2.500000e-01 : f32
    %3 = vector.broadcast %cst_2 : f32 to vector<32x16xf32>
    %4 = arith.mulf %2, %3 : vector<32x16xf32>
    %5 = arith.truncf %4 : vector<32x16xf32> to vector<32x16xbf16>
    %c0_3 = arith.constant 0 : index
    %c0_4 = arith.constant 0 : index
    %6 = vector.load %arg2[%c0_3, %c0_4] : memref<32x16xbf16, #tpu.memory_space<vmem>>, vector<32x16xbf16>
    tpu.vector_store %arg2[%c0_3, %c0_4], %5 {strides = array<i32>} : memref<32x16xbf16, #tpu.memory_space<vmem>>, vector<32x16xbf16>,
    return
  }
  func.func @transform_0(%arg0: i32) -> (i32, i32, i32) {
    %c0_i32 = arith.constant 0 : i32
    %c0_i32_0 = arith.constant 0 : i32
    %c0_i32_1 = arith.constant 0 : i32
    return %c0_i32, %arg0, %c0_i32_0 : i32, i32, i32
  }
  func.func @transform_1(%arg0: i32) -> (i32, i32) {
    %c0_i32 = arith.constant 0 : i32
    %c0_i32_0 = arith.constant 0 : i32
    return %arg0, %c0_i32 : i32, i32
  }
}

module attributes {stable_mosaic.version = 11 : i64} {
  func.func @kernel(%arg0: i32, %arg1: i32, %arg2: memref<32x128xbf16, #tpu.memory_space<vmem>>, %arg3: memref<128x128xbf16, #tpu.memory_space<vmem>>, %arg4: memref<1x128xf32, #tpu.memory_space<vmem>>, %arg5: memref<1x128xf32, #tpu.memory_space<vmem>>, %arg6: memref<1x128xf32, #tpu.memory_space<vmem>>, %arg7: memref<32x128xbf16, #tpu.memory_space<vmem>>) attributes {dimension_semantics = [#tpu.dimension_semantics<parallel>, #tpu.dimension_semantics<parallel>], iteration_bounds = array<i64: 1, 1>, scalar_prefetch = 0 : i64, scratch_operands = 0 : i64, tpu.core_type = #tpu.core_type<tc>, window_params = [{transform_indices = @transform_0, window_bounds = array<i64: 32, 128>}, {transform_indices = @transform_1, window_bounds = array<i64: 128, 128>}, {pipeline_mode = #tpu.pipeline_mode<synchronous>, transform_indices = @transform_2, window_bounds = array<i64: 1, 128>}, {pipeline_mode = #tpu.pipeline_mode<synchronous>, transform_indices = @transform_3, window_bounds = array<i64: 1, 128>}, {transform_indices = @transform_4, window_bounds = array<i64: 1, 128>}, {transform_indices = @transform_5, window_bounds = array<i64: 32, 128>}]} {
    %c0 = arith.constant 0 : index
    %c0_0 = arith.constant 0 : index
    %0 = vector.load %arg2[%c0, %c0_0] : memref<32x128xbf16, #tpu.memory_space<vmem>>, vector<32x128xbf16>
    %1 = arith.extf %0 : vector<32x128xbf16> to vector<32x128xf32>
    %c0_1 = arith.constant 0 : index
    %c0_2 = arith.constant 0 : index
    %2 = vector.load %arg4[%c0_1, %c0_2] : memref<1x128xf32, #tpu.memory_space<vmem>>, vector<1x128xf32>
    %3 = vector.broadcast %2 : vector<1x128xf32> to vector<32x128xf32>
    %4 = arith.mulf %1, %3 : vector<32x128xf32>
    %c0_3 = arith.constant 0 : index
    %c0_4 = arith.constant 0 : index
    %5 = vector.load %arg5[%c0_3, %c0_4] : memref<1x128xf32, #tpu.memory_space<vmem>>, vector<1x128xf32>
    %6 = vector.broadcast %5 : vector<1x128xf32> to vector<32x128xf32>
    %7 = arith.addf %4, %6 : vector<32x128xf32>
    %cst = arith.constant 0.000000e+00 : f32
    %8 = vector.broadcast %cst : f32 to vector<32x128xf32>
    %9 = arith.maximumf %7, %8 : vector<32x128xf32>
    %10 = arith.truncf %9 : vector<32x128xf32> to vector<32x128xbf16>
    %c0_5 = arith.constant 0 : index
    %c0_6 = arith.constant 0 : index
    %11 = vector.load %arg3[%c0_5, %c0_6] : memref<128x128xbf16, #tpu.memory_space<vmem>>, vector<128x128xbf16>
    %cst_7 = arith.constant dense<0.000000e+00> : vector<32x128xf32>
    %12 = tpu.matmul %10, %11, %cst_7 {dimension_numbers = #tpu.dot_dimension_numbers<[1], [0], [0], [1], [0, 0, 1, 1], [], []>} : vector<32x128xbf16>, vector<128x128xbf16>, vector<32x128xf32> -> vector<32x128xf32>
    %c0_8 = arith.constant 0 : index
    %c0_9 = arith.constant 0 : index
    %13 = vector.load %arg6[%c0_8, %c0_9] : memref<1x128xf32, #tpu.memory_space<vmem>>, vector<1x128xf32>
    %14 = vector.broadcast %13 : vector<1x128xf32> to vector<32x128xf32>
    %15 = arith.addf %12, %14 : vector<32x128xf32>
    %cst_10 = arith.constant 0.000000e+00 : f32
    %16 = vector.broadcast %cst_10 : f32 to vector<32x128xf32>
    %17 = arith.maximumf %15, %16 : vector<32x128xf32>
    %18 = arith.truncf %17 : vector<32x128xf32> to vector<32x128xbf16>
    %c0_11 = arith.constant 0 : index
    %c0_12 = arith.constant 0 : index
    %19 = vector.load %arg7[%c0_11, %c0_12] : memref<32x128xbf16, #tpu.memory_space<vmem>>, vector<32x128xbf16>
    tpu.vector_store %arg7[%c0_11, %c0_12], %18 {strides = array<i32>} : memref<32x128xbf16, #tpu.memory_space<vmem>>, vector<32x128xbf16>,
    return
  }
  func.func @transform_0(%arg0: i32, %arg1: i32) -> (i32, i32) {
    %c0_i32 = arith.constant 0 : i32
    %c0_i32_0 = arith.constant 0 : i32
    return %arg0, %c0_i32 : i32, i32
  }
  func.func @transform_1(%arg0: i32, %arg1: i32) -> (i32, i32) {
    %c0_i32 = arith.constant 0 : i32
    %c0_i32_0 = arith.constant 0 : i32
    return %c0_i32, %arg1 : i32, i32
  }
  func.func @transform_2(%arg0: i32, %arg1: i32) -> (i32, i32) {
    %c0_i32 = arith.constant 0 : i32
    %c0_i32_0 = arith.constant 0 : i32
    %c0_i32_1 = arith.constant 0 : i32
    return %c0_i32, %c0_i32_0 : i32, i32
  }
  func.func @transform_3(%arg0: i32, %arg1: i32) -> (i32, i32) {
    %c0_i32 = arith.constant 0 : i32
    %c0_i32_0 = arith.constant 0 : i32
    %c0_i32_1 = arith.constant 0 : i32
    return %c0_i32, %c0_i32_0 : i32, i32
  }
  func.func @transform_4(%arg0: i32, %arg1: i32) -> (i32, i32) {
    %c0_i32 = arith.constant 0 : i32
    %c0_i32_0 = arith.constant 0 : i32
    return %c0_i32, %arg1 : i32, i32
  }
  func.func @transform_5(%arg0: i32, %arg1: i32) -> (i32, i32) {
    %c0_i32 = arith.constant 0 : i32
    return %arg0, %arg1 : i32, i32
  }
}

module attributes {stable_mosaic.version = 11 : i64} {
  func.func @_conv3x3_kernel(%arg0: i32, %arg1: memref<1x42x128xbf16, #tpu.memory_space<vmem>>, %arg2: memref<1152x8xbf16, #tpu.memory_space<vmem>>, %arg3: memref<1x24x8xbf16, #tpu.memory_space<vmem>>) attributes {dimension_semantics = [#tpu.dimension_semantics<parallel>], iteration_bounds = array<i64: 2>, scalar_prefetch = 0 : i64, scratch_operands = 0 : i64, tpu.core_type = #tpu.core_type<tc>, window_params = [{transform_indices = @transform_0, window_bounds = array<i64: 1, 42, 128>}, {pipeline_mode = #tpu.pipeline_mode<synchronous>, transform_indices = @transform_1, window_bounds = array<i64: 1152, 8>}, {transform_indices = @transform_2, window_bounds = array<i64: 1, 24, 8>}]} {
    %cst = arith.constant 0.000000e+00 : f32
    %0 = vector.broadcast %cst : f32 to vector<24x8xf32>
    %c0 = arith.constant 0 : index
    %c0_0 = arith.constant 0 : index
    %c0_1 = arith.constant 0 : index
    %1 = vector.load %arg1[%c0, %c0_0, %c0_1] : memref<1x42x128xbf16, #tpu.memory_space<vmem>>, vector<1x24x128xbf16>
    %2 = vector.shape_cast %1 : vector<1x24x128xbf16> to vector<24x128xbf16>
    %c0_2 = arith.constant 0 : index
    %c0_3 = arith.constant 0 : index
    %3 = vector.load %arg2[%c0_2, %c0_3] : memref<1152x8xbf16, #tpu.memory_space<vmem>>, vector<128x8xbf16>
    %cst_4 = arith.constant dense<0.000000e+00> : vector<24x8xf32>
    %4 = tpu.matmul %2, %3, %cst_4 {dimension_numbers = #tpu.dot_dimension_numbers<[1], [0], [0], [1], [0, 0, 1, 1], [], []>} : vector<24x128xbf16>, vector<128x8xbf16>, vector<24x8xf32> -> vector<24x8xf32>
    %5 = arith.addf %0, %4 : vector<24x8xf32>
    %c0_5 = arith.constant 0 : index
    %c1 = arith.constant 1 : index
    %c0_6 = arith.constant 0 : index
    %6 = vector.load %arg1[%c0_5, %c1, %c0_6] : memref<1x42x128xbf16, #tpu.memory_space<vmem>>, vector<1x24x128xbf16>
    %7 = vector.shape_cast %6 : vector<1x24x128xbf16> to vector<24x128xbf16>
    %c128 = arith.constant 128 : index
    %c0_7 = arith.constant 0 : index
    %8 = vector.load %arg2[%c128, %c0_7] : memref<1152x8xbf16, #tpu.memory_space<vmem>>, vector<128x8xbf16>
    %cst_8 = arith.constant dense<0.000000e+00> : vector<24x8xf32>
    %9 = tpu.matmul %7, %8, %cst_8 {dimension_numbers = #tpu.dot_dimension_numbers<[1], [0], [0], [1], [0, 0, 1, 1], [], []>} : vector<24x128xbf16>, vector<128x8xbf16>, vector<24x8xf32> -> vector<24x8xf32>
    %10 = arith.addf %5, %9 : vector<24x8xf32>
    %c0_9 = arith.constant 0 : index
    %c2 = arith.constant 2 : index
    %c0_10 = arith.constant 0 : index
    %11 = vector.load %arg1[%c0_9, %c2, %c0_10] : memref<1x42x128xbf16, #tpu.memory_space<vmem>>, vector<1x24x128xbf16>
    %12 = vector.shape_cast %11 : vector<1x24x128xbf16> to vector<24x128xbf16>
    %c256 = arith.constant 256 : index
    %c0_11 = arith.constant 0 : index
    %13 = vector.load %arg2[%c256, %c0_11] : memref<1152x8xbf16, #tpu.memory_space<vmem>>, vector<128x8xbf16>
    %cst_12 = arith.constant dense<0.000000e+00> : vector<24x8xf32>
    %14 = tpu.matmul %12, %13, %cst_12 {dimension_numbers = #tpu.dot_dimension_numbers<[1], [0], [0], [1], [0, 0, 1, 1], [], []>} : vector<24x128xbf16>, vector<128x8xbf16>, vector<24x8xf32> -> vector<24x8xf32>
    %15 = arith.addf %10, %14 : vector<24x8xf32>
    %c0_13 = arith.constant 0 : index
    %c6 = arith.constant 6 : index
    %c0_14 = arith.constant 0 : index
    %16 = vector.load %arg1[%c0_13, %c6, %c0_14] : memref<1x42x128xbf16, #tpu.memory_space<vmem>>, vector<1x24x128xbf16>
    %17 = vector.shape_cast %16 : vector<1x24x128xbf16> to vector<24x128xbf16>
    %c384 = arith.constant 384 : index
    %c0_15 = arith.constant 0 : index
    %18 = vector.load %arg2[%c384, %c0_15] : memref<1152x8xbf16, #tpu.memory_space<vmem>>, vector<128x8xbf16>
    %cst_16 = arith.constant dense<0.000000e+00> : vector<24x8xf32>
    %19 = tpu.matmul %17, %18, %cst_16 {dimension_numbers = #tpu.dot_dimension_numbers<[1], [0], [0], [1], [0, 0, 1, 1], [], []>} : vector<24x128xbf16>, vector<128x8xbf16>, vector<24x8xf32> -> vector<24x8xf32>
    %20 = arith.addf %15, %19 : vector<24x8xf32>
    %c0_17 = arith.constant 0 : index
    %c7 = arith.constant 7 : index
    %c0_18 = arith.constant 0 : index
    %21 = vector.load %arg1[%c0_17, %c7, %c0_18] : memref<1x42x128xbf16, #tpu.memory_space<vmem>>, vector<1x24x128xbf16>
    %22 = vector.shape_cast %21 : vector<1x24x128xbf16> to vector<24x128xbf16>
    %c512 = arith.constant 512 : index
    %c0_19 = arith.constant 0 : index
    %23 = vector.load %arg2[%c512, %c0_19] : memref<1152x8xbf16, #tpu.memory_space<vmem>>, vector<128x8xbf16>
    %cst_20 = arith.constant dense<0.000000e+00> : vector<24x8xf32>
    %24 = tpu.matmul %22, %23, %cst_20 {dimension_numbers = #tpu.dot_dimension_numbers<[1], [0], [0], [1], [0, 0, 1, 1], [], []>} : vector<24x128xbf16>, vector<128x8xbf16>, vector<24x8xf32> -> vector<24x8xf32>
    %25 = arith.addf %20, %24 : vector<24x8xf32>
    %c0_21 = arith.constant 0 : index
    %c8 = arith.constant 8 : index
    %c0_22 = arith.constant 0 : index
    %26 = vector.load %arg1[%c0_21, %c8, %c0_22] : memref<1x42x128xbf16, #tpu.memory_space<vmem>>, vector<1x24x128xbf16>
    %27 = vector.shape_cast %26 : vector<1x24x128xbf16> to vector<24x128xbf16>
    %c640 = arith.constant 640 : index
    %c0_23 = arith.constant 0 : index
    %28 = vector.load %arg2[%c640, %c0_23] : memref<1152x8xbf16, #tpu.memory_space<vmem>>, vector<128x8xbf16>
    %cst_24 = arith.constant dense<0.000000e+00> : vector<24x8xf32>
    %29 = tpu.matmul %27, %28, %cst_24 {dimension_numbers = #tpu.dot_dimension_numbers<[1], [0], [0], [1], [0, 0, 1, 1], [], []>} : vector<24x128xbf16>, vector<128x8xbf16>, vector<24x8xf32> -> vector<24x8xf32>
    %30 = arith.addf %25, %29 : vector<24x8xf32>
    %c0_25 = arith.constant 0 : index
    %c12 = arith.constant 12 : index
    %c0_26 = arith.constant 0 : index
    %31 = vector.load %arg1[%c0_25, %c12, %c0_26] : memref<1x42x128xbf16, #tpu.memory_space<vmem>>, vector<1x24x128xbf16>
    %32 = vector.shape_cast %31 : vector<1x24x128xbf16> to vector<24x128xbf16>
    %c768 = arith.constant 768 : index
    %c0_27 = arith.constant 0 : index
    %33 = vector.load %arg2[%c768, %c0_27] : memref<1152x8xbf16, #tpu.memory_space<vmem>>, vector<128x8xbf16>
    %cst_28 = arith.constant dense<0.000000e+00> : vector<24x8xf32>
    %34 = tpu.matmul %32, %33, %cst_28 {dimension_numbers = #tpu.dot_dimension_numbers<[1], [0], [0], [1], [0, 0, 1, 1], [], []>} : vector<24x128xbf16>, vector<128x8xbf16>, vector<24x8xf32> -> vector<24x8xf32>
    %35 = arith.addf %30, %34 : vector<24x8xf32>
    %c0_29 = arith.constant 0 : index
    %c13 = arith.constant 13 : index
    %c0_30 = arith.constant 0 : index
    %36 = vector.load %arg1[%c0_29, %c13, %c0_30] : memref<1x42x128xbf16, #tpu.memory_space<vmem>>, vector<1x24x128xbf16>
    %37 = vector.shape_cast %36 : vector<1x24x128xbf16> to vector<24x128xbf16>
    %c896 = arith.constant 896 : index
    %c0_31 = arith.constant 0 : index
    %38 = vector.load %arg2[%c896, %c0_31] : memref<1152x8xbf16, #tpu.memory_space<vmem>>, vector<128x8xbf16>
    %cst_32 = arith.constant dense<0.000000e+00> : vector<24x8xf32>
    %39 = tpu.matmul %37, %38, %cst_32 {dimension_numbers = #tpu.dot_dimension_numbers<[1], [0], [0], [1], [0, 0, 1, 1], [], []>} : vector<24x128xbf16>, vector<128x8xbf16>, vector<24x8xf32> -> vector<24x8xf32>
    %40 = arith.addf %35, %39 : vector<24x8xf32>
    %c0_33 = arith.constant 0 : index
    %c14 = arith.constant 14 : index
    %c0_34 = arith.constant 0 : index
    %41 = vector.load %arg1[%c0_33, %c14, %c0_34] : memref<1x42x128xbf16, #tpu.memory_space<vmem>>, vector<1x24x128xbf16>
    %42 = vector.shape_cast %41 : vector<1x24x128xbf16> to vector<24x128xbf16>
    %c1024 = arith.constant 1024 : index
    %c0_35 = arith.constant 0 : index
    %43 = vector.load %arg2[%c1024, %c0_35] : memref<1152x8xbf16, #tpu.memory_space<vmem>>, vector<128x8xbf16>
    %cst_36 = arith.constant dense<0.000000e+00> : vector<24x8xf32>
    %44 = tpu.matmul %42, %43, %cst_36 {dimension_numbers = #tpu.dot_dimension_numbers<[1], [0], [0], [1], [0, 0, 1, 1], [], []>} : vector<24x128xbf16>, vector<128x8xbf16>, vector<24x8xf32> -> vector<24x8xf32>
    %45 = arith.addf %40, %44 : vector<24x8xf32>
    %46 = arith.truncf %45 : vector<24x8xf32> to vector<24x8xbf16>
    %c0_37 = arith.constant 0 : index
    %c0_38 = arith.constant 0 : index
    %c0_39 = arith.constant 0 : index
    %47 = vector.load %arg3[%c0_37, %c0_38, %c0_39] : memref<1x24x8xbf16, #tpu.memory_space<vmem>>, vector<1x24x8xbf16>
    %48 = vector.shape_cast %47 : vector<1x24x8xbf16> to vector<24x8xbf16>
    %49 = vector.shape_cast %46 : vector<24x8xbf16> to vector<1x24x8xbf16>
    tpu.vector_store %arg3[%c0_37, %c0_38, %c0_39], %49 {strides = array<i32>} : memref<1x24x8xbf16, #tpu.memory_space<vmem>>, vector<1x24x8xbf16>,
    return
  }
  func.func @transform_0(%arg0: i32) -> (i32, i32, i32) {
    %c0_i32 = arith.constant 0 : i32
    %c0_i32_0 = arith.constant 0 : i32
    %c0_i32_1 = arith.constant 0 : i32
    return %arg0, %c0_i32, %c0_i32_0 : i32, i32, i32
  }
  func.func @transform_1(%arg0: i32) -> (i32, i32) {
    %c0_i32 = arith.constant 0 : i32
    %c0_i32_0 = arith.constant 0 : i32
    %c0_i32_1 = arith.constant 0 : i32
    return %c0_i32, %c0_i32_0 : i32, i32
  }
  func.func @transform_2(%arg0: i32) -> (i32, i32, i32) {
    %c0_i32 = arith.constant 0 : i32
    %c0_i32_0 = arith.constant 0 : i32
    %c0_i32_1 = arith.constant 0 : i32
    return %arg0, %c0_i32, %c0_i32_0 : i32, i32, i32
  }
}

module attributes {stable_mosaic.version = 11 : i64} {
  func.func @kernel(%arg0: i32, %arg1: i32, %arg2: memref<32x128xbf16, #tpu.memory_space<vmem>>, %arg3: memref<128x128xbf16, #tpu.memory_space<vmem>>, %arg4: memref<1x128xf32, #tpu.memory_space<vmem>>, %arg5: memref<1x128xf32, #tpu.memory_space<vmem>>, %arg6: memref<32x128xbf16, #tpu.memory_space<vmem>>) attributes {dimension_semantics = [#tpu.dimension_semantics<parallel>, #tpu.dimension_semantics<parallel>], iteration_bounds = array<i64: 1, 1>, scalar_prefetch = 0 : i64, scratch_operands = 0 : i64, tpu.core_type = #tpu.core_type<tc>, window_params = [{transform_indices = @transform_0, window_bounds = array<i64: 32, 128>}, {transform_indices = @transform_1, window_bounds = array<i64: 128, 128>}, {pipeline_mode = #tpu.pipeline_mode<synchronous>, transform_indices = @transform_2, window_bounds = array<i64: 1, 128>}, {pipeline_mode = #tpu.pipeline_mode<synchronous>, transform_indices = @transform_3, window_bounds = array<i64: 1, 128>}, {transform_indices = @transform_4, window_bounds = array<i64: 32, 128>}]} {
    %c0 = arith.constant 0 : index
    %c0_0 = arith.constant 0 : index
    %0 = vector.load %arg2[%c0, %c0_0] : memref<32x128xbf16, #tpu.memory_space<vmem>>, vector<32x128xbf16>
    %1 = arith.extf %0 : vector<32x128xbf16> to vector<32x128xf32>
    %c0_1 = arith.constant 0 : index
    %c0_2 = arith.constant 0 : index
    %2 = vector.load %arg4[%c0_1, %c0_2] : memref<1x128xf32, #tpu.memory_space<vmem>>, vector<1x128xf32>
    %3 = vector.broadcast %2 : vector<1x128xf32> to vector<32x128xf32>
    %4 = arith.mulf %1, %3 : vector<32x128xf32>
    %c0_3 = arith.constant 0 : index
    %c0_4 = arith.constant 0 : index
    %5 = vector.load %arg5[%c0_3, %c0_4] : memref<1x128xf32, #tpu.memory_space<vmem>>, vector<1x128xf32>
    %6 = vector.broadcast %5 : vector<1x128xf32> to vector<32x128xf32>
    %7 = arith.addf %4, %6 : vector<32x128xf32>
    %cst = arith.constant 0.000000e+00 : f32
    %8 = vector.broadcast %cst : f32 to vector<32x128xf32>
    %9 = arith.maximumf %7, %8 : vector<32x128xf32>
    %10 = arith.truncf %9 : vector<32x128xf32> to vector<32x128xbf16>
    %c0_5 = arith.constant 0 : index
    %c0_6 = arith.constant 0 : index
    %11 = vector.load %arg3[%c0_5, %c0_6] : memref<128x128xbf16, #tpu.memory_space<vmem>>, vector<128x128xbf16>
    %cst_7 = arith.constant dense<0.000000e+00> : vector<32x128xf32>
    %12 = tpu.matmul %10, %11, %cst_7 {dimension_numbers = #tpu.dot_dimension_numbers<[1], [0], [0], [1], [0, 0, 1, 1], [], []>} : vector<32x128xbf16>, vector<128x128xbf16>, vector<32x128xf32> -> vector<32x128xf32>
    %13 = arith.truncf %12 : vector<32x128xf32> to vector<32x128xbf16>
    %c0_8 = arith.constant 0 : index
    %c0_9 = arith.constant 0 : index
    %14 = vector.load %arg6[%c0_8, %c0_9] : memref<32x128xbf16, #tpu.memory_space<vmem>>, vector<32x128xbf16>
    tpu.vector_store %arg6[%c0_8, %c0_9], %13 {strides = array<i32>} : memref<32x128xbf16, #tpu.memory_space<vmem>>, vector<32x128xbf16>,
    return
  }
  func.func @transform_0(%arg0: i32, %arg1: i32) -> (i32, i32) {
    %c0_i32 = arith.constant 0 : i32
    %c0_i32_0 = arith.constant 0 : i32
    return %arg0, %c0_i32 : i32, i32
  }
  func.func @transform_1(%arg0: i32, %arg1: i32) -> (i32, i32) {
    %c0_i32 = arith.constant 0 : i32
    %c0_i32_0 = arith.constant 0 : i32
    return %c0_i32, %arg1 : i32, i32
  }
  func.func @transform_2(%arg0: i32, %arg1: i32) -> (i32, i32) {
    %c0_i32 = arith.constant 0 : i32
    %c0_i32_0 = arith.constant 0 : i32
    %c0_i32_1 = arith.constant 0 : i32
    return %c0_i32, %c0_i32_0 : i32, i32
  }
  func.func @transform_3(%arg0: i32, %arg1: i32) -> (i32, i32) {
    %c0_i32 = arith.constant 0 : i32
    %c0_i32_0 = arith.constant 0 : i32
    %c0_i32_1 = arith.constant 0 : i32
    return %c0_i32, %c0_i32_0 : i32, i32
  }
  func.func @transform_4(%arg0: i32, %arg1: i32) -> (i32, i32) {
    %c0_i32 = arith.constant 0 : i32
    return %arg0, %arg1 : i32, i32
  }
}

module attributes {stable_mosaic.version = 11 : i64} {
  func.func @kernel(%arg0: i32, %arg1: i32, %arg2: memref<8x128xbf16, #tpu.memory_space<vmem>>, %arg3: memref<128x128xbf16, #tpu.memory_space<vmem>>, %arg4: memref<1x128xf32, #tpu.memory_space<vmem>>, %arg5: memref<1x128xf32, #tpu.memory_space<vmem>>, %arg6: memref<1x128xf32, #tpu.memory_space<vmem>>, %arg7: memref<8x128xbf16, #tpu.memory_space<vmem>>) attributes {dimension_semantics = [#tpu.dimension_semantics<parallel>, #tpu.dimension_semantics<parallel>], iteration_bounds = array<i64: 1, 1>, scalar_prefetch = 0 : i64, scratch_operands = 0 : i64, tpu.core_type = #tpu.core_type<tc>, window_params = [{transform_indices = @transform_0, window_bounds = array<i64: 8, 128>}, {transform_indices = @transform_1, window_bounds = array<i64: 128, 128>}, {pipeline_mode = #tpu.pipeline_mode<synchronous>, transform_indices = @transform_2, window_bounds = array<i64: 1, 128>}, {pipeline_mode = #tpu.pipeline_mode<synchronous>, transform_indices = @transform_3, window_bounds = array<i64: 1, 128>}, {transform_indices = @transform_4, window_bounds = array<i64: 1, 128>}, {transform_indices = @transform_5, window_bounds = array<i64: 8, 128>}]} {
    %c0 = arith.constant 0 : index
    %c0_0 = arith.constant 0 : index
    %0 = vector.load %arg2[%c0, %c0_0] : memref<8x128xbf16, #tpu.memory_space<vmem>>, vector<8x128xbf16>
    %1 = arith.extf %0 : vector<8x128xbf16> to vector<8x128xf32>
    %c0_1 = arith.constant 0 : index
    %c0_2 = arith.constant 0 : index
    %2 = vector.load %arg4[%c0_1, %c0_2] : memref<1x128xf32, #tpu.memory_space<vmem>>, vector<1x128xf32>
    %3 = vector.broadcast %2 : vector<1x128xf32> to vector<8x128xf32>
    %4 = arith.mulf %1, %3 : vector<8x128xf32>
    %c0_3 = arith.constant 0 : index
    %c0_4 = arith.constant 0 : index
    %5 = vector.load %arg5[%c0_3, %c0_4] : memref<1x128xf32, #tpu.memory_space<vmem>>, vector<1x128xf32>
    %6 = vector.broadcast %5 : vector<1x128xf32> to vector<8x128xf32>
    %7 = arith.addf %4, %6 : vector<8x128xf32>
    %cst = arith.constant 0.000000e+00 : f32
    %8 = vector.broadcast %cst : f32 to vector<8x128xf32>
    %9 = arith.maximumf %7, %8 : vector<8x128xf32>
    %10 = arith.truncf %9 : vector<8x128xf32> to vector<8x128xbf16>
    %c0_5 = arith.constant 0 : index
    %c0_6 = arith.constant 0 : index
    %11 = vector.load %arg3[%c0_5, %c0_6] : memref<128x128xbf16, #tpu.memory_space<vmem>>, vector<128x128xbf16>
    %cst_7 = arith.constant dense<0.000000e+00> : vector<8x128xf32>
    %12 = tpu.matmul %10, %11, %cst_7 {dimension_numbers = #tpu.dot_dimension_numbers<[1], [0], [0], [1], [0, 0, 1, 1], [], []>} : vector<8x128xbf16>, vector<128x128xbf16>, vector<8x128xf32> -> vector<8x128xf32>
    %c0_8 = arith.constant 0 : index
    %c0_9 = arith.constant 0 : index
    %13 = vector.load %arg6[%c0_8, %c0_9] : memref<1x128xf32, #tpu.memory_space<vmem>>, vector<1x128xf32>
    %14 = vector.broadcast %13 : vector<1x128xf32> to vector<8x128xf32>
    %15 = arith.addf %12, %14 : vector<8x128xf32>
    %cst_10 = arith.constant 0.000000e+00 : f32
    %16 = vector.broadcast %cst_10 : f32 to vector<8x128xf32>
    %17 = arith.maximumf %15, %16 : vector<8x128xf32>
    %18 = arith.truncf %17 : vector<8x128xf32> to vector<8x128xbf16>
    %c0_11 = arith.constant 0 : index
    %c0_12 = arith.constant 0 : index
    %19 = vector.load %arg7[%c0_11, %c0_12] : memref<8x128xbf16, #tpu.memory_space<vmem>>, vector<8x128xbf16>
    tpu.vector_store %arg7[%c0_11, %c0_12], %18 {strides = array<i32>} : memref<8x128xbf16, #tpu.memory_space<vmem>>, vector<8x128xbf16>,
    return
  }
  func.func @transform_0(%arg0: i32, %arg1: i32) -> (i32, i32) {
    %c0_i32 = arith.constant 0 : i32
    %c0_i32_0 = arith.constant 0 : i32
    return %arg0, %c0_i32 : i32, i32
  }
  func.func @transform_1(%arg0: i32, %arg1: i32) -> (i32, i32) {
    %c0_i32 = arith.constant 0 : i32
    %c0_i32_0 = arith.constant 0 : i32
    return %c0_i32, %arg1 : i32, i32
  }
  func.func @transform_2(%arg0: i32, %arg1: i32) -> (i32, i32) {
    %c0_i32 = arith.constant 0 : i32
    %c0_i32_0 = arith.constant 0 : i32
    %c0_i32_1 = arith.constant 0 : i32
    return %c0_i32, %c0_i32_0 : i32, i32
  }
  func.func @transform_3(%arg0: i32, %arg1: i32) -> (i32, i32) {
    %c0_i32 = arith.constant 0 : i32
    %c0_i32_0 = arith.constant 0 : i32
    %c0_i32_1 = arith.constant 0 : i32
    return %c0_i32, %c0_i32_0 : i32, i32
  }
  func.func @transform_4(%arg0: i32, %arg1: i32) -> (i32, i32) {
    %c0_i32 = arith.constant 0 : i32
    %c0_i32_0 = arith.constant 0 : i32
    return %c0_i32, %arg1 : i32, i32
  }
  func.func @transform_5(%arg0: i32, %arg1: i32) -> (i32, i32) {
    %c0_i32 = arith.constant 0 : i32
    return %arg0, %arg1 : i32, i32
  }
}

module attributes {stable_mosaic.version = 11 : i64} {
  func.func @_pool_kernel(%arg0: i32, %arg1: memref<4x8x16xbf16, #tpu.memory_space<vmem>>, %arg2: memref<8x16xbf16, #tpu.memory_space<vmem>>) attributes {dimension_semantics = [#tpu.dimension_semantics<parallel>], iteration_bounds = array<i64: 1>, scalar_prefetch = 0 : i64, scratch_operands = 0 : i64, tpu.core_type = #tpu.core_type<tc>, window_params = [{transform_indices = @transform_0, window_bounds = array<i64: 4, 8, 16>}, {transform_indices = @transform_1, window_bounds = array<i64: 8, 16>}]} {
    %c0 = arith.constant 0 : index
    %c0_0 = arith.constant 0 : index
    %c0_1 = arith.constant 0 : index
    %0 = vector.load %arg1[%c0, %c0_0, %c0_1] : memref<4x8x16xbf16, #tpu.memory_space<vmem>>, vector<4x8x16xbf16>
    %1 = arith.extf %0 : vector<4x8x16xbf16> to vector<4x8x16xf32>
    %cst = arith.constant dense<0.000000e+00> : vector<8x16xf32>
    %2 = vector.multi_reduction <add>, %1, %cst [0] : vector<4x8x16xf32> to vector<8x16xf32>
    %cst_2 = arith.constant 2.500000e-01 : f32
    %3 = vector.broadcast %cst_2 : f32 to vector<8x16xf32>
    %4 = arith.mulf %2, %3 : vector<8x16xf32>
    %5 = arith.truncf %4 : vector<8x16xf32> to vector<8x16xbf16>
    %c0_3 = arith.constant 0 : index
    %c0_4 = arith.constant 0 : index
    %6 = vector.load %arg2[%c0_3, %c0_4] : memref<8x16xbf16, #tpu.memory_space<vmem>>, vector<8x16xbf16>
    tpu.vector_store %arg2[%c0_3, %c0_4], %5 {strides = array<i32>} : memref<8x16xbf16, #tpu.memory_space<vmem>>, vector<8x16xbf16>,
    return
  }
  func.func @transform_0(%arg0: i32) -> (i32, i32, i32) {
    %c0_i32 = arith.constant 0 : i32
    %c0_i32_0 = arith.constant 0 : i32
    %c0_i32_1 = arith.constant 0 : i32
    return %c0_i32, %arg0, %c0_i32_0 : i32, i32, i32
  }
  func.func @transform_1(%arg0: i32) -> (i32, i32) {
    %c0_i32 = arith.constant 0 : i32
    %c0_i32_0 = arith.constant 0 : i32
    return %arg0, %c0_i32 : i32, i32
  }
}

module attributes {stable_mosaic.version = 11 : i64} {
  func.func @_conv3x3_kernel(%arg0: i32, %arg1: memref<1x20x128xbf16, #tpu.memory_space<vmem>>, %arg2: memref<1152x8xbf16, #tpu.memory_space<vmem>>, %arg3: memref<1x8x8xbf16, #tpu.memory_space<vmem>>) attributes {dimension_semantics = [#tpu.dimension_semantics<parallel>], iteration_bounds = array<i64: 2>, scalar_prefetch = 0 : i64, scratch_operands = 0 : i64, tpu.core_type = #tpu.core_type<tc>, window_params = [{transform_indices = @transform_0, window_bounds = array<i64: 1, 20, 128>}, {pipeline_mode = #tpu.pipeline_mode<synchronous>, transform_indices = @transform_1, window_bounds = array<i64: 1152, 8>}, {transform_indices = @transform_2, window_bounds = array<i64: 1, 8, 8>}]} {
    %cst = arith.constant 0.000000e+00 : f32
    %0 = vector.broadcast %cst : f32 to vector<8x8xf32>
    %c0 = arith.constant 0 : index
    %c0_0 = arith.constant 0 : index
    %c0_1 = arith.constant 0 : index
    %1 = vector.load %arg1[%c0, %c0_0, %c0_1] : memref<1x20x128xbf16, #tpu.memory_space<vmem>>, vector<1x8x128xbf16>
    %2 = vector.shape_cast %1 : vector<1x8x128xbf16> to vector<8x128xbf16>
    %c0_2 = arith.constant 0 : index
    %c0_3 = arith.constant 0 : index
    %3 = vector.load %arg2[%c0_2, %c0_3] : memref<1152x8xbf16, #tpu.memory_space<vmem>>, vector<128x8xbf16>
    %cst_4 = arith.constant dense<0.000000e+00> : vector<8x8xf32>
    %4 = tpu.matmul %2, %3, %cst_4 {dimension_numbers = #tpu.dot_dimension_numbers<[1], [0], [0], [1], [0, 0, 1, 1], [], []>} : vector<8x128xbf16>, vector<128x8xbf16>, vector<8x8xf32> -> vector<8x8xf32>
    %5 = arith.addf %0, %4 : vector<8x8xf32>
    %c0_5 = arith.constant 0 : index
    %c1 = arith.constant 1 : index
    %c0_6 = arith.constant 0 : index
    %6 = vector.load %arg1[%c0_5, %c1, %c0_6] : memref<1x20x128xbf16, #tpu.memory_space<vmem>>, vector<1x8x128xbf16>
    %7 = vector.shape_cast %6 : vector<1x8x128xbf16> to vector<8x128xbf16>
    %c128 = arith.constant 128 : index
    %c0_7 = arith.constant 0 : index
    %8 = vector.load %arg2[%c128, %c0_7] : memref<1152x8xbf16, #tpu.memory_space<vmem>>, vector<128x8xbf16>
    %cst_8 = arith.constant dense<0.000000e+00> : vector<8x8xf32>
    %9 = tpu.matmul %7, %8, %cst_8 {dimension_numbers = #tpu.dot_dimension_numbers<[1], [0], [0], [1], [0, 0, 1, 1], [], []>} : vector<8x128xbf16>, vector<128x8xbf16>, vector<8x8xf32> -> vector<8x8xf32>
    %10 = arith.addf %5, %9 : vector<8x8xf32>
    %c0_9 = arith.constant 0 : index
    %c2 = arith.constant 2 : index
    %c0_10 = arith.constant 0 : index
    %11 = vector.load %arg1[%c0_9, %c2, %c0_10] : memref<1x20x128xbf16, #tpu.memory_space<vmem>>, vector<1x8x128xbf16>
    %12 = vector.shape_cast %11 : vector<1x8x128xbf16> to vector<8x128xbf16>
    %c256 = arith.constant 256 : index
    %c0_11 = arith.constant 0 : index
    %13 = vector.load %arg2[%c256, %c0_11] : memref<1152x8xbf16, #tpu.memory_space<vmem>>, vector<128x8xbf16>
    %cst_12 = arith.constant dense<0.000000e+00> : vector<8x8xf32>
    %14 = tpu.matmul %12, %13, %cst_12 {dimension_numbers = #tpu.dot_dimension_numbers<[1], [0], [0], [1], [0, 0, 1, 1], [], []>} : vector<8x128xbf16>, vector<128x8xbf16>, vector<8x8xf32> -> vector<8x8xf32>
    %15 = arith.addf %10, %14 : vector<8x8xf32>
    %c0_13 = arith.constant 0 : index
    %c4 = arith.constant 4 : index
    %c0_14 = arith.constant 0 : index
    %16 = vector.load %arg1[%c0_13, %c4, %c0_14] : memref<1x20x128xbf16, #tpu.memory_space<vmem>>, vector<1x8x128xbf16>
    %17 = vector.shape_cast %16 : vector<1x8x128xbf16> to vector<8x128xbf16>
    %c384 = arith.constant 384 : index
    %c0_15 = arith.constant 0 : index
    %18 = vector.load %arg2[%c384, %c0_15] : memref<1152x8xbf16, #tpu.memory_space<vmem>>, vector<128x8xbf16>
    %cst_16 = arith.constant dense<0.000000e+00> : vector<8x8xf32>
    %19 = tpu.matmul %17, %18, %cst_16 {dimension_numbers = #tpu.dot_dimension_numbers<[1], [0], [0], [1], [0, 0, 1, 1], [], []>} : vector<8x128xbf16>, vector<128x8xbf16>, vector<8x8xf32> -> vector<8x8xf32>
    %20 = arith.addf %15, %19 : vector<8x8xf32>
    %c0_17 = arith.constant 0 : index
    %c5 = arith.constant 5 : index
    %c0_18 = arith.constant 0 : index
    %21 = vector.load %arg1[%c0_17, %c5, %c0_18] : memref<1x20x128xbf16, #tpu.memory_space<vmem>>, vector<1x8x128xbf16>
    %22 = vector.shape_cast %21 : vector<1x8x128xbf16> to vector<8x128xbf16>
    %c512 = arith.constant 512 : index
    %c0_19 = arith.constant 0 : index
    %23 = vector.load %arg2[%c512, %c0_19] : memref<1152x8xbf16, #tpu.memory_space<vmem>>, vector<128x8xbf16>
    %cst_20 = arith.constant dense<0.000000e+00> : vector<8x8xf32>
    %24 = tpu.matmul %22, %23, %cst_20 {dimension_numbers = #tpu.dot_dimension_numbers<[1], [0], [0], [1], [0, 0, 1, 1], [], []>} : vector<8x128xbf16>, vector<128x8xbf16>, vector<8x8xf32> -> vector<8x8xf32>
    %25 = arith.addf %20, %24 : vector<8x8xf32>
    %c0_21 = arith.constant 0 : index
    %c6 = arith.constant 6 : index
    %c0_22 = arith.constant 0 : index
    %26 = vector.load %arg1[%c0_21, %c6, %c0_22] : memref<1x20x128xbf16, #tpu.memory_space<vmem>>, vector<1x8x128xbf16>
    %27 = vector.shape_cast %26 : vector<1x8x128xbf16> to vector<8x128xbf16>
    %c640 = arith.constant 640 : index
    %c0_23 = arith.constant 0 : index
    %28 = vector.load %arg2[%c640, %c0_23] : memref<1152x8xbf16, #tpu.memory_space<vmem>>, vector<128x8xbf16>
    %cst_24 = arith.constant dense<0.000000e+00> : vector<8x8xf32>
    %29 = tpu.matmul %27, %28, %cst_24 {dimension_numbers = #tpu.dot_dimension_numbers<[1], [0], [0], [1], [0, 0, 1, 1], [], []>} : vector<8x128xbf16>, vector<128x8xbf16>, vector<8x8xf32> -> vector<8x8xf32>
    %30 = arith.addf %25, %29 : vector<8x8xf32>
    %c0_25 = arith.constant 0 : index
    %c8 = arith.constant 8 : index
    %c0_26 = arith.constant 0 : index
    %31 = vector.load %arg1[%c0_25, %c8, %c0_26] : memref<1x20x128xbf16, #tpu.memory_space<vmem>>, vector<1x8x128xbf16>
    %32 = vector.shape_cast %31 : vector<1x8x128xbf16> to vector<8x128xbf16>
    %c768 = arith.constant 768 : index
    %c0_27 = arith.constant 0 : index
    %33 = vector.load %arg2[%c768, %c0_27] : memref<1152x8xbf16, #tpu.memory_space<vmem>>, vector<128x8xbf16>
    %cst_28 = arith.constant dense<0.000000e+00> : vector<8x8xf32>
    %34 = tpu.matmul %32, %33, %cst_28 {dimension_numbers = #tpu.dot_dimension_numbers<[1], [0], [0], [1], [0, 0, 1, 1], [], []>} : vector<8x128xbf16>, vector<128x8xbf16>, vector<8x8xf32> -> vector<8x8xf32>
    %35 = arith.addf %30, %34 : vector<8x8xf32>
    %c0_29 = arith.constant 0 : index
    %c9 = arith.constant 9 : index
    %c0_30 = arith.constant 0 : index
    %36 = vector.load %arg1[%c0_29, %c9, %c0_30] : memref<1x20x128xbf16, #tpu.memory_space<vmem>>, vector<1x8x128xbf16>
    %37 = vector.shape_cast %36 : vector<1x8x128xbf16> to vector<8x128xbf16>
    %c896 = arith.constant 896 : index
    %c0_31 = arith.constant 0 : index
    %38 = vector.load %arg2[%c896, %c0_31] : memref<1152x8xbf16, #tpu.memory_space<vmem>>, vector<128x8xbf16>
    %cst_32 = arith.constant dense<0.000000e+00> : vector<8x8xf32>
    %39 = tpu.matmul %37, %38, %cst_32 {dimension_numbers = #tpu.dot_dimension_numbers<[1], [0], [0], [1], [0, 0, 1, 1], [], []>} : vector<8x128xbf16>, vector<128x8xbf16>, vector<8x8xf32> -> vector<8x8xf32>
    %40 = arith.addf %35, %39 : vector<8x8xf32>
    %c0_33 = arith.constant 0 : index
    %c10 = arith.constant 10 : index
    %c0_34 = arith.constant 0 : index
    %41 = vector.load %arg1[%c0_33, %c10, %c0_34] : memref<1x20x128xbf16, #tpu.memory_space<vmem>>, vector<1x8x128xbf16>
    %42 = vector.shape_cast %41 : vector<1x8x128xbf16> to vector<8x128xbf16>
    %c1024 = arith.constant 1024 : index
    %c0_35 = arith.constant 0 : index
    %43 = vector.load %arg2[%c1024, %c0_35] : memref<1152x8xbf16, #tpu.memory_space<vmem>>, vector<128x8xbf16>
    %cst_36 = arith.constant dense<0.000000e+00> : vector<8x8xf32>
    %44 = tpu.matmul %42, %43, %cst_36 {dimension_numbers = #tpu.dot_dimension_numbers<[1], [0], [0], [1], [0, 0, 1, 1], [], []>} : vector<8x128xbf16>, vector<128x8xbf16>, vector<8x8xf32> -> vector<8x8xf32>
    %45 = arith.addf %40, %44 : vector<8x8xf32>
    %46 = arith.truncf %45 : vector<8x8xf32> to vector<8x8xbf16>
    %c0_37 = arith.constant 0 : index
    %c0_38 = arith.constant 0 : index
    %c0_39 = arith.constant 0 : index
    %47 = vector.load %arg3[%c0_37, %c0_38, %c0_39] : memref<1x8x8xbf16, #tpu.memory_space<vmem>>, vector<1x8x8xbf16>
    %48 = vector.shape_cast %47 : vector<1x8x8xbf16> to vector<8x8xbf16>
    %49 = vector.shape_cast %46 : vector<8x8xbf16> to vector<1x8x8xbf16>
    tpu.vector_store %arg3[%c0_37, %c0_38, %c0_39], %49 {strides = array<i32>} : memref<1x8x8xbf16, #tpu.memory_space<vmem>>, vector<1x8x8xbf16>,
    return
  }
  func.func @transform_0(%arg0: i32) -> (i32, i32, i32) {
    %c0_i32 = arith.constant 0 : i32
    %c0_i32_0 = arith.constant 0 : i32
    %c0_i32_1 = arith.constant 0 : i32
    return %arg0, %c0_i32, %c0_i32_0 : i32, i32, i32
  }
  func.func @transform_1(%arg0: i32) -> (i32, i32) {
    %c0_i32 = arith.constant 0 : i32
    %c0_i32_0 = arith.constant 0 : i32
    %c0_i32_1 = arith.constant 0 : i32
    return %c0_i32, %c0_i32_0 : i32, i32
  }
  func.func @transform_2(%arg0: i32) -> (i32, i32, i32) {
    %c0_i32 = arith.constant 0 : i32
    %c0_i32_0 = arith.constant 0 : i32
    %c0_i32_1 = arith.constant 0 : i32
    return %arg0, %c0_i32, %c0_i32_0 : i32, i32, i32
  }
}

module attributes {stable_mosaic.version = 11 : i64} {
  func.func @_pool_kernel(%arg0: i32, %arg1: memref<4x2x16xbf16, #tpu.memory_space<vmem>>, %arg2: memref<2x16xbf16, #tpu.memory_space<vmem>>) attributes {dimension_semantics = [#tpu.dimension_semantics<parallel>], iteration_bounds = array<i64: 1>, scalar_prefetch = 0 : i64, scratch_operands = 0 : i64, tpu.core_type = #tpu.core_type<tc>, window_params = [{transform_indices = @transform_0, window_bounds = array<i64: 4, 2, 16>}, {transform_indices = @transform_1, window_bounds = array<i64: 2, 16>}]} {
    %c0 = arith.constant 0 : index
    %c0_0 = arith.constant 0 : index
    %c0_1 = arith.constant 0 : index
    %0 = vector.load %arg1[%c0, %c0_0, %c0_1] : memref<4x2x16xbf16, #tpu.memory_space<vmem>>, vector<4x2x16xbf16>
    %1 = arith.extf %0 : vector<4x2x16xbf16> to vector<4x2x16xf32>
    %cst = arith.constant dense<0.000000e+00> : vector<2x16xf32>
    %2 = vector.multi_reduction <add>, %1, %cst [0] : vector<4x2x16xf32> to vector<2x16xf32>
    %cst_2 = arith.constant 2.500000e-01 : f32
    %3 = vector.broadcast %cst_2 : f32 to vector<2x16xf32>
    %4 = arith.mulf %2, %3 : vector<2x16xf32>
    %5 = arith.truncf %4 : vector<2x16xf32> to vector<2x16xbf16>
    %c0_3 = arith.constant 0 : index
    %c0_4 = arith.constant 0 : index
    %6 = vector.load %arg2[%c0_3, %c0_4] : memref<2x16xbf16, #tpu.memory_space<vmem>>, vector<2x16xbf16>
    tpu.vector_store %arg2[%c0_3, %c0_4], %5 {strides = array<i32>} : memref<2x16xbf16, #tpu.memory_space<vmem>>, vector<2x16xbf16>,
    return
  }
  func.func @transform_0(%arg0: i32) -> (i32, i32, i32) {
    %c0_i32 = arith.constant 0 : i32
    %c0_i32_0 = arith.constant 0 : i32
    %c0_i32_1 = arith.constant 0 : i32
    return %c0_i32, %arg0, %c0_i32_0 : i32, i32, i32
  }
  func.func @transform_1(%arg0: i32) -> (i32, i32) {
    %c0_i32 = arith.constant 0 : i32
    %c0_i32_0 = arith.constant 0 : i32
    return %arg0, %c0_i32 : i32, i32
  }
}

module attributes {stable_mosaic.version = 11 : i64} {
  func.func @kernel(%arg0: i32, %arg1: i32, %arg2: memref<8x128xbf16, #tpu.memory_space<vmem>>, %arg3: memref<128x128xbf16, #tpu.memory_space<vmem>>, %arg4: memref<1x128xf32, #tpu.memory_space<vmem>>, %arg5: memref<1x128xf32, #tpu.memory_space<vmem>>, %arg6: memref<8x128xbf16, #tpu.memory_space<vmem>>) attributes {dimension_semantics = [#tpu.dimension_semantics<parallel>, #tpu.dimension_semantics<parallel>], iteration_bounds = array<i64: 1, 1>, scalar_prefetch = 0 : i64, scratch_operands = 0 : i64, tpu.core_type = #tpu.core_type<tc>, window_params = [{transform_indices = @transform_0, window_bounds = array<i64: 8, 128>}, {transform_indices = @transform_1, window_bounds = array<i64: 128, 128>}, {pipeline_mode = #tpu.pipeline_mode<synchronous>, transform_indices = @transform_2, window_bounds = array<i64: 1, 128>}, {pipeline_mode = #tpu.pipeline_mode<synchronous>, transform_indices = @transform_3, window_bounds = array<i64: 1, 128>}, {transform_indices = @transform_4, window_bounds = array<i64: 8, 128>}]} {
    %c0 = arith.constant 0 : index
    %c0_0 = arith.constant 0 : index
    %0 = vector.load %arg2[%c0, %c0_0] : memref<8x128xbf16, #tpu.memory_space<vmem>>, vector<8x128xbf16>
    %1 = arith.extf %0 : vector<8x128xbf16> to vector<8x128xf32>
    %c0_1 = arith.constant 0 : index
    %c0_2 = arith.constant 0 : index
    %2 = vector.load %arg4[%c0_1, %c0_2] : memref<1x128xf32, #tpu.memory_space<vmem>>, vector<1x128xf32>
    %3 = vector.broadcast %2 : vector<1x128xf32> to vector<8x128xf32>
    %4 = arith.mulf %1, %3 : vector<8x128xf32>
    %c0_3 = arith.constant 0 : index
    %c0_4 = arith.constant 0 : index
    %5 = vector.load %arg5[%c0_3, %c0_4] : memref<1x128xf32, #tpu.memory_space<vmem>>, vector<1x128xf32>
    %6 = vector.broadcast %5 : vector<1x128xf32> to vector<8x128xf32>
    %7 = arith.addf %4, %6 : vector<8x128xf32>
    %cst = arith.constant 0.000000e+00 : f32
    %8 = vector.broadcast %cst : f32 to vector<8x128xf32>
    %9 = arith.maximumf %7, %8 : vector<8x128xf32>
    %10 = arith.truncf %9 : vector<8x128xf32> to vector<8x128xbf16>
    %c0_5 = arith.constant 0 : index
    %c0_6 = arith.constant 0 : index
    %11 = vector.load %arg3[%c0_5, %c0_6] : memref<128x128xbf16, #tpu.memory_space<vmem>>, vector<128x128xbf16>
    %cst_7 = arith.constant dense<0.000000e+00> : vector<8x128xf32>
    %12 = tpu.matmul %10, %11, %cst_7 {dimension_numbers = #tpu.dot_dimension_numbers<[1], [0], [0], [1], [0, 0, 1, 1], [], []>} : vector<8x128xbf16>, vector<128x128xbf16>, vector<8x128xf32> -> vector<8x128xf32>
    %13 = arith.truncf %12 : vector<8x128xf32> to vector<8x128xbf16>
    %c0_8 = arith.constant 0 : index
    %c0_9 = arith.constant 0 : index
    %14 = vector.load %arg6[%c0_8, %c0_9] : memref<8x128xbf16, #tpu.memory_space<vmem>>, vector<8x128xbf16>
    tpu.vector_store %arg6[%c0_8, %c0_9], %13 {strides = array<i32>} : memref<8x128xbf16, #tpu.memory_space<vmem>>, vector<8x128xbf16>,
    return
  }
  func.func @transform_0(%arg0: i32, %arg1: i32) -> (i32, i32) {
    %c0_i32 = arith.constant 0 : i32
    %c0_i32_0 = arith.constant 0 : i32
    return %arg0, %c0_i32 : i32, i32
  }
  func.func @transform_1(%arg0: i32, %arg1: i32) -> (i32, i32) {
    %c0_i32 = arith.constant 0 : i32
    %c0_i32_0 = arith.constant 0 : i32
    return %c0_i32, %arg1 : i32, i32
  }
  func.func @transform_2(%arg0: i32, %arg1: i32) -> (i32, i32) {
    %c0_i32 = arith.constant 0 : i32
    %c0_i32_0 = arith.constant 0 : i32
    %c0_i32_1 = arith.constant 0 : i32
    return %c0_i32, %c0_i32_0 : i32, i32
  }
  func.func @transform_3(%arg0: i32, %arg1: i32) -> (i32, i32) {
    %c0_i32 = arith.constant 0 : i32
    %c0_i32_0 = arith.constant 0 : i32
    %c0_i32_1 = arith.constant 0 : i32
    return %c0_i32, %c0_i32_0 : i32, i32
  }
  func.func @transform_4(%arg0: i32, %arg1: i32) -> (i32, i32) {
    %c0_i32 = arith.constant 0 : i32
    return %arg0, %arg1 : i32, i32
  }
}

module attributes {stable_mosaic.version = 11 : i64} {
  func.func @_conv3x3_kernel(%arg0: i32, %arg1: memref<1x12x128xbf16, #tpu.memory_space<vmem>>, %arg2: memref<1152x8xbf16, #tpu.memory_space<vmem>>, %arg3: memref<1x3x8xbf16, #tpu.memory_space<vmem>>) attributes {dimension_semantics = [#tpu.dimension_semantics<parallel>], iteration_bounds = array<i64: 2>, scalar_prefetch = 0 : i64, scratch_operands = 0 : i64, tpu.core_type = #tpu.core_type<tc>, window_params = [{transform_indices = @transform_0, window_bounds = array<i64: 1, 12, 128>}, {pipeline_mode = #tpu.pipeline_mode<synchronous>, transform_indices = @transform_1, window_bounds = array<i64: 1152, 8>}, {transform_indices = @transform_2, window_bounds = array<i64: 1, 3, 8>}]} {
    %cst = arith.constant 0.000000e+00 : f32
    %0 = vector.broadcast %cst : f32 to vector<3x8xf32>
    %c0 = arith.constant 0 : index
    %c0_0 = arith.constant 0 : index
    %c0_1 = arith.constant 0 : index
    %1 = vector.load %arg1[%c0, %c0_0, %c0_1] : memref<1x12x128xbf16, #tpu.memory_space<vmem>>, vector<1x3x128xbf16>
    %2 = vector.shape_cast %1 : vector<1x3x128xbf16> to vector<3x128xbf16>
    %c0_2 = arith.constant 0 : index
    %c0_3 = arith.constant 0 : index
    %3 = vector.load %arg2[%c0_2, %c0_3] : memref<1152x8xbf16, #tpu.memory_space<vmem>>, vector<128x8xbf16>
    %cst_4 = arith.constant dense<0.000000e+00> : vector<3x8xf32>
    %4 = tpu.matmul %2, %3, %cst_4 {dimension_numbers = #tpu.dot_dimension_numbers<[1], [0], [0], [1], [0, 0, 1, 1], [], []>} : vector<3x128xbf16>, vector<128x8xbf16>, vector<3x8xf32> -> vector<3x8xf32>
    %5 = arith.addf %0, %4 : vector<3x8xf32>
    %c0_5 = arith.constant 0 : index
    %c1 = arith.constant 1 : index
    %c0_6 = arith.constant 0 : index
    %6 = vector.load %arg1[%c0_5, %c1, %c0_6] : memref<1x12x128xbf16, #tpu.memory_space<vmem>>, vector<1x3x128xbf16>
    %7 = vector.shape_cast %6 : vector<1x3x128xbf16> to vector<3x128xbf16>
    %c128 = arith.constant 128 : index
    %c0_7 = arith.constant 0 : index
    %8 = vector.load %arg2[%c128, %c0_7] : memref<1152x8xbf16, #tpu.memory_space<vmem>>, vector<128x8xbf16>
    %cst_8 = arith.constant dense<0.000000e+00> : vector<3x8xf32>
    %9 = tpu.matmul %7, %8, %cst_8 {dimension_numbers = #tpu.dot_dimension_numbers<[1], [0], [0], [1], [0, 0, 1, 1], [], []>} : vector<3x128xbf16>, vector<128x8xbf16>, vector<3x8xf32> -> vector<3x8xf32>
    %10 = arith.addf %5, %9 : vector<3x8xf32>
    %c0_9 = arith.constant 0 : index
    %c2 = arith.constant 2 : index
    %c0_10 = arith.constant 0 : index
    %11 = vector.load %arg1[%c0_9, %c2, %c0_10] : memref<1x12x128xbf16, #tpu.memory_space<vmem>>, vector<1x3x128xbf16>
    %12 = vector.shape_cast %11 : vector<1x3x128xbf16> to vector<3x128xbf16>
    %c256 = arith.constant 256 : index
    %c0_11 = arith.constant 0 : index
    %13 = vector.load %arg2[%c256, %c0_11] : memref<1152x8xbf16, #tpu.memory_space<vmem>>, vector<128x8xbf16>
    %cst_12 = arith.constant dense<0.000000e+00> : vector<3x8xf32>
    %14 = tpu.matmul %12, %13, %cst_12 {dimension_numbers = #tpu.dot_dimension_numbers<[1], [0], [0], [1], [0, 0, 1, 1], [], []>} : vector<3x128xbf16>, vector<128x8xbf16>, vector<3x8xf32> -> vector<3x8xf32>
    %15 = arith.addf %10, %14 : vector<3x8xf32>
    %c0_13 = arith.constant 0 : index
    %c3 = arith.constant 3 : index
    %c0_14 = arith.constant 0 : index
    %16 = vector.load %arg1[%c0_13, %c3, %c0_14] : memref<1x12x128xbf16, #tpu.memory_space<vmem>>, vector<1x3x128xbf16>
    %17 = vector.shape_cast %16 : vector<1x3x128xbf16> to vector<3x128xbf16>
    %c384 = arith.constant 384 : index
    %c0_15 = arith.constant 0 : index
    %18 = vector.load %arg2[%c384, %c0_15] : memref<1152x8xbf16, #tpu.memory_space<vmem>>, vector<128x8xbf16>
    %cst_16 = arith.constant dense<0.000000e+00> : vector<3x8xf32>
    %19 = tpu.matmul %17, %18, %cst_16 {dimension_numbers = #tpu.dot_dimension_numbers<[1], [0], [0], [1], [0, 0, 1, 1], [], []>} : vector<3x128xbf16>, vector<128x8xbf16>, vector<3x8xf32> -> vector<3x8xf32>
    %20 = arith.addf %15, %19 : vector<3x8xf32>
    %c0_17 = arith.constant 0 : index
    %c4 = arith.constant 4 : index
    %c0_18 = arith.constant 0 : index
    %21 = vector.load %arg1[%c0_17, %c4, %c0_18] : memref<1x12x128xbf16, #tpu.memory_space<vmem>>, vector<1x3x128xbf16>
    %22 = vector.shape_cast %21 : vector<1x3x128xbf16> to vector<3x128xbf16>
    %c512 = arith.constant 512 : index
    %c0_19 = arith.constant 0 : index
    %23 = vector.load %arg2[%c512, %c0_19] : memref<1152x8xbf16, #tpu.memory_space<vmem>>, vector<128x8xbf16>
    %cst_20 = arith.constant dense<0.000000e+00> : vector<3x8xf32>
    %24 = tpu.matmul %22, %23, %cst_20 {dimension_numbers = #tpu.dot_dimension_numbers<[1], [0], [0], [1], [0, 0, 1, 1], [], []>} : vector<3x128xbf16>, vector<128x8xbf16>, vector<3x8xf32> -> vector<3x8xf32>
    %25 = arith.addf %20, %24 : vector<3x8xf32>
    %c0_21 = arith.constant 0 : index
    %c5 = arith.constant 5 : index
    %c0_22 = arith.constant 0 : index
    %26 = vector.load %arg1[%c0_21, %c5, %c0_22] : memref<1x12x128xbf16, #tpu.memory_space<vmem>>, vector<1x3x128xbf16>
    %27 = vector.shape_cast %26 : vector<1x3x128xbf16> to vector<3x128xbf16>
    %c640 = arith.constant 640 : index
    %c0_23 = arith.constant 0 : index
    %28 = vector.load %arg2[%c640, %c0_23] : memref<1152x8xbf16, #tpu.memory_space<vmem>>, vector<128x8xbf16>
    %cst_24 = arith.constant dense<0.000000e+00> : vector<3x8xf32>
    %29 = tpu.matmul %27, %28, %cst_24 {dimension_numbers = #tpu.dot_dimension_numbers<[1], [0], [0], [1], [0, 0, 1, 1], [], []>} : vector<3x128xbf16>, vector<128x8xbf16>, vector<3x8xf32> -> vector<3x8xf32>
    %30 = arith.addf %25, %29 : vector<3x8xf32>
    %c0_25 = arith.constant 0 : index
    %c6 = arith.constant 6 : index
    %c0_26 = arith.constant 0 : index
    %31 = vector.load %arg1[%c0_25, %c6, %c0_26] : memref<1x12x128xbf16, #tpu.memory_space<vmem>>, vector<1x3x128xbf16>
    %32 = vector.shape_cast %31 : vector<1x3x128xbf16> to vector<3x128xbf16>
    %c768 = arith.constant 768 : index
    %c0_27 = arith.constant 0 : index
    %33 = vector.load %arg2[%c768, %c0_27] : memref<1152x8xbf16, #tpu.memory_space<vmem>>, vector<128x8xbf16>
    %cst_28 = arith.constant dense<0.000000e+00> : vector<3x8xf32>
    %34 = tpu.matmul %32, %33, %cst_28 {dimension_numbers = #tpu.dot_dimension_numbers<[1], [0], [0], [1], [0, 0, 1, 1], [], []>} : vector<3x128xbf16>, vector<128x8xbf16>, vector<3x8xf32> -> vector<3x8xf32>
    %35 = arith.addf %30, %34 : vector<3x8xf32>
    %c0_29 = arith.constant 0 : index
    %c7 = arith.constant 7 : index
    %c0_30 = arith.constant 0 : index
    %36 = vector.load %arg1[%c0_29, %c7, %c0_30] : memref<1x12x128xbf16, #tpu.memory_space<vmem>>, vector<1x3x128xbf16>
    %37 = vector.shape_cast %36 : vector<1x3x128xbf16> to vector<3x128xbf16>
    %c896 = arith.constant 896 : index
    %c0_31 = arith.constant 0 : index
    %38 = vector.load %arg2[%c896, %c0_31] : memref<1152x8xbf16, #tpu.memory_space<vmem>>, vector<128x8xbf16>
    %cst_32 = arith.constant dense<0.000000e+00> : vector<3x8xf32>
    %39 = tpu.matmul %37, %38, %cst_32 {dimension_numbers = #tpu.dot_dimension_numbers<[1], [0], [0], [1], [0, 0, 1, 1], [], []>} : vector<3x128xbf16>, vector<128x8xbf16>, vector<3x8xf32> -> vector<3x8xf32>
    %40 = arith.addf %35, %39 : vector<3x8xf32>
    %c0_33 = arith.constant 0 : index
    %c8 = arith.constant 8 : index
    %c0_34 = arith.constant 0 : index
    %41 = vector.load %arg1[%c0_33, %c8, %c0_34] : memref<1x12x128xbf16, #tpu.memory_space<vmem>>, vector<1x3x128xbf16>
    %42 = vector.shape_cast %41 : vector<1x3x128xbf16> to vector<3x128xbf16>
    %c1024 = arith.constant 1024 : index
    %c0_35 = arith.constant 0 : index
    %43 = vector.load %arg2[%c1024, %c0_35] : memref<1152x8xbf16, #tpu.memory_space<vmem>>, vector<128x8xbf16>
    %cst_36 = arith.constant dense<0.000000e+00> : vector<3x8xf32>
    %44 = tpu.matmul %42, %43, %cst_36 {dimension_numbers = #tpu.dot_dimension_numbers<[1], [0], [0], [1], [0, 0, 1, 1], [], []>} : vector<3x128xbf16>, vector<128x8xbf16>, vector<3x8xf32> -> vector<3x8xf32>
    %45 = arith.addf %40, %44 : vector<3x8xf32>
    %46 = arith.truncf %45 : vector<3x8xf32> to vector<3x8xbf16>
    %c0_37 = arith.constant 0 : index
    %c0_38 = arith.constant 0 : index
    %c0_39 = arith.constant 0 : index
    %47 = vector.load %arg3[%c0_37, %c0_38, %c0_39] : memref<1x3x8xbf16, #tpu.memory_space<vmem>>, vector<1x3x8xbf16>
    %48 = vector.shape_cast %47 : vector<1x3x8xbf16> to vector<3x8xbf16>
    %49 = vector.shape_cast %46 : vector<3x8xbf16> to vector<1x3x8xbf16>
    tpu.vector_store %arg3[%c0_37, %c0_38, %c0_39], %49 {strides = array<i32>} : memref<1x3x8xbf16, #tpu.memory_space<vmem>>, vector<1x3x8xbf16>,
    return
  }
  func.func @transform_0(%arg0: i32) -> (i32, i32, i32) {
    %c0_i32 = arith.constant 0 : i32
    %c0_i32_0 = arith.constant 0 : i32
    %c0_i32_1 = arith.constant 0 : i32
    return %arg0, %c0_i32, %c0_i32_0 : i32, i32, i32
  }
  func.func @transform_1(%arg0: i32) -> (i32, i32) {
    %c0_i32 = arith.constant 0 : i32
    %c0_i32_0 = arith.constant 0 : i32
    %c0_i32_1 = arith.constant 0 : i32
    return %c0_i32, %c0_i32_0 : i32, i32
  }
  func.func @transform_2(%arg0: i32) -> (i32, i32, i32) {
    %c0_i32 = arith.constant 0 : i32
    %c0_i32_0 = arith.constant 0 : i32
    %c0_i32_1 = arith.constant 0 : i32
    return %arg0, %c0_i32, %c0_i32_0 : i32, i32, i32
  }
}

module attributes {stable_mosaic.version = 11 : i64} {
  func.func @_head_kernel(%arg0: memref<2x1x32xbf16, #tpu.memory_space<vmem>>, %arg1: memref<1x1x32xf32, #tpu.memory_space<vmem>>, %arg2: memref<1x1x32xf32, #tpu.memory_space<vmem>>, %arg3: memref<32x3xbf16, #tpu.memory_space<vmem>>, %arg4: memref<1x3xf32, #tpu.memory_space<vmem>>, %arg5: memref<2x3xf32, #tpu.memory_space<vmem>>) attributes {dimension_semantics = [], scalar_prefetch = 0 : i64, scratch_operands = 0 : i64, tpu.core_type = #tpu.core_type<tc>} {
    %c0 = arith.constant 0 : index
    %c0_0 = arith.constant 0 : index
    %c0_1 = arith.constant 0 : index
    %0 = vector.load %arg0[%c0, %c0_0, %c0_1] : memref<2x1x32xbf16, #tpu.memory_space<vmem>>, vector<2x1x32xbf16>
    %1 = arith.extf %0 : vector<2x1x32xbf16> to vector<2x1x32xf32>
    %c0_2 = arith.constant 0 : index
    %c0_3 = arith.constant 0 : index
    %c0_4 = arith.constant 0 : index
    %2 = vector.load %arg1[%c0_2, %c0_3, %c0_4] : memref<1x1x32xf32, #tpu.memory_space<vmem>>, vector<1x1x32xf32>
    %3 = vector.broadcast %2 : vector<1x1x32xf32> to vector<2x1x32xf32>
    %4 = arith.mulf %1, %3 : vector<2x1x32xf32>
    %c0_5 = arith.constant 0 : index
    %c0_6 = arith.constant 0 : index
    %c0_7 = arith.constant 0 : index
    %5 = vector.load %arg2[%c0_5, %c0_6, %c0_7] : memref<1x1x32xf32, #tpu.memory_space<vmem>>, vector<1x1x32xf32>
    %6 = vector.broadcast %5 : vector<1x1x32xf32> to vector<2x1x32xf32>
    %7 = arith.addf %4, %6 : vector<2x1x32xf32>
    %cst = arith.constant 0.000000e+00 : f32
    %8 = vector.broadcast %cst : f32 to vector<2x1x32xf32>
    %9 = arith.maximumf %7, %8 : vector<2x1x32xf32>
    %cst_8 = arith.constant dense<0.000000e+00> : vector<2x32xf32>
    %10 = vector.multi_reduction <add>, %9, %cst_8 [1] : vector<2x1x32xf32> to vector<2x32xf32>
    %cst_9 = arith.constant 1.000000e+00 : f32
    %11 = vector.broadcast %cst_9 : f32 to vector<2x32xf32>
    %12 = arith.divf %10, %11 : vector<2x32xf32>
    %13 = arith.truncf %12 : vector<2x32xf32> to vector<2x32xbf16>
    %c0_10 = arith.constant 0 : index
    %c0_11 = arith.constant 0 : index
    %14 = vector.load %arg3[%c0_10, %c0_11] : memref<32x3xbf16, #tpu.memory_space<vmem>>, vector<32x3xbf16>
    %cst_12 = arith.constant dense<0.000000e+00> : vector<2x3xf32>
    %15 = tpu.matmul %13, %14, %cst_12 {dimension_numbers = #tpu.dot_dimension_numbers<[1], [0], [0], [1], [0, 0, 1, 1], [], []>} : vector<2x32xbf16>, vector<32x3xbf16>, vector<2x3xf32> -> vector<2x3xf32>
    %c0_13 = arith.constant 0 : index
    %c0_14 = arith.constant 0 : index
    %16 = vector.load %arg4[%c0_13, %c0_14] : memref<1x3xf32, #tpu.memory_space<vmem>>, vector<1x3xf32>
    %17 = vector.broadcast %16 : vector<1x3xf32> to vector<2x3xf32>
    %18 = arith.addf %15, %17 : vector<2x3xf32>
    %c0_15 = arith.constant 0 : index
    %c0_16 = arith.constant 0 : index
    %19 = vector.load %arg5[%c0_15, %c0_16] : memref<2x3xf32, #tpu.memory_space<vmem>>, vector<2x3xf32>
    tpu.vector_store %arg5[%c0_15, %c0_16], %18 {strides = array<i32>} : memref<2x3xf32, #tpu.memory_space<vmem>>, vector<2x3xf32>,
    return
  }
}

</mosaic_0001>

<llo_original>
// kernel: densenet_forward.26
$region0: #{densenet_forward.26}
  #allocation0 [shape = 'u32[]', space=smem, size = 0x4, offset = 0x4, fixed_abs, tag = 'smem constant byte address 0x4 - core index']
  #allocation1 [shape = 'u32[144,128]{1,0:T(1,128)}', space=vmem, size = 0x12000, scoped, tag = 'internal scratch']
  %s0 = inlined_call_operand.vmem [shape: bf16[9,128,16], index: 0, kind: input, shape index: {}]
  %s1 = inlined_call_operand.vmem [shape: bf16[128,16], index: 1, kind: output, shape index: {}]
  %s2 = sld [smem:[#allocation0]]
  $region14: #{densenet_forward.26} parent=0
    _
  %s4 = ssub.s32 1, %s2
  %s5 = scalar_select 0, %s4, %s2
  // Predicated region
  $region2: #{densenet_forward.26} parent=0 // pred_check
    _
  $region3: #{densenet_forward.26} parent=0 // pred_check_branch
    %7 = sbr.rel (0) target = $region5
  $region4: #{densenet_forward.26} parent=0 // pred_region
    _
  $region5: #{densenet_forward.26} parent=0 // pred_fallthru
    _
  %v8 = vld [vmem:[%s0] sm:$0xf]
  %v9 = vld [vmem:[%s0 + $0x4] sm:$0xf]
  %v10 = vld [vmem:[%s0 + $0x8] sm:$0xf]
  %v11 = vld [vmem:[%s0 + $0xc] sm:$0xf]
  %v12 = vld [vmem:[%s0 + $0x10] sm:$0xf]
  %v13 = vld [vmem:[%s0 + $0x14] sm:$0xf]
  %v14 = vld [vmem:[%s0 + $0x18] sm:$0xf]
  %v15 = vld [vmem:[%s0 + $0x1c] sm:$0xf]
  %v16 = vld [vmem:[%s0 + $0x20] sm:$0xf]
  %v17 = vld [vmem:[%s0 + $0x24] sm:$0xf]
  %v18 = vld [vmem:[%s0 + $0x28] sm:$0xf]
  %v19 = vld [vmem:[%s0 + $0x2c] sm:$0xf]
  %v20 = vld [vmem:[%s0 + $0x30] sm:$0xf]
  %v21 = vld [vmem:[%s0 + $0x34] sm:$0xf]
  %v22 = vld [vmem:[%s0 + $0x38] sm:$0xf]
  %v23 = vld [vmem:[%s0 + $0x3c] sm:$0xf]
  %v24 = vld [vmem:[%s0 + $0x40] sm:$0xf]
  %v25 = vld [vmem:[%s0 + $0x44] sm:$0xf]
  %v26 = vld [vmem:[%s0 + $0x48] sm:$0xf]
  %v27 = vld [vmem:[%s0 + $0x4c] sm:$0xf]
  %v28 = vld [vmem:[%s0 + $0x50] sm:$0xf]
  %v29 = vld [vmem:[%s0 + $0x54] sm:$0xf]
  %v30 = vld [vmem:[%s0 + $0x58] sm:$0xf]
  %v31 = vld [vmem:[%s0 + $0x5c] sm:$0xf]
  %v32 = vld [vmem:[%s0 + $0x60] sm:$0xf]
  %v33 = vld [vmem:[%s0 + $0x64] sm:$0xf]
  %v34 = vld [vmem:[%s0 + $0x68] sm:$0xf]
  %v35 = vld [vmem:[%s0 + $0x6c] sm:$0xf]
  %v36 = vld [vmem:[%s0 + $0x70] sm:$0xf]
  %v37 = vld [vmem:[%s0 + $0x74] sm:$0xf]
  %v38 = vld [vmem:[%s0 + $0x78] sm:$0xf]
  %v39 = vld [vmem:[%s0 + $0x7c] sm:$0xf]
  %v40 = vld [vmem:[%s0 + $0x80] sm:$0xf]
  %v41 = vld [vmem:[%s0 + $0x84] sm:$0xf]
  %v42 = vld [vmem:[%s0 + $0x88] sm:$0xf]
  %v43 = vld [vmem:[%s0 + $0x8c] sm:$0xf]
  %v44 = vld [vmem:[%s0 + $0x90] sm:$0xf]
  %v45 = vld [vmem:[%s0 + $0x94] sm:$0xf]
  %v46 = vld [vmem:[%s0 + $0x98] sm:$0xf]
  %v47 = vld [vmem:[%s0 + $0x9c] sm:$0xf]
  %v48 = vld [vmem:[%s0 + $0xa0] sm:$0xf]
  %v49 = vld [vmem:[%s0 + $0xa4] sm:$0xf]
  %v50 = vld [vmem:[%s0 + $0xa8] sm:$0xf]
  %v51 = vld [vmem:[%s0 + $0xac] sm:$0xf]
  %v52 = vld [vmem:[%s0 + $0xb0] sm:$0xf]
  %v53 = vld [vmem:[%s0 + $0xb4] sm:$0xf]
  %v54 = vld [vmem:[%s0 + $0xb8] sm:$0xf]
  %v55 = vld [vmem:[%s0 + $0xbc] sm:$0xf]
  %v56 = vld [vmem:[%s0 + $0xc0] sm:$0xf]
  %v57 = vld [vmem:[%s0 + $0xc4] sm:$0xf]
  %v58 = vld [vmem:[%s0 + $0xc8] sm:$0xf]
  %v59 = vld [vmem:[%s0 + $0xcc] sm:$0xf]
  %v60 = vld [vmem:[%s0 + $0xd0] sm:$0xf]
  %v61 = vld [vmem:[%s0 + $0xd4] sm:$0xf]
  %v62 = vld [vmem:[%s0 + $0xd8] sm:$0xf]
  %v63 = vld [vmem:[%s0 + $0xdc] sm:$0xf]
  %v64 = vld [vmem:[%s0 + $0xe0] sm:$0xf]
  %v65 = vld [vmem:[%s0 + $0xe4] sm:$0xf]
  %v66 = vld [vmem:[%s0 + $0xe8] sm:$0xf]
  %v67 = vld [vmem:[%s0 + $0xec] sm:$0xf]
  %v68 = vld [vmem:[%s0 + $0xf0] sm:$0xf]
  %v69 = vld [vmem:[%s0 + $0xf4] sm:$0xf]
  %v70 = vld [vmem:[%s0 + $0xf8] sm:$0xf]
  %v71 = vld [vmem:[%s0 + $0xfc] sm:$0xf]
  %v72 = vld [vmem:[%s0 + $0x100] sm:$0xf]
  %v73 = vld [vmem:[%s0 + $0x104] sm:$0xf]
  %v74 = vld [vmem:[%s0 + $0x108] sm:$0xf]
  %v75 = vld [vmem:[%s0 + $0x10c] sm:$0xf]
  %v76 = vld [vmem:[%s0 + $0x110] sm:$0xf]
  %v77 = vld [vmem:[%s0 + $0x114] sm:$0xf]
  %v78 = vld [vmem:[%s0 + $0x118] sm:$0xf]
  %v79 = vld [vmem:[%s0 + $0x11c] sm:$0xf]
  %v80 = vld [vmem:[%s0 + $0x120] sm:$0xf]
  %v81 = vld [vmem:[%s0 + $0x124] sm:$0xf]
  %v82 = vld [vmem:[%s0 + $0x128] sm:$0xf]
  %v83 = vld [vmem:[%s0 + $0x12c] sm:$0xf]
  %v84 = vld [vmem:[%s0 + $0x130] sm:$0xf]
  %v85 = vld [vmem:[%s0 + $0x134] sm:$0xf]
  %v86 = vld [vmem:[%s0 + $0x138] sm:$0xf]
  %v87 = vld [vmem:[%s0 + $0x13c] sm:$0xf]
  %v88 = vld [vmem:[%s0 + $0x140] sm:$0xf]
  %v89 = vld [vmem:[%s0 + $0x144] sm:$0xf]
  %v90 = vld [vmem:[%s0 + $0x148] sm:$0xf]
  %v91 = vld [vmem:[%s0 + $0x14c] sm:$0xf]
  %v92 = vld [vmem:[%s0 + $0x150] sm:$0xf]
  %v93 = vld [vmem:[%s0 + $0x154] sm:$0xf]
  %v94 = vld [vmem:[%s0 + $0x158] sm:$0xf]
  %v95 = vld [vmem:[%s0 + $0x15c] sm:$0xf]
  %v96 = vld [vmem:[%s0 + $0x160] sm:$0xf]
  %v97 = vld [vmem:[%s0 + $0x164] sm:$0xf]
  %v98 = vld [vmem:[%s0 + $0x168] sm:$0xf]
  %v99 = vld [vmem:[%s0 + $0x16c] sm:$0xf]
  %v100 = vld [vmem:[%s0 + $0x170] sm:$0xf]
  %v101 = vld [vmem:[%s0 + $0x174] sm:$0xf]
  %v102 = vld [vmem:[%s0 + $0x178] sm:$0xf]
  %v103 = vld [vmem:[%s0 + $0x17c] sm:$0xf]
  %v104 = vld [vmem:[%s0 + $0x180] sm:$0xf]
  %v105 = vld [vmem:[%s0 + $0x184] sm:$0xf]
  %v106 = vld [vmem:[%s0 + $0x188] sm:$0xf]
  %v107 = vld [vmem:[%s0 + $0x18c] sm:$0xf]
  %v108 = vld [vmem:[%s0 + $0x190] sm:$0xf]
  %v109 = vld [vmem:[%s0 + $0x194] sm:$0xf]
  %v110 = vld [vmem:[%s0 + $0x198] sm:$0xf]
  %v111 = vld [vmem:[%s0 + $0x19c] sm:$0xf]
  %v112 = vld [vmem:[%s0 + $0x1a0] sm:$0xf]
  %v113 = vld [vmem:[%s0 + $0x1a4] sm:$0xf]
  %v114 = vld [vmem:[%s0 + $0x1a8] sm:$0xf]
  %v115 = vld [vmem:[%s0 + $0x1ac] sm:$0xf]
  %v116 = vld [vmem:[%s0 + $0x1b0] sm:$0xf]
  %v117 = vld [vmem:[%s0 + $0x1b4] sm:$0xf]
  %v118 = vld [vmem:[%s0 + $0x1b8] sm:$0xf]
  %v119 = vld [vmem:[%s0 + $0x1bc] sm:$0xf]
  %v120 = vld [vmem:[%s0 + $0x1c0] sm:$0xf]
  %v121 = vld [vmem:[%s0 + $0x1c4] sm:$0xf]
  %v122 = vld [vmem:[%s0 + $0x1c8] sm:$0xf]
  %v123 = vld [vmem:[%s0 + $0x1cc] sm:$0xf]
  %v124 = vld [vmem:[%s0 + $0x1d0] sm:$0xf]
  %v125 = vld [vmem:[%s0 + $0x1d4] sm:$0xf]
  %v126 = vld [vmem:[%s0 + $0x1d8] sm:$0xf]
  %v127 = vld [vmem:[%s0 + $0x1dc] sm:$0xf]
  %v128 = vld [vmem:[%s0 + $0x1e0] sm:$0xf]
  %v129 = vld [vmem:[%s0 + $0x1e4] sm:$0xf]
  %v130 = vld [vmem:[%s0 + $0x1e8] sm:$0xf]
  %v131 = vld [vmem:[%s0 + $0x1ec] sm:$0xf]
  %v132 = vld [vmem:[%s0 + $0x1f0] sm:$0xf]
  %v133 = vld [vmem:[%s0 + $0x1f4] sm:$0xf]
  %v134 = vld [vmem:[%s0 + $0x1f8] sm:$0xf]
  %v135 = vld [vmem:[%s0 + $0x1fc] sm:$0xf]
  %v136 = vld [vmem:[%s0 + $0x200] sm:$0xf]
  %v137 = vld [vmem:[%s0 + $0x204] sm:$0xf]
  %v138 = vld [vmem:[%s0 + $0x208] sm:$0xf]
  %v139 = vld [vmem:[%s0 + $0x20c] sm:$0xf]
  %v140 = vld [vmem:[%s0 + $0x210] sm:$0xf]
  %v141 = vld [vmem:[%s0 + $0x214] sm:$0xf]
  %v142 = vld [vmem:[%s0 + $0x218] sm:$0xf]
  %v143 = vld [vmem:[%s0 + $0x21c] sm:$0xf]
  %v144 = vld [vmem:[%s0 + $0x220] sm:$0xf]
  %v145 = vld [vmem:[%s0 + $0x224] sm:$0xf]
  %v146 = vld [vmem:[%s0 + $0x228] sm:$0xf]
  %v147 = vld [vmem:[%s0 + $0x22c] sm:$0xf]
  %v148 = vld [vmem:[%s0 + $0x230] sm:$0xf]
  %v149 = vld [vmem:[%s0 + $0x234] sm:$0xf]
  %v150 = vld [vmem:[%s0 + $0x238] sm:$0xf]
  %v151 = vld [vmem:[%s0 + $0x23c] sm:$0xf]
  %v152 = vunpack.c.l.bf16 %v8
  %v153 = vunpack.c.l.bf16 %v9
  %v154 = vunpack.c.l.bf16 %v10
  %v155 = vunpack.c.l.bf16 %v11
  %v156 = vunpack.c.l.bf16 %v12
  %v157 = vunpack.c.l.bf16 %v13
  %v158 = vunpack.c.l.bf16 %v14
  %v159 = vunpack.c.l.bf16 %v15
  %v160 = vunpack.c.l.bf16 %v16
  %v161 = vunpack.c.l.bf16 %v17
  %v162 = vunpack.c.l.bf16 %v18
  %v163 = vunpack.c.l.bf16 %v19
  %v164 = vunpack.c.l.bf16 %v20
  %v165 = vunpack.c.l.bf16 %v21
  %v166 = vunpack.c.l.bf16 %v22
  %v167 = vunpack.c.l.bf16 %v23
  %v168 = vunpack.c.l.bf16 %v24
  %v169 = vunpack.c.l.bf16 %v25
  %v170 = vunpack.c.l.bf16 %v26
  %v171 = vunpack.c.l.bf16 %v27
  %v172 = vunpack.c.l.bf16 %v28
  %v173 = vunpack.c.l.bf16 %v29
  %v174 = vunpack.c.l.bf16 %v30
  %v175 = vunpack.c.l.bf16 %v31
  %v176 = vunpack.c.l.bf16 %v32
  %v177 = vunpack.c.l.bf16 %v33
  %v178 = vunpack.c.l.bf16 %v34
  %v179 = vunpack.c.l.bf16 %v35
  %v180 = vunpack.c.l.bf16 %v36
  %v181 = vunpack.c.l.bf16 %v37
  %v182 = vunpack.c.l.bf16 %v38
  %v183 = vunpack.c.l.bf16 %v39
  %v184 = vunpack.c.l.bf16 %v40
  %v185 = vunpack.c.l.bf16 %v41
  %v186 = vunpack.c.l.bf16 %v42
  %v187 = vunpack.c.l.bf16 %v43
  %v188 = vunpack.c.l.bf16 %v44
  %v189 = vunpack.c.l.bf16 %v45
  %v190 = vunpack.c.l.bf16 %v46
  %v191 = vunpack.c.l.bf16 %v47
  %v192 = vunpack.c.l.bf16 %v48
  %v193 = vunpack.c.l.bf16 %v49
  %v194 = vunpack.c.l.bf16 %v50
  %v195 = vunpack.c.l.bf16 %v51
  %v196 = vunpack.c.l.bf16 %v52
  %v197 = vunpack.c.l.bf16 %v53
  %v198 = vunpack.c.l.bf16 %v54
  %v199 = vunpack.c.l.bf16 %v55
  %v200 = vunpack.c.l.bf16 %v56
  %v201 = vunpack.c.l.bf16 %v57
  %v202 = vunpack.c.l.bf16 %v58
  %v203 = vunpack.c.l.bf16 %v59
  %v204 = vunpack.c.l.bf16 %v60
  %v205 = vunpack.c.l.bf16 %v61
  %v206 = vunpack.c.l.bf16 %v62
  %v207 = vunpack.c.l.bf16 %v63
  %v208 = vunpack.c.l.bf16 %v64
  %v209 = vunpack.c.l.bf16 %v65
  %v210 = vunpack.c.l.bf16 %v66
  %v211 = vunpack.c.l.bf16 %v67
  %v212 = vunpack.c.l.bf16 %v68
  %v213 = vunpack.c.l.bf16 %v69
  %v214 = vunpack.c.l.bf16 %v70
  %v215 = vunpack.c.l.bf16 %v71
  %v216 = vunpack.c.l.bf16 %v72
  %v217 = vunpack.c.l.bf16 %v73
  %v218 = vunpack.c.l.bf16 %v74
  %v219 = vunpack.c.l.bf16 %v75
  %v220 = vunpack.c.l.bf16 %v76
  %v221 = vunpack.c.l.bf16 %v77
  %v222 = vunpack.c.l.bf16 %v78
  %v223 = vunpack.c.l.bf16 %v79
  %v224 = vunpack.c.l.bf16 %v80
  %v225 = vunpack.c.l.bf16 %v81
  %v226 = vunpack.c.l.bf16 %v82
  %v227 = vunpack.c.l.bf16 %v83
  %v228 = vunpack.c.l.bf16 %v84
  %v229 = vunpack.c.l.bf16 %v85
  %v230 = vunpack.c.l.bf16 %v86
  %v231 = vunpack.c.l.bf16 %v87
  %v232 = vunpack.c.l.bf16 %v88
  %v233 = vunpack.c.l.bf16 %v89
  %v234 = vunpack.c.l.bf16 %v90
  %v235 = vunpack.c.l.bf16 %v91
  %v236 = vunpack.c.l.bf16 %v92
  %v237 = vunpack.c.l.bf16 %v93
  %v238 = vunpack.c.l.bf16 %v94
  %v239 = vunpack.c.l.bf16 %v95
  %v240 = vunpack.c.l.bf16 %v96
  %v241 = vunpack.c.l.bf16 %v97
  %v242 = vunpack.c.l.bf16 %v98
  %v243 = vunpack.c.l.bf16 %v99
  %v244 = vunpack.c.l.bf16 %v100
  %v245 = vunpack.c.l.bf16 %v101
  %v246 = vunpack.c.l.bf16 %v102
  %v247 = vunpack.c.l.bf16 %v103
  %v248 = vunpack.c.l.bf16 %v104
  %v249 = vunpack.c.l.bf16 %v105
  %v250 = vunpack.c.l.bf16 %v106
  %v251 = vunpack.c.l.bf16 %v107
  %v252 = vunpack.c.l.bf16 %v108
  %v253 = vunpack.c.l.bf16 %v109
  %v254 = vunpack.c.l.bf16 %v110
  %v255 = vunpack.c.l.bf16 %v111
  %v256 = vunpack.c.l.bf16 %v112
  %v257 = vunpack.c.l.bf16 %v113
  %v258 = vunpack.c.l.bf16 %v114
  %v259 = vunpack.c.l.bf16 %v115
  %v260 = vunpack.c.l.bf16 %v116
  %v261 = vunpack.c.l.bf16 %v117
  %v262 = vunpack.c.l.bf16 %v118
  %v263 = vunpack.c.l.bf16 %v119
  %v264 = vunpack.c.l.bf16 %v120
  %v265 = vunpack.c.l.bf16 %v121
  %v266 = vunpack.c.l.bf16 %v122
  %v267 = vunpack.c.l.bf16 %v123
  %v268 = vunpack.c.l.bf16 %v124
  %v269 = vunpack.c.l.bf16 %v125
  %v270 = vunpack.c.l.bf16 %v126
  %v271 = vunpack.c.l.bf16 %v127
  %v272 = vunpack.c.l.bf16 %v128
  %v273 = vunpack.c.l.bf16 %v129
  %v274 = vunpack.c.l.bf16 %v130
  %v275 = vunpack.c.l.bf16 %v131
  %v276 = vunpack.c.l.bf16 %v132
  %v277 = vunpack.c.l.bf16 %v133
  %v278 = vunpack.c.l.bf16 %v134
  %v279 = vunpack.c.l.bf16 %v135
  %v280 = vunpack.c.l.bf16 %v136
  %v281 = vunpack.c.l.bf16 %v137
  %v282 = vunpack.c.l.bf16 %v138
  %v283 = vunpack.c.l.bf16 %v139
  %v284 = vunpack.c.l.bf16 %v140
  %v285 = vunpack.c.l.bf16 %v141
  %v286 = vunpack.c.l.bf16 %v142
  %v287 = vunpack.c.l.bf16 %v143
  %v288 = vunpack.c.l.bf16 %v144
  %v289 = vunpack.c.l.bf16 %v145
  %v290 = vunpack.c.l.bf16 %v146
  %v291 = vunpack.c.l.bf16 %v147
  %v292 = vunpack.c.l.bf16 %v148
  %v293 = vunpack.c.l.bf16 %v149
  %v294 = vunpack.c.l.bf16 %v150
  %v295 = vunpack.c.l.bf16 %v151
  %vm296 = vcmask 130048
  %v297 = vsel %vm296, %v152, -inf
  %v298 = vsel %vm296, %v168, -inf
  %v299 = vmax.f32 %v297, %v298
  %v300 = vsel %vm296, %v184, -inf
  %v301 = vmax.f32 %v299, %v300
  %v302 = vsel %vm296, %v200, -inf
  %v303 = vmax.f32 %v301, %v302
  %v304 = vsel %vm296, %v216, -inf
  %v305 = vmax.f32 %v303, %v304
  %v306 = vsel %vm296, %v232, -inf
  %v307 = vmax.f32 %v305, %v306
  %v308 = vsel %vm296, %v248, -inf
  %v309 = vmax.f32 %v307, %v308
  %v310 = vsel %vm296, %v264, -inf
  %v311 = vmax.f32 %v309, %v310
  %v312 = vsel %vm296, %v280, -inf
  %v313 = vmax.f32 %v311, %v312
  %v314 = vsel %vm296, %v153, -inf
  %v315 = vsel %vm296, %v169, -inf
  %v316 = vmax.f32 %v314, %v315
  %v317 = vsel %vm296, %v185, -inf
  %v318 = vmax.f32 %v316, %v317
  %v319 = vsel %vm296, %v201, -inf
  %v320 = vmax.f32 %v318, %v319
  %v321 = vsel %vm296, %v217, -inf
  %v322 = vmax.f32 %v320, %v321
  %v323 = vsel %vm296, %v233, -inf
  %v324 = vmax.f32 %v322, %v323
  %v325 = vsel %vm296, %v249, -inf
  %v326 = vmax.f32 %v324, %v325
  %v327 = vsel %vm296, %v265, -inf
  %v328 = vmax.f32 %v326, %v327
  %v329 = vsel %vm296, %v281, -inf
  %v330 = vmax.f32 %v328, %v329
  %v331 = vsel %vm296, %v154, -inf
  %v332 = vsel %vm296, %v170, -inf
  %v333 = vmax.f32 %v331, %v332
  %v334 = vsel %vm296, %v186, -inf
  %v335 = vmax.f32 %v333, %v334
  %v336 = vsel %vm296, %v202, -inf
  %v337 = vmax.f32 %v335, %v336
  %v338 = vsel %vm296, %v218, -inf
  %v339 = vmax.f32 %v337, %v338
  %v340 = vsel %vm296, %v234, -inf
  %v341 = vmax.f32 %v339, %v340
  %v342 = vsel %vm296, %v250, -inf
  %v343 = vmax.f32 %v341, %v342
  %v344 = vsel %vm296, %v266, -inf
  %v345 = vmax.f32 %v343, %v344
  %v346 = vsel %vm296, %v282, -inf
  %v347 = vmax.f32 %v345, %v346
  %v348 = vsel %vm296, %v155, -inf
  %v349 = vsel %vm296, %v171, -inf
  %v350 = vmax.f32 %v348, %v349
  %v351 = vsel %vm296, %v187, -inf
  %v352 = vmax.f32 %v350, %v351
  %v353 = vsel %vm296, %v203, -inf
  %v354 = vmax.f32 %v352, %v353
  %v355 = vsel %vm296, %v219, -inf
  %v356 = vmax.f32 %v354, %v355
  %v357 = vsel %vm296, %v235, -inf
  %v358 = vmax.f32 %v356, %v357
  %v359 = vsel %vm296, %v251, -inf
  %v360 = vmax.f32 %v358, %v359
  %v361 = vsel %vm296, %v267, -inf
  %v362 = vmax.f32 %v360, %v361
  %v363 = vsel %vm296, %v283, -inf
  %v364 = vmax.f32 %v362, %v363
  %v365 = vsel %vm296, %v156, -inf
  %v366 = vsel %vm296, %v172, -inf
  %v367 = vmax.f32 %v365, %v366
  %v368 = vsel %vm296, %v188, -inf
  %v369 = vmax.f32 %v367, %v368
  %v370 = vsel %vm296, %v204, -inf
  %v371 = vmax.f32 %v369, %v370
  %v372 = vsel %vm296, %v220, -inf
  %v373 = vmax.f32 %v371, %v372
  %v374 = vsel %vm296, %v236, -inf
  %v375 = vmax.f32 %v373, %v374
  %v376 = vsel %vm296, %v252, -inf
  %v377 = vmax.f32 %v375, %v376
  %v378 = vsel %vm296, %v268, -inf
  %v379 = vmax.f32 %v377, %v378
  %v380 = vsel %vm296, %v284, -inf
  %v381 = vmax.f32 %v379, %v380
  %v382 = vsel %vm296, %v157, -inf
  %v383 = vsel %vm296, %v173, -inf
  %v384 = vmax.f32 %v382, %v383
  %v385 = vsel %vm296, %v189, -inf
  %v386 = vmax.f32 %v384, %v385
  %v387 = vsel %vm296, %v205, -inf
  %v388 = vmax.f32 %v386, %v387
  %v389 = vsel %vm296, %v221, -inf
  %v390 = vmax.f32 %v388, %v389
  %v391 = vsel %vm296, %v237, -inf
  %v392 = vmax.f32 %v390, %v391
  %v393 = vsel %vm296, %v253, -inf
  %v394 = vmax.f32 %v392, %v393
  %v395 = vsel %vm296, %v269, -inf
  %v396 = vmax.f32 %v394, %v395
  %v397 = vsel %vm296, %v285, -inf
  %v398 = vmax.f32 %v396, %v397
  %v399 = vsel %vm296, %v158, -inf
  %v400 = vsel %vm296, %v174, -inf
  %v401 = vmax.f32 %v399, %v400
  %v402 = vsel %vm296, %v190, -inf
  %v403 = vmax.f32 %v401, %v402
  %v404 = vsel %vm296, %v206, -inf
  %v405 = vmax.f32 %v403, %v404
  %v406 = vsel %vm296, %v222, -inf
  %v407 = vmax.f32 %v405, %v406
  %v408 = vsel %vm296, %v238, -inf
  %v409 = vmax.f32 %v407, %v408
  %v410 = vsel %vm296, %v254, -inf
  %v411 = vmax.f32 %v409, %v410
  %v412 = vsel %vm296, %v270, -inf
  %v413 = vmax.f32 %v411, %v412
  %v414 = vsel %vm296, %v286, -inf
  %v415 = vmax.f32 %v413, %v414
  %v416 = vsel %vm296, %v159, -inf
  %v417 = vsel %vm296, %v175, -inf
  %v418 = vmax.f32 %v416, %v417
  %v419 = vsel %vm296, %v191, -inf
  %v420 = vmax.f32 %v418, %v419
  %v421 = vsel %vm296, %v207, -inf
  %v422 = vmax.f32 %v420, %v421
  %v423 = vsel %vm296, %v223, -inf
  %v424 = vmax.f32 %v422, %v423
  %v425 = vsel %vm296, %v239, -inf
  %v426 = vmax.f32 %v424, %v425
  %v427 = vsel %vm296, %v255, -inf
  %v428 = vmax.f32 %v426, %v427
  %v429 = vsel %vm296, %v271, -inf
  %v430 = vmax.f32 %v428, %v429
  %v431 = vsel %vm296, %v287, -inf
  %v432 = vmax.f32 %v430, %v431
  %v433 = vsel %vm296, %v160, -inf
  %v434 = vsel %vm296, %v176, -inf
  %v435 = vmax.f32 %v433, %v434
  %v436 = vsel %vm296, %v192, -inf
  %v437 = vmax.f32 %v435, %v436
  %v438 = vsel %vm296, %v208, -inf
  %v439 = vmax.f32 %v437, %v438
  %v440 = vsel %vm296, %v224, -inf
  %v441 = vmax.f32 %v439, %v440
  %v442 = vsel %vm296, %v240, -inf
  %v443 = vmax.f32 %v441, %v442
  %v444 = vsel %vm296, %v256, -inf
  %v445 = vmax.f32 %v443, %v444
  %v446 = vsel %vm296, %v272, -inf
  %v447 = vmax.f32 %v445, %v446
  %v448 = vsel %vm296, %v288, -inf
  %v449 = vmax.f32 %v447, %v448
  %v450 = vsel %vm296, %v161, -inf
  %v451 = vsel %vm296, %v177, -inf
  %v452 = vmax.f32 %v450, %v451
  %v453 = vsel %vm296, %v193, -inf
  %v454 = vmax.f32 %v452, %v453
  %v455 = vsel %vm296, %v209, -inf
  %v456 = vmax.f32 %v454, %v455
  %v457 = vsel %vm296, %v225, -inf
  %v458 = vmax.f32 %v456, %v457
  %v459 = vsel %vm296, %v241, -inf
  %v460 = vmax.f32 %v458, %v459
  %v461 = vsel %vm296, %v257, -inf
  %v462 = vmax.f32 %v460, %v461
  %v463 = vsel %vm296, %v273, -inf
  %v464 = vmax.f32 %v462, %v463
  %v465 = vsel %vm296, %v289, -inf
  %v466 = vmax.f32 %v464, %v465
  %v467 = vsel %vm296, %v162, -inf
  %v468 = vsel %vm296, %v178, -inf
  %v469 = vmax.f32 %v467, %v468
  %v470 = vsel %vm296, %v194, -inf
  %v471 = vmax.f32 %v469, %v470
  %v472 = vsel %vm296, %v210, -inf
  %v473 = vmax.f32 %v471, %v472
  %v474 = vsel %vm296, %v226, -inf
  %v475 = vmax.f32 %v473, %v474
  %v476 = vsel %vm296, %v242, -inf
  %v477 = vmax.f32 %v475, %v476
  %v478 = vsel %vm296, %v258, -inf
  %v479 = vmax.f32 %v477, %v478
  %v480 = vsel %vm296, %v274, -inf
  %v481 = vmax.f32 %v479, %v480
  %v482 = vsel %vm296, %v290, -inf
  %v483 = vmax.f32 %v481, %v482
  %v484 = vsel %vm296, %v163, -inf
  %v485 = vsel %vm296, %v179, -inf
  %v486 = vmax.f32 %v484, %v485
  %v487 = vsel %vm296, %v195, -inf
  %v488 = vmax.f32 %v486, %v487
  %v489 = vsel %vm296, %v211, -inf
  %v490 = vmax.f32 %v488, %v489
  %v491 = vsel %vm296, %v227, -inf
  %v492 = vmax.f32 %v490, %v491
  %v493 = vsel %vm296, %v243, -inf
  %v494 = vmax.f32 %v492, %v493
  %v495 = vsel %vm296, %v259, -inf
  %v496 = vmax.f32 %v494, %v495
  %v497 = vsel %vm296, %v275, -inf
  %v498 = vmax.f32 %v496, %v497
  %v499 = vsel %vm296, %v291, -inf
  %v500 = vmax.f32 %v498, %v499
  %v501 = vsel %vm296, %v164, -inf
  %v502 = vsel %vm296, %v180, -inf
  %v503 = vmax.f32 %v501, %v502
  %v504 = vsel %vm296, %v196, -inf
  %v505 = vmax.f32 %v503, %v504
  %v506 = vsel %vm296, %v212, -inf
  %v507 = vmax.f32 %v505, %v506
  %v508 = vsel %vm296, %v228, -inf
  %v509 = vmax.f32 %v507, %v508
  %v510 = vsel %vm296, %v244, -inf
  %v511 = vmax.f32 %v509, %v510
  %v512 = vsel %vm296, %v260, -inf
  %v513 = vmax.f32 %v511, %v512
  %v514 = vsel %vm296, %v276, -inf
  %v515 = vmax.f32 %v513, %v514
  %v516 = vsel %vm296, %v292, -inf
  %v517 = vmax.f32 %v515, %v516
  %v518 = vsel %vm296, %v165, -inf
  %v519 = vsel %vm296, %v181, -inf
  %v520 = vmax.f32 %v518, %v519
  %v521 = vsel %vm296, %v197, -inf
  %v522 = vmax.f32 %v520, %v521
  %v523 = vsel %vm296, %v213, -inf
  %v524 = vmax.f32 %v522, %v523
  %v525 = vsel %vm296, %v229, -inf
  %v526 = vmax.f32 %v524, %v525
  %v527 = vsel %vm296, %v245, -inf
  %v528 = vmax.f32 %v526, %v527
  %v529 = vsel %vm296, %v261, -inf
  %v530 = vmax.f32 %v528, %v529
  %v531 = vsel %vm296, %v277, -inf
  %v532 = vmax.f32 %v530, %v531
  %v533 = vsel %vm296, %v293, -inf
  %v534 = vmax.f32 %v532, %v533
  %v535 = vsel %vm296, %v166, -inf
  %v536 = vsel %vm296, %v182, -inf
  %v537 = vmax.f32 %v535, %v536
  %v538 = vsel %vm296, %v198, -inf
  %v539 = vmax.f32 %v537, %v538
  %v540 = vsel %vm296, %v214, -inf
  %v541 = vmax.f32 %v539, %v540
  %v542 = vsel %vm296, %v230, -inf
  %v543 = vmax.f32 %v541, %v542
  %v544 = vsel %vm296, %v246, -inf
  %v545 = vmax.f32 %v543, %v544
  %v546 = vsel %vm296, %v262, -inf
  %v547 = vmax.f32 %v545, %v546
  %v548 = vsel %vm296, %v278, -inf
  %v549 = vmax.f32 %v547, %v548
  %v550 = vsel %vm296, %v294, -inf
  %v551 = vmax.f32 %v549, %v550
  %v552 = vsel %vm296, %v167, -inf
  %v553 = vsel %vm296, %v183, -inf
  %v554 = vmax.f32 %v552, %v553
  %v555 = vsel %vm296, %v199, -inf
  %v556 = vmax.f32 %v554, %v555
  %v557 = vsel %vm296, %v215, -inf
  %v558 = vmax.f32 %v556, %v557
  %v559 = vsel %vm296, %v231, -inf
  %v560 = vmax.f32 %v558, %v559
  %v561 = vsel %vm296, %v247, -inf
  %v562 = vmax.f32 %v560, %v561
  %v563 = vsel %vm296, %v263, -inf
  %v564 = vmax.f32 %v562, %v563
  %v565 = vsel %vm296, %v279, -inf
  %v566 = vmax.f32 %v564, %v565
  %v567 = vsel %vm296, %v295, -inf
  %v568 = vmax.f32 %v566, %v567
  %v569 = vpack.c.bf16 %v330, %v313
  %v570 = vpack.c.bf16 %v364, %v347
  %v571 = vpack.c.bf16 %v398, %v381
  %v572 = vpack.c.bf16 %v432, %v415
  %v573 = vpack.c.bf16 %v466, %v449
  %v574 = vpack.c.bf16 %v500, %v483
  %v575 = vpack.c.bf16 %v534, %v517
  %v576 = vpack.c.bf16 %v568, %v551
  %v585 = vunpack.c.l.b16 %v569
  %v586 = vunpack.c.h.b16 %v569
  %v587 = vunpack.c.l.b16 %v570
  %v588 = vunpack.c.h.b16 %v570
  %v589 = vunpack.c.l.b16 %v571
  %v590 = vunpack.c.h.b16 %v571
  %v591 = vunpack.c.l.b16 %v572
  %v592 = vunpack.c.h.b16 %v572
  %v593 = vunpack.c.l.b16 %v573
  %v594 = vunpack.c.h.b16 %v573
  %v595 = vunpack.c.l.b16 %v574
  %v596 = vunpack.c.h.b16 %v574
  %v597 = vunpack.c.l.b16 %v575
  %v598 = vunpack.c.h.b16 %v575
  %v599 = vunpack.c.l.b16 %v576
  %v600 = vunpack.c.h.b16 %v576
  %v601 = vpack.c.b16 %v585, %v585
  %v602 = vpack.c.b16 %v586, %v586
  %v603 = vpack.c.b16 %v587, %v587
  %v604 = vpack.c.b16 %v588, %v588
  %v605 = vpack.c.b16 %v589, %v589
  %v606 = vpack.c.b16 %v590, %v590
  %v607 = vpack.c.b16 %v591, %v591
  %v608 = vpack.c.b16 %v592, %v592
  %v609 = vpack.c.b16 %v593, %v593
  %v610 = vpack.c.b16 %v594, %v594
  %v611 = vpack.c.b16 %v595, %v595
  %v612 = vpack.c.b16 %v596, %v596
  %v613 = vpack.c.b16 %v597, %v597
  %v614 = vpack.c.b16 %v598, %v598
  %v615 = vpack.c.b16 %v599, %v599
  %v616 = vpack.c.b16 %v600, %v600
  %vm633 = vcmask 125952
  %634 = vst.msk [vmem:[%s1] sm:$0xf] %vm633, %v601
  %635 = vst.msk [vmem:[%s1 + $0x4] sm:$0xf] %vm633, %v602
  %636 = vst.msk [vmem:[%s1 + $0x8] sm:$0xf] %vm633, %v603
  %637 = vst.msk [vmem:[%s1 + $0xc] sm:$0xf] %vm633, %v604
  %638 = vst.msk [vmem:[%s1 + $0x10] sm:$0xf] %vm633, %v605
  %639 = vst.msk [vmem:[%s1 + $0x14] sm:$0xf] %vm633, %v606
  %640 = vst.msk [vmem:[%s1 + $0x18] sm:$0xf] %vm633, %v607
  %641 = vst.msk [vmem:[%s1 + $0x1c] sm:$0xf] %vm633, %v608
  %642 = vst.msk [vmem:[%s1 + $0x20] sm:$0xf] %vm633, %v609
  %643 = vst.msk [vmem:[%s1 + $0x24] sm:$0xf] %vm633, %v610
  %644 = vst.msk [vmem:[%s1 + $0x28] sm:$0xf] %vm633, %v611
  %645 = vst.msk [vmem:[%s1 + $0x2c] sm:$0xf] %vm633, %v612
  %646 = vst.msk [vmem:[%s1 + $0x30] sm:$0xf] %vm633, %v613
  %647 = vst.msk [vmem:[%s1 + $0x34] sm:$0xf] %vm633, %v614
  %648 = vst.msk [vmem:[%s1 + $0x38] sm:$0xf] %vm633, %v615
  %649 = vst.msk [vmem:[%s1 + $0x3c] sm:$0xf] %vm633, %v616
  // Predicated region
  $region6: #{densenet_forward.26} parent=0 // pred_check
    _
  $region7: #{densenet_forward.26} parent=0 // pred_check_branch
    %651 = sbr.rel (0) target = $region9
  $region8: #{densenet_forward.26} parent=0 // pred_region
    _
  $region9: #{densenet_forward.26} parent=0 // pred_fallthru
    _
  // Predicated region
  $region10: #{densenet_forward.26} parent=0 // pred_check
    _
  $region11: #{densenet_forward.26} parent=0 // pred_check_branch
    %653 = sbr.rel (0) target = $region13
  $region12: #{densenet_forward.26} parent=0 // pred_region
    _
  $region13: #{densenet_forward.26} parent=0 // pred_fallthru
    _

// kernel: densenet_forward.25
$region0: #{densenet_forward.25}
  #allocation0 [shape = 'u32[]', space=smem, size = 0x4, offset = 0x4, fixed_abs, tag = 'smem constant byte address 0x4 - core index']
  #allocation1 [shape = 'u32[144,128]{1,0:T(1,128)}', space=vmem, size = 0x12000, scoped, tag = 'internal scratch']
  %s0 = inlined_call_operand.vmem [shape: bf16[512,256], index: 0, kind: input, shape index: {}]
  %s1 = inlined_call_operand.vmem [shape: bf16[256,128], index: 1, kind: input, shape index: {}]
  %s2 = inlined_call_operand.vmem [shape: f32[1,128], index: 2, kind: input, shape index: {}]
  %s3 = inlined_call_operand.vmem [shape: bf16[512,128], index: 3, kind: output, shape index: {}]
  %s4 = sld [smem:[#allocation0]]
  $region22: #{densenet_forward.25} parent=0
    _
  %s6 = ssub.s32 1, %s4
  %s7 = scalar_select 0, %s6, %s4
  // Predicated region
  $region2: #{densenet_forward.25} parent=0 // pred_check
    _
  $region3: #{densenet_forward.25} parent=0 // pred_check_branch
    %9 = sbr.rel (0) target = $region5
  $region4: #{densenet_forward.25} parent=0 // pred_region
    _
  $region5: #{densenet_forward.25} parent=0 // pred_fallthru
    _
  // Predicated region
  $region6: #{densenet_forward.25} parent=0 // pred_check
    _
  $region7: #{densenet_forward.25} parent=0 // pred_check_branch
    %11 = sbr.rel (0) target = $region9
  $region8: #{densenet_forward.25} parent=0 // pred_region
    _
  $region9: #{densenet_forward.25} parent=0 // pred_fallthru
    _
  // Predicated region
  $region10: #{densenet_forward.25} parent=0 // pred_check
    _
  $region11: #{densenet_forward.25} parent=0 // pred_check_branch
    %13 = sbr.rel (0) target = $region13
  $region12: #{densenet_forward.25} parent=0 // pred_region
    _
  $region13: #{densenet_forward.25} parent=0 // pred_fallthru
    _
  %v15 = vld [vmem:[%s0] sm:$0xff]
  %v16 = vld [vmem:[%s0 + $0x8] sm:$0xff]
  %v17 = vld [vmem:[%s0 + $0x10] sm:$0xff]
  %v18 = vld [vmem:[%s0 + $0x18] sm:$0xff]
  %v19 = vld [vmem:[%s0 + $0x20] sm:$0xff]
  %v20 = vld [vmem:[%s0 + $0x28] sm:$0xff]
  %v21 = vld [vmem:[%s0 + $0x30] sm:$0xff]
  %v22 = vld [vmem:[%s0 + $0x38] sm:$0xff]
  %v23 = vld [vmem:[%s0 + $0x40] sm:$0xff]
  %v24 = vld [vmem:[%s0 + $0x48] sm:$0xff]
  %v25 = vld [vmem:[%s0 + $0x50] sm:$0xff]
  %v26 = vld [vmem:[%s0 + $0x58] sm:$0xff]
  %v27 = vld [vmem:[%s0 + $0x60] sm:$0xff]
  %v28 = vld [vmem:[%s0 + $0x68] sm:$0xff]
  %v29 = vld [vmem:[%s0 + $0x70] sm:$0xff]
  %v30 = vld [vmem:[%s0 + $0x78] sm:$0xff]
  %v31 = vld [vmem:[%s0 + $0x80] sm:$0xff]
  %v32 = vld [vmem:[%s0 + $0x88] sm:$0xff]
  %v33 = vld [vmem:[%s0 + $0x90] sm:$0xff]
  %v34 = vld [vmem:[%s0 + $0x98] sm:$0xff]
  %v35 = vld [vmem:[%s0 + $0xa0] sm:$0xff]
  %v36 = vld [vmem:[%s0 + $0xa8] sm:$0xff]
  %v37 = vld [vmem:[%s0 + $0xb0] sm:$0xff]
  %v38 = vld [vmem:[%s0 + $0xb8] sm:$0xff]
  %v39 = vld [vmem:[%s0 + $0xc0] sm:$0xff]
  %v40 = vld [vmem:[%s0 + $0xc8] sm:$0xff]
  %v41 = vld [vmem:[%s0 + $0xd0] sm:$0xff]
  %v42 = vld [vmem:[%s0 + $0xd8] sm:$0xff]
  %v43 = vld [vmem:[%s0 + $0xe0] sm:$0xff]
  %v44 = vld [vmem:[%s0 + $0xe8] sm:$0xff]
  %v45 = vld [vmem:[%s0 + $0xf0] sm:$0xff]
  %v46 = vld [vmem:[%s0 + $0xf8] sm:$0xff]
  %v47 = vld [vmem:[%s0 + $0x100] sm:$0xff]
  %v48 = vld [vmem:[%s0 + $0x108] sm:$0xff]
  %v49 = vld [vmem:[%s0 + $0x110] sm:$0xff]
  %v50 = vld [vmem:[%s0 + $0x118] sm:$0xff]
  %v51 = vld [vmem:[%s0 + $0x120] sm:$0xff]
  %v52 = vld [vmem:[%s0 + $0x128] sm:$0xff]
  %v53 = vld [vmem:[%s0 + $0x130] sm:$0xff]
  %v54 = vld [vmem:[%s0 + $0x138] sm:$0xff]
  %v55 = vld [vmem:[%s0 + $0x140] sm:$0xff]
  %v56 = vld [vmem:[%s0 + $0x148] sm:$0xff]
  %v57 = vld [vmem:[%s0 + $0x150] sm:$0xff]
  %v58 = vld [vmem:[%s0 + $0x158] sm:$0xff]
  %v59 = vld [vmem:[%s0 + $0x160] sm:$0xff]
  %v60 = vld [vmem:[%s0 + $0x168] sm:$0xff]
  %v61 = vld [vmem:[%s0 + $0x170] sm:$0xff]
  %v62 = vld [vmem:[%s0 + $0x178] sm:$0xff]
  %v63 = vld [vmem:[%s0 + $0x180] sm:$0xff]
  %v64 = vld [vmem:[%s0 + $0x188] sm:$0xff]
  %v65 = vld [vmem:[%s0 + $0x190] sm:$0xff]
  %v66 = vld [vmem:[%s0 + $0x198] sm:$0xff]
  %v67 = vld [vmem:[%s0 + $0x1a0] sm:$0xff]
  %v68 = vld [vmem:[%s0 + $0x1a8] sm:$0xff]
  %v69 = vld [vmem:[%s0 + $0x1b0] sm:$0xff]
  %v70 = vld [vmem:[%s0 + $0x1b8] sm:$0xff]
  %v71 = vld [vmem:[%s0 + $0x1c0] sm:$0xff]
  %v72 = vld [vmem:[%s0 + $0x1c8] sm:$0xff]
  %v73 = vld [vmem:[%s0 + $0x1d0] sm:$0xff]
  %v74 = vld [vmem:[%s0 + $0x1d8] sm:$0xff]
  %v75 = vld [vmem:[%s0 + $0x1e0] sm:$0xff]
  %v76 = vld [vmem:[%s0 + $0x1e8] sm:$0xff]
  %v77 = vld [vmem:[%s0 + $0x1f0] sm:$0xff]
  %v78 = vld [vmem:[%s0 + $0x1f8] sm:$0xff]
  %v79 = vld [vmem:[%s1] sm:$0xf]
  %v80 = vld [vmem:[%s1 + $0x4] sm:$0xf]
  %v81 = vld [vmem:[%s1 + $0x8] sm:$0xf]
  %v82 = vld [vmem:[%s1 + $0xc] sm:$0xf]
  %v83 = vld [vmem:[%s1 + $0x10] sm:$0xf]
  %v84 = vld [vmem:[%s1 + $0x14] sm:$0xf]
  %v85 = vld [vmem:[%s1 + $0x18] sm:$0xf]
  %v86 = vld [vmem:[%s1 + $0x1c] sm:$0xf]
  %v87 = vld [vmem:[%s1 + $0x20] sm:$0xf]
  %v88 = vld [vmem:[%s1 + $0x24] sm:$0xf]
  %v89 = vld [vmem:[%s1 + $0x28] sm:$0xf]
  %v90 = vld [vmem:[%s1 + $0x2c] sm:$0xf]
  %v91 = vld [vmem:[%s1 + $0x30] sm:$0xf]
  %v92 = vld [vmem:[%s1 + $0x34] sm:$0xf]
  %v93 = vld [vmem:[%s1 + $0x38] sm:$0xf]
  %v94 = vld [vmem:[%s1 + $0x3c] sm:$0xf]
  %v95 = vld [vmem:[%s1 + $0x40] sm:$0xf]
  %v96 = vld [vmem:[%s1 + $0x44] sm:$0xf]
  %v97 = vld [vmem:[%s1 + $0x48] sm:$0xf]
  %v98 = vld [vmem:[%s1 + $0x4c] sm:$0xf]
  %v99 = vld [vmem:[%s1 + $0x50] sm:$0xf]
  %v100 = vld [vmem:[%s1 + $0x54] sm:$0xf]
  %v101 = vld [vmem:[%s1 + $0x58] sm:$0xf]
  %v102 = vld [vmem:[%s1 + $0x5c] sm:$0xf]
  %v103 = vld [vmem:[%s1 + $0x60] sm:$0xf]
  %v104 = vld [vmem:[%s1 + $0x64] sm:$0xf]
  %v105 = vld [vmem:[%s1 + $0x68] sm:$0xf]
  %v106 = vld [vmem:[%s1 + $0x6c] sm:$0xf]
  %v107 = vld [vmem:[%s1 + $0x70] sm:$0xf]
  %v108 = vld [vmem:[%s1 + $0x74] sm:$0xf]
  %v109 = vld [vmem:[%s1 + $0x78] sm:$0xf]
  %v110 = vld [vmem:[%s1 + $0x7c] sm:$0xf]
  %v111 = vld [vmem:[%s2] sm:$0x1]
  %v113 = vlaneseq
  %v114 = vshrl.u32 %v113, 7
  %v115 = vsub.s32 0, %v114
  %v116 = vrot.slane %v111, %v115
  %v182 = vunpack.c.l.b16 %v15
  %v183 = vunpack.c.h.b16 %v15
  %v184 = vunpack.c.l.b16 %v16
  %v185 = vunpack.c.h.b16 %v16
  %v186 = vunpack.c.l.b16 %v17
  %v187 = vunpack.c.h.b16 %v17
  %v188 = vunpack.c.l.b16 %v18
  %v189 = vunpack.c.h.b16 %v18
  %v190 = vunpack.c.l.b16 %v19
  %v191 = vunpack.c.h.b16 %v19
  %v192 = vunpack.c.l.b16 %v20
  %v193 = vunpack.c.h.b16 %v20
  %v194 = vunpack.c.l.b16 %v21
  %v195 = vunpack.c.h.b16 %v21
  %v196 = vunpack.c.l.b16 %v22
  %v197 = vunpack.c.h.b16 %v22
  %v198 = vunpack.c.l.b16 %v23
  %v199 = vunpack.c.h.b16 %v23
  %v200 = vunpack.c.l.b16 %v24
  %v201 = vunpack.c.h.b16 %v24
  %v202 = vunpack.c.l.b16 %v25
  %v203 = vunpack.c.h.b16 %v25
  %v204 = vunpack.c.l.b16 %v26
  %v205 = vunpack.c.h.b16 %v26
  %v206 = vunpack.c.l.b16 %v27
  %v207 = vunpack.c.h.b16 %v27
  %v208 = vunpack.c.l.b16 %v28
  %v209 = vunpack.c.h.b16 %v28
  %v210 = vunpack.c.l.b16 %v29
  %v211 = vunpack.c.h.b16 %v29
  %v212 = vunpack.c.l.b16 %v30
  %v213 = vunpack.c.h.b16 %v30
  %v214 = vunpack.c.l.b16 %v31
  %v215 = vunpack.c.h.b16 %v31
  %v216 = vunpack.c.l.b16 %v32
  %v217 = vunpack.c.h.b16 %v32
  %v218 = vunpack.c.l.b16 %v33
  %v219 = vunpack.c.h.b16 %v33
  %v220 = vunpack.c.l.b16 %v34
  %v221 = vunpack.c.h.b16 %v34
  %v222 = vunpack.c.l.b16 %v35
  %v223 = vunpack.c.h.b16 %v35
  %v224 = vunpack.c.l.b16 %v36
  %v225 = vunpack.c.h.b16 %v36
  %v226 = vunpack.c.l.b16 %v37
  %v227 = vunpack.c.h.b16 %v37
  %v228 = vunpack.c.l.b16 %v38
  %v229 = vunpack.c.h.b16 %v38
  %v230 = vunpack.c.l.b16 %v39
  %v231 = vunpack.c.h.b16 %v39
  %v232 = vunpack.c.l.b16 %v40
  %v233 = vunpack.c.h.b16 %v40
  %v234 = vunpack.c.l.b16 %v41
  %v235 = vunpack.c.h.b16 %v41
  %v236 = vunpack.c.l.b16 %v42
  %v237 = vunpack.c.h.b16 %v42
  %v238 = vunpack.c.l.b16 %v43
  %v239 = vunpack.c.h.b16 %v43
  %v240 = vunpack.c.l.b16 %v44
  %v241 = vunpack.c.h.b16 %v44
  %v242 = vunpack.c.l.b16 %v45
  %v243 = vunpack.c.h.b16 %v45
  %v244 = vunpack.c.l.b16 %v46
  %v245 = vunpack.c.h.b16 %v46
  %v246 = vunpack.c.l.b16 %v47
  %v247 = vunpack.c.h.b16 %v47
  %v248 = vunpack.c.l.b16 %v48
  %v249 = vunpack.c.h.b16 %v48
  %v250 = vunpack.c.l.b16 %v49
  %v251 = vunpack.c.h.b16 %v49
  %v252 = vunpack.c.l.b16 %v50
  %v253 = vunpack.c.h.b16 %v50
  %v254 = vunpack.c.l.b16 %v51
  %v255 = vunpack.c.h.b16 %v51
  %v256 = vunpack.c.l.b16 %v52
  %v257 = vunpack.c.h.b16 %v52
  %v258 = vunpack.c.l.b16 %v53
  %v259 = vunpack.c.h.b16 %v53
  %v260 = vunpack.c.l.b16 %v54
  %v261 = vunpack.c.h.b16 %v54
  %v262 = vunpack.c.l.b16 %v55
  %v263 = vunpack.c.h.b16 %v55
  %v264 = vunpack.c.l.b16 %v56
  %v265 = vunpack.c.h.b16 %v56
  %v266 = vunpack.c.l.b16 %v57
  %v267 = vunpack.c.h.b16 %v57
  %v268 = vunpack.c.l.b16 %v58
  %v269 = vunpack.c.h.b16 %v58
  %v270 = vunpack.c.l.b16 %v59
  %v271 = vunpack.c.h.b16 %v59
  %v272 = vunpack.c.l.b16 %v60
  %v273 = vunpack.c.h.b16 %v60
  %v274 = vunpack.c.l.b16 %v61
  %v275 = vunpack.c.h.b16 %v61
  %v276 = vunpack.c.l.b16 %v62
  %v277 = vunpack.c.h.b16 %v62
  %v278 = vunpack.c.l.b16 %v63
  %v279 = vunpack.c.h.b16 %v63
  %v280 = vunpack.c.l.b16 %v64
  %v281 = vunpack.c.h.b16 %v64
  %v282 = vunpack.c.l.b16 %v65
  %v283 = vunpack.c.h.b16 %v65
  %v284 = vunpack.c.l.b16 %v66
  %v285 = vunpack.c.h.b16 %v66
  %v286 = vunpack.c.l.b16 %v67
  %v287 = vunpack.c.h.b16 %v67
  %v288 = vunpack.c.l.b16 %v68
  %v289 = vunpack.c.h.b16 %v68
  %v290 = vunpack.c.l.b16 %v69
  %v291 = vunpack.c.h.b16 %v69
  %v292 = vunpack.c.l.b16 %v70
  %v293 = vunpack.c.h.b16 %v70
  %v294 = vunpack.c.l.b16 %v71
  %v295 = vunpack.c.h.b16 %v71
  %v296 = vunpack.c.l.b16 %v72
  %v297 = vunpack.c.h.b16 %v72
  %v298 = vunpack.c.l.b16 %v73
  %v299 = vunpack.c.h.b16 %v73
  %v300 = vunpack.c.l.b16 %v74
  %v301 = vunpack.c.h.b16 %v74
  %v302 = vunpack.c.l.b16 %v75
  %v303 = vunpack.c.h.b16 %v75
  %v304 = vunpack.c.l.b16 %v76
  %v305 = vunpack.c.h.b16 %v76
  %v306 = vunpack.c.l.b16 %v77
  %v307 = vunpack.c.h.b16 %v77
  %v308 = vunpack.c.l.b16 %v78
  %v309 = vunpack.c.h.b16 %v78
  %v310 = vpack.c.b16 %v184, %v182
  %v311 = vpack.c.b16 %v185, %v183
  %v312 = vpack.c.b16 %v188, %v186
  %v313 = vpack.c.b16 %v189, %v187
  %v314 = vpack.c.b16 %v192, %v190
  %v315 = vpack.c.b16 %v193, %v191
  %v316 = vpack.c.b16 %v196, %v194
  %v317 = vpack.c.b16 %v197, %v195
  %v318 = vpack.c.b16 %v200, %v198
  %v319 = vpack.c.b16 %v201, %v199
  %v320 = vpack.c.b16 %v204, %v202
  %v321 = vpack.c.b16 %v205, %v203
  %v322 = vpack.c.b16 %v208, %v206
  %v323 = vpack.c.b16 %v209, %v207
  %v324 = vpack.c.b16 %v212, %v210
  %v325 = vpack.c.b16 %v213, %v211
  %v326 = vpack.c.b16 %v216, %v214
  %v327 = vpack.c.b16 %v217, %v215
  %v328 = vpack.c.b16 %v220, %v218
  %v329 = vpack.c.b16 %v221, %v219
  %v330 = vpack.c.b16 %v224, %v222
  %v331 = vpack.c.b16 %v225, %v223
  %v332 = vpack.c.b16 %v228, %v226
  %v333 = vpack.c.b16 %v229, %v227
  %v334 = vpack.c.b16 %v232, %v230
  %v335 = vpack.c.b16 %v233, %v231
  %v336 = vpack.c.b16 %v236, %v234
  %v337 = vpack.c.b16 %v237, %v235
  %v338 = vpack.c.b16 %v240, %v238
  %v339 = vpack.c.b16 %v241, %v239
  %v340 = vpack.c.b16 %v244, %v242
  %v341 = vpack.c.b16 %v245, %v243
  %v342 = vpack.c.b16 %v248, %v246
  %v343 = vpack.c.b16 %v249, %v247
  %v344 = vpack.c.b16 %v252, %v250
  %v345 = vpack.c.b16 %v253, %v251
  %v346 = vpack.c.b16 %v256, %v254
  %v347 = vpack.c.b16 %v257, %v255
  %v348 = vpack.c.b16 %v260, %v258
  %v349 = vpack.c.b16 %v261, %v259
  %v350 = vpack.c.b16 %v264, %v262
  %v351 = vpack.c.b16 %v265, %v263
  %v352 = vpack.c.b16 %v268, %v266
  %v353 = vpack.c.b16 %v269, %v267
  %v354 = vpack.c.b16 %v272, %v270
  %v355 = vpack.c.b16 %v273, %v271
  %v356 = vpack.c.b16 %v276, %v274
  %v357 = vpack.c.b16 %v277, %v275
  %v358 = vpack.c.b16 %v280, %v278
  %v359 = vpack.c.b16 %v281, %v279
  %v360 = vpack.c.b16 %v284, %v282
  %v361 = vpack.c.b16 %v285, %v283
  %v362 = vpack.c.b16 %v288, %v286
  %v363 = vpack.c.b16 %v289, %v287
  %v364 = vpack.c.b16 %v292, %v290
  %v365 = vpack.c.b16 %v293, %v291
  %v366 = vpack.c.b16 %v296, %v294
  %v367 = vpack.c.b16 %v297, %v295
  %v368 = vpack.c.b16 %v300, %v298
  %v369 = vpack.c.b16 %v301, %v299
  %v370 = vpack.c.b16 %v304, %v302
  %v371 = vpack.c.b16 %v305, %v303
  %v372 = vpack.c.b16 %v308, %v306
  %v373 = vpack.c.b16 %v309, %v307
  %v470 = vunpack.c.l.b16 %v79
  %v471 = vunpack.c.l.b16 %v80
  %v472 = vunpack.c.l.b16 %v81
  %v473 = vunpack.c.l.b16 %v82
  %v474 = vunpack.c.l.b16 %v83
  %v475 = vunpack.c.l.b16 %v84
  %v476 = vunpack.c.l.b16 %v85
  %v477 = vunpack.c.l.b16 %v86
  %v478 = vunpack.c.l.b16 %v87
  %v479 = vunpack.c.l.b16 %v88
  %v480 = vunpack.c.l.b16 %v89
  %v481 = vunpack.c.l.b16 %v90
  %v482 = vunpack.c.l.b16 %v91
  %v483 = vunpack.c.l.b16 %v92
  %v484 = vunpack.c.l.b16 %v93
  %v485 = vunpack.c.l.b16 %v94
  %v486 = vunpack.c.l.b16 %v95
  %v487 = vunpack.c.l.b16 %v96
  %v488 = vunpack.c.l.b16 %v97
  %v489 = vunpack.c.l.b16 %v98
  %v490 = vunpack.c.l.b16 %v99
  %v491 = vunpack.c.l.b16 %v100
  %v492 = vunpack.c.l.b16 %v101
  %v493 = vunpack.c.l.b16 %v102
  %v494 = vunpack.c.l.b16 %v103
  %v495 = vunpack.c.l.b16 %v104
  %v496 = vunpack.c.l.b16 %v105
  %v497 = vunpack.c.l.b16 %v106
  %v498 = vunpack.c.l.b16 %v107
  %v499 = vunpack.c.l.b16 %v108
  %v500 = vunpack.c.l.b16 %v109
  %v501 = vunpack.c.l.b16 %v110
  %v502 = vpack.c.b16 %v471, %v470
  %v503 = vpack.c.b16 %v473, %v472
  %v504 = vpack.c.b16 %v475, %v474
  %v505 = vpack.c.b16 %v477, %v476
  %v506 = vpack.c.b16 %v479, %v478
  %v507 = vpack.c.b16 %v481, %v480
  %v508 = vpack.c.b16 %v483, %v482
  %v509 = vpack.c.b16 %v485, %v484
  %v510 = vpack.c.b16 %v487, %v486
  %v511 = vpack.c.b16 %v489, %v488
  %v512 = vpack.c.b16 %v491, %v490
  %v513 = vpack.c.b16 %v493, %v492
  %v514 = vpack.c.b16 %v495, %v494
  %v515 = vpack.c.b16 %v497, %v496
  %v516 = vpack.c.b16 %v499, %v498
  %v517 = vpack.c.b16 %v501, %v500
  %534 = vmatprep.subr.bf16.mxu0 0
  %535 = vmatpush1.bf16.msra.mxu0 %v509
  %536 = vmatprep.subr.bf16.mxu0 0
  %537 = vmatpush1.bf16.msra.mxu0 %v508
  %538 = vmatprep.subr.bf16.mxu0 0
  %539 = vmatpush1.bf16.msra.mxu0 %v507
  %540 = vmatprep.subr.bf16.mxu0 0
  %541 = vmatpush1.bf16.msra.mxu0 %v506
  %542 = vmatprep.subr.bf16.mxu0 0
  %543 = vmatpush1.bf16.msra.mxu0 %v505
  %544 = vmatprep.subr.bf16.mxu0 0
  %545 = vmatpush1.bf16.msra.mxu0 %v504
  %546 = vmatprep.subr.bf16.mxu0 0
  %547 = vmatpush1.bf16.msra.mxu0 %v503
  %548 = vmatprep.subr.bf16.mxu0 0
  %549 = vmatpush1.bf16.msra.mxu0 %v502
  %550 = vmatprep.subr.bf16.mxu0 0
  %551 = vmatpush2.bf16.msra.mxu0 %v517
  %552 = vmatprep.subr.bf16.mxu0 0
  %553 = vmatpush2.bf16.msra.mxu0 %v516
  %554 = vmatprep.subr.bf16.mxu0 0
  %555 = vmatpush2.bf16.msra.mxu0 %v515
  %556 = vmatprep.subr.bf16.mxu0 0
  %557 = vmatpush2.bf16.msra.mxu0 %v514
  %558 = vmatprep.subr.bf16.mxu0 0
  %559 = vmatpush2.bf16.msra.mxu0 %v513
  %560 = vmatprep.subr.bf16.mxu0 0
  %561 = vmatpush2.bf16.msra.mxu0 %v512
  %562 = vmatprep.subr.bf16.mxu0 0
  %563 = vmatpush2.bf16.msra.mxu0 %v511
  %564 = vmatprep.subr.bf16.mxu0 0
  %565 = vmatpush2.bf16.msra.mxu0 %v510
  %566 = vmatprep.mubr.bf16.mxu0 %v311
  %567 = vmatmul.mubr.bf16.gmra.mxu0 %v310
  %v568 = vpop.f32.mrf.mxu0
  %v569 = vadd.f32 %v116, %v568
  %v570 = vpop.f32.mrf.mxu0
  %v571 = vpop.f32.mrf.mxu0
  %v572 = vadd.f32 %v116, %v571
  %v573 = vpop.f32.mrf.mxu0
  %574 = vmatprep.mubr.bf16.mxu0 %v313
  %575 = vmatmul.mubr.bf16.gmra.mxu0 %v312
  %v576 = vpop.f32.mrf.mxu0
  %v577 = vadd.f32 %v116, %v576
  %v578 = vpop.f32.mrf.mxu0
  %v579 = vpop.f32.mrf.mxu0
  %v580 = vadd.f32 %v116, %v579
  %v581 = vpop.f32.mrf.mxu0
  %582 = vmatprep.mubr.bf16.mxu0 %v315
  %583 = vmatmul.mubr.bf16.gmra.mxu0 %v314
  %v584 = vpop.f32.mrf.mxu0
  %v585 = vadd.f32 %v116, %v584
  %v586 = vpop.f32.mrf.mxu0
  %v587 = vpop.f32.mrf.mxu0
  %v588 = vadd.f32 %v116, %v587
  %v589 = vpop.f32.mrf.mxu0
  %590 = vmatprep.mubr.bf16.mxu0 %v317
  %591 = vmatmul.mubr.bf16.gmra.mxu0 %v316
  %v592 = vpop.f32.mrf.mxu0
  %v593 = vadd.f32 %v116, %v592
  %v594 = vpop.f32.mrf.mxu0
  %v595 = vpop.f32.mrf.mxu0
  %v596 = vadd.f32 %v116, %v595
  %v597 = vpop.f32.mrf.mxu0
  %598 = vmatprep.mubr.bf16.mxu0 %v319
  %599 = vmatmul.mubr.bf16.gmra.mxu0 %v318
  %v600 = vpop.f32.mrf.mxu0
  %v601 = vadd.f32 %v116, %v600
  %v602 = vpop.f32.mrf.mxu0
  %v603 = vpop.f32.mrf.mxu0
  %v604 = vadd.f32 %v116, %v603
  %v605 = vpop.f32.mrf.mxu0
  %606 = vmatprep.mubr.bf16.mxu0 %v321
  %607 = vmatmul.mubr.bf16.gmra.mxu0 %v320
  %v608 = vpop.f32.mrf.mxu0
  %v609 = vadd.f32 %v116, %v608
  %v610 = vpop.f32.mrf.mxu0
  %v611 = vpop.f32.mrf.mxu0
  %v612 = vadd.f32 %v116, %v611
  %v613 = vpop.f32.mrf.mxu0
  %614 = vmatprep.mubr.bf16.mxu0 %v323
  %615 = vmatmul.mubr.bf16.gmra.mxu0 %v322
  %v616 = vpop.f32.mrf.mxu0
  %v617 = vadd.f32 %v116, %v616
  %v618 = vpop.f32.mrf.mxu0
  %v619 = vpop.f32.mrf.mxu0
  %v620 = vadd.f32 %v116, %v619
  %v621 = vpop.f32.mrf.mxu0
  %622 = vmatprep.mubr.bf16.mxu0 %v325
  %623 = vmatmul.mubr.bf16.gmra.mxu0 %v324
  %v624 = vpop.f32.mrf.mxu0
  %v625 = vadd.f32 %v116, %v624
  %v626 = vpop.f32.mrf.mxu0
  %v627 = vpop.f32.mrf.mxu0
  %v628 = vadd.f32 %v116, %v627
  %v629 = vpop.f32.mrf.mxu0
  %630 = vmatprep.mubr.bf16.mxu0 %v327
  %631 = vmatmul.mubr.bf16.gmra.mxu0 %v326
  %v632 = vpop.f32.mrf.mxu0
  %v633 = vadd.f32 %v116, %v632
  %v634 = vpop.f32.mrf.mxu0
  %v635 = vpop.f32.mrf.mxu0
  %v636 = vadd.f32 %v116, %v635
  %v637 = vpop.f32.mrf.mxu0
  %638 = vmatprep.mubr.bf16.mxu0 %v329
  %639 = vmatmul.mubr.bf16.gmra.mxu0 %v328
  %v640 = vpop.f32.mrf.mxu0
  %v641 = vadd.f32 %v116, %v640
  %v642 = vpop.f32.mrf.mxu0
  %v643 = vpop.f32.mrf.mxu0
  %v644 = vadd.f32 %v116, %v643
  %v645 = vpop.f32.mrf.mxu0
  %646 = vmatprep.mubr.bf16.mxu0 %v331
  %647 = vmatmul.mubr.bf16.gmra.mxu0 %v330
  %v648 = vpop.f32.mrf.mxu0
  %v649 = vadd.f32 %v116, %v648
  %v650 = vpop.f32.mrf.mxu0
  %v651 = vpop.f32.mrf.mxu0
  %v652 = vadd.f32 %v116, %v651
  %v653 = vpop.f32.mrf.mxu0
  %654 = vmatprep.mubr.bf16.mxu0 %v333
  %655 = vmatmul.mubr.bf16.gmra.mxu0 %v332
  %v656 = vpop.f32.mrf.mxu0
  %v657 = vadd.f32 %v116, %v656
  %v658 = vpop.f32.mrf.mxu0
  %v659 = vpop.f32.mrf.mxu0
  %v660 = vadd.f32 %v116, %v659
  %v661 = vpop.f32.mrf.mxu0
  %662 = vmatprep.mubr.bf16.mxu0 %v335
  %663 = vmatmul.mubr.bf16.gmra.mxu0 %v334
  %v664 = vpop.f32.mrf.mxu0
  %v665 = vadd.f32 %v116, %v664
  %v666 = vpop.f32.mrf.mxu0
  %v667 = vpop.f32.mrf.mxu0
  %v668 = vadd.f32 %v116, %v667
  %v669 = vpop.f32.mrf.mxu0
  %670 = vmatprep.mubr.bf16.mxu0 %v337
  %671 = vmatmul.mubr.bf16.gmra.mxu0 %v336
  %v672 = vpop.f32.mrf.mxu0
  %v673 = vadd.f32 %v116, %v672
  %v674 = vpop.f32.mrf.mxu0
  %v675 = vpop.f32.mrf.mxu0
  %v676 = vadd.f32 %v116, %v675
  %v677 = vpop.f32.mrf.mxu0
  %678 = vmatprep.mubr.bf16.mxu0 %v339
  %679 = vmatmul.mubr.bf16.gmra.mxu0 %v338
  %v680 = vpop.f32.mrf.mxu0
  %v681 = vadd.f32 %v116, %v680
  %v682 = vpop.f32.mrf.mxu0
  %v683 = vpop.f32.mrf.mxu0
  %v684 = vadd.f32 %v116, %v683
  %v685 = vpop.f32.mrf.mxu0
  %686 = vmatprep.mubr.bf16.mxu0 %v341
  %687 = vmatmul.mubr.bf16.gmra.mxu0 %v340
  %v688 = vpop.f32.mrf.mxu0
  %v689 = vadd.f32 %v116, %v688
  %v690 = vpop.f32.mrf.mxu0
  %v691 = vpop.f32.mrf.mxu0
  %v692 = vadd.f32 %v116, %v691
  %v693 = vpop.f32.mrf.mxu0
  %694 = vmatprep.mubr.bf16.mxu0 %v343
  %695 = vmatmul.mubr.bf16.gmra.mxu0 %v342
  %v696 = vpop.f32.mrf.mxu0
  %v697 = vadd.f32 %v116, %v696
  %v698 = vpop.f32.mrf.mxu0
  %v699 = vpop.f32.mrf.mxu0
  %v700 = vadd.f32 %v116, %v699
  %v701 = vpop.f32.mrf.mxu0
  %702 = vmatprep.mubr.bf16.mxu0 %v345
  %703 = vmatmul.mubr.bf16.gmra.mxu0 %v344
  %v704 = vpop.f32.mrf.mxu0
  %v705 = vadd.f32 %v116, %v704
  %v706 = vpop.f32.mrf.mxu0
  %v707 = vpop.f32.mrf.mxu0
  %v708 = vadd.f32 %v116, %v707
  %v709 = vpop.f32.mrf.mxu0
  %710 = vmatprep.mubr.bf16.mxu0 %v347
  %711 = vmatmul.mubr.bf16.gmra.mxu0 %v346
  %v712 = vpop.f32.mrf.mxu0
  %v713 = vadd.f32 %v116, %v712
  %v714 = vpop.f32.mrf.mxu0
  %v715 = vpop.f32.mrf.mxu0
  %v716 = vadd.f32 %v116, %v715
  %v717 = vpop.f32.mrf.mxu0
  %718 = vmatprep.mubr.bf16.mxu0 %v349
  %719 = vmatmul.mubr.bf16.gmra.mxu0 %v348
  %v720 = vpop.f32.mrf.mxu0
  %v721 = vadd.f32 %v116, %v720
  %v722 = vpop.f32.mrf.mxu0
  %v723 = vpop.f32.mrf.mxu0
  %v724 = vadd.f32 %v116, %v723
  %v725 = vpop.f32.mrf.mxu0
  %726 = vmatprep.mubr.bf16.mxu0 %v351
  %727 = vmatmul.mubr.bf16.gmra.mxu0 %v350
  %v728 = vpop.f32.mrf.mxu0
  %v729 = vadd.f32 %v116, %v728
  %v730 = vpop.f32.mrf.mxu0
  %v731 = vpop.f32.mrf.mxu0
  %v732 = vadd.f32 %v116, %v731
  %v733 = vpop.f32.mrf.mxu0
  %734 = vmatprep.mubr.bf16.mxu0 %v353
  %735 = vmatmul.mubr.bf16.gmra.mxu0 %v352
  %v736 = vpop.f32.mrf.mxu0
  %v737 = vadd.f32 %v116, %v736
  %v738 = vpop.f32.mrf.mxu0
  %v739 = vpop.f32.mrf.mxu0
  %v740 = vadd.f32 %v116, %v739
  %v741 = vpop.f32.mrf.mxu0
  %742 = vmatprep.mubr.bf16.mxu0 %v355
  %743 = vmatmul.mubr.bf16.gmra.mxu0 %v354
  %v744 = vpop.f32.mrf.mxu0
  %v745 = vadd.f32 %v116, %v744
  %v746 = vpop.f32.mrf.mxu0
  %v747 = vpop.f32.mrf.mxu0
  %v748 = vadd.f32 %v116, %v747
  %v749 = vpop.f32.mrf.mxu0
  %750 = vmatprep.mubr.bf16.mxu0 %v357
  %751 = vmatmul.mubr.bf16.gmra.mxu0 %v356
  %v752 = vpop.f32.mrf.mxu0
  %v753 = vadd.f32 %v116, %v752
  %v754 = vpop.f32.mrf.mxu0
  %v755 = vpop.f32.mrf.mxu0
  %v756 = vadd.f32 %v116, %v755
  %v757 = vpop.f32.mrf.mxu0
  %758 = vmatprep.mubr.bf16.mxu0 %v359
  %759 = vmatmul.mubr.bf16.gmra.mxu0 %v358
  %v760 = vpop.f32.mrf.mxu0
  %v761 = vadd.f32 %v116, %v760
  %v762 = vpop.f32.mrf.mxu0
  %v763 = vpop.f32.mrf.mxu0
  %v764 = vadd.f32 %v116, %v763
  %v765 = vpop.f32.mrf.mxu0
  %766 = vmatprep.mubr.bf16.mxu0 %v361
  %767 = vmatmul.mubr.bf16.gmra.mxu0 %v360
  %v768 = vpop.f32.mrf.mxu0
  %v769 = vadd.f32 %v116, %v768
  %v770 = vpop.f32.mrf.mxu0
  %v771 = vpop.f32.mrf.mxu0
  %v772 = vadd.f32 %v116, %v771
  %v773 = vpop.f32.mrf.mxu0
  %774 = vmatprep.mubr.bf16.mxu0 %v363
  %775 = vmatmul.mubr.bf16.gmra.mxu0 %v362
  %v776 = vpop.f32.mrf.mxu0
  %v777 = vadd.f32 %v116, %v776
  %v778 = vpop.f32.mrf.mxu0
  %v779 = vpop.f32.mrf.mxu0
  %v780 = vadd.f32 %v116, %v779
  %v781 = vpop.f32.mrf.mxu0
  %782 = vmatprep.mubr.bf16.mxu0 %v365
  %783 = vmatmul.mubr.bf16.gmra.mxu0 %v364
  %v784 = vpop.f32.mrf.mxu0
  %v785 = vadd.f32 %v116, %v784
  %v786 = vpop.f32.mrf.mxu0
  %v787 = vpop.f32.mrf.mxu0
  %v788 = vadd.f32 %v116, %v787
  %v789 = vpop.f32.mrf.mxu0
  %790 = vmatprep.mubr.bf16.mxu0 %v367
  %791 = vmatmul.mubr.bf16.gmra.mxu0 %v366
  %v792 = vpop.f32.mrf.mxu0
  %v793 = vadd.f32 %v116, %v792
  %v794 = vpop.f32.mrf.mxu0
  %v795 = vpop.f32.mrf.mxu0
  %v796 = vadd.f32 %v116, %v795
  %v797 = vpop.f32.mrf.mxu0
  %798 = vmatprep.mubr.bf16.mxu0 %v369
  %799 = vmatmul.mubr.bf16.gmra.mxu0 %v368
  %v800 = vpop.f32.mrf.mxu0
  %v801 = vadd.f32 %v116, %v800
  %v802 = vpop.f32.mrf.mxu0
  %v803 = vpop.f32.mrf.mxu0
  %v804 = vadd.f32 %v116, %v803
  %v805 = vpop.f32.mrf.mxu0
  %806 = vmatprep.mubr.bf16.mxu0 %v371
  %807 = vmatmul.mubr.bf16.gmra.mxu0 %v370
  %v808 = vpop.f32.mrf.mxu0
  %v809 = vadd.f32 %v116, %v808
  %v810 = vpop.f32.mrf.mxu0
  %v811 = vpop.f32.mrf.mxu0
  %v812 = vadd.f32 %v116, %v811
  %v813 = vpop.f32.mrf.mxu0
  %814 = vmatprep.mubr.bf16.mxu0 %v373
  %815 = vmatmul.mubr.bf16.gmra.mxu0 %v372
  %v816 = vpop.f32.mrf.mxu0
  %v817 = vadd.f32 %v116, %v816
  %v818 = vpop.f32.mrf.mxu0
  %v819 = vpop.f32.mrf.mxu0
  %v820 = vadd.f32 %v116, %v819
  %v821 = vpop.f32.mrf.mxu0
  %822 = vdwg.mxu0
  %v823 = vmax.f32 %v569, 0.0
  %v824 = vmax.f32 %v572, 0.0
  %v825 = vmax.f32 %v577, 0.0
  %v826 = vmax.f32 %v580, 0.0
  %v827 = vmax.f32 %v585, 0.0
  %v828 = vmax.f32 %v588, 0.0
  %v829 = vmax.f32 %v593, 0.0
  %v830 = vmax.f32 %v596, 0.0
  %v831 = vmax.f32 %v601, 0.0
  %v832 = vmax.f32 %v604, 0.0
  %v833 = vmax.f32 %v609, 0.0
  %v834 = vmax.f32 %v612, 0.0
  %v835 = vmax.f32 %v617, 0.0
  %v836 = vmax.f32 %v620, 0.0
  %v837 = vmax.f32 %v625, 0.0
  %v838 = vmax.f32 %v628, 0.0
  %v839 = vmax.f32 %v633, 0.0
  %v840 = vmax.f32 %v636, 0.0
  %v841 = vmax.f32 %v641, 0.0
  %v842 = vmax.f32 %v644, 0.0
  %v843 = vmax.f32 %v649, 0.0
  %v844 = vmax.f32 %v652, 0.0
  %v845 = vmax.f32 %v657, 0.0
  %v846 = vmax.f32 %v660, 0.0
  %v847 = vmax.f32 %v665, 0.0
  %v848 = vmax.f32 %v668, 0.0
  %v849 = vmax.f32 %v673, 0.0
  %v850 = vmax.f32 %v676, 0.0
  %v851 = vmax.f32 %v681, 0.0
  %v852 = vmax.f32 %v684, 0.0
  %v853 = vmax.f32 %v689, 0.0
  %v854 = vmax.f32 %v692, 0.0
  %v855 = vmax.f32 %v697, 0.0
  %v856 = vmax.f32 %v700, 0.0
  %v857 = vmax.f32 %v705, 0.0
  %v858 = vmax.f32 %v708, 0.0
  %v859 = vmax.f32 %v713, 0.0
  %v860 = vmax.f32 %v716, 0.0
  %v861 = vmax.f32 %v721, 0.0
  %v862 = vmax.f32 %v724, 0.0
  %v863 = vmax.f32 %v729, 0.0
  %v864 = vmax.f32 %v732, 0.0
  %v865 = vmax.f32 %v737, 0.0
  %v866 = vmax.f32 %v740, 0.0
  %v867 = vmax.f32 %v745, 0.0
  %v868 = vmax.f32 %v748, 0.0
  %v869 = vmax.f32 %v753, 0.0
  %v870 = vmax.f32 %v756, 0.0
  %v871 = vmax.f32 %v761, 0.0
  %v872 = vmax.f32 %v764, 0.0
  %v873 = vmax.f32 %v769, 0.0
  %v874 = vmax.f32 %v772, 0.0
  %v875 = vmax.f32 %v777, 0.0
  %v876 = vmax.f32 %v780, 0.0
  %v877 = vmax.f32 %v785, 0.0
  %v878 = vmax.f32 %v788, 0.0
  %v879 = vmax.f32 %v793, 0.0
  %v880 = vmax.f32 %v796, 0.0
  %v881 = vmax.f32 %v801, 0.0
  %v882 = vmax.f32 %v804, 0.0
  %v883 = vmax.f32 %v809, 0.0
  %v884 = vmax.f32 %v812, 0.0
  %v885 = vmax.f32 %v817, 0.0
  %v886 = vmax.f32 %v820, 0.0
  %v887 = vpack.c.bf16 %v824, %v823
  %v888 = vpack.c.bf16 %v826, %v825
  %v889 = vpack.c.bf16 %v828, %v827
  %v890 = vpack.c.bf16 %v830, %v829
  %v891 = vpack.c.bf16 %v832, %v831
  %v892 = vpack.c.bf16 %v834, %v833
  %v893 = vpack.c.bf16 %v836, %v835
  %v894 = vpack.c.bf16 %v838, %v837
  %v895 = vpack.c.bf16 %v840, %v839
  %v896 = vpack.c.bf16 %v842, %v841
  %v897 = vpack.c.bf16 %v844, %v843
  %v898 = vpack.c.bf16 %v846, %v845
  %v899 = vpack.c.bf16 %v848, %v847
  %v900 = vpack.c.bf16 %v850, %v849
  %v901 = vpack.c.bf16 %v852, %v851
  %v902 = vpack.c.bf16 %v854, %v853
  %v903 = vpack.c.bf16 %v856, %v855
  %v904 = vpack.c.bf16 %v858, %v857
  %v905 = vpack.c.bf16 %v860, %v859
  %v906 = vpack.c.bf16 %v862, %v861
  %v907 = vpack.c.bf16 %v864, %v863
  %v908 = vpack.c.bf16 %v866, %v865
  %v909 = vpack.c.bf16 %v868, %v867
  %v910 = vpack.c.bf16 %v870, %v869
  %v911 = vpack.c.bf16 %v872, %v871
  %v912 = vpack.c.bf16 %v874, %v873
  %v913 = vpack.c.bf16 %v876, %v875
  %v914 = vpack.c.bf16 %v878, %v877
  %v915 = vpack.c.bf16 %v880, %v879
  %v916 = vpack.c.bf16 %v882, %v881
  %v917 = vpack.c.bf16 %v884, %v883
  %v918 = vpack.c.bf16 %v886, %v885
  %v951 = vunpack.c.l.b16 %v887
  %v952 = vunpack.c.h.b16 %v887
  %v953 = vunpack.c.l.b16 %v888
  %v954 = vunpack.c.h.b16 %v888
  %v955 = vunpack.c.l.b16 %v889
  %v956 = vunpack.c.h.b16 %v889
  %v957 = vunpack.c.l.b16 %v890
  %v958 = vunpack.c.h.b16 %v890
  %v959 = vunpack.c.l.b16 %v891
  %v960 = vunpack.c.h.b16 %v891
  %v961 = vunpack.c.l.b16 %v892
  %v962 = vunpack.c.h.b16 %v892
  %v963 = vunpack.c.l.b16 %v893
  %v964 = vunpack.c.h.b16 %v893
  %v965 = vunpack.c.l.b16 %v894
  %v966 = vunpack.c.h.b16 %v894
  %v967 = vunpack.c.l.b16 %v895
  %v968 = vunpack.c.h.b16 %v895
  %v969 = vunpack.c.l.b16 %v896
  %v970 = vunpack.c.h.b16 %v896
  %v971 = vunpack.c.l.b16 %v897
  %v972 = vunpack.c.h.b16 %v897
  %v973 = vunpack.c.l.b16 %v898
  %v974 = vunpack.c.h.b16 %v898
  %v975 = vunpack.c.l.b16 %v899
  %v976 = vunpack.c.h.b16 %v899
  %v977 = vunpack.c.l.b16 %v900
  %v978 = vunpack.c.h.b16 %v900
  %v979 = vunpack.c.l.b16 %v901
  %v980 = vunpack.c.h.b16 %v901
  %v981 = vunpack.c.l.b16 %v902
  %v982 = vunpack.c.h.b16 %v902
  %v983 = vunpack.c.l.b16 %v903
  %v984 = vunpack.c.h.b16 %v903
  %v985 = vunpack.c.l.b16 %v904
  %v986 = vunpack.c.h.b16 %v904
  %v987 = vunpack.c.l.b16 %v905
  %v988 = vunpack.c.h.b16 %v905
  %v989 = vunpack.c.l.b16 %v906
  %v990 = vunpack.c.h.b16 %v906
  %v991 = vunpack.c.l.b16 %v907
  %v992 = vunpack.c.h.b16 %v907
  %v993 = vunpack.c.l.b16 %v908
  %v994 = vunpack.c.h.b16 %v908
  %v995 = vunpack.c.l.b16 %v909
  %v996 = vunpack.c.h.b16 %v909
  %v997 = vunpack.c.l.b16 %v910
  %v998 = vunpack.c.h.b16 %v910
  %v999 = vunpack.c.l.b16 %v911
  %v1000 = vunpack.c.h.b16 %v911
  %v1001 = vunpack.c.l.b16 %v912
  %v1002 = vunpack.c.h.b16 %v912
  %v1003 = vunpack.c.l.b16 %v913
  %v1004 = vunpack.c.h.b16 %v913
  %v1005 = vunpack.c.l.b16 %v914
  %v1006 = vunpack.c.h.b16 %v914
  %v1007 = vunpack.c.l.b16 %v915
  %v1008 = vunpack.c.h.b16 %v915
  %v1009 = vunpack.c.l.b16 %v916
  %v1010 = vunpack.c.h.b16 %v916
  %v1011 = vunpack.c.l.b16 %v917
  %v1012 = vunpack.c.h.b16 %v917
  %v1013 = vunpack.c.l.b16 %v918
  %v1014 = vunpack.c.h.b16 %v918
  %v1015 = vpack.c.b16 %v951, %v951
  %v1016 = vpack.c.b16 %v952, %v952
  %v1017 = vpack.c.b16 %v953, %v953
  %v1018 = vpack.c.b16 %v954, %v954
  %v1019 = vpack.c.b16 %v955, %v955
  %v1020 = vpack.c.b16 %v956, %v956
  %v1021 = vpack.c.b16 %v957, %v957
  %v1022 = vpack.c.b16 %v958, %v958
  %v1023 = vpack.c.b16 %v959, %v959
  %v1024 = vpack.c.b16 %v960, %v960
  %v1025 = vpack.c.b16 %v961, %v961
  %v1026 = vpack.c.b16 %v962, %v962
  %v1027 = vpack.c.b16 %v963, %v963
  %v1028 = vpack.c.b16 %v964, %v964
  %v1029 = vpack.c.b16 %v965, %v965
  %v1030 = vpack.c.b16 %v966, %v966
  %v1031 = vpack.c.b16 %v967, %v967
  %v1032 = vpack.c.b16 %v968, %v968
  %v1033 = vpack.c.b16 %v969, %v969
  %v1034 = vpack.c.b16 %v970, %v970
  %v1035 = vpack.c.b16 %v971, %v971
  %v1036 = vpack.c.b16 %v972, %v972
  %v1037 = vpack.c.b16 %v973, %v973
  %v1038 = vpack.c.b16 %v974, %v974
  %v1039 = vpack.c.b16 %v975, %v975
  %v1040 = vpack.c.b16 %v976, %v976
  %v1041 = vpack.c.b16 %v977, %v977
  %v1042 = vpack.c.b16 %v978, %v978
  %v1043 = vpack.c.b16 %v979, %v979
  %v1044 = vpack.c.b16 %v980, %v980
  %v1045 = vpack.c.b16 %v981, %v981
  %v1046 = vpack.c.b16 %v982, %v982
  %v1047 = vpack.c.b16 %v983, %v983
  %v1048 = vpack.c.b16 %v984, %v984
  %v1049 = vpack.c.b16 %v985, %v985
  %v1050 = vpack.c.b16 %v986, %v986
  %v1051 = vpack.c.b16 %v987, %v987
  %v1052 = vpack.c.b16 %v988, %v988
  %v1053 = vpack.c.b16 %v989, %v989
  %v1054 = vpack.c.b16 %v990, %v990
  %v1055 = vpack.c.b16 %v991, %v991
  %v1056 = vpack.c.b16 %v992, %v992
  %v1057 = vpack.c.b16 %v993, %v993
  %v1058 = vpack.c.b16 %v994, %v994
  %v1059 = vpack.c.b16 %v995, %v995
  %v1060 = vpack.c.b16 %v996, %v996
  %v1061 = vpack.c.b16 %v997, %v997
  %v1062 = vpack.c.b16 %v998, %v998
  %v1063 = vpack.c.b16 %v999, %v999
  %v1064 = vpack.c.b16 %v1000, %v1000
  %v1065 = vpack.c.b16 %v1001, %v1001
  %v1066 = vpack.c.b16 %v1002, %v1002
  %v1067 = vpack.c.b16 %v1003, %v1003
  %v1068 = vpack.c.b16 %v1004, %v1004
  %v1069 = vpack.c.b16 %v1005, %v1005
  %v1070 = vpack.c.b16 %v1006, %v1006
  %v1071 = vpack.c.b16 %v1007, %v1007
  %v1072 = vpack.c.b16 %v1008, %v1008
  %v1073 = vpack.c.b16 %v1009, %v1009
  %v1074 = vpack.c.b16 %v1010, %v1010
  %v1075 = vpack.c.b16 %v1011, %v1011
  %v1076 = vpack.c.b16 %v1012, %v1012
  %v1077 = vpack.c.b16 %v1013, %v1013
  %v1078 = vpack.c.b16 %v1014, %v1014
  %1143 = vst [vmem:[%s3] sm:$0xf] %v1015
  %1144 = vst [vmem:[%s3 + $0x4] sm:$0xf] %v1016
  %1145 = vst [vmem:[%s3 + $0x8] sm:$0xf] %v1017
  %1146 = vst [vmem:[%s3 + $0xc] sm:$0xf] %v1018
  %1147 = vst [vmem:[%s3 + $0x10] sm:$0xf] %v1019
  %1148 = vst [vmem:[%s3 + $0x14] sm:$0xf] %v1020
  %1149 = vst [vmem:[%s3 + $0x18] sm:$0xf] %v1021
  %1150 = vst [vmem:[%s3 + $0x1c] sm:$0xf] %v1022
  %1151 = vst [vmem:[%s3 + $0x20] sm:$0xf] %v1023
  %1152 = vst [vmem:[%s3 + $0x24] sm:$0xf] %v1024
  %1153 = vst [vmem:[%s3 + $0x28] sm:$0xf] %v1025
  %1154 = vst [vmem:[%s3 + $0x2c] sm:$0xf] %v1026
  %1155 = vst [vmem:[%s3 + $0x30] sm:$0xf] %v1027
  %1156 = vst [vmem:[%s3 + $0x34] sm:$0xf] %v1028
  %1157 = vst [vmem:[%s3 + $0x38] sm:$0xf] %v1029
  %1158 = vst [vmem:[%s3 + $0x3c] sm:$0xf] %v1030
  %1159 = vst [vmem:[%s3 + $0x40] sm:$0xf] %v1031
  %1160 = vst [vmem:[%s3 + $0x44] sm:$0xf] %v1032
  %1161 = vst [vmem:[%s3 + $0x48] sm:$0xf] %v1033
  %1162 = vst [vmem:[%s3 + $0x4c] sm:$0xf] %v1034
  %1163 = vst [vmem:[%s3 + $0x50] sm:$0xf] %v1035
  %1164 = vst [vmem:[%s3 + $0x54] sm:$0xf] %v1036
  %1165 = vst [vmem:[%s3 + $0x58] sm:$0xf] %v1037
  %1166 = vst [vmem:[%s3 + $0x5c] sm:$0xf] %v1038
  %1167 = vst [vmem:[%s3 + $0x60] sm:$0xf] %v1039
  %1168 = vst [vmem:[%s3 + $0x64] sm:$0xf] %v1040
  %1169 = vst [vmem:[%s3 + $0x68] sm:$0xf] %v1041
  %1170 = vst [vmem:[%s3 + $0x6c] sm:$0xf] %v1042
  %1171 = vst [vmem:[%s3 + $0x70] sm:$0xf] %v1043
  %1172 = vst [vmem:[%s3 + $0x74] sm:$0xf] %v1044
  %1173 = vst [vmem:[%s3 + $0x78] sm:$0xf] %v1045
  %1174 = vst [vmem:[%s3 + $0x7c] sm:$0xf] %v1046
  %1175 = vst [vmem:[%s3 + $0x80] sm:$0xf] %v1047
  %1176 = vst [vmem:[%s3 + $0x84] sm:$0xf] %v1048
  %1177 = vst [vmem:[%s3 + $0x88] sm:$0xf] %v1049
  %1178 = vst [vmem:[%s3 + $0x8c] sm:$0xf] %v1050
  %1179 = vst [vmem:[%s3 + $0x90] sm:$0xf] %v1051
  %1180 = vst [vmem:[%s3 + $0x94] sm:$0xf] %v1052
  %1181 = vst [vmem:[%s3 + $0x98] sm:$0xf] %v1053
  %1182 = vst [vmem:[%s3 + $0x9c] sm:$0xf] %v1054
  %1183 = vst [vmem:[%s3 + $0xa0] sm:$0xf] %v1055
  %1184 = vst [vmem:[%s3 + $0xa4] sm:$0xf] %v1056
  %1185 = vst [vmem:[%s3 + $0xa8] sm:$0xf] %v1057
  %1186 = vst [vmem:[%s3 + $0xac] sm:$0xf] %v1058
  %1187 = vst [vmem:[%s3 + $0xb0] sm:$0xf] %v1059
  %1188 = vst [vmem:[%s3 + $0xb4] sm:$0xf] %v1060
  %1189 = vst [vmem:[%s3 + $0xb8] sm:$0xf] %v1061
  %1190 = vst [vmem:[%s3 + $0xbc] sm:$0xf] %v1062
  %1191 = vst [vmem:[%s3 + $0xc0] sm:$0xf] %v1063
  %1192 = vst [vmem:[%s3 + $0xc4] sm:$0xf] %v1064
  %1193 = vst [vmem:[%s3 + $0xc8] sm:$0xf] %v1065
  %1194 = vst [vmem:[%s3 + $0xcc] sm:$0xf] %v1066
  %1195 = vst [vmem:[%s3 + $0xd0] sm:$0xf] %v1067
  %1196 = vst [vmem:[%s3 + $0xd4] sm:$0xf] %v1068
  %1197 = vst [vmem:[%s3 + $0xd8] sm:$0xf] %v1069
  %1198 = vst [vmem:[%s3 + $0xdc] sm:$0xf] %v1070
  %1199 = vst [vmem:[%s3 + $0xe0] sm:$0xf] %v1071
  %1200 = vst [vmem:[%s3 + $0xe4] sm:$0xf] %v1072
  %1201 = vst [vmem:[%s3 + $0xe8] sm:$0xf] %v1073
  %1202 = vst [vmem:[%s3 + $0xec] sm:$0xf] %v1074
  %1203 = vst [vmem:[%s3 + $0xf0] sm:$0xf] %v1075
  %1204 = vst [vmem:[%s3 + $0xf4] sm:$0xf] %v1076
  %1205 = vst [vmem:[%s3 + $0xf8] sm:$0xf] %v1077
  %1206 = vst [vmem:[%s3 + $0xfc] sm:$0xf] %v1078
  // Predicated region
  $region14: #{densenet_forward.25} parent=0 // pred_check
    _
  $region15: #{densenet_forward.25} parent=0 // pred_check_branch
    %1208 = sbr.rel (0) target = $region17
  $region16: #{densenet_forward.25} parent=0 // pred_region
    _
  $region17: #{densenet_forward.25} parent=0 // pred_fallthru
    _
  // Predicated region
  $region18: #{densenet_forward.25} parent=0 // pred_check
    _
  $region19: #{densenet_forward.25} parent=0 // pred_check_branch
    %1210 = sbr.rel (0) target = $region21
  $region20: #{densenet_forward.25} parent=0 // pred_region
    _
  $region21: #{densenet_forward.25} parent=0 // pred_fallthru
    _

// kernel: densenet_forward.27
$region0: #{densenet_forward.27}
  #allocation0 [shape = 'u32[]', space=smem, size = 0x4, offset = 0x4, fixed_abs, tag = 'smem constant byte address 0x4 - core index']
  #allocation1 [shape = 'u32[144,128]{1,0:T(1,128)}', space=vmem, size = 0x12000, scoped, tag = 'internal scratch']
  %s0 = inlined_call_operand.vmem [shape: bf16[128,128], index: 0, kind: input, shape index: {}]
  %s1 = inlined_call_operand.vmem [shape: bf16[128,128], index: 1, kind: input, shape index: {}]
  %s2 = inlined_call_operand.vmem [shape: f32[1,128], index: 2, kind: input, shape index: {}]
  %s3 = inlined_call_operand.vmem [shape: f32[1,128], index: 3, kind: input, shape index: {}]
  %s4 = inlined_call_operand.vmem [shape: f32[1,128], index: 4, kind: input, shape index: {}]
  %s5 = inlined_call_operand.vmem [shape: bf16[128,128], index: 5, kind: output, shape index: {}]
  %s6 = sld [smem:[#allocation0]]
  $region30: #{densenet_forward.27} parent=0
    _
  %s8 = ssub.s32 1, %s6
  %s9 = scalar_select 0, %s8, %s6
  // Predicated region
  $region2: #{densenet_forward.27} parent=0 // pred_check
    _
  $region3: #{densenet_forward.27} parent=0 // pred_check_branch
    %11 = sbr.rel (0) target = $region5
  $region4: #{densenet_forward.27} parent=0 // pred_region
    _
  $region5: #{densenet_forward.27} parent=0 // pred_fallthru
    _
  // Predicated region
  $region6: #{densenet_forward.27} parent=0 // pred_check
    _
  $region7: #{densenet_forward.27} parent=0 // pred_check_branch
    %13 = sbr.rel (0) target = $region9
  $region8: #{densenet_forward.27} parent=0 // pred_region
    _
  $region9: #{densenet_forward.27} parent=0 // pred_fallthru
    _
  // Predicated region
  $region10: #{densenet_forward.27} parent=0 // pred_check
    _
  $region11: #{densenet_forward.27} parent=0 // pred_check_branch
    %15 = sbr.rel (0) target = $region13
  $region12: #{densenet_forward.27} parent=0 // pred_region
    _
  $region13: #{densenet_forward.27} parent=0 // pred_fallthru
    _
  // Predicated region
  $region14: #{densenet_forward.27} parent=0 // pred_check
    _
  $region15: #{densenet_forward.27} parent=0 // pred_check_branch
    %17 = sbr.rel (0) target = $region17
  $region16: #{densenet_forward.27} parent=0 // pred_region
    _
  $region17: #{densenet_forward.27} parent=0 // pred_fallthru
    _
  // Predicated region
  $region18: #{densenet_forward.27} parent=0 // pred_check
    _
  $region19: #{densenet_forward.27} parent=0 // pred_check_branch
    %19 = sbr.rel (0) target = $region21
  $region20: #{densenet_forward.27} parent=0 // pred_region
    _
  $region21: #{densenet_forward.27} parent=0 // pred_fallthru
    _
  %v21 = vld [vmem:[%s0] sm:$0xf]
  %v22 = vld [vmem:[%s0 + $0x4] sm:$0xf]
  %v23 = vld [vmem:[%s0 + $0x8] sm:$0xf]
  %v24 = vld [vmem:[%s0 + $0xc] sm:$0xf]
  %v25 = vld [vmem:[%s0 + $0x10] sm:$0xf]
  %v26 = vld [vmem:[%s0 + $0x14] sm:$0xf]
  %v27 = vld [vmem:[%s0 + $0x18] sm:$0xf]
  %v28 = vld [vmem:[%s0 + $0x1c] sm:$0xf]
  %v29 = vld [vmem:[%s0 + $0x20] sm:$0xf]
  %v30 = vld [vmem:[%s0 + $0x24] sm:$0xf]
  %v31 = vld [vmem:[%s0 + $0x28] sm:$0xf]
  %v32 = vld [vmem:[%s0 + $0x2c] sm:$0xf]
  %v33 = vld [vmem:[%s0 + $0x30] sm:$0xf]
  %v34 = vld [vmem:[%s0 + $0x34] sm:$0xf]
  %v35 = vld [vmem:[%s0 + $0x38] sm:$0xf]
  %v36 = vld [vmem:[%s0 + $0x3c] sm:$0xf]
  %v37 = vunpack.c.l.bf16 %v21
  %v38 = vunpack.c.l.bf16 %v22
  %v39 = vunpack.c.l.bf16 %v23
  %v40 = vunpack.c.l.bf16 %v24
  %v41 = vunpack.c.l.bf16 %v25
  %v42 = vunpack.c.l.bf16 %v26
  %v43 = vunpack.c.l.bf16 %v27
  %v44 = vunpack.c.l.bf16 %v28
  %v45 = vunpack.c.l.bf16 %v29
  %v46 = vunpack.c.l.bf16 %v30
  %v47 = vunpack.c.l.bf16 %v31
  %v48 = vunpack.c.l.bf16 %v32
  %v49 = vunpack.c.l.bf16 %v33
  %v50 = vunpack.c.l.bf16 %v34
  %v51 = vunpack.c.l.bf16 %v35
  %v52 = vunpack.c.l.bf16 %v36
  %v53 = vld [vmem:[%s2] sm:$0x1]
  %v55 = vlaneseq
  %v56 = vshrl.u32 %v55, 7
  %v57 = vsub.s32 0, %v56
  %v58 = vrot.slane %v53, %v57
  %v60 = vmul.f32 %v37, %v58
  %v61 = vmul.f32 %v38, %v58
  %v62 = vmul.f32 %v39, %v58
  %v63 = vmul.f32 %v40, %v58
  %v64 = vmul.f32 %v41, %v58
  %v65 = vmul.f32 %v42, %v58
  %v66 = vmul.f32 %v43, %v58
  %v67 = vmul.f32 %v44, %v58
  %v68 = vmul.f32 %v45, %v58
  %v69 = vmul.f32 %v46, %v58
  %v70 = vmul.f32 %v47, %v58
  %v71 = vmul.f32 %v48, %v58
  %v72 = vmul.f32 %v49, %v58
  %v73 = vmul.f32 %v50, %v58
  %v74 = vmul.f32 %v51, %v58
  %v75 = vmul.f32 %v52, %v58
  %v76 = vld [vmem:[%s3] sm:$0x1]
  %v78 = vlaneseq
  %v79 = vshrl.u32 %v78, 7
  %v80 = vsub.s32 0, %v79
  %v81 = vrot.slane %v76, %v80
  %v83 = vadd.f32 %v60, %v81
  %v84 = vadd.f32 %v61, %v81
  %v85 = vadd.f32 %v62, %v81
  %v86 = vadd.f32 %v63, %v81
  %v87 = vadd.f32 %v64, %v81
  %v88 = vadd.f32 %v65, %v81
  %v89 = vadd.f32 %v66, %v81
  %v90 = vadd.f32 %v67, %v81
  %v91 = vadd.f32 %v68, %v81
  %v92 = vadd.f32 %v69, %v81
  %v93 = vadd.f32 %v70, %v81
  %v94 = vadd.f32 %v71, %v81
  %v95 = vadd.f32 %v72, %v81
  %v96 = vadd.f32 %v73, %v81
  %v97 = vadd.f32 %v74, %v81
  %v98 = vadd.f32 %v75, %v81
  %v99 = vmax.f32 %v83, 0.0
  %v100 = vmax.f32 %v84, 0.0
  %v101 = vmax.f32 %v85, 0.0
  %v102 = vmax.f32 %v86, 0.0
  %v103 = vmax.f32 %v87, 0.0
  %v104 = vmax.f32 %v88, 0.0
  %v105 = vmax.f32 %v89, 0.0
  %v106 = vmax.f32 %v90, 0.0
  %v107 = vmax.f32 %v91, 0.0
  %v108 = vmax.f32 %v92, 0.0
  %v109 = vmax.f32 %v93, 0.0
  %v110 = vmax.f32 %v94, 0.0
  %v111 = vmax.f32 %v95, 0.0
  %v112 = vmax.f32 %v96, 0.0
  %v113 = vmax.f32 %v97, 0.0
  %v114 = vmax.f32 %v98, 0.0
  %v115 = vpack.c.bf16 %v100, %v99
  %v116 = vpack.c.bf16 %v102, %v101
  %v117 = vpack.c.bf16 %v104, %v103
  %v118 = vpack.c.bf16 %v106, %v105
  %v119 = vpack.c.bf16 %v108, %v107
  %v120 = vpack.c.bf16 %v110, %v109
  %v121 = vpack.c.bf16 %v112, %v111
  %v122 = vpack.c.bf16 %v114, %v113
  %v123 = vld [vmem:[%s1] sm:$0xf]
  %v124 = vld [vmem:[%s1 + $0x4] sm:$0xf]
  %v125 = vld [vmem:[%s1 + $0x8] sm:$0xf]
  %v126 = vld [vmem:[%s1 + $0xc] sm:$0xf]
  %v127 = vld [vmem:[%s1 + $0x10] sm:$0xf]
  %v128 = vld [vmem:[%s1 + $0x14] sm:$0xf]
  %v129 = vld [vmem:[%s1 + $0x18] sm:$0xf]
  %v130 = vld [vmem:[%s1 + $0x1c] sm:$0xf]
  %v131 = vld [vmem:[%s1 + $0x20] sm:$0xf]
  %v132 = vld [vmem:[%s1 + $0x24] sm:$0xf]
  %v133 = vld [vmem:[%s1 + $0x28] sm:$0xf]
  %v134 = vld [vmem:[%s1 + $0x2c] sm:$0xf]
  %v135 = vld [vmem:[%s1 + $0x30] sm:$0xf]
  %v136 = vld [vmem:[%s1 + $0x34] sm:$0xf]
  %v137 = vld [vmem:[%s1 + $0x38] sm:$0xf]
  %v138 = vld [vmem:[%s1 + $0x3c] sm:$0xf]
  %v139 = vld [vmem:[%s4] sm:$0x1]
  %v141 = vlaneseq
  %v142 = vshrl.u32 %v141, 7
  %v143 = vsub.s32 0, %v142
  %v144 = vrot.slane %v139, %v143
  %v162 = vunpack.c.l.b16 %v123
  %v163 = vunpack.c.l.b16 %v124
  %v164 = vunpack.c.l.b16 %v125
  %v165 = vunpack.c.l.b16 %v126
  %v166 = vunpack.c.l.b16 %v127
  %v167 = vunpack.c.l.b16 %v128
  %v168 = vunpack.c.l.b16 %v129
  %v169 = vunpack.c.l.b16 %v130
  %v170 = vunpack.c.l.b16 %v131
  %v171 = vunpack.c.l.b16 %v132
  %v172 = vunpack.c.l.b16 %v133
  %v173 = vunpack.c.l.b16 %v134
  %v174 = vunpack.c.l.b16 %v135
  %v175 = vunpack.c.l.b16 %v136
  %v176 = vunpack.c.l.b16 %v137
  %v177 = vunpack.c.l.b16 %v138
  %v178 = vpack.c.b16 %v163, %v162
  %v179 = vpack.c.b16 %v165, %v164
  %v180 = vpack.c.b16 %v167, %v166
  %v181 = vpack.c.b16 %v169, %v168
  %v182 = vpack.c.b16 %v171, %v170
  %v183 = vpack.c.b16 %v173, %v172
  %v184 = vpack.c.b16 %v175, %v174
  %v185 = vpack.c.b16 %v177, %v176
  %194 = vmatprep.subr.bf16.mxu0 0
  %195 = vmatpush1.bf16.msra.mxu0 %v185
  %196 = vmatprep.subr.bf16.mxu0 0
  %197 = vmatpush1.bf16.msra.mxu0 %v184
  %198 = vmatprep.subr.bf16.mxu0 0
  %199 = vmatpush1.bf16.msra.mxu0 %v183
  %200 = vmatprep.subr.bf16.mxu0 0
  %201 = vmatpush1.bf16.msra.mxu0 %v182
  %202 = vmatprep.subr.bf16.mxu0 0
  %203 = vmatpush1.bf16.msra.mxu0 %v181
  %204 = vmatprep.subr.bf16.mxu0 0
  %205 = vmatpush1.bf16.msra.mxu0 %v180
  %206 = vmatprep.subr.bf16.mxu0 0
  %207 = vmatpush1.bf16.msra.mxu0 %v179
  %208 = vmatprep.subr.bf16.mxu0 0
  %209 = vmatpush1.bf16.msra.mxu0 %v178
  %210 = vmatprep.subr.bf16.mxu0 0
  %211 = vmatpush2.bf16.msra.mxu0 0
  %212 = vmatprep.subr.bf16.mxu0 0
  %213 = vmatpush2.bf16.msra.mxu0 0
  %214 = vmatprep.subr.bf16.mxu0 0
  %215 = vmatpush2.bf16.msra.mxu0 0
  %216 = vmatprep.subr.bf16.mxu0 0
  %217 = vmatpush2.bf16.msra.mxu0 0
  %218 = vmatprep.subr.bf16.mxu0 0
  %219 = vmatpush2.bf16.msra.mxu0 0
  %220 = vmatprep.subr.bf16.mxu0 0
  %221 = vmatpush2.bf16.msra.mxu0 0
  %222 = vmatprep.subr.bf16.mxu0 0
  %223 = vmatpush2.bf16.msra.mxu0 0
  %224 = vmatprep.subr.bf16.mxu0 0
  %225 = vmatpush2.bf16.msra.mxu0 0
  %226 = vmatprep.mubr.bf16.mxu0 0
  %227 = vmatmul.mubr.bf16.gmra.mxu0 %v115
  %v228 = vpop.f32.mrf.mxu0
  %v229 = vadd.f32 %v144, %v228
  %v230 = vpop.f32.mrf.mxu0
  %v231 = vpop.f32.mrf.mxu0
  %v232 = vadd.f32 %v144, %v231
  %v233 = vpop.f32.mrf.mxu0
  %234 = vmatprep.mubr.bf16.mxu0 0
  %235 = vmatmul.mubr.bf16.gmra.mxu0 %v116
  %v236 = vpop.f32.mrf.mxu0
  %v237 = vadd.f32 %v144, %v236
  %v238 = vpop.f32.mrf.mxu0
  %v239 = vpop.f32.mrf.mxu0
  %v240 = vadd.f32 %v144, %v239
  %v241 = vpop.f32.mrf.mxu0
  %242 = vmatprep.mubr.bf16.mxu0 0
  %243 = vmatmul.mubr.bf16.gmra.mxu0 %v117
  %v244 = vpop.f32.mrf.mxu0
  %v245 = vadd.f32 %v144, %v244
  %v246 = vpop.f32.mrf.mxu0
  %v247 = vpop.f32.mrf.mxu0
  %v248 = vadd.f32 %v144, %v247
  %v249 = vpop.f32.mrf.mxu0
  %250 = vmatprep.mubr.bf16.mxu0 0
  %251 = vmatmul.mubr.bf16.gmra.mxu0 %v118
  %v252 = vpop.f32.mrf.mxu0
  %v253 = vadd.f32 %v144, %v252
  %v254 = vpop.f32.mrf.mxu0
  %v255 = vpop.f32.mrf.mxu0
  %v256 = vadd.f32 %v144, %v255
  %v257 = vpop.f32.mrf.mxu0
  %258 = vmatprep.mubr.bf16.mxu0 0
  %259 = vmatmul.mubr.bf16.gmra.mxu0 %v119
  %v260 = vpop.f32.mrf.mxu0
  %v261 = vadd.f32 %v144, %v260
  %v262 = vpop.f32.mrf.mxu0
  %v263 = vpop.f32.mrf.mxu0
  %v264 = vadd.f32 %v144, %v263
  %v265 = vpop.f32.mrf.mxu0
  %266 = vmatprep.mubr.bf16.mxu0 0
  %267 = vmatmul.mubr.bf16.gmra.mxu0 %v120
  %v268 = vpop.f32.mrf.mxu0
  %v269 = vadd.f32 %v144, %v268
  %v270 = vpop.f32.mrf.mxu0
  %v271 = vpop.f32.mrf.mxu0
  %v272 = vadd.f32 %v144, %v271
  %v273 = vpop.f32.mrf.mxu0
  %274 = vmatprep.mubr.bf16.mxu0 0
  %275 = vmatmul.mubr.bf16.gmra.mxu0 %v121
  %v276 = vpop.f32.mrf.mxu0
  %v277 = vadd.f32 %v144, %v276
  %v278 = vpop.f32.mrf.mxu0
  %v279 = vpop.f32.mrf.mxu0
  %v280 = vadd.f32 %v144, %v279
  %v281 = vpop.f32.mrf.mxu0
  %282 = vmatprep.mubr.bf16.mxu0 0
  %283 = vmatmul.mubr.bf16.gmra.mxu0 %v122
  %v284 = vpop.f32.mrf.mxu0
  %v285 = vadd.f32 %v144, %v284
  %v286 = vpop.f32.mrf.mxu0
  %v287 = vpop.f32.mrf.mxu0
  %v288 = vadd.f32 %v144, %v287
  %v289 = vpop.f32.mrf.mxu0
  %290 = vdwg.mxu0
  %v291 = vmax.f32 %v229, 0.0
  %v292 = vmax.f32 %v232, 0.0
  %v293 = vmax.f32 %v237, 0.0
  %v294 = vmax.f32 %v240, 0.0
  %v295 = vmax.f32 %v245, 0.0
  %v296 = vmax.f32 %v248, 0.0
  %v297 = vmax.f32 %v253, 0.0
  %v298 = vmax.f32 %v256, 0.0
  %v299 = vmax.f32 %v261, 0.0
  %v300 = vmax.f32 %v264, 0.0
  %v301 = vmax.f32 %v269, 0.0
  %v302 = vmax.f32 %v272, 0.0
  %v303 = vmax.f32 %v277, 0.0
  %v304 = vmax.f32 %v280, 0.0
  %v305 = vmax.f32 %v285, 0.0
  %v306 = vmax.f32 %v288, 0.0
  %v307 = vpack.c.bf16 %v292, %v291
  %v308 = vpack.c.bf16 %v294, %v293
  %v309 = vpack.c.bf16 %v296, %v295
  %v310 = vpack.c.bf16 %v298, %v297
  %v311 = vpack.c.bf16 %v300, %v299
  %v312 = vpack.c.bf16 %v302, %v301
  %v313 = vpack.c.bf16 %v304, %v303
  %v314 = vpack.c.bf16 %v306, %v305
  %v323 = vunpack.c.l.b16 %v307
  %v324 = vunpack.c.h.b16 %v307
  %v325 = vunpack.c.l.b16 %v308
  %v326 = vunpack.c.h.b16 %v308
  %v327 = vunpack.c.l.b16 %v309
  %v328 = vunpack.c.h.b16 %v309
  %v329 = vunpack.c.l.b16 %v310
  %v330 = vunpack.c.h.b16 %v310
  %v331 = vunpack.c.l.b16 %v311
  %v332 = vunpack.c.h.b16 %v311
  %v333 = vunpack.c.l.b16 %v312
  %v334 = vunpack.c.h.b16 %v312
  %v335 = vunpack.c.l.b16 %v313
  %v336 = vunpack.c.h.b16 %v313
  %v337 = vunpack.c.l.b16 %v314
  %v338 = vunpack.c.h.b16 %v314
  %v339 = vpack.c.b16 %v323, %v323
  %v340 = vpack.c.b16 %v324, %v324
  %v341 = vpack.c.b16 %v325, %v325
  %v342 = vpack.c.b16 %v326, %v326
  %v343 = vpack.c.b16 %v327, %v327
  %v344 = vpack.c.b16 %v328, %v328
  %v345 = vpack.c.b16 %v329, %v329
  %v346 = vpack.c.b16 %v330, %v330
  %v347 = vpack.c.b16 %v331, %v331
  %v348 = vpack.c.b16 %v332, %v332
  %v349 = vpack.c.b16 %v333, %v333
  %v350 = vpack.c.b16 %v334, %v334
  %v351 = vpack.c.b16 %v335, %v335
  %v352 = vpack.c.b16 %v336, %v336
  %v353 = vpack.c.b16 %v337, %v337
  %v354 = vpack.c.b16 %v338, %v338
  %371 = vst [vmem:[%s5] sm:$0xf] %v339
  %372 = vst [vmem:[%s5 + $0x4] sm:$0xf] %v340
  %373 = vst [vmem:[%s5 + $0x8] sm:$0xf] %v341
  %374 = vst [vmem:[%s5 + $0xc] sm:$0xf] %v342
  %375 = vst [vmem:[%s5 + $0x10] sm:$0xf] %v343
  %376 = vst [vmem:[%s5 + $0x14] sm:$0xf] %v344
  %377 = vst [vmem:[%s5 + $0x18] sm:$0xf] %v345
  %378 = vst [vmem:[%s5 + $0x1c] sm:$0xf] %v346
  %379 = vst [vmem:[%s5 + $0x20] sm:$0xf] %v347
  %380 = vst [vmem:[%s5 + $0x24] sm:$0xf] %v348
  %381 = vst [vmem:[%s5 + $0x28] sm:$0xf] %v349
  %382 = vst [vmem:[%s5 + $0x2c] sm:$0xf] %v350
  %383 = vst [vmem:[%s5 + $0x30] sm:$0xf] %v351
  %384 = vst [vmem:[%s5 + $0x34] sm:$0xf] %v352
  %385 = vst [vmem:[%s5 + $0x38] sm:$0xf] %v353
  %386 = vst [vmem:[%s5 + $0x3c] sm:$0xf] %v354
  // Predicated region
  $region22: #{densenet_forward.27} parent=0 // pred_check
    _
  $region23: #{densenet_forward.27} parent=0 // pred_check_branch
    %388 = sbr.rel (0) target = $region25
  $region24: #{densenet_forward.27} parent=0 // pred_region
    _
  $region25: #{densenet_forward.27} parent=0 // pred_fallthru
    _
  // Predicated region
  $region26: #{densenet_forward.27} parent=0 // pred_check
    _
  $region27: #{densenet_forward.27} parent=0 // pred_check_branch
    %390 = sbr.rel (0) target = $region29
  $region28: #{densenet_forward.27} parent=0 // pred_region
    _
  $region29: #{densenet_forward.27} parent=0 // pred_fallthru
    _

// kernel: densenet_forward.31
$region0: #{densenet_forward.31}
  #allocation0 [shape = 'u32[]', space=smem, size = 0x4, offset = 0x4, fixed_abs, tag = 'smem constant byte address 0x4 - core index']
  #allocation1 [shape = 'u32[144,128]{1,0:T(1,128)}', space=vmem, size = 0x12000, scoped, tag = 'internal scratch']
  %s0 = inlined_call_operand.vmem [shape: bf16[128,128], index: 0, kind: input, shape index: {}]
  %s1 = inlined_call_operand.vmem [shape: bf16[128,128], index: 1, kind: input, shape index: {}]
  %s2 = inlined_call_operand.vmem [shape: f32[1,128], index: 2, kind: input, shape index: {}]
  %s3 = inlined_call_operand.vmem [shape: f32[1,128], index: 3, kind: input, shape index: {}]
  %s4 = inlined_call_operand.vmem [shape: bf16[128,128], index: 4, kind: output, shape index: {}]
  %s5 = sld [smem:[#allocation0]]
  $region26: #{densenet_forward.31} parent=0
    _
  %s7 = ssub.s32 1, %s5
  %s8 = scalar_select 0, %s7, %s5
  // Predicated region
  $region2: #{densenet_forward.31} parent=0 // pred_check
    _
  $region3: #{densenet_forward.31} parent=0 // pred_check_branch
    %10 = sbr.rel (0) target = $region5
  $region4: #{densenet_forward.31} parent=0 // pred_region
    _
  $region5: #{densenet_forward.31} parent=0 // pred_fallthru
    _
  // Predicated region
  $region6: #{densenet_forward.31} parent=0 // pred_check
    _
  $region7: #{densenet_forward.31} parent=0 // pred_check_branch
    %12 = sbr.rel (0) target = $region9
  $region8: #{densenet_forward.31} parent=0 // pred_region
    _
  $region9: #{densenet_forward.31} parent=0 // pred_fallthru
    _
  // Predicated region
  $region10: #{densenet_forward.31} parent=0 // pred_check
    _
  $region11: #{densenet_forward.31} parent=0 // pred_check_branch
    %14 = sbr.rel (0) target = $region13
  $region12: #{densenet_forward.31} parent=0 // pred_region
    _
  $region13: #{densenet_forward.31} parent=0 // pred_fallthru
    _
  // Predicated region
  $region14: #{densenet_forward.31} parent=0 // pred_check
    _
  $region15: #{densenet_forward.31} parent=0 // pred_check_branch
    %16 = sbr.rel (0) target = $region17
  $region16: #{densenet_forward.31} parent=0 // pred_region
    _
  $region17: #{densenet_forward.31} parent=0 // pred_fallthru
    _
  %v18 = vld [vmem:[%s0] sm:$0xf]
  %v19 = vld [vmem:[%s0 + $0x4] sm:$0xf]
  %v20 = vld [vmem:[%s0 + $0x8] sm:$0xf]
  %v21 = vld [vmem:[%s0 + $0xc] sm:$0xf]
  %v22 = vld [vmem:[%s0 + $0x10] sm:$0xf]
  %v23 = vld [vmem:[%s0 + $0x14] sm:$0xf]
  %v24 = vld [vmem:[%s0 + $0x18] sm:$0xf]
  %v25 = vld [vmem:[%s0 + $0x1c] sm:$0xf]
  %v26 = vld [vmem:[%s0 + $0x20] sm:$0xf]
  %v27 = vld [vmem:[%s0 + $0x24] sm:$0xf]
  %v28 = vld [vmem:[%s0 + $0x28] sm:$0xf]
  %v29 = vld [vmem:[%s0 + $0x2c] sm:$0xf]
  %v30 = vld [vmem:[%s0 + $0x30] sm:$0xf]
  %v31 = vld [vmem:[%s0 + $0x34] sm:$0xf]
  %v32 = vld [vmem:[%s0 + $0x38] sm:$0xf]
  %v33 = vld [vmem:[%s0 + $0x3c] sm:$0xf]
  %v34 = vunpack.c.l.bf16 %v18
  %v35 = vunpack.c.l.bf16 %v19
  %v36 = vunpack.c.l.bf16 %v20
  %v37 = vunpack.c.l.bf16 %v21
  %v38 = vunpack.c.l.bf16 %v22
  %v39 = vunpack.c.l.bf16 %v23
  %v40 = vunpack.c.l.bf16 %v24
  %v41 = vunpack.c.l.bf16 %v25
  %v42 = vunpack.c.l.bf16 %v26
  %v43 = vunpack.c.l.bf16 %v27
  %v44 = vunpack.c.l.bf16 %v28
  %v45 = vunpack.c.l.bf16 %v29
  %v46 = vunpack.c.l.bf16 %v30
  %v47 = vunpack.c.l.bf16 %v31
  %v48 = vunpack.c.l.bf16 %v32
  %v49 = vunpack.c.l.bf16 %v33
  %v50 = vld [vmem:[%s2] sm:$0x1]
  %v52 = vlaneseq
  %v53 = vshrl.u32 %v52, 7
  %v54 = vsub.s32 0, %v53
  %v55 = vrot.slane %v50, %v54
  %v57 = vmul.f32 %v34, %v55
  %v58 = vmul.f32 %v35, %v55
  %v59 = vmul.f32 %v36, %v55
  %v60 = vmul.f32 %v37, %v55
  %v61 = vmul.f32 %v38, %v55
  %v62 = vmul.f32 %v39, %v55
  %v63 = vmul.f32 %v40, %v55
  %v64 = vmul.f32 %v41, %v55
  %v65 = vmul.f32 %v42, %v55
  %v66 = vmul.f32 %v43, %v55
  %v67 = vmul.f32 %v44, %v55
  %v68 = vmul.f32 %v45, %v55
  %v69 = vmul.f32 %v46, %v55
  %v70 = vmul.f32 %v47, %v55
  %v71 = vmul.f32 %v48, %v55
  %v72 = vmul.f32 %v49, %v55
  %v73 = vld [vmem:[%s3] sm:$0x1]
  %v75 = vlaneseq
  %v76 = vshrl.u32 %v75, 7
  %v77 = vsub.s32 0, %v76
  %v78 = vrot.slane %v73, %v77
  %v80 = vadd.f32 %v57, %v78
  %v81 = vadd.f32 %v58, %v78
  %v82 = vadd.f32 %v59, %v78
  %v83 = vadd.f32 %v60, %v78
  %v84 = vadd.f32 %v61, %v78
  %v85 = vadd.f32 %v62, %v78
  %v86 = vadd.f32 %v63, %v78
  %v87 = vadd.f32 %v64, %v78
  %v88 = vadd.f32 %v65, %v78
  %v89 = vadd.f32 %v66, %v78
  %v90 = vadd.f32 %v67, %v78
  %v91 = vadd.f32 %v68, %v78
  %v92 = vadd.f32 %v69, %v78
  %v93 = vadd.f32 %v70, %v78
  %v94 = vadd.f32 %v71, %v78
  %v95 = vadd.f32 %v72, %v78
  %v96 = vmax.f32 %v80, 0.0
  %v97 = vmax.f32 %v81, 0.0
  %v98 = vmax.f32 %v82, 0.0
  %v99 = vmax.f32 %v83, 0.0
  %v100 = vmax.f32 %v84, 0.0
  %v101 = vmax.f32 %v85, 0.0
  %v102 = vmax.f32 %v86, 0.0
  %v103 = vmax.f32 %v87, 0.0
  %v104 = vmax.f32 %v88, 0.0
  %v105 = vmax.f32 %v89, 0.0
  %v106 = vmax.f32 %v90, 0.0
  %v107 = vmax.f32 %v91, 0.0
  %v108 = vmax.f32 %v92, 0.0
  %v109 = vmax.f32 %v93, 0.0
  %v110 = vmax.f32 %v94, 0.0
  %v111 = vmax.f32 %v95, 0.0
  %v112 = vpack.c.bf16 %v97, %v96
  %v113 = vpack.c.bf16 %v99, %v98
  %v114 = vpack.c.bf16 %v101, %v100
  %v115 = vpack.c.bf16 %v103, %v102
  %v116 = vpack.c.bf16 %v105, %v104
  %v117 = vpack.c.bf16 %v107, %v106
  %v118 = vpack.c.bf16 %v109, %v108
  %v119 = vpack.c.bf16 %v111, %v110
  %v120 = vld [vmem:[%s1] sm:$0xf]
  %v121 = vld [vmem:[%s1 + $0x4] sm:$0xf]
  %v122 = vld [vmem:[%s1 + $0x8] sm:$0xf]
  %v123 = vld [vmem:[%s1 + $0xc] sm:$0xf]
  %v124 = vld [vmem:[%s1 + $0x10] sm:$0xf]
  %v125 = vld [vmem:[%s1 + $0x14] sm:$0xf]
  %v126 = vld [vmem:[%s1 + $0x18] sm:$0xf]
  %v127 = vld [vmem:[%s1 + $0x1c] sm:$0xf]
  %v128 = vld [vmem:[%s1 + $0x20] sm:$0xf]
  %v129 = vld [vmem:[%s1 + $0x24] sm:$0xf]
  %v130 = vld [vmem:[%s1 + $0x28] sm:$0xf]
  %v131 = vld [vmem:[%s1 + $0x2c] sm:$0xf]
  %v132 = vld [vmem:[%s1 + $0x30] sm:$0xf]
  %v133 = vld [vmem:[%s1 + $0x34] sm:$0xf]
  %v134 = vld [vmem:[%s1 + $0x38] sm:$0xf]
  %v135 = vld [vmem:[%s1 + $0x3c] sm:$0xf]
  %v152 = vunpack.c.l.b16 %v120
  %v153 = vunpack.c.l.b16 %v121
  %v154 = vunpack.c.l.b16 %v122
  %v155 = vunpack.c.l.b16 %v123
  %v156 = vunpack.c.l.b16 %v124
  %v157 = vunpack.c.l.b16 %v125
  %v158 = vunpack.c.l.b16 %v126
  %v159 = vunpack.c.l.b16 %v127
  %v160 = vunpack.c.l.b16 %v128
  %v161 = vunpack.c.l.b16 %v129
  %v162 = vunpack.c.l.b16 %v130
  %v163 = vunpack.c.l.b16 %v131
  %v164 = vunpack.c.l.b16 %v132
  %v165 = vunpack.c.l.b16 %v133
  %v166 = vunpack.c.l.b16 %v134
  %v167 = vunpack.c.l.b16 %v135
  %v168 = vpack.c.b16 %v153, %v152
  %v169 = vpack.c.b16 %v155, %v154
  %v170 = vpack.c.b16 %v157, %v156
  %v171 = vpack.c.b16 %v159, %v158
  %v172 = vpack.c.b16 %v161, %v160
  %v173 = vpack.c.b16 %v163, %v162
  %v174 = vpack.c.b16 %v165, %v164
  %v175 = vpack.c.b16 %v167, %v166
  %184 = vmatprep.subr.bf16.mxu0 0
  %185 = vmatpush1.bf16.msra.mxu0 %v175
  %186 = vmatprep.subr.bf16.mxu0 0
  %187 = vmatpush1.bf16.msra.mxu0 %v174
  %188 = vmatprep.subr.bf16.mxu0 0
  %189 = vmatpush1.bf16.msra.mxu0 %v173
  %190 = vmatprep.subr.bf16.mxu0 0
  %191 = vmatpush1.bf16.msra.mxu0 %v172
  %192 = vmatprep.subr.bf16.mxu0 0
  %193 = vmatpush1.bf16.msra.mxu0 %v171
  %194 = vmatprep.subr.bf16.mxu0 0
  %195 = vmatpush1.bf16.msra.mxu0 %v170
  %196 = vmatprep.subr.bf16.mxu0 0
  %197 = vmatpush1.bf16.msra.mxu0 %v169
  %198 = vmatprep.subr.bf16.mxu0 0
  %199 = vmatpush1.bf16.msra.mxu0 %v168
  %200 = vmatprep.subr.bf16.mxu0 0
  %201 = vmatpush2.bf16.msra.mxu0 0
  %202 = vmatprep.subr.bf16.mxu0 0
  %203 = vmatpush2.bf16.msra.mxu0 0
  %204 = vmatprep.subr.bf16.mxu0 0
  %205 = vmatpush2.bf16.msra.mxu0 0
  %206 = vmatprep.subr.bf16.mxu0 0
  %207 = vmatpush2.bf16.msra.mxu0 0
  %208 = vmatprep.subr.bf16.mxu0 0
  %209 = vmatpush2.bf16.msra.mxu0 0
  %210 = vmatprep.subr.bf16.mxu0 0
  %211 = vmatpush2.bf16.msra.mxu0 0
  %212 = vmatprep.subr.bf16.mxu0 0
  %213 = vmatpush2.bf16.msra.mxu0 0
  %214 = vmatprep.subr.bf16.mxu0 0
  %215 = vmatpush2.bf16.msra.mxu0 0
  %216 = vmatprep.mubr.bf16.mxu0 0
  %217 = vmatmul.mubr.bf16.gmra.mxu0 %v112
  %v218 = vpop.f32.mrf.mxu0
  %v219 = vadd.f32 0.0, %v218
  %v220 = vpop.f32.mrf.mxu0
  %v221 = vpop.f32.mrf.mxu0
  %v222 = vadd.f32 0.0, %v221
  %v223 = vpop.f32.mrf.mxu0
  %224 = vmatprep.mubr.bf16.mxu0 0
  %225 = vmatmul.mubr.bf16.gmra.mxu0 %v113
  %v226 = vpop.f32.mrf.mxu0
  %v227 = vadd.f32 0.0, %v226
  %v228 = vpop.f32.mrf.mxu0
  %v229 = vpop.f32.mrf.mxu0
  %v230 = vadd.f32 0.0, %v229
  %v231 = vpop.f32.mrf.mxu0
  %232 = vmatprep.mubr.bf16.mxu0 0
  %233 = vmatmul.mubr.bf16.gmra.mxu0 %v114
  %v234 = vpop.f32.mrf.mxu0
  %v235 = vadd.f32 0.0, %v234
  %v236 = vpop.f32.mrf.mxu0
  %v237 = vpop.f32.mrf.mxu0
  %v238 = vadd.f32 0.0, %v237
  %v239 = vpop.f32.mrf.mxu0
  %240 = vmatprep.mubr.bf16.mxu0 0
  %241 = vmatmul.mubr.bf16.gmra.mxu0 %v115
  %v242 = vpop.f32.mrf.mxu0
  %v243 = vadd.f32 0.0, %v242
  %v244 = vpop.f32.mrf.mxu0
  %v245 = vpop.f32.mrf.mxu0
  %v246 = vadd.f32 0.0, %v245
  %v247 = vpop.f32.mrf.mxu0
  %248 = vmatprep.mubr.bf16.mxu0 0
  %249 = vmatmul.mubr.bf16.gmra.mxu0 %v116
  %v250 = vpop.f32.mrf.mxu0
  %v251 = vadd.f32 0.0, %v250
  %v252 = vpop.f32.mrf.mxu0
  %v253 = vpop.f32.mrf.mxu0
  %v254 = vadd.f32 0.0, %v253
  %v255 = vpop.f32.mrf.mxu0
  %256 = vmatprep.mubr.bf16.mxu0 0
  %257 = vmatmul.mubr.bf16.gmra.mxu0 %v117
  %v258 = vpop.f32.mrf.mxu0
  %v259 = vadd.f32 0.0, %v258
  %v260 = vpop.f32.mrf.mxu0
  %v261 = vpop.f32.mrf.mxu0
  %v262 = vadd.f32 0.0, %v261
  %v263 = vpop.f32.mrf.mxu0
  %264 = vmatprep.mubr.bf16.mxu0 0
  %265 = vmatmul.mubr.bf16.gmra.mxu0 %v118
  %v266 = vpop.f32.mrf.mxu0
  %v267 = vadd.f32 0.0, %v266
  %v268 = vpop.f32.mrf.mxu0
  %v269 = vpop.f32.mrf.mxu0
  %v270 = vadd.f32 0.0, %v269
  %v271 = vpop.f32.mrf.mxu0
  %272 = vmatprep.mubr.bf16.mxu0 0
  %273 = vmatmul.mubr.bf16.gmra.mxu0 %v119
  %v274 = vpop.f32.mrf.mxu0
  %v275 = vadd.f32 0.0, %v274
  %v276 = vpop.f32.mrf.mxu0
  %v277 = vpop.f32.mrf.mxu0
  %v278 = vadd.f32 0.0, %v277
  %v279 = vpop.f32.mrf.mxu0
  %280 = vdwg.mxu0
  %v281 = vpack.c.bf16 %v222, %v219
  %v282 = vpack.c.bf16 %v230, %v227
  %v283 = vpack.c.bf16 %v238, %v235
  %v284 = vpack.c.bf16 %v246, %v243
  %v285 = vpack.c.bf16 %v254, %v251
  %v286 = vpack.c.bf16 %v262, %v259
  %v287 = vpack.c.bf16 %v270, %v267
  %v288 = vpack.c.bf16 %v278, %v275
  %v297 = vunpack.c.l.b16 %v281
  %v298 = vunpack.c.h.b16 %v281
  %v299 = vunpack.c.l.b16 %v282
  %v300 = vunpack.c.h.b16 %v282
  %v301 = vunpack.c.l.b16 %v283
  %v302 = vunpack.c.h.b16 %v283
  %v303 = vunpack.c.l.b16 %v284
  %v304 = vunpack.c.h.b16 %v284
  %v305 = vunpack.c.l.b16 %v285
  %v306 = vunpack.c.h.b16 %v285
  %v307 = vunpack.c.l.b16 %v286
  %v308 = vunpack.c.h.b16 %v286
  %v309 = vunpack.c.l.b16 %v287
  %v310 = vunpack.c.h.b16 %v287
  %v311 = vunpack.c.l.b16 %v288
  %v312 = vunpack.c.h.b16 %v288
  %v313 = vpack.c.b16 %v297, %v297
  %v314 = vpack.c.b16 %v298, %v298
  %v315 = vpack.c.b16 %v299, %v299
  %v316 = vpack.c.b16 %v300, %v300
  %v317 = vpack.c.b16 %v301, %v301
  %v318 = vpack.c.b16 %v302, %v302
  %v319 = vpack.c.b16 %v303, %v303
  %v320 = vpack.c.b16 %v304, %v304
  %v321 = vpack.c.b16 %v305, %v305
  %v322 = vpack.c.b16 %v306, %v306
  %v323 = vpack.c.b16 %v307, %v307
  %v324 = vpack.c.b16 %v308, %v308
  %v325 = vpack.c.b16 %v309, %v309
  %v326 = vpack.c.b16 %v310, %v310
  %v327 = vpack.c.b16 %v311, %v311
  %v328 = vpack.c.b16 %v312, %v312
  %345 = vst [vmem:[%s4] sm:$0xf] %v313
  %346 = vst [vmem:[%s4 + $0x4] sm:$0xf] %v314
  %347 = vst [vmem:[%s4 + $0x8] sm:$0xf] %v315
  %348 = vst [vmem:[%s4 + $0xc] sm:$0xf] %v316
  %349 = vst [vmem:[%s4 + $0x10] sm:$0xf] %v317
  %350 = vst [vmem:[%s4 + $0x14] sm:$0xf] %v318
  %351 = vst [vmem:[%s4 + $0x18] sm:$0xf] %v319
  %352 = vst [vmem:[%s4 + $0x1c] sm:$0xf] %v320
  %353 = vst [vmem:[%s4 + $0x20] sm:$0xf] %v321
  %354 = vst [vmem:[%s4 + $0x24] sm:$0xf] %v322
  %355 = vst [vmem:[%s4 + $0x28] sm:$0xf] %v323
  %356 = vst [vmem:[%s4 + $0x2c] sm:$0xf] %v324
  %357 = vst [vmem:[%s4 + $0x30] sm:$0xf] %v325
  %358 = vst [vmem:[%s4 + $0x34] sm:$0xf] %v326
  %359 = vst [vmem:[%s4 + $0x38] sm:$0xf] %v327
  %360 = vst [vmem:[%s4 + $0x3c] sm:$0xf] %v328
  // Predicated region
  $region18: #{densenet_forward.31} parent=0 // pred_check
    _
  $region19: #{densenet_forward.31} parent=0 // pred_check_branch
    %362 = sbr.rel (0) target = $region21
  $region20: #{densenet_forward.31} parent=0 // pred_region
    _
  $region21: #{densenet_forward.31} parent=0 // pred_fallthru
    _
  // Predicated region
  $region22: #{densenet_forward.31} parent=0 // pred_check
    _
  $region23: #{densenet_forward.31} parent=0 // pred_check_branch
    %364 = sbr.rel (0) target = $region25
  $region24: #{densenet_forward.31} parent=0 // pred_region
    _
  $region25: #{densenet_forward.31} parent=0 // pred_fallthru
    _

// kernel: densenet_forward.32
$region0: #{densenet_forward.32}
  #allocation0 [shape = 'u32[]', space=smem, size = 0x4, offset = 0x4, fixed_abs, tag = 'smem constant byte address 0x4 - core index']
  #allocation1 [shape = 'u32[144,128]{1,0:T(1,128)}', space=vmem, size = 0x12000, scoped, tag = 'internal scratch']
  %s0 = inlined_call_operand.vmem [shape: bf16[4,32,16], index: 0, kind: input, shape index: {}]
  %s1 = inlined_call_operand.vmem [shape: bf16[32,16], index: 1, kind: output, shape index: {}]
  %s2 = sld [smem:[#allocation0]]
  $region14: #{densenet_forward.32} parent=0
    _
  %s4 = ssub.s32 1, %s2
  %s5 = scalar_select 0, %s4, %s2
  // Predicated region
  $region2: #{densenet_forward.32} parent=0 // pred_check
    _
  $region3: #{densenet_forward.32} parent=0 // pred_check_branch
    %7 = sbr.rel (0) target = $region5
  $region4: #{densenet_forward.32} parent=0 // pred_region
    _
  $region5: #{densenet_forward.32} parent=0 // pred_fallthru
    _
  %v8 = vld [vmem:[%s0] sm:$0xf]
  %v9 = vld [vmem:[%s0 + $0x4] sm:$0xf]
  %v10 = vld [vmem:[%s0 + $0x8] sm:$0xf]
  %v11 = vld [vmem:[%s0 + $0xc] sm:$0xf]
  %v12 = vld [vmem:[%s0 + $0x10] sm:$0xf]
  %v13 = vld [vmem:[%s0 + $0x14] sm:$0xf]
  %v14 = vld [vmem:[%s0 + $0x18] sm:$0xf]
  %v15 = vld [vmem:[%s0 + $0x1c] sm:$0xf]
  %v16 = vld [vmem:[%s0 + $0x20] sm:$0xf]
  %v17 = vld [vmem:[%s0 + $0x24] sm:$0xf]
  %v18 = vld [vmem:[%s0 + $0x28] sm:$0xf]
  %v19 = vld [vmem:[%s0 + $0x2c] sm:$0xf]
  %v20 = vld [vmem:[%s0 + $0x30] sm:$0xf]
  %v21 = vld [vmem:[%s0 + $0x34] sm:$0xf]
  %v22 = vld [vmem:[%s0 + $0x38] sm:$0xf]
  %v23 = vld [vmem:[%s0 + $0x3c] sm:$0xf]
  %v24 = vunpack.c.l.bf16 %v8
  %v25 = vunpack.c.l.bf16 %v9
  %v26 = vunpack.c.l.bf16 %v10
  %v27 = vunpack.c.l.bf16 %v11
  %v28 = vunpack.c.l.bf16 %v12
  %v29 = vunpack.c.l.bf16 %v13
  %v30 = vunpack.c.l.bf16 %v14
  %v31 = vunpack.c.l.bf16 %v15
  %v32 = vunpack.c.l.bf16 %v16
  %v33 = vunpack.c.l.bf16 %v17
  %v34 = vunpack.c.l.bf16 %v18
  %v35 = vunpack.c.l.bf16 %v19
  %v36 = vunpack.c.l.bf16 %v20
  %v37 = vunpack.c.l.bf16 %v21
  %v38 = vunpack.c.l.bf16 %v22
  %v39 = vunpack.c.l.bf16 %v23
  %vm40 = vcmask 130048
  %v41 = vsel %vm40, %v24, 0.0
  %v42 = vsel %vm40, %v28, 0.0
  %v43 = vadd.f32 %v41, %v42
  %v44 = vsel %vm40, %v32, 0.0
  %v45 = vadd.f32 %v43, %v44
  %v46 = vsel %vm40, %v36, 0.0
  %v47 = vadd.f32 %v45, %v46
  %v48 = vsel %vm40, %v25, 0.0
  %v49 = vsel %vm40, %v29, 0.0
  %v50 = vadd.f32 %v48, %v49
  %v51 = vsel %vm40, %v33, 0.0
  %v52 = vadd.f32 %v50, %v51
  %v53 = vsel %vm40, %v37, 0.0
  %v54 = vadd.f32 %v52, %v53
  %v55 = vsel %vm40, %v26, 0.0
  %v56 = vsel %vm40, %v30, 0.0
  %v57 = vadd.f32 %v55, %v56
  %v58 = vsel %vm40, %v34, 0.0
  %v59 = vadd.f32 %v57, %v58
  %v60 = vsel %vm40, %v38, 0.0
  %v61 = vadd.f32 %v59, %v60
  %v62 = vsel %vm40, %v27, 0.0
  %v63 = vsel %vm40, %v31, 0.0
  %v64 = vadd.f32 %v62, %v63
  %v65 = vsel %vm40, %v35, 0.0
  %v66 = vadd.f32 %v64, %v65
  %v67 = vsel %vm40, %v39, 0.0
  %v68 = vadd.f32 %v66, %v67
  %v69 = vmul.f32 %v47, 0.25
  %v70 = vmul.f32 %v54, 0.25
  %v71 = vmul.f32 %v61, 0.25
  %v72 = vmul.f32 %v68, 0.25
  %v73 = vpack.c.bf16 %v70, %v69
  %v74 = vpack.c.bf16 %v72, %v71
  %v77 = vunpack.c.l.b16 %v73
  %v78 = vunpack.c.h.b16 %v73
  %v79 = vunpack.c.l.b16 %v74
  %v80 = vunpack.c.h.b16 %v74
  %v81 = vpack.c.b16 %v77, %v77
  %v82 = vpack.c.b16 %v78, %v78
  %v83 = vpack.c.b16 %v79, %v79
  %v84 = vpack.c.b16 %v80, %v80
  %vm89 = vcmask 125952
  %90 = vst.msk [vmem:[%s1] sm:$0xf] %vm89, %v81
  %91 = vst.msk [vmem:[%s1 + $0x4] sm:$0xf] %vm89, %v82
  %92 = vst.msk [vmem:[%s1 + $0x8] sm:$0xf] %vm89, %v83
  %93 = vst.msk [vmem:[%s1 + $0xc] sm:$0xf] %vm89, %v84
  // Predicated region
  $region6: #{densenet_forward.32} parent=0 // pred_check
    _
  $region7: #{densenet_forward.32} parent=0 // pred_check_branch
    %95 = sbr.rel (0) target = $region9
  $region8: #{densenet_forward.32} parent=0 // pred_region
    _
  $region9: #{densenet_forward.32} parent=0 // pred_fallthru
    _
  // Predicated region
  $region10: #{densenet_forward.32} parent=0 // pred_check
    _
  $region11: #{densenet_forward.32} parent=0 // pred_check_branch
    %97 = sbr.rel (0) target = $region13
  $region12: #{densenet_forward.32} parent=0 // pred_region
    _
  $region13: #{densenet_forward.32} parent=0 // pred_fallthru
    _

// kernel: densenet_forward.33
$region0: #{densenet_forward.33}
  #allocation0 [shape = 'u32[]', space=smem, size = 0x4, offset = 0x4, fixed_abs, tag = 'smem constant byte address 0x4 - core index']
  #allocation1 [shape = 'u32[144,128]{1,0:T(1,128)}', space=vmem, size = 0x12000, scoped, tag = 'internal scratch']
  %s0 = inlined_call_operand.vmem [shape: bf16[32,128], index: 0, kind: input, shape index: {}]
  %s1 = inlined_call_operand.vmem [shape: bf16[128,128], index: 1, kind: input, shape index: {}]
  %s2 = inlined_call_operand.vmem [shape: f32[1,128], index: 2, kind: input, shape index: {}]
  %s3 = inlined_call_operand.vmem [shape: f32[1,128], index: 3, kind: input, shape index: {}]
  %s4 = inlined_call_operand.vmem [shape: f32[1,128], index: 4, kind: input, shape index: {}]
  %s5 = inlined_call_operand.vmem [shape: bf16[32,128], index: 5, kind: output, shape index: {}]
  %s6 = sld [smem:[#allocation0]]
  $region30: #{densenet_forward.33} parent=0
    _
  %s8 = ssub.s32 1, %s6
  %s9 = scalar_select 0, %s8, %s6
  // Predicated region
  $region2: #{densenet_forward.33} parent=0 // pred_check
    _
  $region3: #{densenet_forward.33} parent=0 // pred_check_branch
    %11 = sbr.rel (0) target = $region5
  $region4: #{densenet_forward.33} parent=0 // pred_region
    _
  $region5: #{densenet_forward.33} parent=0 // pred_fallthru
    _
  // Predicated region
  $region6: #{densenet_forward.33} parent=0 // pred_check
    _
  $region7: #{densenet_forward.33} parent=0 // pred_check_branch
    %13 = sbr.rel (0) target = $region9
  $region8: #{densenet_forward.33} parent=0 // pred_region
    _
  $region9: #{densenet_forward.33} parent=0 // pred_fallthru
    _
  // Predicated region
  $region10: #{densenet_forward.33} parent=0 // pred_check
    _
  $region11: #{densenet_forward.33} parent=0 // pred_check_branch
    %15 = sbr.rel (0) target = $region13
  $region12: #{densenet_forward.33} parent=0 // pred_region
    _
  $region13: #{densenet_forward.33} parent=0 // pred_fallthru
    _
  // Predicated region
  $region14: #{densenet_forward.33} parent=0 // pred_check
    _
  $region15: #{densenet_forward.33} parent=0 // pred_check_branch
    %17 = sbr.rel (0) target = $region17
  $region16: #{densenet_forward.33} parent=0 // pred_region
    _
  $region17: #{densenet_forward.33} parent=0 // pred_fallthru
    _
  // Predicated region
  $region18: #{densenet_forward.33} parent=0 // pred_check
    _
  $region19: #{densenet_forward.33} parent=0 // pred_check_branch
    %19 = sbr.rel (0) target = $region21
  $region20: #{densenet_forward.33} parent=0 // pred_region
    _
  $region21: #{densenet_forward.33} parent=0 // pred_fallthru
    _
  %v21 = vld [vmem:[%s0] sm:$0xf]
  %v22 = vld [vmem:[%s0 + $0x4] sm:$0xf]
  %v23 = vld [vmem:[%s0 + $0x8] sm:$0xf]
  %v24 = vld [vmem:[%s0 + $0xc] sm:$0xf]
  %v25 = vunpack.c.l.bf16 %v21
  %v26 = vunpack.c.l.bf16 %v22
  %v27 = vunpack.c.l.bf16 %v23
  %v28 = vunpack.c.l.bf16 %v24
  %v29 = vld [vmem:[%s2] sm:$0x1]
  %v31 = vlaneseq
  %v32 = vshrl.u32 %v31, 7
  %v33 = vsub.s32 0, %v32
  %v34 = vrot.slane %v29, %v33
  %v36 = vmul.f32 %v25, %v34
  %v37 = vmul.f32 %v26, %v34
  %v38 = vmul.f32 %v27, %v34
  %v39 = vmul.f32 %v28, %v34
  %v40 = vld [vmem:[%s3] sm:$0x1]
  %v42 = vlaneseq
  %v43 = vshrl.u32 %v42, 7
  %v44 = vsub.s32 0, %v43
  %v45 = vrot.slane %v40, %v44
  %v47 = vadd.f32 %v36, %v45
  %v48 = vadd.f32 %v37, %v45
  %v49 = vadd.f32 %v38, %v45
  %v50 = vadd.f32 %v39, %v45
  %v51 = vmax.f32 %v47, 0.0
  %v52 = vmax.f32 %v48, 0.0
  %v53 = vmax.f32 %v49, 0.0
  %v54 = vmax.f32 %v50, 0.0
  %v55 = vpack.c.bf16 %v52, %v51
  %v56 = vpack.c.bf16 %v54, %v53
  %v57 = vld [vmem:[%s1] sm:$0xf]
  %v58 = vld [vmem:[%s1 + $0x4] sm:$0xf]
  %v59 = vld [vmem:[%s1 + $0x8] sm:$0xf]
  %v60 = vld [vmem:[%s1 + $0xc] sm:$0xf]
  %v61 = vld [vmem:[%s1 + $0x10] sm:$0xf]
  %v62 = vld [vmem:[%s1 + $0x14] sm:$0xf]
  %v63 = vld [vmem:[%s1 + $0x18] sm:$0xf]
  %v64 = vld [vmem:[%s1 + $0x1c] sm:$0xf]
  %v65 = vld [vmem:[%s1 + $0x20] sm:$0xf]
  %v66 = vld [vmem:[%s1 + $0x24] sm:$0xf]
  %v67 = vld [vmem:[%s1 + $0x28] sm:$0xf]
  %v68 = vld [vmem:[%s1 + $0x2c] sm:$0xf]
  %v69 = vld [vmem:[%s1 + $0x30] sm:$0xf]
  %v70 = vld [vmem:[%s1 + $0x34] sm:$0xf]
  %v71 = vld [vmem:[%s1 + $0x38] sm:$0xf]
  %v72 = vld [vmem:[%s1 + $0x3c] sm:$0xf]
  %v73 = vld [vmem:[%s4] sm:$0x1]
  %v75 = vlaneseq
  %v76 = vshrl.u32 %v75, 7
  %v77 = vsub.s32 0, %v76
  %v78 = vrot.slane %v73, %v77
  %v96 = vunpack.c.l.b16 %v57
  %v97 = vunpack.c.l.b16 %v58
  %v98 = vunpack.c.l.b16 %v59
  %v99 = vunpack.c.l.b16 %v60
  %v100 = vunpack.c.l.b16 %v61
  %v101 = vunpack.c.l.b16 %v62
  %v102 = vunpack.c.l.b16 %v63
  %v103 = vunpack.c.l.b16 %v64
  %v104 = vunpack.c.l.b16 %v65
  %v105 = vunpack.c.l.b16 %v66
  %v106 = vunpack.c.l.b16 %v67
  %v107 = vunpack.c.l.b16 %v68
  %v108 = vunpack.c.l.b16 %v69
  %v109 = vunpack.c.l.b16 %v70
  %v110 = vunpack.c.l.b16 %v71
  %v111 = vunpack.c.l.b16 %v72
  %v112 = vpack.c.b16 %v97, %v96
  %v113 = vpack.c.b16 %v99, %v98
  %v114 = vpack.c.b16 %v101, %v100
  %v115 = vpack.c.b16 %v103, %v102
  %v116 = vpack.c.b16 %v105, %v104
  %v117 = vpack.c.b16 %v107, %v106
  %v118 = vpack.c.b16 %v109, %v108
  %v119 = vpack.c.b16 %v111, %v110
  %128 = vmatprep.subr.bf16.mxu0 0
  %129 = vmatpush1.bf16.msra.mxu0 %v119
  %130 = vmatprep.subr.bf16.mxu0 0
  %131 = vmatpush1.bf16.msra.mxu0 %v118
  %132 = vmatprep.subr.bf16.mxu0 0
  %133 = vmatpush1.bf16.msra.mxu0 %v117
  %134 = vmatprep.subr.bf16.mxu0 0
  %135 = vmatpush1.bf16.msra.mxu0 %v116
  %136 = vmatprep.subr.bf16.mxu0 0
  %137 = vmatpush1.bf16.msra.mxu0 %v115
  %138 = vmatprep.subr.bf16.mxu0 0
  %139 = vmatpush1.bf16.msra.mxu0 %v114
  %140 = vmatprep.subr.bf16.mxu0 0
  %141 = vmatpush1.bf16.msra.mxu0 %v113
  %142 = vmatprep.subr.bf16.mxu0 0
  %143 = vmatpush1.bf16.msra.mxu0 %v112
  %144 = vmatprep.subr.bf16.mxu0 0
  %145 = vmatpush2.bf16.msra.mxu0 0
  %146 = vmatprep.subr.bf16.mxu0 0
  %147 = vmatpush2.bf16.msra.mxu0 0
  %148 = vmatprep.subr.bf16.mxu0 0
  %149 = vmatpush2.bf16.msra.mxu0 0
  %150 = vmatprep.subr.bf16.mxu0 0
  %151 = vmatpush2.bf16.msra.mxu0 0
  %152 = vmatprep.subr.bf16.mxu0 0
  %153 = vmatpush2.bf16.msra.mxu0 0
  %154 = vmatprep.subr.bf16.mxu0 0
  %155 = vmatpush2.bf16.msra.mxu0 0
  %156 = vmatprep.subr.bf16.mxu0 0
  %157 = vmatpush2.bf16.msra.mxu0 0
  %158 = vmatprep.subr.bf16.mxu0 0
  %159 = vmatpush2.bf16.msra.mxu0 0
  %160 = vmatprep.mubr.bf16.mxu0 0
  %161 = vmatmul.mubr.bf16.gmra.mxu0 %v55
  %v162 = vpop.f32.mrf.mxu0
  %v163 = vadd.f32 %v78, %v162
  %v164 = vpop.f32.mrf.mxu0
  %v165 = vpop.f32.mrf.mxu0
  %v166 = vadd.f32 %v78, %v165
  %v167 = vpop.f32.mrf.mxu0
  %168 = vmatprep.mubr.bf16.mxu0 0
  %169 = vmatmul.mubr.bf16.gmra.mxu0 %v56
  %v170 = vpop.f32.mrf.mxu0
  %v171 = vadd.f32 %v78, %v170
  %v172 = vpop.f32.mrf.mxu0
  %v173 = vpop.f32.mrf.mxu0
  %v174 = vadd.f32 %v78, %v173
  %v175 = vpop.f32.mrf.mxu0
  %176 = vdwg.mxu0
  %v177 = vmax.f32 %v163, 0.0
  %v178 = vmax.f32 %v166, 0.0
  %v179 = vmax.f32 %v171, 0.0
  %v180 = vmax.f32 %v174, 0.0
  %v181 = vpack.c.bf16 %v178, %v177
  %v182 = vpack.c.bf16 %v180, %v179
  %v185 = vunpack.c.l.b16 %v181
  %v186 = vunpack.c.h.b16 %v181
  %v187 = vunpack.c.l.b16 %v182
  %v188 = vunpack.c.h.b16 %v182
  %v189 = vpack.c.b16 %v185, %v185
  %v190 = vpack.c.b16 %v186, %v186
  %v191 = vpack.c.b16 %v187, %v187
  %v192 = vpack.c.b16 %v188, %v188
  %197 = vst [vmem:[%s5] sm:$0xf] %v189
  %198 = vst [vmem:[%s5 + $0x4] sm:$0xf] %v190
  %199 = vst [vmem:[%s5 + $0x8] sm:$0xf] %v191
  %200 = vst [vmem:[%s5 + $0xc] sm:$0xf] %v192
  // Predicated region
  $region22: #{densenet_forward.33} parent=0 // pred_check
    _
  $region23: #{densenet_forward.33} parent=0 // pred_check_branch
    %202 = sbr.rel (0) target = $region25
  $region24: #{densenet_forward.33} parent=0 // pred_region
    _
  $region25: #{densenet_forward.33} parent=0 // pred_fallthru
    _
  // Predicated region
  $region26: #{densenet_forward.33} parent=0 // pred_check
    _
  $region27: #{densenet_forward.33} parent=0 // pred_check_branch
    %204 = sbr.rel (0) target = $region29
  $region28: #{densenet_forward.33} parent=0 // pred_region
    _
  $region29: #{densenet_forward.33} parent=0 // pred_fallthru
    _

// kernel: densenet_forward.28
$region0: #{densenet_forward.28}
  #allocation0 [shape = 'u32[]', space=smem, size = 0x4, offset = 0x4, fixed_abs, tag = 'smem constant byte address 0x4 - core index']
  #allocation1 [shape = 'u32[144,128]{1,0:T(1,128)}', space=vmem, size = 0x12000, scoped, tag = 'internal scratch']
  %s0 = inlined_call_operand.vmem [shape: bf16[2,110,128], index: 0, kind: input, shape index: {}]
  %s1 = inlined_call_operand.vmem [shape: bf16[1152,8], index: 1, kind: input, shape index: {}]
  %s2 = inlined_call_operand.vmem [shape: bf16[2,80,8], index: 2, kind: output, shape index: {}]
  %s3 = sld [smem:[#allocation0]]
  $region41: #{densenet_forward.28} parent=0
    _
  %s5 = ssub.s32 1, %s3
  %s6 = scalar_select 0, %s5, %s3
  loop: start=0, step=1, limit=4
  $region2: #{densenet_forward.28} parent=0 // loop_pre_header
    _
  $region3: #{densenet_forward.28} parent=0 // loop_header
    %s8 = sphi 0, %s12
    %p9 = scmp.ge.s32.totalorder %s8, 4
    %s18 = sphi 0, %s20
    %s21 = sphi 0, %s18
    %s22 = sphi 0, %s21
    %s38 = sphi 0, %s22
    %s42 = sphi 0, %s42
    %s44 = sphi 0, %s42
    %s45 = sphi 0, %s44
    %s59 = sphi 0, %s45
    %s65 = sphi 0, %s67
    %s68 = sphi 0, %s65
    %s69 = sphi 0, %s68
    %s85 = sphi 0, %s69
  $region4: #{densenet_forward.28} parent=0 // loop_header_branch
    %11 = sbr.rel (%p9) target = $region8
  $region5: #{densenet_forward.28} parent=0 // loop_body
    %s13 = ssub.s32 %s8, 1
    %s14 = ssub.s32 %s8, 2
    %s15 = sadd.s32 %s8, 1
    %s16 = ssub.s32 %s8, %s15
    %p17 = scmp.eq.s32.totalorder %s16, 0
    %s19 = sadd.s32 %s18, 1
    %s20 = scalar_select %p17, %s18, %s19
    %p23 = pneg %p17
    %p24 = scmp.eq.s32.totalorder %s8, 1
    %p25 = por %p23, %p24
    %p26 = scmp.ne.s32.totalorder %s18, %s21
    %p27 = scmp.eq.s32.totalorder %s8, 0
    %p28 = por %p26, %p27
    %p29 = scmp.ne.s32.totalorder %s18, %s21
    %p30 = scmp.eq.s32.totalorder %s13, 1
    %p31 = por %p29, %p30
    %p32 = scmp.ne.s32.totalorder %s21, %s22
    %p33 = scmp.eq.s32.totalorder %s13, 0
    %p34 = por %p32, %p33
    %p35 = scmp.ne.s32.totalorder %s21, %s22
    %p36 = scmp.eq.s32.totalorder %s14, 1
    %p37 = por %p35, %p36
    %p39 = scmp.ne.s32.totalorder %s22, %s38
    %p40 = scmp.eq.s32.totalorder %s14, 0
    %p41 = por %p39, %p40
    %s43 = sadd.s32 %s42, 1
    %p46 = scmp.eq.s32.totalorder %s8, 1
    %p47 = scmp.ne.s32.totalorder %s42, %s44
    %p48 = scmp.eq.s32.totalorder %s8, 0
    %p49 = por %p47, %p48
    %p50 = scmp.ne.s32.totalorder %s42, %s44
    %p51 = scmp.eq.s32.totalorder %s13, 1
    %p52 = por %p50, %p51
    %p53 = scmp.ne.s32.totalorder %s44, %s45
    %p54 = scmp.eq.s32.totalorder %s13, 0
    %p55 = por %p53, %p54
    %p56 = scmp.ne.s32.totalorder %s44, %s45
    %p57 = scmp.eq.s32.totalorder %s14, 1
    %p58 = por %p56, %p57
    %p60 = scmp.ne.s32.totalorder %s45, %s59
    %p61 = scmp.eq.s32.totalorder %s14, 0
    %p62 = por %p60, %p61
    %s63 = ssub.s32 %s8, %s15
    %p64 = scmp.eq.s32.totalorder %s63, 0
    %s66 = sadd.s32 %s65, 1
    %s67 = scalar_select %p64, %s65, %s66
    %p70 = pneg %p64
    %p71 = scmp.eq.s32.totalorder %s8, 1
    %p72 = por %p70, %p71
    %p73 = scmp.ne.s32.totalorder %s65, %s68
    %p74 = scmp.eq.s32.totalorder %s8, 0
    %p75 = por %p73, %p74
    %p76 = scmp.ne.s32.totalorder %s65, %s68
    %p77 = scmp.eq.s32.totalorder %s13, 1
    %p78 = por %p76, %p77
    %p79 = scmp.ne.s32.totalorder %s68, %s69
    %p80 = scmp.eq.s32.totalorder %s13, 0
    %p81 = por %p79, %p80
    %p82 = scmp.ne.s32.totalorder %s68, %s69
    %p83 = scmp.eq.s32.totalorder %s14, 1
    %p84 = por %p82, %p83
    %p86 = scmp.ne.s32.totalorder %s69, %s85
    %p87 = scmp.eq.s32.totalorder %s14, 0
    %p88 = por %p86, %p87
    %p89 = scmp.le.s32.totalorder 1, %s8
    %p90 = scmp.lt.s32.totalorder %s8, 3
    %p91 = pnand %p89, %p90
    %p92 = pneg %p91
    // Predicated region
    $region9: #{densenet_forward.28} parent=5 // pred_check
      _
    $region10: #{densenet_forward.28} parent=5 // pred_check_branch
      %94 = sbr.rel (%p91) target = $region12
    $region11: #{densenet_forward.28} parent=5 // pred_region
      %s95 = ssub.s32 %s8, 1
      // Predicated region
      $region13: #{densenet_forward.28} parent=11 // pred_check
        %p96 = pneg %p55
      $region14: #{densenet_forward.28} parent=11 // pred_check_branch
        %98 = sbr.rel (%p96) target = $region16
      $region15: #{densenet_forward.28} parent=11 // pred_region
        _
      $region16: #{densenet_forward.28} parent=11 // pred_fallthru
        _
    $region12: #{densenet_forward.28} parent=5 // pred_fallthru
      _
    %p99 = scmp.lt.s32.totalorder %s8, 2
    // Predicated region
    $region17: #{densenet_forward.28} parent=5 // pred_check
      %p100 = pneg %p99
    $region18: #{densenet_forward.28} parent=5 // pred_check_branch
      %102 = sbr.rel (%p100) target = $region20
    $region19: #{densenet_forward.28} parent=5 // pred_region
      // Predicated region
      $region21: #{densenet_forward.28} parent=19 // pred_check
        %p103 = pneg %p28
      $region22: #{densenet_forward.28} parent=19 // pred_check_branch
        %105 = sbr.rel (%p103) target = $region24
      $region23: #{densenet_forward.28} parent=19 // pred_region
        %p106 = scmp.lt.s32.totalorder %s8, 1
        %s107 = scalar_select %p106, %s8, 1
        %s108 = smul.addr %s107, 14
        %s109 = smul.addr %s108, 4
        %s110 = scalar_lea.vmem %s0, %s109
      $region24: #{densenet_forward.28} parent=19 // pred_fallthru
        _
    $region20: #{densenet_forward.28} parent=5 // pred_fallthru
      _
    %p111 = scmp.le.s32.totalorder 1, %s8
    %p112 = scmp.lt.s32.totalorder %s8, 3
    %p113 = pnand %p111, %p112
    %p114 = pneg %p113
    // Predicated region
    $region25: #{densenet_forward.28} parent=5 // pred_check
      _
    $region26: #{densenet_forward.28} parent=5 // pred_check_branch
      %116 = sbr.rel (%p113) target = $region28
    $region27: #{densenet_forward.28} parent=5 // pred_region
      %s117 = ssub.s32 %s8, 1
      %p118 = scmp.lt.s32.totalorder %s13, 1
      %s119 = scalar_select %p118, %s13, 1
      %s120 = smul.addr %s119, 14
      %s121 = smul.addr %s120, 4
      %s122 = scalar_lea.vmem %s0, %s121
      %p123 = pneg %p34
      %p124 = pneg %p31
      %p125 = pneg %p55
      %p126 = pneg %p52
      %p127 = pneg %p81
      %p128 = pneg %p78
      %p129 = scmp.lt.s32.totalorder %s13, 1
      %s130 = scalar_select %p129, %s13, 1
      %s131 = smul.addr %s130, 10
      %s132 = smul.addr %s131, 4
      %s133 = scalar_lea.vmem %s2, %s132
      %p134 = scmp.lt.s32.totalorder %s13, 1
      %s135 = scalar_select %p134, %s13, 1
      %s136 = smul.addr %s135, 14
      %s137 = smul.addr %s136, 4
      %s138 = scalar_lea.vmem %s0, %s137
      %p139 = scmp.lt.s32.totalorder %s13, 1
      %s140 = scalar_select %p139, %s13, 1
      %s141 = smul.addr %s140, 10
      %s142 = smul.addr %s141, 4
      %s143 = scalar_lea.vmem %s2, %s142
      %v145 = vld [vmem:[%s138] sm:$0xf]
      %v146 = vld [vmem:[%s138 + $0x4] sm:$0xf]
      %v147 = vld [vmem:[%s138 + $0x8] sm:$0xf]
      %v148 = vld [vmem:[%s138 + $0xc] sm:$0xf]
      %v149 = vld [vmem:[%s138 + $0x10] sm:$0xf]
      %v150 = vld [vmem:[%s138 + $0x14] sm:$0xf]
      %v151 = vld [vmem:[%s138 + $0x18] sm:$0xf]
      %v152 = vld [vmem:[%s138 + $0x1c] sm:$0xf]
      %v153 = vld [vmem:[%s138 + $0x20] sm:$0xf]
      %v154 = vld [vmem:[%s138 + $0x24] sm:$0xf]
      %v155 = vld [vmem:[%s1] sm:$0xf]
      %v156 = vld [vmem:[%s1 + $0x4] sm:$0xf]
      %v157 = vld [vmem:[%s1 + $0x8] sm:$0xf]
      %v158 = vld [vmem:[%s1 + $0xc] sm:$0xf]
      %v159 = vld [vmem:[%s1 + $0x10] sm:$0xf]
      %v160 = vld [vmem:[%s1 + $0x14] sm:$0xf]
      %v161 = vld [vmem:[%s1 + $0x18] sm:$0xf]
      %v162 = vld [vmem:[%s1 + $0x1c] sm:$0xf]
      %v163 = vld [vmem:[%s1 + $0x20] sm:$0xf]
      %v164 = vld [vmem:[%s1 + $0x24] sm:$0xf]
      %v165 = vld [vmem:[%s1 + $0x28] sm:$0xf]
      %v166 = vld [vmem:[%s1 + $0x2c] sm:$0xf]
      %v167 = vld [vmem:[%s1 + $0x30] sm:$0xf]
      %v168 = vld [vmem:[%s1 + $0x34] sm:$0xf]
      %v169 = vld [vmem:[%s1 + $0x38] sm:$0xf]
      %v170 = vld [vmem:[%s1 + $0x3c] sm:$0xf]
      %v171 = vld [vmem:[%s138 + $0x28] sm:$0x1]
      %v172 = vld [vmem:[%s1 + $0x40] sm:$0xf]
      %v173 = vld [vmem:[%s1 + $0x44] sm:$0xf]
      %v174 = vld [vmem:[%s1 + $0x48] sm:$0xf]
      %v175 = vld [vmem:[%s1 + $0x4c] sm:$0xf]
      %v176 = vld [vmem:[%s1 + $0x50] sm:$0xf]
      %v177 = vld [vmem:[%s1 + $0x54] sm:$0xf]
      %v178 = vld [vmem:[%s1 + $0x58] sm:$0xf]
      %v179 = vld [vmem:[%s1 + $0x5c] sm:$0xf]
      %v180 = vld [vmem:[%s1 + $0x60] sm:$0xf]
      %v181 = vld [vmem:[%s1 + $0x64] sm:$0xf]
      %v182 = vld [vmem:[%s1 + $0x68] sm:$0xf]
      %v183 = vld [vmem:[%s1 + $0x6c] sm:$0xf]
      %v184 = vld [vmem:[%s1 + $0x70] sm:$0xf]
      %v185 = vld [vmem:[%s1 + $0x74] sm:$0xf]
      %v186 = vld [vmem:[%s1 + $0x78] sm:$0xf]
      %v187 = vld [vmem:[%s1 + $0x7c] sm:$0xf]
      %v199 = vunpack.c.l.b16 %v145
      %v200 = vunpack.c.l.b16 %v146
      %v201 = vunpack.c.l.b16 %v147
      %v202 = vunpack.c.l.b16 %v148
      %v203 = vunpack.c.l.b16 %v149
      %v204 = vunpack.c.l.b16 %v150
      %v205 = vunpack.c.l.b16 %v151
      %v206 = vunpack.c.l.b16 %v152
      %v207 = vunpack.c.l.b16 %v153
      %v208 = vunpack.c.l.b16 %v154
      %v209 = vunpack.c.l.b16 %v171
      %v210 = vpack.c.b16 %v200, %v199
      %v211 = vpack.c.b16 %v202, %v201
      %v212 = vpack.c.b16 %v204, %v203
      %v213 = vpack.c.b16 %v206, %v205
      %v214 = vpack.c.b16 %v208, %v207
      %v215 = vpack.c.b16 %v209, %v209
      %vm216 = vsmask.f32 7424
      %v218 = vshrl.u32 %v210, 16
      %v220 = vshll.u32 %v210, 16
      %v222 = vrot.slane %v220, 1
      %v223 = vor.u32 %v218, %v222
      %v225 = vshll.u32 %v211, 16
      %v227 = vrot.slane %v225, 1
      %v228 = vsel %vm216, %v223, %v227
      %v229 = vshrl.u32 %v211, 16
      %v231 = vor.u32 %v229, %v227
      %v233 = vshll.u32 %v212, 16
      %v235 = vrot.slane %v233, 1
      %v236 = vsel %vm216, %v231, %v235
      %v237 = vshrl.u32 %v212, 16
      %v239 = vor.u32 %v237, %v235
      %v241 = vshll.u32 %v213, 16
      %v243 = vrot.slane %v241, 1
      %v244 = vsel %vm216, %v239, %v243
      %v245 = vshrl.u32 %v213, 16
      %v247 = vor.u32 %v245, %v243
      %v249 = vshll.u32 %v214, 16
      %v251 = vrot.slane %v249, 1
      %v252 = vsel %vm216, %v247, %v251
      %v253 = vshrl.u32 %v214, 16
      %v255 = vor.u32 %v253, %v251
      %v257 = vshll.u32 %v215, 16
      %v259 = vrot.slane %v257, 1
      %v260 = vsel %vm216, %v255, %v259
      %v282 = vunpack.c.l.b16 %v172
      %v283 = vunpack.c.l.b16 %v173
      %v284 = vunpack.c.l.b16 %v174
      %v285 = vunpack.c.l.b16 %v175
      %v286 = vunpack.c.l.b16 %v176
      %v287 = vunpack.c.l.b16 %v177
      %v288 = vunpack.c.l.b16 %v178
      %v289 = vunpack.c.l.b16 %v179
      %v290 = vunpack.c.l.b16 %v180
      %v291 = vunpack.c.l.b16 %v181
      %v292 = vunpack.c.l.b16 %v182
      %v293 = vunpack.c.l.b16 %v183
      %v294 = vunpack.c.l.b16 %v184
      %v295 = vunpack.c.l.b16 %v185
      %v296 = vunpack.c.l.b16 %v186
      %v297 = vunpack.c.l.b16 %v187
      %v298 = vpack.c.b16 %v283, %v282
      %v299 = vpack.c.b16 %v285, %v284
      %v300 = vpack.c.b16 %v287, %v286
      %v301 = vpack.c.b16 %v289, %v288
      %v302 = vpack.c.b16 %v291, %v290
      %v303 = vpack.c.b16 %v293, %v292
      %v304 = vpack.c.b16 %v295, %v294
      %v305 = vpack.c.b16 %v297, %v296
      %314 = vmatprep.subr.bf16.mxu0 0
      %315 = vmatpush1.bf16.msra.mxu0 %v305
      %316 = vmatprep.subr.bf16.mxu0 0
      %317 = vmatpush1.bf16.msra.mxu0 %v304
      %318 = vmatprep.subr.bf16.mxu0 0
      %319 = vmatpush1.bf16.msra.mxu0 %v303
      %320 = vmatprep.subr.bf16.mxu0 0
      %321 = vmatpush1.bf16.msra.mxu0 %v302
      %322 = vmatprep.subr.bf16.mxu0 0
      %323 = vmatpush1.bf16.msra.mxu0 %v301
      %324 = vmatprep.subr.bf16.mxu0 0
      %325 = vmatpush1.bf16.msra.mxu0 %v300
      %326 = vmatprep.subr.bf16.mxu0 0
      %327 = vmatpush1.bf16.msra.mxu0 %v299
      %328 = vmatprep.subr.bf16.mxu0 0
      %329 = vmatpush1.bf16.msra.mxu0 %v298
      %330 = vmatprep.subr.bf16.mxu0 0
      %331 = vmatpush2.bf16.msra.mxu0 0
      %332 = vmatprep.subr.bf16.mxu0 0
      %333 = vmatpush2.bf16.msra.mxu0 0
      %334 = vmatprep.subr.bf16.mxu0 0
      %335 = vmatpush2.bf16.msra.mxu0 0
      %336 = vmatprep.subr.bf16.mxu0 0
      %337 = vmatpush2.bf16.msra.mxu0 0
      %338 = vmatprep.subr.bf16.mxu0 0
      %339 = vmatpush2.bf16.msra.mxu0 0
      %340 = vmatprep.subr.bf16.mxu0 0
      %341 = vmatpush2.bf16.msra.mxu0 0
      %342 = vmatprep.subr.bf16.mxu0 0
      %343 = vmatpush2.bf16.msra.mxu0 0
      %344 = vmatprep.subr.bf16.mxu0 0
      %345 = vmatpush2.bf16.msra.mxu0 0
      %346 = vmatprep.mubr.bf16.mxu0 0
      %347 = vmatmul.mubr.bf16.gmra.mxu0 %v228
      %v348 = vpop.f32.mrf.mxu0
      %v349 = vadd.f32 0.0, %v348
      %v350 = vpop.f32.mrf.mxu0
      %v351 = vpop.f32.mrf.mxu0
      %v352 = vadd.f32 0.0, %v351
      %v353 = vpop.f32.mrf.mxu0
      %354 = vmatprep.mubr.bf16.mxu0 0
      %355 = vmatmul.mubr.bf16.gmra.mxu0 %v236
      %v356 = vpop.f32.mrf.mxu0
      %v357 = vadd.f32 0.0, %v356
      %v358 = vpop.f32.mrf.mxu0
      %v359 = vpop.f32.mrf.mxu0
      %v360 = vadd.f32 0.0, %v359
      %v361 = vpop.f32.mrf.mxu0
      %362 = vmatprep.mubr.bf16.mxu0 0
      %363 = vmatmul.mubr.bf16.gmra.mxu0 %v244
      %v364 = vpop.f32.mrf.mxu0
      %v365 = vadd.f32 0.0, %v364
      %v366 = vpop.f32.mrf.mxu0
      %v367 = vpop.f32.mrf.mxu0
      %v368 = vadd.f32 0.0, %v367
      %v369 = vpop.f32.mrf.mxu0
      %370 = vmatprep.mubr.bf16.mxu0 0
      %371 = vmatmul.mubr.bf16.gmra.mxu0 %v252
      %v372 = vpop.f32.mrf.mxu0
      %v373 = vadd.f32 0.0, %v372
      %v374 = vpop.f32.mrf.mxu0
      %v375 = vpop.f32.mrf.mxu0
      %v376 = vadd.f32 0.0, %v375
      %v377 = vpop.f32.mrf.mxu0
      %378 = vmatprep.mubr.bf16.mxu0 0
      %379 = vmatmul.mubr.bf16.gmra.mxu0 %v260
      %v380 = vpop.f32.mrf.mxu0
      %v381 = vadd.f32 0.0, %v380
      %v382 = vpop.f32.mrf.mxu0
      %v383 = vpop.f32.mrf.mxu0
      %v384 = vadd.f32 0.0, %v383
      %v385 = vpop.f32.mrf.mxu0
      %386 = vdwg.mxu0
      %v408 = vunpack.c.l.b16 %v155
      %v409 = vunpack.c.l.b16 %v156
      %v410 = vunpack.c.l.b16 %v157
      %v411 = vunpack.c.l.b16 %v158
      %v412 = vunpack.c.l.b16 %v159
      %v413 = vunpack.c.l.b16 %v160
      %v414 = vunpack.c.l.b16 %v161
      %v415 = vunpack.c.l.b16 %v162
      %v416 = vunpack.c.l.b16 %v163
      %v417 = vunpack.c.l.b16 %v164
      %v418 = vunpack.c.l.b16 %v165
      %v419 = vunpack.c.l.b16 %v166
      %v420 = vunpack.c.l.b16 %v167
      %v421 = vunpack.c.l.b16 %v168
      %v422 = vunpack.c.l.b16 %v169
      %v423 = vunpack.c.l.b16 %v170
      %v424 = vpack.c.b16 %v409, %v408
      %v425 = vpack.c.b16 %v411, %v410
      %v426 = vpack.c.b16 %v413, %v412
      %v427 = vpack.c.b16 %v415, %v414
      %v428 = vpack.c.b16 %v417, %v416
      %v429 = vpack.c.b16 %v419, %v418
      %v430 = vpack.c.b16 %v421, %v420
      %v431 = vpack.c.b16 %v423, %v422
      %440 = vmatprep.subr.bf16.mxu0 0
      %441 = vmatpush1.bf16.msra.mxu0 %v431
      %442 = vmatprep.subr.bf16.mxu0 0
      %443 = vmatpush1.bf16.msra.mxu0 %v430
      %444 = vmatprep.subr.bf16.mxu0 0
      %445 = vmatpush1.bf16.msra.mxu0 %v429
      %446 = vmatprep.subr.bf16.mxu0 0
      %447 = vmatpush1.bf16.msra.mxu0 %v428
      %448 = vmatprep.subr.bf16.mxu0 0
      %449 = vmatpush1.bf16.msra.mxu0 %v427
      %450 = vmatprep.subr.bf16.mxu0 0
      %451 = vmatpush1.bf16.msra.mxu0 %v426
      %452 = vmatprep.subr.bf16.mxu0 0
      %453 = vmatpush1.bf16.msra.mxu0 %v425
      %454 = vmatprep.subr.bf16.mxu0 0
      %455 = vmatpush1.bf16.msra.mxu0 %v424
      %456 = vmatprep.subr.bf16.mxu0 0
      %457 = vmatpush2.bf16.msra.mxu0 0
      %458 = vmatprep.subr.bf16.mxu0 0
      %459 = vmatpush2.bf16.msra.mxu0 0
      %460 = vmatprep.subr.bf16.mxu0 0
      %461 = vmatpush2.bf16.msra.mxu0 0
      %462 = vmatprep.subr.bf16.mxu0 0
      %463 = vmatpush2.bf16.msra.mxu0 0
      %464 = vmatprep.subr.bf16.mxu0 0
      %465 = vmatpush2.bf16.msra.mxu0 0
      %466 = vmatprep.subr.bf16.mxu0 0
      %467 = vmatpush2.bf16.msra.mxu0 0
      %468 = vmatprep.subr.bf16.mxu0 0
      %469 = vmatpush2.bf16.msra.mxu0 0
      %470 = vmatprep.subr.bf16.mxu0 0
      %471 = vmatpush2.bf16.msra.mxu0 0
      %472 = vmatprep.mubr.bf16.mxu0 0
      %473 = vmatmul.mubr.bf16.gmra.mxu0 %v210
      %v474 = vpop.f32.mrf.mxu0
      %v475 = vadd.f32 %v349, %v474
      %v476 = vpop.f32.mrf.mxu0
      %v477 = vpop.f32.mrf.mxu0
      %v478 = vadd.f32 %v352, %v477
      %v479 = vpop.f32.mrf.mxu0
      %480 = vmatprep.mubr.bf16.mxu0 0
      %481 = vmatmul.mubr.bf16.gmra.mxu0 %v211
      %v482 = vpop.f32.mrf.mxu0
      %v483 = vadd.f32 %v357, %v482
      %v484 = vpop.f32.mrf.mxu0
      %v485 = vpop.f32.mrf.mxu0
      %v486 = vadd.f32 %v360, %v485
      %v487 = vpop.f32.mrf.mxu0
      %488 = vmatprep.mubr.bf16.mxu0 0
      %489 = vmatmul.mubr.bf16.gmra.mxu0 %v212
      %v490 = vpop.f32.mrf.mxu0
      %v491 = vadd.f32 %v365, %v490
      %v492 = vpop.f32.mrf.mxu0
      %v493 = vpop.f32.mrf.mxu0
      %v494 = vadd.f32 %v368, %v493
      %v495 = vpop.f32.mrf.mxu0
      %496 = vmatprep.mubr.bf16.mxu0 0
      %497 = vmatmul.mubr.bf16.gmra.mxu0 %v213
      %v498 = vpop.f32.mrf.mxu0
      %v499 = vadd.f32 %v373, %v498
      %v500 = vpop.f32.mrf.mxu0
      %v501 = vpop.f32.mrf.mxu0
      %v502 = vadd.f32 %v376, %v501
      %v503 = vpop.f32.mrf.mxu0
      %504 = vmatprep.mubr.bf16.mxu0 0
      %505 = vmatmul.mubr.bf16.gmra.mxu0 %v214
      %v506 = vpop.f32.mrf.mxu0
      %v507 = vadd.f32 %v381, %v506
      %v508 = vpop.f32.mrf.mxu0
      %v509 = vpop.f32.mrf.mxu0
      %v510 = vadd.f32 %v384, %v509
      %v511 = vpop.f32.mrf.mxu0
      %512 = vdwg.mxu0
      %v513 = vld [vmem:[%s138] sm:$0xe]
      %v514 = vld [vmem:[%s1 + $0x80] sm:$0xf]
      %v515 = vld [vmem:[%s1 + $0x84] sm:$0xf]
      %v516 = vld [vmem:[%s1 + $0x88] sm:$0xf]
      %v517 = vld [vmem:[%s1 + $0x8c] sm:$0xf]
      %v518 = vld [vmem:[%s1 + $0x90] sm:$0xf]
      %v519 = vld [vmem:[%s1 + $0x94] sm:$0xf]
      %v520 = vld [vmem:[%s1 + $0x98] sm:$0xf]
      %v521 = vld [vmem:[%s1 + $0x9c] sm:$0xf]
      %v522 = vld [vmem:[%s1 + $0xa0] sm:$0xf]
      %v523 = vld [vmem:[%s1 + $0xa4] sm:$0xf]
      %v524 = vld [vmem:[%s1 + $0xa8] sm:$0xf]
      %v525 = vld [vmem:[%s1 + $0xac] sm:$0xf]
      %v526 = vld [vmem:[%s1 + $0xb0] sm:$0xf]
      %v527 = vld [vmem:[%s1 + $0xb4] sm:$0xf]
      %v528 = vld [vmem:[%s1 + $0xb8] sm:$0xf]
      %v529 = vld [vmem:[%s1 + $0xbc] sm:$0xf]
      %v531 = vunpack.c.l.b16 %v513
      %v532 = vpack.c.b16 %v200, %v531
      %vm533 = vcmask 1046528
      %v534 = vrot.slane %v532, 1
      %v535 = vrot.slane %v211, 1
      %v536 = vsel %vm533, %v534, %v535
      %v537 = vrot.slane %v212, 1
      %v538 = vsel %vm533, %v535, %v537
      %v539 = vrot.slane %v213, 1
      %v540 = vsel %vm533, %v537, %v539
      %v541 = vrot.slane %v214, 1
      %v542 = vsel %vm533, %v539, %v541
      %v543 = vrot.slane %v215, 1
      %v544 = vsel %vm533, %v541, %v543
      %v566 = vunpack.c.l.b16 %v514
      %v567 = vunpack.c.l.b16 %v515
      %v568 = vunpack.c.l.b16 %v516
      %v569 = vunpack.c.l.b16 %v517
      %v570 = vunpack.c.l.b16 %v518
      %v571 = vunpack.c.l.b16 %v519
      %v572 = vunpack.c.l.b16 %v520
      %v573 = vunpack.c.l.b16 %v521
      %v574 = vunpack.c.l.b16 %v522
      %v575 = vunpack.c.l.b16 %v523
      %v576 = vunpack.c.l.b16 %v524
      %v577 = vunpack.c.l.b16 %v525
      %v578 = vunpack.c.l.b16 %v526
      %v579 = vunpack.c.l.b16 %v527
      %v580 = vunpack.c.l.b16 %v528
      %v581 = vunpack.c.l.b16 %v529
      %v582 = vpack.c.b16 %v567, %v566
      %v583 = vpack.c.b16 %v569, %v568
      %v584 = vpack.c.b16 %v571, %v570
      %v585 = vpack.c.b16 %v573, %v572
      %v586 = vpack.c.b16 %v575, %v574
      %v587 = vpack.c.b16 %v577, %v576
      %v588 = vpack.c.b16 %v579, %v578
      %v589 = vpack.c.b16 %v581, %v580
      %598 = vmatprep.subr.bf16.mxu0 0
      %599 = vmatpush1.bf16.msra.mxu0 %v589
      %600 = vmatprep.subr.bf16.mxu0 0
      %601 = vmatpush1.bf16.msra.mxu0 %v588
      %602 = vmatprep.subr.bf16.mxu0 0
      %603 = vmatpush1.bf16.msra.mxu0 %v587
      %604 = vmatprep.subr.bf16.mxu0 0
      %605 = vmatpush1.bf16.msra.mxu0 %v586
      %606 = vmatprep.subr.bf16.mxu0 0
      %607 = vmatpush1.bf16.msra.mxu0 %v585
      %608 = vmatprep.subr.bf16.mxu0 0
      %609 = vmatpush1.bf16.msra.mxu0 %v584
      %610 = vmatprep.subr.bf16.mxu0 0
      %611 = vmatpush1.bf16.msra.mxu0 %v583
      %612 = vmatprep.subr.bf16.mxu0 0
      %613 = vmatpush1.bf16.msra.mxu0 %v582
      %614 = vmatprep.subr.bf16.mxu0 0
      %615 = vmatpush2.bf16.msra.mxu0 0
      %616 = vmatprep.subr.bf16.mxu0 0
      %617 = vmatpush2.bf16.msra.mxu0 0
      %618 = vmatprep.subr.bf16.mxu0 0
      %619 = vmatpush2.bf16.msra.mxu0 0
      %620 = vmatprep.subr.bf16.mxu0 0
      %621 = vmatpush2.bf16.msra.mxu0 0
      %622 = vmatprep.subr.bf16.mxu0 0
      %623 = vmatpush2.bf16.msra.mxu0 0
      %624 = vmatprep.subr.bf16.mxu0 0
      %625 = vmatpush2.bf16.msra.mxu0 0
      %626 = vmatprep.subr.bf16.mxu0 0
      %627 = vmatpush2.bf16.msra.mxu0 0
      %628 = vmatprep.subr.bf16.mxu0 0
      %629 = vmatpush2.bf16.msra.mxu0 0
      %630 = vmatprep.mubr.bf16.mxu0 0
      %631 = vmatmul.mubr.bf16.gmra.mxu0 %v536
      %v632 = vpop.f32.mrf.mxu0
      %v633 = vadd.f32 0.0, %v632
      %v634 = vpop.f32.mrf.mxu0
      %v635 = vpop.f32.mrf.mxu0
      %v636 = vadd.f32 0.0, %v635
      %v637 = vpop.f32.mrf.mxu0
      %638 = vmatprep.mubr.bf16.mxu0 0
      %639 = vmatmul.mubr.bf16.gmra.mxu0 %v538
      %v640 = vpop.f32.mrf.mxu0
      %v641 = vadd.f32 0.0, %v640
      %v642 = vpop.f32.mrf.mxu0
      %v643 = vpop.f32.mrf.mxu0
      %v644 = vadd.f32 0.0, %v643
      %v645 = vpop.f32.mrf.mxu0
      %646 = vmatprep.mubr.bf16.mxu0 0
      %647 = vmatmul.mubr.bf16.gmra.mxu0 %v540
      %v648 = vpop.f32.mrf.mxu0
      %v649 = vadd.f32 0.0, %v648
      %v650 = vpop.f32.mrf.mxu0
      %v651 = vpop.f32.mrf.mxu0
      %v652 = vadd.f32 0.0, %v651
      %v653 = vpop.f32.mrf.mxu0
      %654 = vmatprep.mubr.bf16.mxu0 0
      %655 = vmatmul.mubr.bf16.gmra.mxu0 %v542
      %v656 = vpop.f32.mrf.mxu0
      %v657 = vadd.f32 0.0, %v656
      %v658 = vpop.f32.mrf.mxu0
      %v659 = vpop.f32.mrf.mxu0
      %v660 = vadd.f32 0.0, %v659
      %v661 = vpop.f32.mrf.mxu0
      %662 = vmatprep.mubr.bf16.mxu0 0
      %663 = vmatmul.mubr.bf16.gmra.mxu0 %v544
      %v664 = vpop.f32.mrf.mxu0
      %v665 = vadd.f32 0.0, %v664
      %v666 = vpop.f32.mrf.mxu0
      %v667 = vpop.f32.mrf.mxu0
      %v668 = vadd.f32 0.0, %v667
      %v669 = vpop.f32.mrf.mxu0
      %670 = vdwg.mxu0
      %v671 = vadd.f32 %v475, %v633
      %v672 = vadd.f32 %v478, %v636
      %v673 = vadd.f32 %v483, %v641
      %v674 = vadd.f32 %v486, %v644
      %v675 = vadd.f32 %v491, %v649
      %v676 = vadd.f32 %v494, %v652
      %v677 = vadd.f32 %v499, %v657
      %v678 = vadd.f32 %v502, %v660
      %v679 = vadd.f32 %v507, %v665
      %v680 = vadd.f32 %v510, %v668
      %v681 = vld [vmem:[%s138 + $0x4] sm:$0xe]
      %v682 = vld [vmem:[%s138 + $0x8] sm:$0xf]
      %v683 = vld [vmem:[%s138 + $0xc] sm:$0xf]
      %v684 = vld [vmem:[%s138 + $0x10] sm:$0xf]
      %v685 = vld [vmem:[%s138 + $0x14] sm:$0xf]
      %v686 = vld [vmem:[%s138 + $0x18] sm:$0xf]
      %v687 = vld [vmem:[%s138 + $0x1c] sm:$0xf]
      %v688 = vld [vmem:[%s138 + $0x20] sm:$0xf]
      %v689 = vld [vmem:[%s138 + $0x24] sm:$0xf]
      %v690 = vld [vmem:[%s138 + $0x28] sm:$0xf]
      %v691 = vld [vmem:[%s138 + $0x2c] sm:$0x1]
      %v692 = vld [vmem:[%s1 + $0xc0] sm:$0xf]
      %v693 = vld [vmem:[%s1 + $0xc4] sm:$0xf]
      %v694 = vld [vmem:[%s1 + $0xc8] sm:$0xf]
      %v695 = vld [vmem:[%s1 + $0xcc] sm:$0xf]
      %v696 = vld [vmem:[%s1 + $0xd0] sm:$0xf]
      %v697 = vld [vmem:[%s1 + $0xd4] sm:$0xf]
      %v698 = vld [vmem:[%s1 + $0xd8] sm:$0xf]
      %v699 = vld [vmem:[%s1 + $0xdc] sm:$0xf]
      %v700 = vld [vmem:[%s1 + $0xe0] sm:$0xf]
      %v701 = vld [vmem:[%s1 + $0xe4] sm:$0xf]
      %v702 = vld [vmem:[%s1 + $0xe8] sm:$0xf]
      %v703 = vld [vmem:[%s1 + $0xec] sm:$0xf]
      %v704 = vld [vmem:[%s1 + $0xf0] sm:$0xf]
      %v705 = vld [vmem:[%s1 + $0xf4] sm:$0xf]
      %v706 = vld [vmem:[%s1 + $0xf8] sm:$0xf]
      %v707 = vld [vmem:[%s1 + $0xfc] sm:$0xf]
      %v719 = vunpack.c.l.b16 %v681
      %v720 = vunpack.c.l.b16 %v682
      %v721 = vunpack.c.l.b16 %v683
      %v722 = vunpack.c.l.b16 %v684
      %v723 = vunpack.c.l.b16 %v685
      %v724 = vunpack.c.l.b16 %v686
      %v725 = vunpack.c.l.b16 %v687
      %v726 = vunpack.c.l.b16 %v688
      %v727 = vunpack.c.l.b16 %v689
      %v728 = vunpack.c.l.b16 %v690
      %v729 = vunpack.c.l.b16 %v691
      %v730 = vpack.c.b16 %v720, %v719
      %v731 = vpack.c.b16 %v722, %v721
      %v732 = vpack.c.b16 %v724, %v723
      %v733 = vpack.c.b16 %v726, %v725
      %v734 = vpack.c.b16 %v728, %v727
      %v735 = vpack.c.b16 %v729, %v729
      %v736 = vrot.slane %v730, 1
      %v737 = vrot.slane %v731, 1
      %v738 = vsel %vm533, %v736, %v737
      %v739 = vrot.slane %v732, 1
      %v740 = vsel %vm533, %v737, %v739
      %v741 = vrot.slane %v733, 1
      %v742 = vsel %vm533, %v739, %v741
      %v743 = vrot.slane %v734, 1
      %v744 = vsel %vm533, %v741, %v743
      %v745 = vrot.slane %v735, 1
      %v746 = vsel %vm533, %v743, %v745
      %v768 = vunpack.c.l.b16 %v692
      %v769 = vunpack.c.l.b16 %v693
      %v770 = vunpack.c.l.b16 %v694
      %v771 = vunpack.c.l.b16 %v695
      %v772 = vunpack.c.l.b16 %v696
      %v773 = vunpack.c.l.b16 %v697
      %v774 = vunpack.c.l.b16 %v698
      %v775 = vunpack.c.l.b16 %v699
      %v776 = vunpack.c.l.b16 %v700
      %v777 = vunpack.c.l.b16 %v701
      %v778 = vunpack.c.l.b16 %v702
      %v779 = vunpack.c.l.b16 %v703
      %v780 = vunpack.c.l.b16 %v704
      %v781 = vunpack.c.l.b16 %v705
      %v782 = vunpack.c.l.b16 %v706
      %v783 = vunpack.c.l.b16 %v707
      %v784 = vpack.c.b16 %v769, %v768
      %v785 = vpack.c.b16 %v771, %v770
      %v786 = vpack.c.b16 %v773, %v772
      %v787 = vpack.c.b16 %v775, %v774
      %v788 = vpack.c.b16 %v777, %v776
      %v789 = vpack.c.b16 %v779, %v778
      %v790 = vpack.c.b16 %v781, %v780
      %v791 = vpack.c.b16 %v783, %v782
      %800 = vmatprep.subr.bf16.mxu0 0
      %801 = vmatpush1.bf16.msra.mxu0 %v791
      %802 = vmatprep.subr.bf16.mxu0 0
      %803 = vmatpush1.bf16.msra.mxu0 %v790
      %804 = vmatprep.subr.bf16.mxu0 0
      %805 = vmatpush1.bf16.msra.mxu0 %v789
      %806 = vmatprep.subr.bf16.mxu0 0
      %807 = vmatpush1.bf16.msra.mxu0 %v788
      %808 = vmatprep.subr.bf16.mxu0 0
      %809 = vmatpush1.bf16.msra.mxu0 %v787
      %810 = vmatprep.subr.bf16.mxu0 0
      %811 = vmatpush1.bf16.msra.mxu0 %v786
      %812 = vmatprep.subr.bf16.mxu0 0
      %813 = vmatpush1.bf16.msra.mxu0 %v785
      %814 = vmatprep.subr.bf16.mxu0 0
      %815 = vmatpush1.bf16.msra.mxu0 %v784
      %816 = vmatprep.subr.bf16.mxu0 0
      %817 = vmatpush2.bf16.msra.mxu0 0
      %818 = vmatprep.subr.bf16.mxu0 0
      %819 = vmatpush2.bf16.msra.mxu0 0
      %820 = vmatprep.subr.bf16.mxu0 0
      %821 = vmatpush2.bf16.msra.mxu0 0
      %822 = vmatprep.subr.bf16.mxu0 0
      %823 = vmatpush2.bf16.msra.mxu0 0
      %824 = vmatprep.subr.bf16.mxu0 0
      %825 = vmatpush2.bf16.msra.mxu0 0
      %826 = vmatprep.subr.bf16.mxu0 0
      %827 = vmatpush2.bf16.msra.mxu0 0
      %828 = vmatprep.subr.bf16.mxu0 0
      %829 = vmatpush2.bf16.msra.mxu0 0
      %830 = vmatprep.subr.bf16.mxu0 0
      %831 = vmatpush2.bf16.msra.mxu0 0
      %832 = vmatprep.mubr.bf16.mxu0 0
      %833 = vmatmul.mubr.bf16.gmra.mxu0 %v738
      %v834 = vpop.f32.mrf.mxu0
      %v835 = vadd.f32 0.0, %v834
      %v836 = vpop.f32.mrf.mxu0
      %v837 = vpop.f32.mrf.mxu0
      %v838 = vadd.f32 0.0, %v837
      %v839 = vpop.f32.mrf.mxu0
      %840 = vmatprep.mubr.bf16.mxu0 0
      %841 = vmatmul.mubr.bf16.gmra.mxu0 %v740
      %v842 = vpop.f32.mrf.mxu0
      %v843 = vadd.f32 0.0, %v842
      %v844 = vpop.f32.mrf.mxu0
      %v845 = vpop.f32.mrf.mxu0
      %v846 = vadd.f32 0.0, %v845
      %v847 = vpop.f32.mrf.mxu0
      %848 = vmatprep.mubr.bf16.mxu0 0
      %849 = vmatmul.mubr.bf16.gmra.mxu0 %v742
      %v850 = vpop.f32.mrf.mxu0
      %v851 = vadd.f32 0.0, %v850
      %v852 = vpop.f32.mrf.mxu0
      %v853 = vpop.f32.mrf.mxu0
      %v854 = vadd.f32 0.0, %v853
      %v855 = vpop.f32.mrf.mxu0
      %856 = vmatprep.mubr.bf16.mxu0 0
      %857 = vmatmul.mubr.bf16.gmra.mxu0 %v744
      %v858 = vpop.f32.mrf.mxu0
      %v859 = vadd.f32 0.0, %v858
      %v860 = vpop.f32.mrf.mxu0
      %v861 = vpop.f32.mrf.mxu0
      %v862 = vadd.f32 0.0, %v861
      %v863 = vpop.f32.mrf.mxu0
      %864 = vmatprep.mubr.bf16.mxu0 0
      %865 = vmatmul.mubr.bf16.gmra.mxu0 %v746
      %v866 = vpop.f32.mrf.mxu0
      %v867 = vadd.f32 0.0, %v866
      %v868 = vpop.f32.mrf.mxu0
      %v869 = vpop.f32.mrf.mxu0
      %v870 = vadd.f32 0.0, %v869
      %v871 = vpop.f32.mrf.mxu0
      %872 = vdwg.mxu0
      %v873 = vadd.f32 %v671, %v835
      %v874 = vadd.f32 %v672, %v838
      %v875 = vadd.f32 %v673, %v843
      %v876 = vadd.f32 %v674, %v846
      %v877 = vadd.f32 %v675, %v851
      %v878 = vadd.f32 %v676, %v854
      %v879 = vadd.f32 %v677, %v859
      %v880 = vadd.f32 %v678, %v862
      %v881 = vadd.f32 %v679, %v867
      %v882 = vadd.f32 %v680, %v870
      %v883 = vld [vmem:[%s138 + $0x2c] sm:$0x3]
      %v884 = vld [vmem:[%s1 + $0x100] sm:$0xf]
      %v885 = vld [vmem:[%s1 + $0x104] sm:$0xf]
      %v886 = vld [vmem:[%s1 + $0x108] sm:$0xf]
      %v887 = vld [vmem:[%s1 + $0x10c] sm:$0xf]
      %v888 = vld [vmem:[%s1 + $0x110] sm:$0xf]
      %v889 = vld [vmem:[%s1 + $0x114] sm:$0xf]
      %v890 = vld [vmem:[%s1 + $0x118] sm:$0xf]
      %v891 = vld [vmem:[%s1 + $0x11c] sm:$0xf]
      %v892 = vld [vmem:[%s1 + $0x120] sm:$0xf]
      %v893 = vld [vmem:[%s1 + $0x124] sm:$0xf]
      %v894 = vld [vmem:[%s1 + $0x128] sm:$0xf]
      %v895 = vld [vmem:[%s1 + $0x12c] sm:$0xf]
      %v896 = vld [vmem:[%s1 + $0x130] sm:$0xf]
      %v897 = vld [vmem:[%s1 + $0x134] sm:$0xf]
      %v898 = vld [vmem:[%s1 + $0x138] sm:$0xf]
      %v899 = vld [vmem:[%s1 + $0x13c] sm:$0xf]
      %v901 = vunpack.c.l.b16 %v883
      %v902 = vpack.c.b16 %v901, %v901
      %vm903 = vsmask.f32 6400
      %v905 = vshrl.u32 %v730, 16
      %v907 = vrot.slane %v905, 1
      %v908 = vshll.u32 %v730, 16
      %v910 = vrot.slane %v908, 2
      %v911 = vor.u32 %v907, %v910
      %v913 = vshrl.u32 %v731, 16
      %v915 = vrot.slane %v913, 1
      %v916 = vshll.u32 %v731, 16
      %v918 = vrot.slane %v916, 2
      %v919 = vor.u32 %v915, %v918
      %v920 = vsel %vm903, %v911, %v919
      %v922 = vshrl.u32 %v732, 16
      %v924 = vrot.slane %v922, 1
      %v925 = vshll.u32 %v732, 16
      %v927 = vrot.slane %v925, 2
      %v928 = vor.u32 %v924, %v927
      %v929 = vsel %vm903, %v919, %v928
      %v931 = vshrl.u32 %v733, 16
      %v933 = vrot.slane %v931, 1
      %v934 = vshll.u32 %v733, 16
      %v936 = vrot.slane %v934, 2
      %v937 = vor.u32 %v933, %v936
      %v938 = vsel %vm903, %v928, %v937
      %v940 = vshrl.u32 %v734, 16
      %v942 = vrot.slane %v940, 1
      %v943 = vshll.u32 %v734, 16
      %v945 = vrot.slane %v943, 2
      %v946 = vor.u32 %v942, %v945
      %v947 = vsel %vm903, %v937, %v946
      %v949 = vshrl.u32 %v902, 16
      %v951 = vrot.slane %v949, 1
      %v952 = vshll.u32 %v902, 16
      %v954 = vrot.slane %v952, 2
      %v955 = vor.u32 %v951, %v954
      %v956 = vsel %vm903, %v946, %v955
      %v978 = vunpack.c.l.b16 %v884
      %v979 = vunpack.c.l.b16 %v885
      %v980 = vunpack.c.l.b16 %v886
      %v981 = vunpack.c.l.b16 %v887
      %v982 = vunpack.c.l.b16 %v888
      %v983 = vunpack.c.l.b16 %v889
      %v984 = vunpack.c.l.b16 %v890
      %v985 = vunpack.c.l.b16 %v891
      %v986 = vunpack.c.l.b16 %v892
      %v987 = vunpack.c.l.b16 %v893
      %v988 = vunpack.c.l.b16 %v894
      %v989 = vunpack.c.l.b16 %v895
      %v990 = vunpack.c.l.b16 %v896
      %v991 = vunpack.c.l.b16 %v897
      %v992 = vunpack.c.l.b16 %v898
      %v993 = vunpack.c.l.b16 %v899
      %v994 = vpack.c.b16 %v979, %v978
      %v995 = vpack.c.b16 %v981, %v980
      %v996 = vpack.c.b16 %v983, %v982
      %v997 = vpack.c.b16 %v985, %v984
      %v998 = vpack.c.b16 %v987, %v986
      %v999 = vpack.c.b16 %v989, %v988
      %v1000 = vpack.c.b16 %v991, %v990
      %v1001 = vpack.c.b16 %v993, %v992
      %1010 = vmatprep.subr.bf16.mxu0 0
      %1011 = vmatpush1.bf16.msra.mxu0 %v1001
      %1012 = vmatprep.subr.bf16.mxu0 0
      %1013 = vmatpush1.bf16.msra.mxu0 %v1000
      %1014 = vmatprep.subr.bf16.mxu0 0
      %1015 = vmatpush1.bf16.msra.mxu0 %v999
      %1016 = vmatprep.subr.bf16.mxu0 0
      %1017 = vmatpush1.bf16.msra.mxu0 %v998
      %1018 = vmatprep.subr.bf16.mxu0 0
      %1019 = vmatpush1.bf16.msra.mxu0 %v997
      %1020 = vmatprep.subr.bf16.mxu0 0
      %1021 = vmatpush1.bf16.msra.mxu0 %v996
      %1022 = vmatprep.subr.bf16.mxu0 0
      %1023 = vmatpush1.bf16.msra.mxu0 %v995
      %1024 = vmatprep.subr.bf16.mxu0 0
      %1025 = vmatpush1.bf16.msra.mxu0 %v994
      %1026 = vmatprep.subr.bf16.mxu0 0
      %1027 = vmatpush2.bf16.msra.mxu0 0
      %1028 = vmatprep.subr.bf16.mxu0 0
      %1029 = vmatpush2.bf16.msra.mxu0 0
      %1030 = vmatprep.subr.bf16.mxu0 0
      %1031 = vmatpush2.bf16.msra.mxu0 0
      %1032 = vmatprep.subr.bf16.mxu0 0
      %1033 = vmatpush2.bf16.msra.mxu0 0
      %1034 = vmatprep.subr.bf16.mxu0 0
      %1035 = vmatpush2.bf16.msra.mxu0 0
      %1036 = vmatprep.subr.bf16.mxu0 0
      %1037 = vmatpush2.bf16.msra.mxu0 0
      %1038 = vmatprep.subr.bf16.mxu0 0
      %1039 = vmatpush2.bf16.msra.mxu0 0
      %1040 = vmatprep.subr.bf16.mxu0 0
      %1041 = vmatpush2.bf16.msra.mxu0 0
      %1042 = vmatprep.mubr.bf16.mxu0 0
      %1043 = vmatmul.mubr.bf16.gmra.mxu0 %v920
      %v1044 = vpop.f32.mrf.mxu0
      %v1045 = vadd.f32 0.0, %v1044
      %v1046 = vpop.f32.mrf.mxu0
      %v1047 = vpop.f32.mrf.mxu0
      %v1048 = vadd.f32 0.0, %v1047
      %v1049 = vpop.f32.mrf.mxu0
      %1050 = vmatprep.mubr.bf16.mxu0 0
      %1051 = vmatmul.mubr.bf16.gmra.mxu0 %v929
      %v1052 = vpop.f32.mrf.mxu0
      %v1053 = vadd.f32 0.0, %v1052
      %v1054 = vpop.f32.mrf.mxu0
      %v1055 = vpop.f32.mrf.mxu0
      %v1056 = vadd.f32 0.0, %v1055
      %v1057 = vpop.f32.mrf.mxu0
      %1058 = vmatprep.mubr.bf16.mxu0 0
      %1059 = vmatmul.mubr.bf16.gmra.mxu0 %v938
      %v1060 = vpop.f32.mrf.mxu0
      %v1061 = vadd.f32 0.0, %v1060
      %v1062 = vpop.f32.mrf.mxu0
      %v1063 = vpop.f32.mrf.mxu0
      %v1064 = vadd.f32 0.0, %v1063
      %v1065 = vpop.f32.mrf.mxu0
      %1066 = vmatprep.mubr.bf16.mxu0 0
      %1067 = vmatmul.mubr.bf16.gmra.mxu0 %v947
      %v1068 = vpop.f32.mrf.mxu0
      %v1069 = vadd.f32 0.0, %v1068
      %v1070 = vpop.f32.mrf.mxu0
      %v1071 = vpop.f32.mrf.mxu0
      %v1072 = vadd.f32 0.0, %v1071
      %v1073 = vpop.f32.mrf.mxu0
      %1074 = vmatprep.mubr.bf16.mxu0 0
      %1075 = vmatmul.mubr.bf16.gmra.mxu0 %v956
      %v1076 = vpop.f32.mrf.mxu0
      %v1077 = vadd.f32 0.0, %v1076
      %v1078 = vpop.f32.mrf.mxu0
      %v1079 = vpop.f32.mrf.mxu0
      %v1080 = vadd.f32 0.0, %v1079
      %v1081 = vpop.f32.mrf.mxu0
      %1082 = vdwg.mxu0
      %v1083 = vadd.f32 %v873, %v1045
      %v1084 = vadd.f32 %v874, %v1048
      %v1085 = vadd.f32 %v875, %v1053
      %v1086 = vadd.f32 %v876, %v1056
      %v1087 = vadd.f32 %v877, %v1061
      %v1088 = vadd.f32 %v878, %v1064
      %v1089 = vadd.f32 %v879, %v1069
      %v1090 = vadd.f32 %v880, %v1072
      %v1091 = vadd.f32 %v881, %v1077
      %v1092 = vadd.f32 %v882, %v1080
      %v1093 = vld [vmem:[%s138 + $0x4] sm:$0xc]
      %v1094 = vld [vmem:[%s1 + $0x140] sm:$0xf]
      %v1095 = vld [vmem:[%s1 + $0x144] sm:$0xf]
      %v1096 = vld [vmem:[%s1 + $0x148] sm:$0xf]
      %v1097 = vld [vmem:[%s1 + $0x14c] sm:$0xf]
      %v1098 = vld [vmem:[%s1 + $0x150] sm:$0xf]
      %v1099 = vld [vmem:[%s1 + $0x154] sm:$0xf]
      %v1100 = vld [vmem:[%s1 + $0x158] sm:$0xf]
      %v1101 = vld [vmem:[%s1 + $0x15c] sm:$0xf]
      %v1102 = vld [vmem:[%s1 + $0x160] sm:$0xf]
      %v1103 = vld [vmem:[%s1 + $0x164] sm:$0xf]
      %v1104 = vld [vmem:[%s1 + $0x168] sm:$0xf]
      %v1105 = vld [vmem:[%s1 + $0x16c] sm:$0xf]
      %v1106 = vld [vmem:[%s1 + $0x170] sm:$0xf]
      %v1107 = vld [vmem:[%s1 + $0x174] sm:$0xf]
      %v1108 = vld [vmem:[%s1 + $0x178] sm:$0xf]
      %v1109 = vld [vmem:[%s1 + $0x17c] sm:$0xf]
      %v1111 = vunpack.c.l.b16 %v1093
      %v1112 = vpack.c.b16 %v720, %v1111
      %vm1113 = vcmask 1045504
      %v1114 = vrot.slane %v1112, 2
      %v1115 = vrot.slane %v731, 2
      %v1116 = vsel %vm1113, %v1114, %v1115
      %v1117 = vrot.slane %v732, 2
      %v1118 = vsel %vm1113, %v1115, %v1117
      %v1119 = vrot.slane %v733, 2
      %v1120 = vsel %vm1113, %v1117, %v1119
      %v1121 = vrot.slane %v734, 2
      %v1122 = vsel %vm1113, %v1119, %v1121
      %v1123 = vrot.slane %v902, 2
      %v1124 = vsel %vm1113, %v1121, %v1123
      %v1146 = vunpack.c.l.b16 %v1094
      %v1147 = vunpack.c.l.b16 %v1095
      %v1148 = vunpack.c.l.b16 %v1096
      %v1149 = vunpack.c.l.b16 %v1097
      %v1150 = vunpack.c.l.b16 %v1098
      %v1151 = vunpack.c.l.b16 %v1099
      %v1152 = vunpack.c.l.b16 %v1100
      %v1153 = vunpack.c.l.b16 %v1101
      %v1154 = vunpack.c.l.b16 %v1102
      %v1155 = vunpack.c.l.b16 %v1103
      %v1156 = vunpack.c.l.b16 %v1104
      %v1157 = vunpack.c.l.b16 %v1105
      %v1158 = vunpack.c.l.b16 %v1106
      %v1159 = vunpack.c.l.b16 %v1107
      %v1160 = vunpack.c.l.b16 %v1108
      %v1161 = vunpack.c.l.b16 %v1109
      %v1162 = vpack.c.b16 %v1147, %v1146
      %v1163 = vpack.c.b16 %v1149, %v1148
      %v1164 = vpack.c.b16 %v1151, %v1150
      %v1165 = vpack.c.b16 %v1153, %v1152
      %v1166 = vpack.c.b16 %v1155, %v1154
      %v1167 = vpack.c.b16 %v1157, %v1156
      %v1168 = vpack.c.b16 %v1159, %v1158
      %v1169 = vpack.c.b16 %v1161, %v1160
      %1178 = vmatprep.subr.bf16.mxu0 0
      %1179 = vmatpush1.bf16.msra.mxu0 %v1169
      %1180 = vmatprep.subr.bf16.mxu0 0
      %1181 = vmatpush1.bf16.msra.mxu0 %v1168
      %1182 = vmatprep.subr.bf16.mxu0 0
      %1183 = vmatpush1.bf16.msra.mxu0 %v1167
      %1184 = vmatprep.subr.bf16.mxu0 0
      %1185 = vmatpush1.bf16.msra.mxu0 %v1166
      %1186 = vmatprep.subr.bf16.mxu0 0
      %1187 = vmatpush1.bf16.msra.mxu0 %v1165
      %1188 = vmatprep.subr.bf16.mxu0 0
      %1189 = vmatpush1.bf16.msra.mxu0 %v1164
      %1190 = vmatprep.subr.bf16.mxu0 0
      %1191 = vmatpush1.bf16.msra.mxu0 %v1163
      %1192 = vmatprep.subr.bf16.mxu0 0
      %1193 = vmatpush1.bf16.msra.mxu0 %v1162
      %1194 = vmatprep.subr.bf16.mxu0 0
      %1195 = vmatpush2.bf16.msra.mxu0 0
      %1196 = vmatprep.subr.bf16.mxu0 0
      %1197 = vmatpush2.bf16.msra.mxu0 0
      %1198 = vmatprep.subr.bf16.mxu0 0
      %1199 = vmatpush2.bf16.msra.mxu0 0
      %1200 = vmatprep.subr.bf16.mxu0 0
      %1201 = vmatpush2.bf16.msra.mxu0 0
      %1202 = vmatprep.subr.bf16.mxu0 0
      %1203 = vmatpush2.bf16.msra.mxu0 0
      %1204 = vmatprep.subr.bf16.mxu0 0
      %1205 = vmatpush2.bf16.msra.mxu0 0
      %1206 = vmatprep.subr.bf16.mxu0 0
      %1207 = vmatpush2.bf16.msra.mxu0 0
      %1208 = vmatprep.subr.bf16.mxu0 0
      %1209 = vmatpush2.bf16.msra.mxu0 0
      %1210 = vmatprep.mubr.bf16.mxu0 0
      %1211 = vmatmul.mubr.bf16.gmra.mxu0 %v1116
      %v1212 = vpop.f32.mrf.mxu0
      %v1213 = vadd.f32 0.0, %v1212
      %v1214 = vpop.f32.mrf.mxu0
      %v1215 = vpop.f32.mrf.mxu0
      %v1216 = vadd.f32 0.0, %v1215
      %v1217 = vpop.f32.mrf.mxu0
      %1218 = vmatprep.mubr.bf16.mxu0 0
      %1219 = vmatmul.mubr.bf16.gmra.mxu0 %v1118
      %v1220 = vpop.f32.mrf.mxu0
      %v1221 = vadd.f32 0.0, %v1220
      %v1222 = vpop.f32.mrf.mxu0
      %v1223 = vpop.f32.mrf.mxu0
      %v1224 = vadd.f32 0.0, %v1223
      %v1225 = vpop.f32.mrf.mxu0
      %1226 = vmatprep.mubr.bf16.mxu0 0
      %1227 = vmatmul.mubr.bf16.gmra.mxu0 %v1120
      %v1228 = vpop.f32.mrf.mxu0
      %v1229 = vadd.f32 0.0, %v1228
      %v1230 = vpop.f32.mrf.mxu0
      %v1231 = vpop.f32.mrf.mxu0
      %v1232 = vadd.f32 0.0, %v1231
      %v1233 = vpop.f32.mrf.mxu0
      %1234 = vmatprep.mubr.bf16.mxu0 0
      %1235 = vmatmul.mubr.bf16.gmra.mxu0 %v1122
      %v1236 = vpop.f32.mrf.mxu0
      %v1237 = vadd.f32 0.0, %v1236
      %v1238 = vpop.f32.mrf.mxu0
      %v1239 = vpop.f32.mrf.mxu0
      %v1240 = vadd.f32 0.0, %v1239
      %v1241 = vpop.f32.mrf.mxu0
      %1242 = vmatprep.mubr.bf16.mxu0 0
      %1243 = vmatmul.mubr.bf16.gmra.mxu0 %v1124
      %v1244 = vpop.f32.mrf.mxu0
      %v1245 = vadd.f32 0.0, %v1244
      %v1246 = vpop.f32.mrf.mxu0
      %v1247 = vpop.f32.mrf.mxu0
      %v1248 = vadd.f32 0.0, %v1247
      %v1249 = vpop.f32.mrf.mxu0
      %1250 = vdwg.mxu0
      %v1251 = vadd.f32 %v1083, %v1213
      %v1252 = vadd.f32 %v1084, %v1216
      %v1253 = vadd.f32 %v1085, %v1221
      %v1254 = vadd.f32 %v1086, %v1224
      %v1255 = vadd.f32 %v1087, %v1229
      %v1256 = vadd.f32 %v1088, %v1232
      %v1257 = vadd.f32 %v1089, %v1237
      %v1258 = vadd.f32 %v1090, %v1240
      %v1259 = vadd.f32 %v1091, %v1245
      %v1260 = vadd.f32 %v1092, %v1248
      %v1261 = vld [vmem:[%s138 + $0x8] sm:$0xc]
      %v1262 = vld [vmem:[%s138 + $0xc] sm:$0xf]
      %v1263 = vld [vmem:[%s138 + $0x10] sm:$0xf]
      %v1264 = vld [vmem:[%s138 + $0x14] sm:$0xf]
      %v1265 = vld [vmem:[%s138 + $0x18] sm:$0xf]
      %v1266 = vld [vmem:[%s138 + $0x1c] sm:$0xf]
      %v1267 = vld [vmem:[%s138 + $0x20] sm:$0xf]
      %v1268 = vld [vmem:[%s138 + $0x24] sm:$0xf]
      %v1269 = vld [vmem:[%s138 + $0x28] sm:$0xf]
      %v1270 = vld [vmem:[%s138 + $0x2c] sm:$0xf]
      %v1271 = vld [vmem:[%s138 + $0x30] sm:$0x3]
      %v1272 = vld [vmem:[%s1 + $0x180] sm:$0xf]
      %v1273 = vld [vmem:[%s1 + $0x184] sm:$0xf]
      %v1274 = vld [vmem:[%s1 + $0x188] sm:$0xf]
      %v1275 = vld [vmem:[%s1 + $0x18c] sm:$0xf]
      %v1276 = vld [vmem:[%s1 + $0x190] sm:$0xf]
      %v1277 = vld [vmem:[%s1 + $0x194] sm:$0xf]
      %v1278 = vld [vmem:[%s1 + $0x198] sm:$0xf]
      %v1279 = vld [vmem:[%s1 + $0x19c] sm:$0xf]
      %v1280 = vld [vmem:[%s1 + $0x1a0] sm:$0xf]
      %v1281 = vld [vmem:[%s1 + $0x1a4] sm:$0xf]
      %v1282 = vld [vmem:[%s1 + $0x1a8] sm:$0xf]
      %v1283 = vld [vmem:[%s1 + $0x1ac] sm:$0xf]
      %v1284 = vld [vmem:[%s1 + $0x1b0] sm:$0xf]
      %v1285 = vld [vmem:[%s1 + $0x1b4] sm:$0xf]
      %v1286 = vld [vmem:[%s1 + $0x1b8] sm:$0xf]
      %v1287 = vld [vmem:[%s1 + $0x1bc] sm:$0xf]
      %v1299 = vunpack.c.l.b16 %v1261
      %v1300 = vunpack.c.l.b16 %v1262
      %v1301 = vunpack.c.l.b16 %v1263
      %v1302 = vunpack.c.l.b16 %v1264
      %v1303 = vunpack.c.l.b16 %v1265
      %v1304 = vunpack.c.l.b16 %v1266
      %v1305 = vunpack.c.l.b16 %v1267
      %v1306 = vunpack.c.l.b16 %v1268
      %v1307 = vunpack.c.l.b16 %v1269
      %v1308 = vunpack.c.l.b16 %v1270
      %v1309 = vunpack.c.l.b16 %v1271
      %v1310 = vpack.c.b16 %v1300, %v1299
      %v1311 = vpack.c.b16 %v1302, %v1301
      %v1312 = vpack.c.b16 %v1304, %v1303
      %v1313 = vpack.c.b16 %v1306, %v1305
      %v1314 = vpack.c.b16 %v1308, %v1307
      %v1315 = vpack.c.b16 %v1309, %v1309
      %v1316 = vrot.slane %v1310, 2
      %v1317 = vrot.slane %v1311, 2
      %v1318 = vsel %vm1113, %v1316, %v1317
      %v1319 = vrot.slane %v1312, 2
      %v1320 = vsel %vm1113, %v1317, %v1319
      %v1321 = vrot.slane %v1313, 2
      %v1322 = vsel %vm1113, %v1319, %v1321
      %v1323 = vrot.slane %v1314, 2
      %v1324 = vsel %vm1113, %v1321, %v1323
      %v1325 = vrot.slane %v1315, 2
      %v1326 = vsel %vm1113, %v1323, %v1325
      %v1348 = vunpack.c.l.b16 %v1272
      %v1349 = vunpack.c.l.b16 %v1273
      %v1350 = vunpack.c.l.b16 %v1274
      %v1351 = vunpack.c.l.b16 %v1275
      %v1352 = vunpack.c.l.b16 %v1276
      %v1353 = vunpack.c.l.b16 %v1277
      %v1354 = vunpack.c.l.b16 %v1278
      %v1355 = vunpack.c.l.b16 %v1279
      %v1356 = vunpack.c.l.b16 %v1280
      %v1357 = vunpack.c.l.b16 %v1281
      %v1358 = vunpack.c.l.b16 %v1282
      %v1359 = vunpack.c.l.b16 %v1283
      %v1360 = vunpack.c.l.b16 %v1284
      %v1361 = vunpack.c.l.b16 %v1285
      %v1362 = vunpack.c.l.b16 %v1286
      %v1363 = vunpack.c.l.b16 %v1287
      %v1364 = vpack.c.b16 %v1349, %v1348
      %v1365 = vpack.c.b16 %v1351, %v1350
      %v1366 = vpack.c.b16 %v1353, %v1352
      %v1367 = vpack.c.b16 %v1355, %v1354
      %v1368 = vpack.c.b16 %v1357, %v1356
      %v1369 = vpack.c.b16 %v1359, %v1358
      %v1370 = vpack.c.b16 %v1361, %v1360
      %v1371 = vpack.c.b16 %v1363, %v1362
      %1380 = vmatprep.subr.bf16.mxu0 0
      %1381 = vmatpush1.bf16.msra.mxu0 %v1371
      %1382 = vmatprep.subr.bf16.mxu0 0
      %1383 = vmatpush1.bf16.msra.mxu0 %v1370
      %1384 = vmatprep.subr.bf16.mxu0 0
      %1385 = vmatpush1.bf16.msra.mxu0 %v1369
      %1386 = vmatprep.subr.bf16.mxu0 0
      %1387 = vmatpush1.bf16.msra.mxu0 %v1368
      %1388 = vmatprep.subr.bf16.mxu0 0
      %1389 = vmatpush1.bf16.msra.mxu0 %v1367
      %1390 = vmatprep.subr.bf16.mxu0 0
      %1391 = vmatpush1.bf16.msra.mxu0 %v1366
      %1392 = vmatprep.subr.bf16.mxu0 0
      %1393 = vmatpush1.bf16.msra.mxu0 %v1365
      %1394 = vmatprep.subr.bf16.mxu0 0
      %1395 = vmatpush1.bf16.msra.mxu0 %v1364
      %1396 = vmatprep.subr.bf16.mxu0 0
      %1397 = vmatpush2.bf16.msra.mxu0 0
      %1398 = vmatprep.subr.bf16.mxu0 0
      %1399 = vmatpush2.bf16.msra.mxu0 0
      %1400 = vmatprep.subr.bf16.mxu0 0
      %1401 = vmatpush2.bf16.msra.mxu0 0
      %1402 = vmatprep.subr.bf16.mxu0 0
      %1403 = vmatpush2.bf16.msra.mxu0 0
      %1404 = vmatprep.subr.bf16.mxu0 0
      %1405 = vmatpush2.bf16.msra.mxu0 0
      %1406 = vmatprep.subr.bf16.mxu0 0
      %1407 = vmatpush2.bf16.msra.mxu0 0
      %1408 = vmatprep.subr.bf16.mxu0 0
      %1409 = vmatpush2.bf16.msra.mxu0 0
      %1410 = vmatprep.subr.bf16.mxu0 0
      %1411 = vmatpush2.bf16.msra.mxu0 0
      %1412 = vmatprep.mubr.bf16.mxu0 0
      %1413 = vmatmul.mubr.bf16.gmra.mxu0 %v1318
      %v1414 = vpop.f32.mrf.mxu0
      %v1415 = vadd.f32 0.0, %v1414
      %v1416 = vpop.f32.mrf.mxu0
      %v1417 = vpop.f32.mrf.mxu0
      %v1418 = vadd.f32 0.0, %v1417
      %v1419 = vpop.f32.mrf.mxu0
      %1420 = vmatprep.mubr.bf16.mxu0 0
      %1421 = vmatmul.mubr.bf16.gmra.mxu0 %v1320
      %v1422 = vpop.f32.mrf.mxu0
      %v1423 = vadd.f32 0.0, %v1422
      %v1424 = vpop.f32.mrf.mxu0
      %v1425 = vpop.f32.mrf.mxu0
      %v1426 = vadd.f32 0.0, %v1425
      %v1427 = vpop.f32.mrf.mxu0
      %1428 = vmatprep.mubr.bf16.mxu0 0
      %1429 = vmatmul.mubr.bf16.gmra.mxu0 %v1322
      %v1430 = vpop.f32.mrf.mxu0
      %v1431 = vadd.f32 0.0, %v1430
      %v1432 = vpop.f32.mrf.mxu0
      %v1433 = vpop.f32.mrf.mxu0
      %v1434 = vadd.f32 0.0, %v1433
      %v1435 = vpop.f32.mrf.mxu0
      %1436 = vmatprep.mubr.bf16.mxu0 0
      %1437 = vmatmul.mubr.bf16.gmra.mxu0 %v1324
      %v1438 = vpop.f32.mrf.mxu0
      %v1439 = vadd.f32 0.0, %v1438
      %v1440 = vpop.f32.mrf.mxu0
      %v1441 = vpop.f32.mrf.mxu0
      %v1442 = vadd.f32 0.0, %v1441
      %v1443 = vpop.f32.mrf.mxu0
      %1444 = vmatprep.mubr.bf16.mxu0 0
      %1445 = vmatmul.mubr.bf16.gmra.mxu0 %v1326
      %v1446 = vpop.f32.mrf.mxu0
      %v1447 = vadd.f32 0.0, %v1446
      %v1448 = vpop.f32.mrf.mxu0
      %v1449 = vpop.f32.mrf.mxu0
      %v1450 = vadd.f32 0.0, %v1449
      %v1451 = vpop.f32.mrf.mxu0
      %1452 = vdwg.mxu0
      %v1453 = vadd.f32 %v1251, %v1415
      %v1454 = vadd.f32 %v1252, %v1418
      %v1455 = vadd.f32 %v1253, %v1423
      %v1456 = vadd.f32 %v1254, %v1426
      %v1457 = vadd.f32 %v1255, %v1431
      %v1458 = vadd.f32 %v1256, %v1434
      %v1459 = vadd.f32 %v1257, %v1439
      %v1460 = vadd.f32 %v1258, %v1442
      %v1461 = vadd.f32 %v1259, %v1447
      %v1462 = vadd.f32 %v1260, %v1450
      %v1463 = vld [vmem:[%s138 + $0x30] sm:$0x7]
      %v1464 = vld [vmem:[%s1 + $0x1c0] sm:$0xf]
      %v1465 = vld [vmem:[%s1 + $0x1c4] sm:$0xf]
      %v1466 = vld [vmem:[%s1 + $0x1c8] sm:$0xf]
      %v1467 = vld [vmem:[%s1 + $0x1cc] sm:$0xf]
      %v1468 = vld [vmem:[%s1 + $0x1d0] sm:$0xf]
      %v1469 = vld [vmem:[%s1 + $0x1d4] sm:$0xf]
      %v1470 = vld [vmem:[%s1 + $0x1d8] sm:$0xf]
      %v1471 = vld [vmem:[%s1 + $0x1dc] sm:$0xf]
      %v1472 = vld [vmem:[%s1 + $0x1e0] sm:$0xf]
      %v1473 = vld [vmem:[%s1 + $0x1e4] sm:$0xf]
      %v1474 = vld [vmem:[%s1 + $0x1e8] sm:$0xf]
      %v1475 = vld [vmem:[%s1 + $0x1ec] sm:$0xf]
      %v1476 = vld [vmem:[%s1 + $0x1f0] sm:$0xf]
      %v1477 = vld [vmem:[%s1 + $0x1f4] sm:$0xf]
      %v1478 = vld [vmem:[%s1 + $0x1f8] sm:$0xf]
      %v1479 = vld [vmem:[%s1 + $0x1fc] sm:$0xf]
      %v1481 = vunpack.c.l.b16 %v1463
      %v1482 = vpack.c.b16 %v1481, %v1481
      %vm1483 = vsmask.f32 5376
      %v1485 = vshrl.u32 %v1310, 16
      %v1487 = vrot.slane %v1485, 2
      %v1488 = vshll.u32 %v1310, 16
      %v1490 = vrot.slane %v1488, 3
      %v1491 = vor.u32 %v1487, %v1490
      %v1493 = vshrl.u32 %v1311, 16
      %v1495 = vrot.slane %v1493, 2
      %v1496 = vshll.u32 %v1311, 16
      %v1498 = vrot.slane %v1496, 3
      %v1499 = vor.u32 %v1495, %v1498
      %v1500 = vsel %vm1483, %v1491, %v1499
      %v1502 = vshrl.u32 %v1312, 16
      %v1504 = vrot.slane %v1502, 2
      %v1505 = vshll.u32 %v1312, 16
      %v1507 = vrot.slane %v1505, 3
      %v1508 = vor.u32 %v1504, %v1507
      %v1509 = vsel %vm1483, %v1499, %v1508
      %v1511 = vshrl.u32 %v1313, 16
      %v1513 = vrot.slane %v1511, 2
      %v1514 = vshll.u32 %v1313, 16
      %v1516 = vrot.slane %v1514, 3
      %v1517 = vor.u32 %v1513, %v1516
      %v1518 = vsel %vm1483, %v1508, %v1517
      %v1520 = vshrl.u32 %v1314, 16
      %v1522 = vrot.slane %v1520, 2
      %v1523 = vshll.u32 %v1314, 16
      %v1525 = vrot.slane %v1523, 3
      %v1526 = vor.u32 %v1522, %v1525
      %v1527 = vsel %vm1483, %v1517, %v1526
      %v1529 = vshrl.u32 %v1482, 16
      %v1531 = vrot.slane %v1529, 2
      %v1532 = vshll.u32 %v1482, 16
      %v1534 = vrot.slane %v1532, 3
      %v1535 = vor.u32 %v1531, %v1534
      %v1536 = vsel %vm1483, %v1526, %v1535
      %v1558 = vunpack.c.l.b16 %v1464
      %v1559 = vunpack.c.l.b16 %v1465
      %v1560 = vunpack.c.l.b16 %v1466
      %v1561 = vunpack.c.l.b16 %v1467
      %v1562 = vunpack.c.l.b16 %v1468
      %v1563 = vunpack.c.l.b16 %v1469
      %v1564 = vunpack.c.l.b16 %v1470
      %v1565 = vunpack.c.l.b16 %v1471
      %v1566 = vunpack.c.l.b16 %v1472
      %v1567 = vunpack.c.l.b16 %v1473
      %v1568 = vunpack.c.l.b16 %v1474
      %v1569 = vunpack.c.l.b16 %v1475
      %v1570 = vunpack.c.l.b16 %v1476
      %v1571 = vunpack.c.l.b16 %v1477
      %v1572 = vunpack.c.l.b16 %v1478
      %v1573 = vunpack.c.l.b16 %v1479
      %v1574 = vpack.c.b16 %v1559, %v1558
      %v1575 = vpack.c.b16 %v1561, %v1560
      %v1576 = vpack.c.b16 %v1563, %v1562
      %v1577 = vpack.c.b16 %v1565, %v1564
      %v1578 = vpack.c.b16 %v1567, %v1566
      %v1579 = vpack.c.b16 %v1569, %v1568
      %v1580 = vpack.c.b16 %v1571, %v1570
      %v1581 = vpack.c.b16 %v1573, %v1572
      %1590 = vmatprep.subr.bf16.mxu0 0
      %1591 = vmatpush1.bf16.msra.mxu0 %v1581
      %1592 = vmatprep.subr.bf16.mxu0 0
      %1593 = vmatpush1.bf16.msra.mxu0 %v1580
      %1594 = vmatprep.subr.bf16.mxu0 0
      %1595 = vmatpush1.bf16.msra.mxu0 %v1579
      %1596 = vmatprep.subr.bf16.mxu0 0
      %1597 = vmatpush1.bf16.msra.mxu0 %v1578
      %1598 = vmatprep.subr.bf16.mxu0 0
      %1599 = vmatpush1.bf16.msra.mxu0 %v1577
      %1600 = vmatprep.subr.bf16.mxu0 0
      %1601 = vmatpush1.bf16.msra.mxu0 %v1576
      %1602 = vmatprep.subr.bf16.mxu0 0
      %1603 = vmatpush1.bf16.msra.mxu0 %v1575
      %1604 = vmatprep.subr.bf16.mxu0 0
      %1605 = vmatpush1.bf16.msra.mxu0 %v1574
      %1606 = vmatprep.subr.bf16.mxu0 0
      %1607 = vmatpush2.bf16.msra.mxu0 0
      %1608 = vmatprep.subr.bf16.mxu0 0
      %1609 = vmatpush2.bf16.msra.mxu0 0
      %1610 = vmatprep.subr.bf16.mxu0 0
      %1611 = vmatpush2.bf16.msra.mxu0 0
      %1612 = vmatprep.subr.bf16.mxu0 0
      %1613 = vmatpush2.bf16.msra.mxu0 0
      %1614 = vmatprep.subr.bf16.mxu0 0
      %1615 = vmatpush2.bf16.msra.mxu0 0
      %1616 = vmatprep.subr.bf16.mxu0 0
      %1617 = vmatpush2.bf16.msra.mxu0 0
      %1618 = vmatprep.subr.bf16.mxu0 0
      %1619 = vmatpush2.bf16.msra.mxu0 0
      %1620 = vmatprep.subr.bf16.mxu0 0
      %1621 = vmatpush2.bf16.msra.mxu0 0
      %1622 = vmatprep.mubr.bf16.mxu0 0
      %1623 = vmatmul.mubr.bf16.gmra.mxu0 %v1500
      %v1624 = vpop.f32.mrf.mxu0
      %v1625 = vadd.f32 0.0, %v1624
      %v1626 = vpop.f32.mrf.mxu0
      %v1627 = vpop.f32.mrf.mxu0
      %v1628 = vadd.f32 0.0, %v1627
      %v1629 = vpop.f32.mrf.mxu0
      %1630 = vmatprep.mubr.bf16.mxu0 0
      %1631 = vmatmul.mubr.bf16.gmra.mxu0 %v1509
      %v1632 = vpop.f32.mrf.mxu0
      %v1633 = vadd.f32 0.0, %v1632
      %v1634 = vpop.f32.mrf.mxu0
      %v1635 = vpop.f32.mrf.mxu0
      %v1636 = vadd.f32 0.0, %v1635
      %v1637 = vpop.f32.mrf.mxu0
      %1638 = vmatprep.mubr.bf16.mxu0 0
      %1639 = vmatmul.mubr.bf16.gmra.mxu0 %v1518
      %v1640 = vpop.f32.mrf.mxu0
      %v1641 = vadd.f32 0.0, %v1640
      %v1642 = vpop.f32.mrf.mxu0
      %v1643 = vpop.f32.mrf.mxu0
      %v1644 = vadd.f32 0.0, %v1643
      %v1645 = vpop.f32.mrf.mxu0
      %1646 = vmatprep.mubr.bf16.mxu0 0
      %1647 = vmatmul.mubr.bf16.gmra.mxu0 %v1527
      %v1648 = vpop.f32.mrf.mxu0
      %v1649 = vadd.f32 0.0, %v1648
      %v1650 = vpop.f32.mrf.mxu0
      %v1651 = vpop.f32.mrf.mxu0
      %v1652 = vadd.f32 0.0, %v1651
      %v1653 = vpop.f32.mrf.mxu0
      %1654 = vmatprep.mubr.bf16.mxu0 0
      %1655 = vmatmul.mubr.bf16.gmra.mxu0 %v1536
      %v1656 = vpop.f32.mrf.mxu0
      %v1657 = vadd.f32 0.0, %v1656
      %v1658 = vpop.f32.mrf.mxu0
      %v1659 = vpop.f32.mrf.mxu0
      %v1660 = vadd.f32 0.0, %v1659
      %v1661 = vpop.f32.mrf.mxu0
      %1662 = vdwg.mxu0
      %v1663 = vadd.f32 %v1453, %v1625
      %v1664 = vadd.f32 %v1454, %v1628
      %v1665 = vadd.f32 %v1455, %v1633
      %v1666 = vadd.f32 %v1456, %v1636
      %v1667 = vadd.f32 %v1457, %v1641
      %v1668 = vadd.f32 %v1458, %v1644
      %v1669 = vadd.f32 %v1459, %v1649
      %v1670 = vadd.f32 %v1460, %v1652
      %v1671 = vadd.f32 %v1461, %v1657
      %v1672 = vadd.f32 %v1462, %v1660
      %v1673 = vld [vmem:[%s138 + $0x8] sm:$0x8]
      %v1674 = vld [vmem:[%s1 + $0x200] sm:$0xf]
      %v1675 = vld [vmem:[%s1 + $0x204] sm:$0xf]
      %v1676 = vld [vmem:[%s1 + $0x208] sm:$0xf]
      %v1677 = vld [vmem:[%s1 + $0x20c] sm:$0xf]
      %v1678 = vld [vmem:[%s1 + $0x210] sm:$0xf]
      %v1679 = vld [vmem:[%s1 + $0x214] sm:$0xf]
      %v1680 = vld [vmem:[%s1 + $0x218] sm:$0xf]
      %v1681 = vld [vmem:[%s1 + $0x21c] sm:$0xf]
      %v1682 = vld [vmem:[%s1 + $0x220] sm:$0xf]
      %v1683 = vld [vmem:[%s1 + $0x224] sm:$0xf]
      %v1684 = vld [vmem:[%s1 + $0x228] sm:$0xf]
      %v1685 = vld [vmem:[%s1 + $0x22c] sm:$0xf]
      %v1686 = vld [vmem:[%s1 + $0x230] sm:$0xf]
      %v1687 = vld [vmem:[%s1 + $0x234] sm:$0xf]
      %v1688 = vld [vmem:[%s1 + $0x238] sm:$0xf]
      %v1689 = vld [vmem:[%s1 + $0x23c] sm:$0xf]
      %v1691 = vunpack.c.l.b16 %v1673
      %v1692 = vpack.c.b16 %v1300, %v1691
      %vm1693 = vcmask 1044480
      %v1694 = vrot.slane %v1692, 3
      %v1695 = vrot.slane %v1311, 3
      %v1696 = vsel %vm1693, %v1694, %v1695
      %v1697 = vrot.slane %v1312, 3
      %v1698 = vsel %vm1693, %v1695, %v1697
      %v1699 = vrot.slane %v1313, 3
      %v1700 = vsel %vm1693, %v1697, %v1699
      %v1701 = vrot.slane %v1314, 3
      %v1702 = vsel %vm1693, %v1699, %v1701
      %v1703 = vrot.slane %v1482, 3
      %v1704 = vsel %vm1693, %v1701, %v1703
      %v1726 = vunpack.c.l.b16 %v1674
      %v1727 = vunpack.c.l.b16 %v1675
      %v1728 = vunpack.c.l.b16 %v1676
      %v1729 = vunpack.c.l.b16 %v1677
      %v1730 = vunpack.c.l.b16 %v1678
      %v1731 = vunpack.c.l.b16 %v1679
      %v1732 = vunpack.c.l.b16 %v1680
      %v1733 = vunpack.c.l.b16 %v1681
      %v1734 = vunpack.c.l.b16 %v1682
      %v1735 = vunpack.c.l.b16 %v1683
      %v1736 = vunpack.c.l.b16 %v1684
      %v1737 = vunpack.c.l.b16 %v1685
      %v1738 = vunpack.c.l.b16 %v1686
      %v1739 = vunpack.c.l.b16 %v1687
      %v1740 = vunpack.c.l.b16 %v1688
      %v1741 = vunpack.c.l.b16 %v1689
      %v1742 = vpack.c.b16 %v1727, %v1726
      %v1743 = vpack.c.b16 %v1729, %v1728
      %v1744 = vpack.c.b16 %v1731, %v1730
      %v1745 = vpack.c.b16 %v1733, %v1732
      %v1746 = vpack.c.b16 %v1735, %v1734
      %v1747 = vpack.c.b16 %v1737, %v1736
      %v1748 = vpack.c.b16 %v1739, %v1738
      %v1749 = vpack.c.b16 %v1741, %v1740
      %1758 = vmatprep.subr.bf16.mxu0 0
      %1759 = vmatpush1.bf16.msra.mxu0 %v1749
      %1760 = vmatprep.subr.bf16.mxu0 0
      %1761 = vmatpush1.bf16.msra.mxu0 %v1748
      %1762 = vmatprep.subr.bf16.mxu0 0
      %1763 = vmatpush1.bf16.msra.mxu0 %v1747
      %1764 = vmatprep.subr.bf16.mxu0 0
      %1765 = vmatpush1.bf16.msra.mxu0 %v1746
      %1766 = vmatprep.subr.bf16.mxu0 0
      %1767 = vmatpush1.bf16.msra.mxu0 %v1745
      %1768 = vmatprep.subr.bf16.mxu0 0
      %1769 = vmatpush1.bf16.msra.mxu0 %v1744
      %1770 = vmatprep.subr.bf16.mxu0 0
      %1771 = vmatpush1.bf16.msra.mxu0 %v1743
      %1772 = vmatprep.subr.bf16.mxu0 0
      %1773 = vmatpush1.bf16.msra.mxu0 %v1742
      %1774 = vmatprep.subr.bf16.mxu0 0
      %1775 = vmatpush2.bf16.msra.mxu0 0
      %1776 = vmatprep.subr.bf16.mxu0 0
      %1777 = vmatpush2.bf16.msra.mxu0 0
      %1778 = vmatprep.subr.bf16.mxu0 0
      %1779 = vmatpush2.bf16.msra.mxu0 0
      %1780 = vmatprep.subr.bf16.mxu0 0
      %1781 = vmatpush2.bf16.msra.mxu0 0
      %1782 = vmatprep.subr.bf16.mxu0 0
      %1783 = vmatpush2.bf16.msra.mxu0 0
      %1784 = vmatprep.subr.bf16.mxu0 0
      %1785 = vmatpush2.bf16.msra.mxu0 0
      %1786 = vmatprep.subr.bf16.mxu0 0
      %1787 = vmatpush2.bf16.msra.mxu0 0
      %1788 = vmatprep.subr.bf16.mxu0 0
      %1789 = vmatpush2.bf16.msra.mxu0 0
      %1790 = vmatprep.mubr.bf16.mxu0 0
      %1791 = vmatmul.mubr.bf16.gmra.mxu0 %v1696
      %v1792 = vpop.f32.mrf.mxu0
      %v1793 = vadd.f32 0.0, %v1792
      %v1794 = vpop.f32.mrf.mxu0
      %v1795 = vpop.f32.mrf.mxu0
      %v1796 = vadd.f32 0.0, %v1795
      %v1797 = vpop.f32.mrf.mxu0
      %1798 = vmatprep.mubr.bf16.mxu0 0
      %1799 = vmatmul.mubr.bf16.gmra.mxu0 %v1698
      %v1800 = vpop.f32.mrf.mxu0
      %v1801 = vadd.f32 0.0, %v1800
      %v1802 = vpop.f32.mrf.mxu0
      %v1803 = vpop.f32.mrf.mxu0
      %v1804 = vadd.f32 0.0, %v1803
      %v1805 = vpop.f32.mrf.mxu0
      %1806 = vmatprep.mubr.bf16.mxu0 0
      %1807 = vmatmul.mubr.bf16.gmra.mxu0 %v1700
      %v1808 = vpop.f32.mrf.mxu0
      %v1809 = vadd.f32 0.0, %v1808
      %v1810 = vpop.f32.mrf.mxu0
      %v1811 = vpop.f32.mrf.mxu0
      %v1812 = vadd.f32 0.0, %v1811
      %v1813 = vpop.f32.mrf.mxu0
      %1814 = vmatprep.mubr.bf16.mxu0 0
      %1815 = vmatmul.mubr.bf16.gmra.mxu0 %v1702
      %v1816 = vpop.f32.mrf.mxu0
      %v1817 = vadd.f32 0.0, %v1816
      %v1818 = vpop.f32.mrf.mxu0
      %v1819 = vpop.f32.mrf.mxu0
      %v1820 = vadd.f32 0.0, %v1819
      %v1821 = vpop.f32.mrf.mxu0
      %1822 = vmatprep.mubr.bf16.mxu0 0
      %1823 = vmatmul.mubr.bf16.gmra.mxu0 %v1704
      %v1824 = vpop.f32.mrf.mxu0
      %v1825 = vadd.f32 0.0, %v1824
      %v1826 = vpop.f32.mrf.mxu0
      %v1827 = vpop.f32.mrf.mxu0
      %v1828 = vadd.f32 0.0, %v1827
      %v1829 = vpop.f32.mrf.mxu0
      %1830 = vdwg.mxu0
      %v1831 = vadd.f32 %v1663, %v1793
      %v1832 = vadd.f32 %v1664, %v1796
      %v1833 = vadd.f32 %v1665, %v1801
      %v1834 = vadd.f32 %v1666, %v1804
      %v1835 = vadd.f32 %v1667, %v1809
      %v1836 = vadd.f32 %v1668, %v1812
      %v1837 = vadd.f32 %v1669, %v1817
      %v1838 = vadd.f32 %v1670, %v1820
      %v1839 = vadd.f32 %v1671, %v1825
      %v1840 = vadd.f32 %v1672, %v1828
      %v1841 = vpack.c.bf16 %v1832, %v1831
      %v1842 = vpack.c.bf16 %v1834, %v1833
      %v1843 = vpack.c.bf16 %v1836, %v1835
      %v1844 = vpack.c.bf16 %v1838, %v1837
      %v1845 = vpack.c.bf16 %v1840, %v1839
      %v1851 = vunpack.c.l.b16 %v1841
      %v1852 = vunpack.c.h.b16 %v1841
      %v1853 = vunpack.c.l.b16 %v1842
      %v1854 = vunpack.c.h.b16 %v1842
      %v1855 = vunpack.c.l.b16 %v1843
      %v1856 = vunpack.c.h.b16 %v1843
      %v1857 = vunpack.c.l.b16 %v1844
      %v1858 = vunpack.c.h.b16 %v1844
      %v1859 = vunpack.c.l.b16 %v1845
      %v1860 = vunpack.c.h.b16 %v1845
      %v1861 = vpack.c.b16 %v1851, %v1851
      %v1862 = vpack.c.b16 %v1852, %v1852
      %v1863 = vpack.c.b16 %v1853, %v1853
      %v1864 = vpack.c.b16 %v1854, %v1854
      %v1865 = vpack.c.b16 %v1855, %v1855
      %v1866 = vpack.c.b16 %v1856, %v1856
      %v1867 = vpack.c.b16 %v1857, %v1857
      %v1868 = vpack.c.b16 %v1858, %v1858
      %v1869 = vpack.c.b16 %v1859, %v1859
      %v1870 = vpack.c.b16 %v1860, %v1860
      %vm1881 = vcmask 60416
      %1882 = vst.msk [vmem:[%s143] sm:$0xf] %vm1881, %v1861
      %1883 = vst.msk [vmem:[%s143 + $0x4] sm:$0xf] %vm1881, %v1862
      %1884 = vst.msk [vmem:[%s143 + $0x8] sm:$0xf] %vm1881, %v1863
      %1885 = vst.msk [vmem:[%s143 + $0xc] sm:$0xf] %vm1881, %v1864
      %1886 = vst.msk [vmem:[%s143 + $0x10] sm:$0xf] %vm1881, %v1865
      %1887 = vst.msk [vmem:[%s143 + $0x14] sm:$0xf] %vm1881, %v1866
      %1888 = vst.msk [vmem:[%s143 + $0x18] sm:$0xf] %vm1881, %v1867
      %1889 = vst.msk [vmem:[%s143 + $0x1c] sm:$0xf] %vm1881, %v1868
      %1890 = vst.msk [vmem:[%s143 + $0x20] sm:$0xf] %vm1881, %v1869
      %1891 = vst.msk [vmem:[%s143 + $0x24] sm:$0xf] %vm1881, %v1870
      %p1892 = scmp.lt.s32.totalorder %s13, 1
      %s1893 = scalar_select %p1892, %s13, 1
      %s1894 = smul.addr %s1893, 10
      %s1895 = smul.addr %s1894, 4
      %s1896 = scalar_lea.vmem %s2, %s1895
      // Predicated region
      $region29: #{densenet_forward.28} parent=27 // pred_check
        %p1897 = pneg %p78
      $region30: #{densenet_forward.28} parent=27 // pred_check_branch
        %1899 = sbr.rel (%p1897) target = $region32
      $region31: #{densenet_forward.28} parent=27 // pred_region
        _
      $region32: #{densenet_forward.28} parent=27 // pred_fallthru
        _
    $region28: #{densenet_forward.28} parent=5 // pred_fallthru
      _
    %p1900 = scmp.le.s32.totalorder 2, %s8
    // Predicated region
    $region33: #{densenet_forward.28} parent=5 // pred_check
      %p1901 = pneg %p1900
    $region34: #{densenet_forward.28} parent=5 // pred_check_branch
      %1903 = sbr.rel (%p1901) target = $region36
    $region35: #{densenet_forward.28} parent=5 // pred_region
      %s1904 = ssub.s32 %s8, 2
      // Predicated region
      $region37: #{densenet_forward.28} parent=35 // pred_check
        %p1905 = pneg %p84
      $region38: #{densenet_forward.28} parent=35 // pred_check_branch
        %1907 = sbr.rel (%p1905) target = $region40
      $region39: #{densenet_forward.28} parent=35 // pred_region
        %p1908 = scmp.lt.s32.totalorder %s14, 1
        %s1909 = scalar_select %p1908, %s14, 1
        %s1910 = smul.addr %s1909, 10
        %s1911 = smul.addr %s1910, 4
        %s1912 = scalar_lea.vmem %s2, %s1911
      $region40: #{densenet_forward.28} parent=35 // pred_fallthru
        _
    $region36: #{densenet_forward.28} parent=5 // pred_fallthru
      _
  $region6: #{densenet_forward.28} parent=0 // loop_footer
    %s12 = sadd.s32 1, %s8
  $region7: #{densenet_forward.28} parent=0 // loop_footer_branch
    %7 = sbr.rel target = $region3
  $region8: #{densenet_forward.28} parent=0 // loop_exit
    _

// kernel: densenet_forward.37
$region0: #{densenet_forward.37}
  #allocation0 [shape = 'u32[]', space=smem, size = 0x4, offset = 0x4, fixed_abs, tag = 'smem constant byte address 0x4 - core index']
  #allocation1 [shape = 'u32[144,128]{1,0:T(1,128)}', space=vmem, size = 0x12000, scoped, tag = 'internal scratch']
  %s0 = inlined_call_operand.vmem [shape: bf16[32,128], index: 0, kind: input, shape index: {}]
  %s1 = inlined_call_operand.vmem [shape: bf16[128,128], index: 1, kind: input, shape index: {}]
  %s2 = inlined_call_operand.vmem [shape: f32[1,128], index: 2, kind: input, shape index: {}]
  %s3 = inlined_call_operand.vmem [shape: f32[1,128], index: 3, kind: input, shape index: {}]
  %s4 = inlined_call_operand.vmem [shape: bf16[32,128], index: 4, kind: output, shape index: {}]
  %s5 = sld [smem:[#allocation0]]
  $region26: #{densenet_forward.37} parent=0
    _
  %s7 = ssub.s32 1, %s5
  %s8 = scalar_select 0, %s7, %s5
  // Predicated region
  $region2: #{densenet_forward.37} parent=0 // pred_check
    _
  $region3: #{densenet_forward.37} parent=0 // pred_check_branch
    %10 = sbr.rel (0) target = $region5
  $region4: #{densenet_forward.37} parent=0 // pred_region
    _
  $region5: #{densenet_forward.37} parent=0 // pred_fallthru
    _
  // Predicated region
  $region6: #{densenet_forward.37} parent=0 // pred_check
    _
  $region7: #{densenet_forward.37} parent=0 // pred_check_branch
    %12 = sbr.rel (0) target = $region9
  $region8: #{densenet_forward.37} parent=0 // pred_region
    _
  $region9: #{densenet_forward.37} parent=0 // pred_fallthru
    _
  // Predicated region
  $region10: #{densenet_forward.37} parent=0 // pred_check
    _
  $region11: #{densenet_forward.37} parent=0 // pred_check_branch
    %14 = sbr.rel (0) target = $region13
  $region12: #{densenet_forward.37} parent=0 // pred_region
    _
  $region13: #{densenet_forward.37} parent=0 // pred_fallthru
    _
  // Predicated region
  $region14: #{densenet_forward.37} parent=0 // pred_check
    _
  $region15: #{densenet_forward.37} parent=0 // pred_check_branch
    %16 = sbr.rel (0) target = $region17
  $region16: #{densenet_forward.37} parent=0 // pred_region
    _
  $region17: #{densenet_forward.37} parent=0 // pred_fallthru
    _
  %v18 = vld [vmem:[%s0] sm:$0xf]
  %v19 = vld [vmem:[%s0 + $0x4] sm:$0xf]
  %v20 = vld [vmem:[%s0 + $0x8] sm:$0xf]
  %v21 = vld [vmem:[%s0 + $0xc] sm:$0xf]
  %v22 = vunpack.c.l.bf16 %v18
  %v23 = vunpack.c.l.bf16 %v19
  %v24 = vunpack.c.l.bf16 %v20
  %v25 = vunpack.c.l.bf16 %v21
  %v26 = vld [vmem:[%s2] sm:$0x1]
  %v28 = vlaneseq
  %v29 = vshrl.u32 %v28, 7
  %v30 = vsub.s32 0, %v29
  %v31 = vrot.slane %v26, %v30
  %v33 = vmul.f32 %v22, %v31
  %v34 = vmul.f32 %v23, %v31
  %v35 = vmul.f32 %v24, %v31
  %v36 = vmul.f32 %v25, %v31
  %v37 = vld [vmem:[%s3] sm:$0x1]
  %v39 = vlaneseq
  %v40 = vshrl.u32 %v39, 7
  %v41 = vsub.s32 0, %v40
  %v42 = vrot.slane %v37, %v41
  %v44 = vadd.f32 %v33, %v42
  %v45 = vadd.f32 %v34, %v42
  %v46 = vadd.f32 %v35, %v42
  %v47 = vadd.f32 %v36, %v42
  %v48 = vmax.f32 %v44, 0.0
  %v49 = vmax.f32 %v45, 0.0
  %v50 = vmax.f32 %v46, 0.0
  %v51 = vmax.f32 %v47, 0.0
  %v52 = vpack.c.bf16 %v49, %v48
  %v53 = vpack.c.bf16 %v51, %v50
  %v54 = vld [vmem:[%s1] sm:$0xf]
  %v55 = vld [vmem:[%s1 + $0x4] sm:$0xf]
  %v56 = vld [vmem:[%s1 + $0x8] sm:$0xf]
  %v57 = vld [vmem:[%s1 + $0xc] sm:$0xf]
  %v58 = vld [vmem:[%s1 + $0x10] sm:$0xf]
  %v59 = vld [vmem:[%s1 + $0x14] sm:$0xf]
  %v60 = vld [vmem:[%s1 + $0x18] sm:$0xf]
  %v61 = vld [vmem:[%s1 + $0x1c] sm:$0xf]
  %v62 = vld [vmem:[%s1 + $0x20] sm:$0xf]
  %v63 = vld [vmem:[%s1 + $0x24] sm:$0xf]
  %v64 = vld [vmem:[%s1 + $0x28] sm:$0xf]
  %v65 = vld [vmem:[%s1 + $0x2c] sm:$0xf]
  %v66 = vld [vmem:[%s1 + $0x30] sm:$0xf]
  %v67 = vld [vmem:[%s1 + $0x34] sm:$0xf]
  %v68 = vld [vmem:[%s1 + $0x38] sm:$0xf]
  %v69 = vld [vmem:[%s1 + $0x3c] sm:$0xf]
  %v86 = vunpack.c.l.b16 %v54
  %v87 = vunpack.c.l.b16 %v55
  %v88 = vunpack.c.l.b16 %v56
  %v89 = vunpack.c.l.b16 %v57
  %v90 = vunpack.c.l.b16 %v58
  %v91 = vunpack.c.l.b16 %v59
  %v92 = vunpack.c.l.b16 %v60
  %v93 = vunpack.c.l.b16 %v61
  %v94 = vunpack.c.l.b16 %v62
  %v95 = vunpack.c.l.b16 %v63
  %v96 = vunpack.c.l.b16 %v64
  %v97 = vunpack.c.l.b16 %v65
  %v98 = vunpack.c.l.b16 %v66
  %v99 = vunpack.c.l.b16 %v67
  %v100 = vunpack.c.l.b16 %v68
  %v101 = vunpack.c.l.b16 %v69
  %v102 = vpack.c.b16 %v87, %v86
  %v103 = vpack.c.b16 %v89, %v88
  %v104 = vpack.c.b16 %v91, %v90
  %v105 = vpack.c.b16 %v93, %v92
  %v106 = vpack.c.b16 %v95, %v94
  %v107 = vpack.c.b16 %v97, %v96
  %v108 = vpack.c.b16 %v99, %v98
  %v109 = vpack.c.b16 %v101, %v100
  %118 = vmatprep.subr.bf16.mxu0 0
  %119 = vmatpush1.bf16.msra.mxu0 %v109
  %120 = vmatprep.subr.bf16.mxu0 0
  %121 = vmatpush1.bf16.msra.mxu0 %v108
  %122 = vmatprep.subr.bf16.mxu0 0
  %123 = vmatpush1.bf16.msra.mxu0 %v107
  %124 = vmatprep.subr.bf16.mxu0 0
  %125 = vmatpush1.bf16.msra.mxu0 %v106
  %126 = vmatprep.subr.bf16.mxu0 0
  %127 = vmatpush1.bf16.msra.mxu0 %v105
  %128 = vmatprep.subr.bf16.mxu0 0
  %129 = vmatpush1.bf16.msra.mxu0 %v104
  %130 = vmatprep.subr.bf16.mxu0 0
  %131 = vmatpush1.bf16.msra.mxu0 %v103
  %132 = vmatprep.subr.bf16.mxu0 0
  %133 = vmatpush1.bf16.msra.mxu0 %v102
  %134 = vmatprep.subr.bf16.mxu0 0
  %135 = vmatpush2.bf16.msra.mxu0 0
  %136 = vmatprep.subr.bf16.mxu0 0
  %137 = vmatpush2.bf16.msra.mxu0 0
  %138 = vmatprep.subr.bf16.mxu0 0
  %139 = vmatpush2.bf16.msra.mxu0 0
  %140 = vmatprep.subr.bf16.mxu0 0
  %141 = vmatpush2.bf16.msra.mxu0 0
  %142 = vmatprep.subr.bf16.mxu0 0
  %143 = vmatpush2.bf16.msra.mxu0 0
  %144 = vmatprep.subr.bf16.mxu0 0
  %145 = vmatpush2.bf16.msra.mxu0 0
  %146 = vmatprep.subr.bf16.mxu0 0
  %147 = vmatpush2.bf16.msra.mxu0 0
  %148 = vmatprep.subr.bf16.mxu0 0
  %149 = vmatpush2.bf16.msra.mxu0 0
  %150 = vmatprep.mubr.bf16.mxu0 0
  %151 = vmatmul.mubr.bf16.gmra.mxu0 %v52
  %v152 = vpop.f32.mrf.mxu0
  %v153 = vadd.f32 0.0, %v152
  %v154 = vpop.f32.mrf.mxu0
  %v155 = vpop.f32.mrf.mxu0
  %v156 = vadd.f32 0.0, %v155
  %v157 = vpop.f32.mrf.mxu0
  %158 = vmatprep.mubr.bf16.mxu0 0
  %159 = vmatmul.mubr.bf16.gmra.mxu0 %v53
  %v160 = vpop.f32.mrf.mxu0
  %v161 = vadd.f32 0.0, %v160
  %v162 = vpop.f32.mrf.mxu0
  %v163 = vpop.f32.mrf.mxu0
  %v164 = vadd.f32 0.0, %v163
  %v165 = vpop.f32.mrf.mxu0
  %166 = vdwg.mxu0
  %v167 = vpack.c.bf16 %v156, %v153
  %v168 = vpack.c.bf16 %v164, %v161
  %v171 = vunpack.c.l.b16 %v167
  %v172 = vunpack.c.h.b16 %v167
  %v173 = vunpack.c.l.b16 %v168
  %v174 = vunpack.c.h.b16 %v168
  %v175 = vpack.c.b16 %v171, %v171
  %v176 = vpack.c.b16 %v172, %v172
  %v177 = vpack.c.b16 %v173, %v173
  %v178 = vpack.c.b16 %v174, %v174
  %183 = vst [vmem:[%s4] sm:$0xf] %v175
  %184 = vst [vmem:[%s4 + $0x4] sm:$0xf] %v176
  %185 = vst [vmem:[%s4 + $0x8] sm:$0xf] %v177
  %186 = vst [vmem:[%s4 + $0xc] sm:$0xf] %v178
  // Predicated region
  $region18: #{densenet_forward.37} parent=0 // pred_check
    _
  $region19: #{densenet_forward.37} parent=0 // pred_check_branch
    %188 = sbr.rel (0) target = $region21
  $region20: #{densenet_forward.37} parent=0 // pred_region
    _
  $region21: #{densenet_forward.37} parent=0 // pred_fallthru
    _
  // Predicated region
  $region22: #{densenet_forward.37} parent=0 // pred_check
    _
  $region23: #{densenet_forward.37} parent=0 // pred_check_branch
    %190 = sbr.rel (0) target = $region25
  $region24: #{densenet_forward.37} parent=0 // pred_region
    _
  $region25: #{densenet_forward.37} parent=0 // pred_fallthru
    _

// kernel: densenet_forward.34
$region0: #{densenet_forward.34}
  #allocation0 [shape = 'u32[]', space=smem, size = 0x4, offset = 0x4, fixed_abs, tag = 'smem constant byte address 0x4 - core index']
  #allocation1 [shape = 'u32[144,128]{1,0:T(1,128)}', space=vmem, size = 0x12000, scoped, tag = 'internal scratch']
  %s0 = inlined_call_operand.vmem [shape: bf16[2,42,128], index: 0, kind: input, shape index: {}]
  %s1 = inlined_call_operand.vmem [shape: bf16[1152,8], index: 1, kind: input, shape index: {}]
  %s2 = inlined_call_operand.vmem [shape: bf16[2,24,8], index: 2, kind: output, shape index: {}]
  %s3 = sld [smem:[#allocation0]]
  $region41: #{densenet_forward.34} parent=0
    _
  %s5 = ssub.s32 1, %s3
  %s6 = scalar_select 0, %s5, %s3
  loop: start=0, step=1, limit=4
  $region2: #{densenet_forward.34} parent=0 // loop_pre_header
    _
  $region3: #{densenet_forward.34} parent=0 // loop_header
    %s8 = sphi 0, %s12
    %p9 = scmp.ge.s32.totalorder %s8, 4
    %s18 = sphi 0, %s20
    %s21 = sphi 0, %s18
    %s22 = sphi 0, %s21
    %s38 = sphi 0, %s22
    %s42 = sphi 0, %s42
    %s44 = sphi 0, %s42
    %s45 = sphi 0, %s44
    %s59 = sphi 0, %s45
    %s65 = sphi 0, %s67
    %s68 = sphi 0, %s65
    %s69 = sphi 0, %s68
    %s85 = sphi 0, %s69
  $region4: #{densenet_forward.34} parent=0 // loop_header_branch
    %11 = sbr.rel (%p9) target = $region8
  $region5: #{densenet_forward.34} parent=0 // loop_body
    %s13 = ssub.s32 %s8, 1
    %s14 = ssub.s32 %s8, 2
    %s15 = sadd.s32 %s8, 1
    %s16 = ssub.s32 %s8, %s15
    %p17 = scmp.eq.s32.totalorder %s16, 0
    %s19 = sadd.s32 %s18, 1
    %s20 = scalar_select %p17, %s18, %s19
    %p23 = pneg %p17
    %p24 = scmp.eq.s32.totalorder %s8, 1
    %p25 = por %p23, %p24
    %p26 = scmp.ne.s32.totalorder %s18, %s21
    %p27 = scmp.eq.s32.totalorder %s8, 0
    %p28 = por %p26, %p27
    %p29 = scmp.ne.s32.totalorder %s18, %s21
    %p30 = scmp.eq.s32.totalorder %s13, 1
    %p31 = por %p29, %p30
    %p32 = scmp.ne.s32.totalorder %s21, %s22
    %p33 = scmp.eq.s32.totalorder %s13, 0
    %p34 = por %p32, %p33
    %p35 = scmp.ne.s32.totalorder %s21, %s22
    %p36 = scmp.eq.s32.totalorder %s14, 1
    %p37 = por %p35, %p36
    %p39 = scmp.ne.s32.totalorder %s22, %s38
    %p40 = scmp.eq.s32.totalorder %s14, 0
    %p41 = por %p39, %p40
    %s43 = sadd.s32 %s42, 1
    %p46 = scmp.eq.s32.totalorder %s8, 1
    %p47 = scmp.ne.s32.totalorder %s42, %s44
    %p48 = scmp.eq.s32.totalorder %s8, 0
    %p49 = por %p47, %p48
    %p50 = scmp.ne.s32.totalorder %s42, %s44
    %p51 = scmp.eq.s32.totalorder %s13, 1
    %p52 = por %p50, %p51
    %p53 = scmp.ne.s32.totalorder %s44, %s45
    %p54 = scmp.eq.s32.totalorder %s13, 0
    %p55 = por %p53, %p54
    %p56 = scmp.ne.s32.totalorder %s44, %s45
    %p57 = scmp.eq.s32.totalorder %s14, 1
    %p58 = por %p56, %p57
    %p60 = scmp.ne.s32.totalorder %s45, %s59
    %p61 = scmp.eq.s32.totalorder %s14, 0
    %p62 = por %p60, %p61
    %s63 = ssub.s32 %s8, %s15
    %p64 = scmp.eq.s32.totalorder %s63, 0
    %s66 = sadd.s32 %s65, 1
    %s67 = scalar_select %p64, %s65, %s66
    %p70 = pneg %p64
    %p71 = scmp.eq.s32.totalorder %s8, 1
    %p72 = por %p70, %p71
    %p73 = scmp.ne.s32.totalorder %s65, %s68
    %p74 = scmp.eq.s32.totalorder %s8, 0
    %p75 = por %p73, %p74
    %p76 = scmp.ne.s32.totalorder %s65, %s68
    %p77 = scmp.eq.s32.totalorder %s13, 1
    %p78 = por %p76, %p77
    %p79 = scmp.ne.s32.totalorder %s68, %s69
    %p80 = scmp.eq.s32.totalorder %s13, 0
    %p81 = por %p79, %p80
    %p82 = scmp.ne.s32.totalorder %s68, %s69
    %p83 = scmp.eq.s32.totalorder %s14, 1
    %p84 = por %p82, %p83
    %p86 = scmp.ne.s32.totalorder %s69, %s85
    %p87 = scmp.eq.s32.totalorder %s14, 0
    %p88 = por %p86, %p87
    %p89 = scmp.le.s32.totalorder 1, %s8
    %p90 = scmp.lt.s32.totalorder %s8, 3
    %p91 = pnand %p89, %p90
    %p92 = pneg %p91
    // Predicated region
    $region9: #{densenet_forward.34} parent=5 // pred_check
      _
    $region10: #{densenet_forward.34} parent=5 // pred_check_branch
      %94 = sbr.rel (%p91) target = $region12
    $region11: #{densenet_forward.34} parent=5 // pred_region
      %s95 = ssub.s32 %s8, 1
      // Predicated region
      $region13: #{densenet_forward.34} parent=11 // pred_check
        %p96 = pneg %p55
      $region14: #{densenet_forward.34} parent=11 // pred_check_branch
        %98 = sbr.rel (%p96) target = $region16
      $region15: #{densenet_forward.34} parent=11 // pred_region
        _
      $region16: #{densenet_forward.34} parent=11 // pred_fallthru
        _
    $region12: #{densenet_forward.34} parent=5 // pred_fallthru
      _
    %p99 = scmp.lt.s32.totalorder %s8, 2
    // Predicated region
    $region17: #{densenet_forward.34} parent=5 // pred_check
      %p100 = pneg %p99
    $region18: #{densenet_forward.34} parent=5 // pred_check_branch
      %102 = sbr.rel (%p100) target = $region20
    $region19: #{densenet_forward.34} parent=5 // pred_region
      // Predicated region
      $region21: #{densenet_forward.34} parent=19 // pred_check
        %p103 = pneg %p28
      $region22: #{densenet_forward.34} parent=19 // pred_check_branch
        %105 = sbr.rel (%p103) target = $region24
      $region23: #{densenet_forward.34} parent=19 // pred_region
        %p106 = scmp.lt.s32.totalorder %s8, 1
        %s107 = scalar_select %p106, %s8, 1
        %s108 = smul.addr %s107, 6
        %s109 = smul.addr %s108, 4
        %s110 = scalar_lea.vmem %s0, %s109
      $region24: #{densenet_forward.34} parent=19 // pred_fallthru
        _
    $region20: #{densenet_forward.34} parent=5 // pred_fallthru
      _
    %p111 = scmp.le.s32.totalorder 1, %s8
    %p112 = scmp.lt.s32.totalorder %s8, 3
    %p113 = pnand %p111, %p112
    %p114 = pneg %p113
    // Predicated region
    $region25: #{densenet_forward.34} parent=5 // pred_check
      _
    $region26: #{densenet_forward.34} parent=5 // pred_check_branch
      %116 = sbr.rel (%p113) target = $region28
    $region27: #{densenet_forward.34} parent=5 // pred_region
      %s117 = ssub.s32 %s8, 1
      %p118 = scmp.lt.s32.totalorder %s13, 1
      %s119 = scalar_select %p118, %s13, 1
      %s120 = smul.addr %s119, 6
      %s121 = smul.addr %s120, 4
      %s122 = scalar_lea.vmem %s0, %s121
      %p123 = pneg %p34
      %p124 = pneg %p31
      %p125 = pneg %p55
      %p126 = pneg %p52
      %p127 = pneg %p81
      %p128 = pneg %p78
      %p129 = scmp.lt.s32.totalorder %s13, 1
      %s130 = scalar_select %p129, %s13, 1
      %s131 = smul.addr %s130, 3
      %s132 = smul.addr %s131, 4
      %s133 = scalar_lea.vmem %s2, %s132
      %p134 = scmp.lt.s32.totalorder %s13, 1
      %s135 = scalar_select %p134, %s13, 1
      %s136 = smul.addr %s135, 6
      %s137 = smul.addr %s136, 4
      %s138 = scalar_lea.vmem %s0, %s137
      %p139 = scmp.lt.s32.totalorder %s13, 1
      %s140 = scalar_select %p139, %s13, 1
      %s141 = smul.addr %s140, 3
      %s142 = smul.addr %s141, 4
      %s143 = scalar_lea.vmem %s2, %s142
      %v145 = vld [vmem:[%s138] sm:$0xf]
      %v146 = vld [vmem:[%s138 + $0x4] sm:$0xf]
      %v147 = vld [vmem:[%s138 + $0x8] sm:$0xf]
      %v148 = vld [vmem:[%s1] sm:$0xf]
      %v149 = vld [vmem:[%s1 + $0x4] sm:$0xf]
      %v150 = vld [vmem:[%s1 + $0x8] sm:$0xf]
      %v151 = vld [vmem:[%s1 + $0xc] sm:$0xf]
      %v152 = vld [vmem:[%s1 + $0x10] sm:$0xf]
      %v153 = vld [vmem:[%s1 + $0x14] sm:$0xf]
      %v154 = vld [vmem:[%s1 + $0x18] sm:$0xf]
      %v155 = vld [vmem:[%s1 + $0x1c] sm:$0xf]
      %v156 = vld [vmem:[%s1 + $0x20] sm:$0xf]
      %v157 = vld [vmem:[%s1 + $0x24] sm:$0xf]
      %v158 = vld [vmem:[%s1 + $0x28] sm:$0xf]
      %v159 = vld [vmem:[%s1 + $0x2c] sm:$0xf]
      %v160 = vld [vmem:[%s1 + $0x30] sm:$0xf]
      %v161 = vld [vmem:[%s1 + $0x34] sm:$0xf]
      %v162 = vld [vmem:[%s1 + $0x38] sm:$0xf]
      %v163 = vld [vmem:[%s1 + $0x3c] sm:$0xf]
      %v164 = vld [vmem:[%s138 + $0xc] sm:$0x1]
      %v165 = vld [vmem:[%s1 + $0x40] sm:$0xf]
      %v166 = vld [vmem:[%s1 + $0x44] sm:$0xf]
      %v167 = vld [vmem:[%s1 + $0x48] sm:$0xf]
      %v168 = vld [vmem:[%s1 + $0x4c] sm:$0xf]
      %v169 = vld [vmem:[%s1 + $0x50] sm:$0xf]
      %v170 = vld [vmem:[%s1 + $0x54] sm:$0xf]
      %v171 = vld [vmem:[%s1 + $0x58] sm:$0xf]
      %v172 = vld [vmem:[%s1 + $0x5c] sm:$0xf]
      %v173 = vld [vmem:[%s1 + $0x60] sm:$0xf]
      %v174 = vld [vmem:[%s1 + $0x64] sm:$0xf]
      %v175 = vld [vmem:[%s1 + $0x68] sm:$0xf]
      %v176 = vld [vmem:[%s1 + $0x6c] sm:$0xf]
      %v177 = vld [vmem:[%s1 + $0x70] sm:$0xf]
      %v178 = vld [vmem:[%s1 + $0x74] sm:$0xf]
      %v179 = vld [vmem:[%s1 + $0x78] sm:$0xf]
      %v180 = vld [vmem:[%s1 + $0x7c] sm:$0xf]
      %v185 = vunpack.c.l.b16 %v145
      %v186 = vunpack.c.l.b16 %v146
      %v187 = vunpack.c.l.b16 %v147
      %v188 = vunpack.c.l.b16 %v164
      %v189 = vpack.c.b16 %v186, %v185
      %v190 = vpack.c.b16 %v188, %v187
      %vm191 = vsmask.f32 7424
      %v193 = vshrl.u32 %v189, 16
      %v195 = vshll.u32 %v189, 16
      %v197 = vrot.slane %v195, 1
      %v198 = vor.u32 %v193, %v197
      %v200 = vshll.u32 %v190, 16
      %v202 = vrot.slane %v200, 1
      %v203 = vsel %vm191, %v198, %v202
      %v204 = vshrl.u32 %v190, 16
      %v206 = vor.u32 %v204, %v202
      %v225 = vunpack.c.l.b16 %v165
      %v226 = vunpack.c.l.b16 %v166
      %v227 = vunpack.c.l.b16 %v167
      %v228 = vunpack.c.l.b16 %v168
      %v229 = vunpack.c.l.b16 %v169
      %v230 = vunpack.c.l.b16 %v170
      %v231 = vunpack.c.l.b16 %v171
      %v232 = vunpack.c.l.b16 %v172
      %v233 = vunpack.c.l.b16 %v173
      %v234 = vunpack.c.l.b16 %v174
      %v235 = vunpack.c.l.b16 %v175
      %v236 = vunpack.c.l.b16 %v176
      %v237 = vunpack.c.l.b16 %v177
      %v238 = vunpack.c.l.b16 %v178
      %v239 = vunpack.c.l.b16 %v179
      %v240 = vunpack.c.l.b16 %v180
      %v241 = vpack.c.b16 %v226, %v225
      %v242 = vpack.c.b16 %v228, %v227
      %v243 = vpack.c.b16 %v230, %v229
      %v244 = vpack.c.b16 %v232, %v231
      %v245 = vpack.c.b16 %v234, %v233
      %v246 = vpack.c.b16 %v236, %v235
      %v247 = vpack.c.b16 %v238, %v237
      %v248 = vpack.c.b16 %v240, %v239
      %257 = vmatprep.subr.bf16.mxu0 0
      %258 = vmatpush1.bf16.msra.mxu0 %v248
      %259 = vmatprep.subr.bf16.mxu0 0
      %260 = vmatpush1.bf16.msra.mxu0 %v247
      %261 = vmatprep.subr.bf16.mxu0 0
      %262 = vmatpush1.bf16.msra.mxu0 %v246
      %263 = vmatprep.subr.bf16.mxu0 0
      %264 = vmatpush1.bf16.msra.mxu0 %v245
      %265 = vmatprep.subr.bf16.mxu0 0
      %266 = vmatpush1.bf16.msra.mxu0 %v244
      %267 = vmatprep.subr.bf16.mxu0 0
      %268 = vmatpush1.bf16.msra.mxu0 %v243
      %269 = vmatprep.subr.bf16.mxu0 0
      %270 = vmatpush1.bf16.msra.mxu0 %v242
      %271 = vmatprep.subr.bf16.mxu0 0
      %272 = vmatpush1.bf16.msra.mxu0 %v241
      %273 = vmatprep.subr.bf16.mxu0 0
      %274 = vmatpush2.bf16.msra.mxu0 0
      %275 = vmatprep.subr.bf16.mxu0 0
      %276 = vmatpush2.bf16.msra.mxu0 0
      %277 = vmatprep.subr.bf16.mxu0 0
      %278 = vmatpush2.bf16.msra.mxu0 0
      %279 = vmatprep.subr.bf16.mxu0 0
      %280 = vmatpush2.bf16.msra.mxu0 0
      %281 = vmatprep.subr.bf16.mxu0 0
      %282 = vmatpush2.bf16.msra.mxu0 0
      %283 = vmatprep.subr.bf16.mxu0 0
      %284 = vmatpush2.bf16.msra.mxu0 0
      %285 = vmatprep.subr.bf16.mxu0 0
      %286 = vmatpush2.bf16.msra.mxu0 0
      %287 = vmatprep.subr.bf16.mxu0 0
      %288 = vmatpush2.bf16.msra.mxu0 0
      %289 = vmatprep.mubr.bf16.mxu0 0
      %290 = vmatmul.mubr.bf16.gmra.mxu0 %v203
      %v291 = vpop.f32.mrf.mxu0
      %v292 = vadd.f32 0.0, %v291
      %v293 = vpop.f32.mrf.mxu0
      %v294 = vpop.f32.mrf.mxu0
      %v295 = vadd.f32 0.0, %v294
      %v296 = vpop.f32.mrf.mxu0
      %297 = vmatprep.mubr.bf16.mxu0 0
      %298 = vmatmul.mubr.bf16.gmra.mxu0 %v206
      %v299 = vpop.f32.mrf.mxu0
      %v300 = vadd.f32 0.0, %v299
      %v301 = vpop.f32.mrf.mxu0
      %v302 = vpop.f32.mrf.mxu0
      %v303 = vpop.f32.mrf.mxu0
      %304 = vdwg.mxu0
      %v305 = vpack.c.b16 %v187, %v187
      %v324 = vunpack.c.l.b16 %v148
      %v325 = vunpack.c.l.b16 %v149
      %v326 = vunpack.c.l.b16 %v150
      %v327 = vunpack.c.l.b16 %v151
      %v328 = vunpack.c.l.b16 %v152
      %v329 = vunpack.c.l.b16 %v153
      %v330 = vunpack.c.l.b16 %v154
      %v331 = vunpack.c.l.b16 %v155
      %v332 = vunpack.c.l.b16 %v156
      %v333 = vunpack.c.l.b16 %v157
      %v334 = vunpack.c.l.b16 %v158
      %v335 = vunpack.c.l.b16 %v159
      %v336 = vunpack.c.l.b16 %v160
      %v337 = vunpack.c.l.b16 %v161
      %v338 = vunpack.c.l.b16 %v162
      %v339 = vunpack.c.l.b16 %v163
      %v340 = vpack.c.b16 %v325, %v324
      %v341 = vpack.c.b16 %v327, %v326
      %v342 = vpack.c.b16 %v329, %v328
      %v343 = vpack.c.b16 %v331, %v330
      %v344 = vpack.c.b16 %v333, %v332
      %v345 = vpack.c.b16 %v335, %v334
      %v346 = vpack.c.b16 %v337, %v336
      %v347 = vpack.c.b16 %v339, %v338
      %356 = vmatprep.subr.bf16.mxu0 0
      %357 = vmatpush1.bf16.msra.mxu0 %v347
      %358 = vmatprep.subr.bf16.mxu0 0
      %359 = vmatpush1.bf16.msra.mxu0 %v346
      %360 = vmatprep.subr.bf16.mxu0 0
      %361 = vmatpush1.bf16.msra.mxu0 %v345
      %362 = vmatprep.subr.bf16.mxu0 0
      %363 = vmatpush1.bf16.msra.mxu0 %v344
      %364 = vmatprep.subr.bf16.mxu0 0
      %365 = vmatpush1.bf16.msra.mxu0 %v343
      %366 = vmatprep.subr.bf16.mxu0 0
      %367 = vmatpush1.bf16.msra.mxu0 %v342
      %368 = vmatprep.subr.bf16.mxu0 0
      %369 = vmatpush1.bf16.msra.mxu0 %v341
      %370 = vmatprep.subr.bf16.mxu0 0
      %371 = vmatpush1.bf16.msra.mxu0 %v340
      %372 = vmatprep.subr.bf16.mxu0 0
      %373 = vmatpush2.bf16.msra.mxu0 0
      %374 = vmatprep.subr.bf16.mxu0 0
      %375 = vmatpush2.bf16.msra.mxu0 0
      %376 = vmatprep.subr.bf16.mxu0 0
      %377 = vmatpush2.bf16.msra.mxu0 0
      %378 = vmatprep.subr.bf16.mxu0 0
      %379 = vmatpush2.bf16.msra.mxu0 0
      %380 = vmatprep.subr.bf16.mxu0 0
      %381 = vmatpush2.bf16.msra.mxu0 0
      %382 = vmatprep.subr.bf16.mxu0 0
      %383 = vmatpush2.bf16.msra.mxu0 0
      %384 = vmatprep.subr.bf16.mxu0 0
      %385 = vmatpush2.bf16.msra.mxu0 0
      %386 = vmatprep.subr.bf16.mxu0 0
      %387 = vmatpush2.bf16.msra.mxu0 0
      %388 = vmatprep.mubr.bf16.mxu0 0
      %389 = vmatmul.mubr.bf16.gmra.mxu0 %v189
      %v390 = vpop.f32.mrf.mxu0
      %v391 = vadd.f32 %v292, %v390
      %v392 = vpop.f32.mrf.mxu0
      %v393 = vpop.f32.mrf.mxu0
      %v394 = vadd.f32 %v295, %v393
      %v395 = vpop.f32.mrf.mxu0
      %396 = vmatprep.mubr.bf16.mxu0 0
      %397 = vmatmul.mubr.bf16.gmra.mxu0 %v305
      %v398 = vpop.f32.mrf.mxu0
      %v399 = vadd.f32 %v300, %v398
      %v400 = vpop.f32.mrf.mxu0
      %v401 = vpop.f32.mrf.mxu0
      %v402 = vpop.f32.mrf.mxu0
      %403 = vdwg.mxu0
      %v404 = vld [vmem:[%s138] sm:$0xe]
      %v405 = vld [vmem:[%s1 + $0x80] sm:$0xf]
      %v406 = vld [vmem:[%s1 + $0x84] sm:$0xf]
      %v407 = vld [vmem:[%s1 + $0x88] sm:$0xf]
      %v408 = vld [vmem:[%s1 + $0x8c] sm:$0xf]
      %v409 = vld [vmem:[%s1 + $0x90] sm:$0xf]
      %v410 = vld [vmem:[%s1 + $0x94] sm:$0xf]
      %v411 = vld [vmem:[%s1 + $0x98] sm:$0xf]
      %v412 = vld [vmem:[%s1 + $0x9c] sm:$0xf]
      %v413 = vld [vmem:[%s1 + $0xa0] sm:$0xf]
      %v414 = vld [vmem:[%s1 + $0xa4] sm:$0xf]
      %v415 = vld [vmem:[%s1 + $0xa8] sm:$0xf]
      %v416 = vld [vmem:[%s1 + $0xac] sm:$0xf]
      %v417 = vld [vmem:[%s1 + $0xb0] sm:$0xf]
      %v418 = vld [vmem:[%s1 + $0xb4] sm:$0xf]
      %v419 = vld [vmem:[%s1 + $0xb8] sm:$0xf]
      %v420 = vld [vmem:[%s1 + $0xbc] sm:$0xf]
      %v422 = vunpack.c.l.b16 %v404
      %v423 = vpack.c.b16 %v186, %v422
      %vm424 = vcmask 1046528
      %v425 = vrot.slane %v423, 1
      %v426 = vrot.slane %v190, 1
      %v427 = vsel %vm424, %v425, %v426
      %v446 = vunpack.c.l.b16 %v405
      %v447 = vunpack.c.l.b16 %v406
      %v448 = vunpack.c.l.b16 %v407
      %v449 = vunpack.c.l.b16 %v408
      %v450 = vunpack.c.l.b16 %v409
      %v451 = vunpack.c.l.b16 %v410
      %v452 = vunpack.c.l.b16 %v411
      %v453 = vunpack.c.l.b16 %v412
      %v454 = vunpack.c.l.b16 %v413
      %v455 = vunpack.c.l.b16 %v414
      %v456 = vunpack.c.l.b16 %v415
      %v457 = vunpack.c.l.b16 %v416
      %v458 = vunpack.c.l.b16 %v417
      %v459 = vunpack.c.l.b16 %v418
      %v460 = vunpack.c.l.b16 %v419
      %v461 = vunpack.c.l.b16 %v420
      %v462 = vpack.c.b16 %v447, %v446
      %v463 = vpack.c.b16 %v449, %v448
      %v464 = vpack.c.b16 %v451, %v450
      %v465 = vpack.c.b16 %v453, %v452
      %v466 = vpack.c.b16 %v455, %v454
      %v467 = vpack.c.b16 %v457, %v456
      %v468 = vpack.c.b16 %v459, %v458
      %v469 = vpack.c.b16 %v461, %v460
      %478 = vmatprep.subr.bf16.mxu0 0
      %479 = vmatpush1.bf16.msra.mxu0 %v469
      %480 = vmatprep.subr.bf16.mxu0 0
      %481 = vmatpush1.bf16.msra.mxu0 %v468
      %482 = vmatprep.subr.bf16.mxu0 0
      %483 = vmatpush1.bf16.msra.mxu0 %v467
      %484 = vmatprep.subr.bf16.mxu0 0
      %485 = vmatpush1.bf16.msra.mxu0 %v466
      %486 = vmatprep.subr.bf16.mxu0 0
      %487 = vmatpush1.bf16.msra.mxu0 %v465
      %488 = vmatprep.subr.bf16.mxu0 0
      %489 = vmatpush1.bf16.msra.mxu0 %v464
      %490 = vmatprep.subr.bf16.mxu0 0
      %491 = vmatpush1.bf16.msra.mxu0 %v463
      %492 = vmatprep.subr.bf16.mxu0 0
      %493 = vmatpush1.bf16.msra.mxu0 %v462
      %494 = vmatprep.subr.bf16.mxu0 0
      %495 = vmatpush2.bf16.msra.mxu0 0
      %496 = vmatprep.subr.bf16.mxu0 0
      %497 = vmatpush2.bf16.msra.mxu0 0
      %498 = vmatprep.subr.bf16.mxu0 0
      %499 = vmatpush2.bf16.msra.mxu0 0
      %500 = vmatprep.subr.bf16.mxu0 0
      %501 = vmatpush2.bf16.msra.mxu0 0
      %502 = vmatprep.subr.bf16.mxu0 0
      %503 = vmatpush2.bf16.msra.mxu0 0
      %504 = vmatprep.subr.bf16.mxu0 0
      %505 = vmatpush2.bf16.msra.mxu0 0
      %506 = vmatprep.subr.bf16.mxu0 0
      %507 = vmatpush2.bf16.msra.mxu0 0
      %508 = vmatprep.subr.bf16.mxu0 0
      %509 = vmatpush2.bf16.msra.mxu0 0
      %510 = vmatprep.mubr.bf16.mxu0 0
      %511 = vmatmul.mubr.bf16.gmra.mxu0 %v427
      %v512 = vpop.f32.mrf.mxu0
      %v513 = vadd.f32 0.0, %v512
      %v514 = vpop.f32.mrf.mxu0
      %v515 = vpop.f32.mrf.mxu0
      %v516 = vadd.f32 0.0, %v515
      %v517 = vpop.f32.mrf.mxu0
      %518 = vmatprep.mubr.bf16.mxu0 0
      %519 = vmatmul.mubr.bf16.gmra.mxu0 %v426
      %v520 = vpop.f32.mrf.mxu0
      %v521 = vadd.f32 0.0, %v520
      %v522 = vpop.f32.mrf.mxu0
      %v523 = vpop.f32.mrf.mxu0
      %v524 = vpop.f32.mrf.mxu0
      %525 = vdwg.mxu0
      %v526 = vadd.f32 %v391, %v513
      %v527 = vadd.f32 %v394, %v516
      %v528 = vadd.f32 %v399, %v521
      %v529 = vld [vmem:[%s138] sm:$0x8]
      %v530 = vld [vmem:[%s138 + $0xc] sm:$0x7]
      %v531 = vld [vmem:[%s1 + $0xc0] sm:$0xf]
      %v532 = vld [vmem:[%s1 + $0xc4] sm:$0xf]
      %v533 = vld [vmem:[%s1 + $0xc8] sm:$0xf]
      %v534 = vld [vmem:[%s1 + $0xcc] sm:$0xf]
      %v535 = vld [vmem:[%s1 + $0xd0] sm:$0xf]
      %v536 = vld [vmem:[%s1 + $0xd4] sm:$0xf]
      %v537 = vld [vmem:[%s1 + $0xd8] sm:$0xf]
      %v538 = vld [vmem:[%s1 + $0xdc] sm:$0xf]
      %v539 = vld [vmem:[%s1 + $0xe0] sm:$0xf]
      %v540 = vld [vmem:[%s1 + $0xe4] sm:$0xf]
      %v541 = vld [vmem:[%s1 + $0xe8] sm:$0xf]
      %v542 = vld [vmem:[%s1 + $0xec] sm:$0xf]
      %v543 = vld [vmem:[%s1 + $0xf0] sm:$0xf]
      %v544 = vld [vmem:[%s1 + $0xf4] sm:$0xf]
      %v545 = vld [vmem:[%s1 + $0xf8] sm:$0xf]
      %v546 = vld [vmem:[%s1 + $0xfc] sm:$0xf]
      %v549 = vunpack.c.l.b16 %v529
      %v550 = vunpack.c.l.b16 %v530
      %v551 = vpack.c.b16 %v186, %v549
      %v552 = vpack.c.b16 %v550, %v187
      %vm553 = vcmask 1044480
      %v554 = vrot.slane %v551, 3
      %v555 = vrot.slane %v552, 3
      %v556 = vsel %vm553, %v554, %v555
      %v575 = vunpack.c.l.b16 %v531
      %v576 = vunpack.c.l.b16 %v532
      %v577 = vunpack.c.l.b16 %v533
      %v578 = vunpack.c.l.b16 %v534
      %v579 = vunpack.c.l.b16 %v535
      %v580 = vunpack.c.l.b16 %v536
      %v581 = vunpack.c.l.b16 %v537
      %v582 = vunpack.c.l.b16 %v538
      %v583 = vunpack.c.l.b16 %v539
      %v584 = vunpack.c.l.b16 %v540
      %v585 = vunpack.c.l.b16 %v541
      %v586 = vunpack.c.l.b16 %v542
      %v587 = vunpack.c.l.b16 %v543
      %v588 = vunpack.c.l.b16 %v544
      %v589 = vunpack.c.l.b16 %v545
      %v590 = vunpack.c.l.b16 %v546
      %v591 = vpack.c.b16 %v576, %v575
      %v592 = vpack.c.b16 %v578, %v577
      %v593 = vpack.c.b16 %v580, %v579
      %v594 = vpack.c.b16 %v582, %v581
      %v595 = vpack.c.b16 %v584, %v583
      %v596 = vpack.c.b16 %v586, %v585
      %v597 = vpack.c.b16 %v588, %v587
      %v598 = vpack.c.b16 %v590, %v589
      %607 = vmatprep.subr.bf16.mxu0 0
      %608 = vmatpush1.bf16.msra.mxu0 %v598
      %609 = vmatprep.subr.bf16.mxu0 0
      %610 = vmatpush1.bf16.msra.mxu0 %v597
      %611 = vmatprep.subr.bf16.mxu0 0
      %612 = vmatpush1.bf16.msra.mxu0 %v596
      %613 = vmatprep.subr.bf16.mxu0 0
      %614 = vmatpush1.bf16.msra.mxu0 %v595
      %615 = vmatprep.subr.bf16.mxu0 0
      %616 = vmatpush1.bf16.msra.mxu0 %v594
      %617 = vmatprep.subr.bf16.mxu0 0
      %618 = vmatpush1.bf16.msra.mxu0 %v593
      %619 = vmatprep.subr.bf16.mxu0 0
      %620 = vmatpush1.bf16.msra.mxu0 %v592
      %621 = vmatprep.subr.bf16.mxu0 0
      %622 = vmatpush1.bf16.msra.mxu0 %v591
      %623 = vmatprep.subr.bf16.mxu0 0
      %624 = vmatpush2.bf16.msra.mxu0 0
      %625 = vmatprep.subr.bf16.mxu0 0
      %626 = vmatpush2.bf16.msra.mxu0 0
      %627 = vmatprep.subr.bf16.mxu0 0
      %628 = vmatpush2.bf16.msra.mxu0 0
      %629 = vmatprep.subr.bf16.mxu0 0
      %630 = vmatpush2.bf16.msra.mxu0 0
      %631 = vmatprep.subr.bf16.mxu0 0
      %632 = vmatpush2.bf16.msra.mxu0 0
      %633 = vmatprep.subr.bf16.mxu0 0
      %634 = vmatpush2.bf16.msra.mxu0 0
      %635 = vmatprep.subr.bf16.mxu0 0
      %636 = vmatpush2.bf16.msra.mxu0 0
      %637 = vmatprep.subr.bf16.mxu0 0
      %638 = vmatpush2.bf16.msra.mxu0 0
      %639 = vmatprep.mubr.bf16.mxu0 0
      %640 = vmatmul.mubr.bf16.gmra.mxu0 %v556
      %v641 = vpop.f32.mrf.mxu0
      %v642 = vadd.f32 0.0, %v641
      %v643 = vpop.f32.mrf.mxu0
      %v644 = vpop.f32.mrf.mxu0
      %v645 = vadd.f32 0.0, %v644
      %v646 = vpop.f32.mrf.mxu0
      %647 = vmatprep.mubr.bf16.mxu0 0
      %648 = vmatmul.mubr.bf16.gmra.mxu0 %v555
      %v649 = vpop.f32.mrf.mxu0
      %v650 = vadd.f32 0.0, %v649
      %v651 = vpop.f32.mrf.mxu0
      %v652 = vpop.f32.mrf.mxu0
      %v653 = vpop.f32.mrf.mxu0
      %654 = vdwg.mxu0
      %v655 = vadd.f32 %v526, %v642
      %v656 = vadd.f32 %v527, %v645
      %v657 = vadd.f32 %v528, %v650
      %v658 = vld [vmem:[%s138 + $0xc] sm:$0xf]
      %v659 = vld [vmem:[%s1 + $0x100] sm:$0xf]
      %v660 = vld [vmem:[%s1 + $0x104] sm:$0xf]
      %v661 = vld [vmem:[%s1 + $0x108] sm:$0xf]
      %v662 = vld [vmem:[%s1 + $0x10c] sm:$0xf]
      %v663 = vld [vmem:[%s1 + $0x110] sm:$0xf]
      %v664 = vld [vmem:[%s1 + $0x114] sm:$0xf]
      %v665 = vld [vmem:[%s1 + $0x118] sm:$0xf]
      %v666 = vld [vmem:[%s1 + $0x11c] sm:$0xf]
      %v667 = vld [vmem:[%s1 + $0x120] sm:$0xf]
      %v668 = vld [vmem:[%s1 + $0x124] sm:$0xf]
      %v669 = vld [vmem:[%s1 + $0x128] sm:$0xf]
      %v670 = vld [vmem:[%s1 + $0x12c] sm:$0xf]
      %v671 = vld [vmem:[%s1 + $0x130] sm:$0xf]
      %v672 = vld [vmem:[%s1 + $0x134] sm:$0xf]
      %v673 = vld [vmem:[%s1 + $0x138] sm:$0xf]
      %v674 = vld [vmem:[%s1 + $0x13c] sm:$0xf]
      %v676 = vunpack.c.l.b16 %v658
      %v677 = vpack.c.b16 %v676, %v187
      %vm678 = vsmask.f32 4352
      %v680 = vshrl.u32 %v551, 16
      %v682 = vrot.slane %v680, 3
      %v683 = vshll.u32 %v551, 16
      %v685 = vrot.slane %v683, 4
      %v686 = vor.u32 %v682, %v685
      %v688 = vshrl.u32 %v677, 16
      %v690 = vrot.slane %v688, 3
      %v691 = vshll.u32 %v677, 16
      %v693 = vrot.slane %v691, 4
      %v694 = vor.u32 %v690, %v693
      %v695 = vsel %vm678, %v686, %v694
      %v714 = vunpack.c.l.b16 %v659
      %v715 = vunpack.c.l.b16 %v660
      %v716 = vunpack.c.l.b16 %v661
      %v717 = vunpack.c.l.b16 %v662
      %v718 = vunpack.c.l.b16 %v663
      %v719 = vunpack.c.l.b16 %v664
      %v720 = vunpack.c.l.b16 %v665
      %v721 = vunpack.c.l.b16 %v666
      %v722 = vunpack.c.l.b16 %v667
      %v723 = vunpack.c.l.b16 %v668
      %v724 = vunpack.c.l.b16 %v669
      %v725 = vunpack.c.l.b16 %v670
      %v726 = vunpack.c.l.b16 %v671
      %v727 = vunpack.c.l.b16 %v672
      %v728 = vunpack.c.l.b16 %v673
      %v729 = vunpack.c.l.b16 %v674
      %v730 = vpack.c.b16 %v715, %v714
      %v731 = vpack.c.b16 %v717, %v716
      %v732 = vpack.c.b16 %v719, %v718
      %v733 = vpack.c.b16 %v721, %v720
      %v734 = vpack.c.b16 %v723, %v722
      %v735 = vpack.c.b16 %v725, %v724
      %v736 = vpack.c.b16 %v727, %v726
      %v737 = vpack.c.b16 %v729, %v728
      %746 = vmatprep.subr.bf16.mxu0 0
      %747 = vmatpush1.bf16.msra.mxu0 %v737
      %748 = vmatprep.subr.bf16.mxu0 0
      %749 = vmatpush1.bf16.msra.mxu0 %v736
      %750 = vmatprep.subr.bf16.mxu0 0
      %751 = vmatpush1.bf16.msra.mxu0 %v735
      %752 = vmatprep.subr.bf16.mxu0 0
      %753 = vmatpush1.bf16.msra.mxu0 %v734
      %754 = vmatprep.subr.bf16.mxu0 0
      %755 = vmatpush1.bf16.msra.mxu0 %v733
      %756 = vmatprep.subr.bf16.mxu0 0
      %757 = vmatpush1.bf16.msra.mxu0 %v732
      %758 = vmatprep.subr.bf16.mxu0 0
      %759 = vmatpush1.bf16.msra.mxu0 %v731
      %760 = vmatprep.subr.bf16.mxu0 0
      %761 = vmatpush1.bf16.msra.mxu0 %v730
      %762 = vmatprep.subr.bf16.mxu0 0
      %763 = vmatpush2.bf16.msra.mxu0 0
      %764 = vmatprep.subr.bf16.mxu0 0
      %765 = vmatpush2.bf16.msra.mxu0 0
      %766 = vmatprep.subr.bf16.mxu0 0
      %767 = vmatpush2.bf16.msra.mxu0 0
      %768 = vmatprep.subr.bf16.mxu0 0
      %769 = vmatpush2.bf16.msra.mxu0 0
      %770 = vmatprep.subr.bf16.mxu0 0
      %771 = vmatpush2.bf16.msra.mxu0 0
      %772 = vmatprep.subr.bf16.mxu0 0
      %773 = vmatpush2.bf16.msra.mxu0 0
      %774 = vmatprep.subr.bf16.mxu0 0
      %775 = vmatpush2.bf16.msra.mxu0 0
      %776 = vmatprep.subr.bf16.mxu0 0
      %777 = vmatpush2.bf16.msra.mxu0 0
      %778 = vmatprep.mubr.bf16.mxu0 0
      %779 = vmatmul.mubr.bf16.gmra.mxu0 %v695
      %v780 = vpop.f32.mrf.mxu0
      %v781 = vadd.f32 0.0, %v780
      %v782 = vpop.f32.mrf.mxu0
      %v783 = vpop.f32.mrf.mxu0
      %v784 = vadd.f32 0.0, %v783
      %v785 = vpop.f32.mrf.mxu0
      %786 = vmatprep.mubr.bf16.mxu0 0
      %787 = vmatmul.mubr.bf16.gmra.mxu0 %v694
      %v788 = vpop.f32.mrf.mxu0
      %v789 = vadd.f32 0.0, %v788
      %v790 = vpop.f32.mrf.mxu0
      %v791 = vpop.f32.mrf.mxu0
      %v792 = vpop.f32.mrf.mxu0
      %793 = vdwg.mxu0
      %v794 = vadd.f32 %v655, %v781
      %v795 = vadd.f32 %v656, %v784
      %v796 = vadd.f32 %v657, %v789
      %v797 = vld [vmem:[%s1 + $0x140] sm:$0xf]
      %v798 = vld [vmem:[%s1 + $0x144] sm:$0xf]
      %v799 = vld [vmem:[%s1 + $0x148] sm:$0xf]
      %v800 = vld [vmem:[%s1 + $0x14c] sm:$0xf]
      %v801 = vld [vmem:[%s1 + $0x150] sm:$0xf]
      %v802 = vld [vmem:[%s1 + $0x154] sm:$0xf]
      %v803 = vld [vmem:[%s1 + $0x158] sm:$0xf]
      %v804 = vld [vmem:[%s1 + $0x15c] sm:$0xf]
      %v805 = vld [vmem:[%s1 + $0x160] sm:$0xf]
      %v806 = vld [vmem:[%s1 + $0x164] sm:$0xf]
      %v807 = vld [vmem:[%s1 + $0x168] sm:$0xf]
      %v808 = vld [vmem:[%s1 + $0x16c] sm:$0xf]
      %v809 = vld [vmem:[%s1 + $0x170] sm:$0xf]
      %v810 = vld [vmem:[%s1 + $0x174] sm:$0xf]
      %v811 = vld [vmem:[%s1 + $0x178] sm:$0xf]
      %v812 = vld [vmem:[%s1 + $0x17c] sm:$0xf]
      %v813 = vpack.c.b16 %v187, %v186
      %v814 = vpack.c.b16 %v676, %v676
      %v833 = vunpack.c.l.b16 %v797
      %v834 = vunpack.c.l.b16 %v798
      %v835 = vunpack.c.l.b16 %v799
      %v836 = vunpack.c.l.b16 %v800
      %v837 = vunpack.c.l.b16 %v801
      %v838 = vunpack.c.l.b16 %v802
      %v839 = vunpack.c.l.b16 %v803
      %v840 = vunpack.c.l.b16 %v804
      %v841 = vunpack.c.l.b16 %v805
      %v842 = vunpack.c.l.b16 %v806
      %v843 = vunpack.c.l.b16 %v807
      %v844 = vunpack.c.l.b16 %v808
      %v845 = vunpack.c.l.b16 %v809
      %v846 = vunpack.c.l.b16 %v810
      %v847 = vunpack.c.l.b16 %v811
      %v848 = vunpack.c.l.b16 %v812
      %v849 = vpack.c.b16 %v834, %v833
      %v850 = vpack.c.b16 %v836, %v835
      %v851 = vpack.c.b16 %v838, %v837
      %v852 = vpack.c.b16 %v840, %v839
      %v853 = vpack.c.b16 %v842, %v841
      %v854 = vpack.c.b16 %v844, %v843
      %v855 = vpack.c.b16 %v846, %v845
      %v856 = vpack.c.b16 %v848, %v847
      %865 = vmatprep.subr.bf16.mxu0 0
      %866 = vmatpush1.bf16.msra.mxu0 %v856
      %867 = vmatprep.subr.bf16.mxu0 0
      %868 = vmatpush1.bf16.msra.mxu0 %v855
      %869 = vmatprep.subr.bf16.mxu0 0
      %870 = vmatpush1.bf16.msra.mxu0 %v854
      %871 = vmatprep.subr.bf16.mxu0 0
      %872 = vmatpush1.bf16.msra.mxu0 %v853
      %873 = vmatprep.subr.bf16.mxu0 0
      %874 = vmatpush1.bf16.msra.mxu0 %v852
      %875 = vmatprep.subr.bf16.mxu0 0
      %876 = vmatpush1.bf16.msra.mxu0 %v851
      %877 = vmatprep.subr.bf16.mxu0 0
      %878 = vmatpush1.bf16.msra.mxu0 %v850
      %879 = vmatprep.subr.bf16.mxu0 0
      %880 = vmatpush1.bf16.msra.mxu0 %v849
      %881 = vmatprep.subr.bf16.mxu0 0
      %882 = vmatpush2.bf16.msra.mxu0 0
      %883 = vmatprep.subr.bf16.mxu0 0
      %884 = vmatpush2.bf16.msra.mxu0 0
      %885 = vmatprep.subr.bf16.mxu0 0
      %886 = vmatpush2.bf16.msra.mxu0 0
      %887 = vmatprep.subr.bf16.mxu0 0
      %888 = vmatpush2.bf16.msra.mxu0 0
      %889 = vmatprep.subr.bf16.mxu0 0
      %890 = vmatpush2.bf16.msra.mxu0 0
      %891 = vmatprep.subr.bf16.mxu0 0
      %892 = vmatpush2.bf16.msra.mxu0 0
      %893 = vmatprep.subr.bf16.mxu0 0
      %894 = vmatpush2.bf16.msra.mxu0 0
      %895 = vmatprep.subr.bf16.mxu0 0
      %896 = vmatpush2.bf16.msra.mxu0 0
      %897 = vmatprep.mubr.bf16.mxu0 0
      %898 = vmatmul.mubr.bf16.gmra.mxu0 %v813
      %v899 = vpop.f32.mrf.mxu0
      %v900 = vadd.f32 0.0, %v899
      %v901 = vpop.f32.mrf.mxu0
      %v902 = vpop.f32.mrf.mxu0
      %v903 = vadd.f32 0.0, %v902
      %v904 = vpop.f32.mrf.mxu0
      %905 = vmatprep.mubr.bf16.mxu0 0
      %906 = vmatmul.mubr.bf16.gmra.mxu0 %v814
      %v907 = vpop.f32.mrf.mxu0
      %v908 = vadd.f32 0.0, %v907
      %v909 = vpop.f32.mrf.mxu0
      %v910 = vpop.f32.mrf.mxu0
      %v911 = vpop.f32.mrf.mxu0
      %912 = vdwg.mxu0
      %v913 = vadd.f32 %v794, %v900
      %v914 = vadd.f32 %v795, %v903
      %v915 = vadd.f32 %v796, %v908
      %v916 = vld [vmem:[%s138 + $0x4] sm:$0xc]
      %v917 = vld [vmem:[%s138 + $0x8] sm:$0xf]
      %v918 = vld [vmem:[%s138 + $0xc] sm:$0xf]
      %v919 = vld [vmem:[%s138 + $0x10] sm:$0x3]
      %v920 = vld [vmem:[%s1 + $0x180] sm:$0xf]
      %v921 = vld [vmem:[%s1 + $0x184] sm:$0xf]
      %v922 = vld [vmem:[%s1 + $0x188] sm:$0xf]
      %v923 = vld [vmem:[%s1 + $0x18c] sm:$0xf]
      %v924 = vld [vmem:[%s1 + $0x190] sm:$0xf]
      %v925 = vld [vmem:[%s1 + $0x194] sm:$0xf]
      %v926 = vld [vmem:[%s1 + $0x198] sm:$0xf]
      %v927 = vld [vmem:[%s1 + $0x19c] sm:$0xf]
      %v928 = vld [vmem:[%s1 + $0x1a0] sm:$0xf]
      %v929 = vld [vmem:[%s1 + $0x1a4] sm:$0xf]
      %v930 = vld [vmem:[%s1 + $0x1a8] sm:$0xf]
      %v931 = vld [vmem:[%s1 + $0x1ac] sm:$0xf]
      %v932 = vld [vmem:[%s1 + $0x1b0] sm:$0xf]
      %v933 = vld [vmem:[%s1 + $0x1b4] sm:$0xf]
      %v934 = vld [vmem:[%s1 + $0x1b8] sm:$0xf]
      %v935 = vld [vmem:[%s1 + $0x1bc] sm:$0xf]
      %v940 = vunpack.c.l.b16 %v916
      %v941 = vunpack.c.l.b16 %v917
      %v942 = vunpack.c.l.b16 %v918
      %v943 = vunpack.c.l.b16 %v919
      %v944 = vpack.c.b16 %v941, %v940
      %v945 = vpack.c.b16 %v943, %v942
      %vm946 = vcmask 1045504
      %v947 = vrot.slane %v944, 2
      %v948 = vrot.slane %v945, 2
      %v949 = vsel %vm946, %v947, %v948
      %v968 = vunpack.c.l.b16 %v920
      %v969 = vunpack.c.l.b16 %v921
      %v970 = vunpack.c.l.b16 %v922
      %v971 = vunpack.c.l.b16 %v923
      %v972 = vunpack.c.l.b16 %v924
      %v973 = vunpack.c.l.b16 %v925
      %v974 = vunpack.c.l.b16 %v926
      %v975 = vunpack.c.l.b16 %v927
      %v976 = vunpack.c.l.b16 %v928
      %v977 = vunpack.c.l.b16 %v929
      %v978 = vunpack.c.l.b16 %v930
      %v979 = vunpack.c.l.b16 %v931
      %v980 = vunpack.c.l.b16 %v932
      %v981 = vunpack.c.l.b16 %v933
      %v982 = vunpack.c.l.b16 %v934
      %v983 = vunpack.c.l.b16 %v935
      %v984 = vpack.c.b16 %v969, %v968
      %v985 = vpack.c.b16 %v971, %v970
      %v986 = vpack.c.b16 %v973, %v972
      %v987 = vpack.c.b16 %v975, %v974
      %v988 = vpack.c.b16 %v977, %v976
      %v989 = vpack.c.b16 %v979, %v978
      %v990 = vpack.c.b16 %v981, %v980
      %v991 = vpack.c.b16 %v983, %v982
      %1000 = vmatprep.subr.bf16.mxu0 0
      %1001 = vmatpush1.bf16.msra.mxu0 %v991
      %1002 = vmatprep.subr.bf16.mxu0 0
      %1003 = vmatpush1.bf16.msra.mxu0 %v990
      %1004 = vmatprep.subr.bf16.mxu0 0
      %1005 = vmatpush1.bf16.msra.mxu0 %v989
      %1006 = vmatprep.subr.bf16.mxu0 0
      %1007 = vmatpush1.bf16.msra.mxu0 %v988
      %1008 = vmatprep.subr.bf16.mxu0 0
      %1009 = vmatpush1.bf16.msra.mxu0 %v987
      %1010 = vmatprep.subr.bf16.mxu0 0
      %1011 = vmatpush1.bf16.msra.mxu0 %v986
      %1012 = vmatprep.subr.bf16.mxu0 0
      %1013 = vmatpush1.bf16.msra.mxu0 %v985
      %1014 = vmatprep.subr.bf16.mxu0 0
      %1015 = vmatpush1.bf16.msra.mxu0 %v984
      %1016 = vmatprep.subr.bf16.mxu0 0
      %1017 = vmatpush2.bf16.msra.mxu0 0
      %1018 = vmatprep.subr.bf16.mxu0 0
      %1019 = vmatpush2.bf16.msra.mxu0 0
      %1020 = vmatprep.subr.bf16.mxu0 0
      %1021 = vmatpush2.bf16.msra.mxu0 0
      %1022 = vmatprep.subr.bf16.mxu0 0
      %1023 = vmatpush2.bf16.msra.mxu0 0
      %1024 = vmatprep.subr.bf16.mxu0 0
      %1025 = vmatpush2.bf16.msra.mxu0 0
      %1026 = vmatprep.subr.bf16.mxu0 0
      %1027 = vmatpush2.bf16.msra.mxu0 0
      %1028 = vmatprep.subr.bf16.mxu0 0
      %1029 = vmatpush2.bf16.msra.mxu0 0
      %1030 = vmatprep.subr.bf16.mxu0 0
      %1031 = vmatpush2.bf16.msra.mxu0 0
      %1032 = vmatprep.mubr.bf16.mxu0 0
      %1033 = vmatmul.mubr.bf16.gmra.mxu0 %v949
      %v1034 = vpop.f32.mrf.mxu0
      %v1035 = vadd.f32 0.0, %v1034
      %v1036 = vpop.f32.mrf.mxu0
      %v1037 = vpop.f32.mrf.mxu0
      %v1038 = vadd.f32 0.0, %v1037
      %v1039 = vpop.f32.mrf.mxu0
      %1040 = vmatprep.mubr.bf16.mxu0 0
      %1041 = vmatmul.mubr.bf16.gmra.mxu0 %v948
      %v1042 = vpop.f32.mrf.mxu0
      %v1043 = vadd.f32 0.0, %v1042
      %v1044 = vpop.f32.mrf.mxu0
      %v1045 = vpop.f32.mrf.mxu0
      %v1046 = vpop.f32.mrf.mxu0
      %1047 = vdwg.mxu0
      %v1048 = vadd.f32 %v913, %v1035
      %v1049 = vadd.f32 %v914, %v1038
      %v1050 = vadd.f32 %v915, %v1043
      %v1051 = vld [vmem:[%s138 + $0x10] sm:$0x7]
      %v1052 = vld [vmem:[%s1 + $0x1c0] sm:$0xf]
      %v1053 = vld [vmem:[%s1 + $0x1c4] sm:$0xf]
      %v1054 = vld [vmem:[%s1 + $0x1c8] sm:$0xf]
      %v1055 = vld [vmem:[%s1 + $0x1cc] sm:$0xf]
      %v1056 = vld [vmem:[%s1 + $0x1d0] sm:$0xf]
      %v1057 = vld [vmem:[%s1 + $0x1d4] sm:$0xf]
      %v1058 = vld [vmem:[%s1 + $0x1d8] sm:$0xf]
      %v1059 = vld [vmem:[%s1 + $0x1dc] sm:$0xf]
      %v1060 = vld [vmem:[%s1 + $0x1e0] sm:$0xf]
      %v1061 = vld [vmem:[%s1 + $0x1e4] sm:$0xf]
      %v1062 = vld [vmem:[%s1 + $0x1e8] sm:$0xf]
      %v1063 = vld [vmem:[%s1 + $0x1ec] sm:$0xf]
      %v1064 = vld [vmem:[%s1 + $0x1f0] sm:$0xf]
      %v1065 = vld [vmem:[%s1 + $0x1f4] sm:$0xf]
      %v1066 = vld [vmem:[%s1 + $0x1f8] sm:$0xf]
      %v1067 = vld [vmem:[%s1 + $0x1fc] sm:$0xf]
      %v1069 = vunpack.c.l.b16 %v1051
      %v1070 = vpack.c.b16 %v1069, %v942
      %vm1071 = vsmask.f32 5376
      %v1073 = vshrl.u32 %v944, 16
      %v1075 = vrot.slane %v1073, 2
      %v1076 = vshll.u32 %v944, 16
      %v1078 = vrot.slane %v1076, 3
      %v1079 = vor.u32 %v1075, %v1078
      %v1081 = vshrl.u32 %v1070, 16
      %v1083 = vrot.slane %v1081, 2
      %v1084 = vshll.u32 %v1070, 16
      %v1086 = vrot.slane %v1084, 3
      %v1087 = vor.u32 %v1083, %v1086
      %v1088 = vsel %vm1071, %v1079, %v1087
      %v1107 = vunpack.c.l.b16 %v1052
      %v1108 = vunpack.c.l.b16 %v1053
      %v1109 = vunpack.c.l.b16 %v1054
      %v1110 = vunpack.c.l.b16 %v1055
      %v1111 = vunpack.c.l.b16 %v1056
      %v1112 = vunpack.c.l.b16 %v1057
      %v1113 = vunpack.c.l.b16 %v1058
      %v1114 = vunpack.c.l.b16 %v1059
      %v1115 = vunpack.c.l.b16 %v1060
      %v1116 = vunpack.c.l.b16 %v1061
      %v1117 = vunpack.c.l.b16 %v1062
      %v1118 = vunpack.c.l.b16 %v1063
      %v1119 = vunpack.c.l.b16 %v1064
      %v1120 = vunpack.c.l.b16 %v1065
      %v1121 = vunpack.c.l.b16 %v1066
      %v1122 = vunpack.c.l.b16 %v1067
      %v1123 = vpack.c.b16 %v1108, %v1107
      %v1124 = vpack.c.b16 %v1110, %v1109
      %v1125 = vpack.c.b16 %v1112, %v1111
      %v1126 = vpack.c.b16 %v1114, %v1113
      %v1127 = vpack.c.b16 %v1116, %v1115
      %v1128 = vpack.c.b16 %v1118, %v1117
      %v1129 = vpack.c.b16 %v1120, %v1119
      %v1130 = vpack.c.b16 %v1122, %v1121
      %1139 = vmatprep.subr.bf16.mxu0 0
      %1140 = vmatpush1.bf16.msra.mxu0 %v1130
      %1141 = vmatprep.subr.bf16.mxu0 0
      %1142 = vmatpush1.bf16.msra.mxu0 %v1129
      %1143 = vmatprep.subr.bf16.mxu0 0
      %1144 = vmatpush1.bf16.msra.mxu0 %v1128
      %1145 = vmatprep.subr.bf16.mxu0 0
      %1146 = vmatpush1.bf16.msra.mxu0 %v1127
      %1147 = vmatprep.subr.bf16.mxu0 0
      %1148 = vmatpush1.bf16.msra.mxu0 %v1126
      %1149 = vmatprep.subr.bf16.mxu0 0
      %1150 = vmatpush1.bf16.msra.mxu0 %v1125
      %1151 = vmatprep.subr.bf16.mxu0 0
      %1152 = vmatpush1.bf16.msra.mxu0 %v1124
      %1153 = vmatprep.subr.bf16.mxu0 0
      %1154 = vmatpush1.bf16.msra.mxu0 %v1123
      %1155 = vmatprep.subr.bf16.mxu0 0
      %1156 = vmatpush2.bf16.msra.mxu0 0
      %1157 = vmatprep.subr.bf16.mxu0 0
      %1158 = vmatpush2.bf16.msra.mxu0 0
      %1159 = vmatprep.subr.bf16.mxu0 0
      %1160 = vmatpush2.bf16.msra.mxu0 0
      %1161 = vmatprep.subr.bf16.mxu0 0
      %1162 = vmatpush2.bf16.msra.mxu0 0
      %1163 = vmatprep.subr.bf16.mxu0 0
      %1164 = vmatpush2.bf16.msra.mxu0 0
      %1165 = vmatprep.subr.bf16.mxu0 0
      %1166 = vmatpush2.bf16.msra.mxu0 0
      %1167 = vmatprep.subr.bf16.mxu0 0
      %1168 = vmatpush2.bf16.msra.mxu0 0
      %1169 = vmatprep.subr.bf16.mxu0 0
      %1170 = vmatpush2.bf16.msra.mxu0 0
      %1171 = vmatprep.mubr.bf16.mxu0 0
      %1172 = vmatmul.mubr.bf16.gmra.mxu0 %v1088
      %v1173 = vpop.f32.mrf.mxu0
      %v1174 = vadd.f32 0.0, %v1173
      %v1175 = vpop.f32.mrf.mxu0
      %v1176 = vpop.f32.mrf.mxu0
      %v1177 = vadd.f32 0.0, %v1176
      %v1178 = vpop.f32.mrf.mxu0
      %1179 = vmatprep.mubr.bf16.mxu0 0
      %1180 = vmatmul.mubr.bf16.gmra.mxu0 %v1087
      %v1181 = vpop.f32.mrf.mxu0
      %v1182 = vadd.f32 0.0, %v1181
      %v1183 = vpop.f32.mrf.mxu0
      %v1184 = vpop.f32.mrf.mxu0
      %v1185 = vpop.f32.mrf.mxu0
      %1186 = vdwg.mxu0
      %v1187 = vadd.f32 %v1048, %v1174
      %v1188 = vadd.f32 %v1049, %v1177
      %v1189 = vadd.f32 %v1050, %v1182
      %v1190 = vld [vmem:[%s138 + $0x4] sm:$0x8]
      %v1191 = vld [vmem:[%s1 + $0x200] sm:$0xf]
      %v1192 = vld [vmem:[%s1 + $0x204] sm:$0xf]
      %v1193 = vld [vmem:[%s1 + $0x208] sm:$0xf]
      %v1194 = vld [vmem:[%s1 + $0x20c] sm:$0xf]
      %v1195 = vld [vmem:[%s1 + $0x210] sm:$0xf]
      %v1196 = vld [vmem:[%s1 + $0x214] sm:$0xf]
      %v1197 = vld [vmem:[%s1 + $0x218] sm:$0xf]
      %v1198 = vld [vmem:[%s1 + $0x21c] sm:$0xf]
      %v1199 = vld [vmem:[%s1 + $0x220] sm:$0xf]
      %v1200 = vld [vmem:[%s1 + $0x224] sm:$0xf]
      %v1201 = vld [vmem:[%s1 + $0x228] sm:$0xf]
      %v1202 = vld [vmem:[%s1 + $0x22c] sm:$0xf]
      %v1203 = vld [vmem:[%s1 + $0x230] sm:$0xf]
      %v1204 = vld [vmem:[%s1 + $0x234] sm:$0xf]
      %v1205 = vld [vmem:[%s1 + $0x238] sm:$0xf]
      %v1206 = vld [vmem:[%s1 + $0x23c] sm:$0xf]
      %v1208 = vunpack.c.l.b16 %v1190
      %v1209 = vpack.c.b16 %v941, %v1208
      %v1210 = vrot.slane %v1209, 3
      %v1211 = vrot.slane %v1070, 3
      %v1212 = vsel %vm553, %v1210, %v1211
      %v1231 = vunpack.c.l.b16 %v1191
      %v1232 = vunpack.c.l.b16 %v1192
      %v1233 = vunpack.c.l.b16 %v1193
      %v1234 = vunpack.c.l.b16 %v1194
      %v1235 = vunpack.c.l.b16 %v1195
      %v1236 = vunpack.c.l.b16 %v1196
      %v1237 = vunpack.c.l.b16 %v1197
      %v1238 = vunpack.c.l.b16 %v1198
      %v1239 = vunpack.c.l.b16 %v1199
      %v1240 = vunpack.c.l.b16 %v1200
      %v1241 = vunpack.c.l.b16 %v1201
      %v1242 = vunpack.c.l.b16 %v1202
      %v1243 = vunpack.c.l.b16 %v1203
      %v1244 = vunpack.c.l.b16 %v1204
      %v1245 = vunpack.c.l.b16 %v1205
      %v1246 = vunpack.c.l.b16 %v1206
      %v1247 = vpack.c.b16 %v1232, %v1231
      %v1248 = vpack.c.b16 %v1234, %v1233
      %v1249 = vpack.c.b16 %v1236, %v1235
      %v1250 = vpack.c.b16 %v1238, %v1237
      %v1251 = vpack.c.b16 %v1240, %v1239
      %v1252 = vpack.c.b16 %v1242, %v1241
      %v1253 = vpack.c.b16 %v1244, %v1243
      %v1254 = vpack.c.b16 %v1246, %v1245
      %1263 = vmatprep.subr.bf16.mxu0 0
      %1264 = vmatpush1.bf16.msra.mxu0 %v1254
      %1265 = vmatprep.subr.bf16.mxu0 0
      %1266 = vmatpush1.bf16.msra.mxu0 %v1253
      %1267 = vmatprep.subr.bf16.mxu0 0
      %1268 = vmatpush1.bf16.msra.mxu0 %v1252
      %1269 = vmatprep.subr.bf16.mxu0 0
      %1270 = vmatpush1.bf16.msra.mxu0 %v1251
      %1271 = vmatprep.subr.bf16.mxu0 0
      %1272 = vmatpush1.bf16.msra.mxu0 %v1250
      %1273 = vmatprep.subr.bf16.mxu0 0
      %1274 = vmatpush1.bf16.msra.mxu0 %v1249
      %1275 = vmatprep.subr.bf16.mxu0 0
      %1276 = vmatpush1.bf16.msra.mxu0 %v1248
      %1277 = vmatprep.subr.bf16.mxu0 0
      %1278 = vmatpush1.bf16.msra.mxu0 %v1247
      %1279 = vmatprep.subr.bf16.mxu0 0
      %1280 = vmatpush2.bf16.msra.mxu0 0
      %1281 = vmatprep.subr.bf16.mxu0 0
      %1282 = vmatpush2.bf16.msra.mxu0 0
      %1283 = vmatprep.subr.bf16.mxu0 0
      %1284 = vmatpush2.bf16.msra.mxu0 0
      %1285 = vmatprep.subr.bf16.mxu0 0
      %1286 = vmatpush2.bf16.msra.mxu0 0
      %1287 = vmatprep.subr.bf16.mxu0 0
      %1288 = vmatpush2.bf16.msra.mxu0 0
      %1289 = vmatprep.subr.bf16.mxu0 0
      %1290 = vmatpush2.bf16.msra.mxu0 0
      %1291 = vmatprep.subr.bf16.mxu0 0
      %1292 = vmatpush2.bf16.msra.mxu0 0
      %1293 = vmatprep.subr.bf16.mxu0 0
      %1294 = vmatpush2.bf16.msra.mxu0 0
      %1295 = vmatprep.mubr.bf16.mxu0 0
      %1296 = vmatmul.mubr.bf16.gmra.mxu0 %v1212
      %v1297 = vpop.f32.mrf.mxu0
      %v1298 = vadd.f32 0.0, %v1297
      %v1299 = vpop.f32.mrf.mxu0
      %v1300 = vpop.f32.mrf.mxu0
      %v1301 = vadd.f32 0.0, %v1300
      %v1302 = vpop.f32.mrf.mxu0
      %1303 = vmatprep.mubr.bf16.mxu0 0
      %1304 = vmatmul.mubr.bf16.gmra.mxu0 %v1211
      %v1305 = vpop.f32.mrf.mxu0
      %v1306 = vadd.f32 0.0, %v1305
      %v1307 = vpop.f32.mrf.mxu0
      %v1308 = vpop.f32.mrf.mxu0
      %v1309 = vpop.f32.mrf.mxu0
      %1310 = vdwg.mxu0
      %v1311 = vadd.f32 %v1187, %v1298
      %v1312 = vadd.f32 %v1188, %v1301
      %v1313 = vadd.f32 %v1189, %v1306
      %v1314 = vpack.c.bf16 %v1312, %v1311
      %v1315 = vpack.c.bf16 %v1313, %v1313
      %v1318 = vunpack.c.l.b16 %v1314
      %v1319 = vunpack.c.h.b16 %v1314
      %v1320 = vunpack.c.l.b16 %v1315
      %v1321 = vpack.c.b16 %v1318, %v1318
      %v1322 = vpack.c.b16 %v1319, %v1319
      %v1323 = vpack.c.b16 %v1320, %v1320
      %vm1327 = vcmask 60416
      %1328 = vst.msk [vmem:[%s143] sm:$0xf] %vm1327, %v1321
      %1329 = vst.msk [vmem:[%s143 + $0x4] sm:$0xf] %vm1327, %v1322
      %1330 = vst.msk [vmem:[%s143 + $0x8] sm:$0xf] %vm1327, %v1323
      %p1331 = scmp.lt.s32.totalorder %s13, 1
      %s1332 = scalar_select %p1331, %s13, 1
      %s1333 = smul.addr %s1332, 3
      %s1334 = smul.addr %s1333, 4
      %s1335 = scalar_lea.vmem %s2, %s1334
      // Predicated region
      $region29: #{densenet_forward.34} parent=27 // pred_check
        %p1336 = pneg %p78
      $region30: #{densenet_forward.34} parent=27 // pred_check_branch
        %1338 = sbr.rel (%p1336) target = $region32
      $region31: #{densenet_forward.34} parent=27 // pred_region
        _
      $region32: #{densenet_forward.34} parent=27 // pred_fallthru
        _
    $region28: #{densenet_forward.34} parent=5 // pred_fallthru
      _
    %p1339 = scmp.le.s32.totalorder 2, %s8
    // Predicated region
    $region33: #{densenet_forward.34} parent=5 // pred_check
      %p1340 = pneg %p1339
    $region34: #{densenet_forward.34} parent=5 // pred_check_branch
      %1342 = sbr.rel (%p1340) target = $region36
    $region35: #{densenet_forward.34} parent=5 // pred_region
      %s1343 = ssub.s32 %s8, 2
      // Predicated region
      $region37: #{densenet_forward.34} parent=35 // pred_check
        %p1344 = pneg %p84
      $region38: #{densenet_forward.34} parent=35 // pred_check_branch
        %1346 = sbr.rel (%p1344) target = $region40
      $region39: #{densenet_forward.34} parent=35 // pred_region
        %p1347 = scmp.lt.s32.totalorder %s14, 1
        %s1348 = scalar_select %p1347, %s14, 1
        %s1349 = smul.addr %s1348, 3
        %s1350 = smul.addr %s1349, 4
        %s1351 = scalar_lea.vmem %s2, %s1350
      $region40: #{densenet_forward.34} parent=35 // pred_fallthru
        _
    $region36: #{densenet_forward.34} parent=5 // pred_fallthru
      _
  $region6: #{densenet_forward.34} parent=0 // loop_footer
    %s12 = sadd.s32 1, %s8
  $region7: #{densenet_forward.34} parent=0 // loop_footer_branch
    %7 = sbr.rel target = $region3
  $region8: #{densenet_forward.34} parent=0 // loop_exit
    _

// kernel: densenet_forward.38
$region0: #{densenet_forward.38}
  #allocation0 [shape = 'u32[]', space=smem, size = 0x4, offset = 0x4, fixed_abs, tag = 'smem constant byte address 0x4 - core index']
  #allocation1 [shape = 'u32[144,128]{1,0:T(1,128)}', space=vmem, size = 0x12000, scoped, tag = 'internal scratch']
  %s0 = inlined_call_operand.vmem [shape: bf16[4,8,16], index: 0, kind: input, shape index: {}]
  %s1 = inlined_call_operand.vmem [shape: bf16[8,16], index: 1, kind: output, shape index: {}]
  %s2 = sld [smem:[#allocation0]]
  $region14: #{densenet_forward.38} parent=0
    _
  %s4 = ssub.s32 1, %s2
  %s5 = scalar_select 0, %s4, %s2
  // Predicated region
  $region2: #{densenet_forward.38} parent=0 // pred_check
    _
  $region3: #{densenet_forward.38} parent=0 // pred_check_branch
    %7 = sbr.rel (0) target = $region5
  $region4: #{densenet_forward.38} parent=0 // pred_region
    _
  $region5: #{densenet_forward.38} parent=0 // pred_fallthru
    _
  %v8 = vld [vmem:[%s0] sm:$0xf]
  %v9 = vld [vmem:[%s0 + $0x4] sm:$0xf]
  %v10 = vld [vmem:[%s0 + $0x8] sm:$0xf]
  %v11 = vld [vmem:[%s0 + $0xc] sm:$0xf]
  %v12 = vunpack.c.l.bf16 %v8
  %v13 = vunpack.c.l.bf16 %v9
  %v14 = vunpack.c.l.bf16 %v10
  %v15 = vunpack.c.l.bf16 %v11
  %vm16 = vcmask 130048
  %v17 = vsel %vm16, %v12, 0.0
  %v18 = vsel %vm16, %v13, 0.0
  %v19 = vadd.f32 %v17, %v18
  %v20 = vsel %vm16, %v14, 0.0
  %v21 = vadd.f32 %v19, %v20
  %v22 = vsel %vm16, %v15, 0.0
  %v23 = vadd.f32 %v21, %v22
  %v24 = vmul.f32 %v23, 0.25
  %v25 = vpack.c.bf16 %v24, %v24
  %vm26 = vcmask 125952
  %27 = vst.msk [vmem:[%s1] sm:$0xf] %vm26, %v25
  // Predicated region
  $region6: #{densenet_forward.38} parent=0 // pred_check
    _
  $region7: #{densenet_forward.38} parent=0 // pred_check_branch
    %29 = sbr.rel (0) target = $region9
  $region8: #{densenet_forward.38} parent=0 // pred_region
    _
  $region9: #{densenet_forward.38} parent=0 // pred_fallthru
    _
  // Predicated region
  $region10: #{densenet_forward.38} parent=0 // pred_check
    _
  $region11: #{densenet_forward.38} parent=0 // pred_check_branch
    %31 = sbr.rel (0) target = $region13
  $region12: #{densenet_forward.38} parent=0 // pred_region
    _
  $region13: #{densenet_forward.38} parent=0 // pred_fallthru
    _

// kernel: densenet_forward.39
$region0: #{densenet_forward.39}
  #allocation0 [shape = 'u32[]', space=smem, size = 0x4, offset = 0x4, fixed_abs, tag = 'smem constant byte address 0x4 - core index']
  #allocation1 [shape = 'u32[144,128]{1,0:T(1,128)}', space=vmem, size = 0x12000, scoped, tag = 'internal scratch']
  %s0 = inlined_call_operand.vmem [shape: bf16[8,128], index: 0, kind: input, shape index: {}]
  %s1 = inlined_call_operand.vmem [shape: bf16[128,128], index: 1, kind: input, shape index: {}]
  %s2 = inlined_call_operand.vmem [shape: f32[1,128], index: 2, kind: input, shape index: {}]
  %s3 = inlined_call_operand.vmem [shape: f32[1,128], index: 3, kind: input, shape index: {}]
  %s4 = inlined_call_operand.vmem [shape: f32[1,128], index: 4, kind: input, shape index: {}]
  %s5 = inlined_call_operand.vmem [shape: bf16[8,128], index: 5, kind: output, shape index: {}]
  %s6 = sld [smem:[#allocation0]]
  $region30: #{densenet_forward.39} parent=0
    _
  %s8 = ssub.s32 1, %s6
  %s9 = scalar_select 0, %s8, %s6
  // Predicated region
  $region2: #{densenet_forward.39} parent=0 // pred_check
    _
  $region3: #{densenet_forward.39} parent=0 // pred_check_branch
    %11 = sbr.rel (0) target = $region5
  $region4: #{densenet_forward.39} parent=0 // pred_region
    _
  $region5: #{densenet_forward.39} parent=0 // pred_fallthru
    _
  // Predicated region
  $region6: #{densenet_forward.39} parent=0 // pred_check
    _
  $region7: #{densenet_forward.39} parent=0 // pred_check_branch
    %13 = sbr.rel (0) target = $region9
  $region8: #{densenet_forward.39} parent=0 // pred_region
    _
  $region9: #{densenet_forward.39} parent=0 // pred_fallthru
    _
  // Predicated region
  $region10: #{densenet_forward.39} parent=0 // pred_check
    _
  $region11: #{densenet_forward.39} parent=0 // pred_check_branch
    %15 = sbr.rel (0) target = $region13
  $region12: #{densenet_forward.39} parent=0 // pred_region
    _
  $region13: #{densenet_forward.39} parent=0 // pred_fallthru
    _
  // Predicated region
  $region14: #{densenet_forward.39} parent=0 // pred_check
    _
  $region15: #{densenet_forward.39} parent=0 // pred_check_branch
    %17 = sbr.rel (0) target = $region17
  $region16: #{densenet_forward.39} parent=0 // pred_region
    _
  $region17: #{densenet_forward.39} parent=0 // pred_fallthru
    _
  // Predicated region
  $region18: #{densenet_forward.39} parent=0 // pred_check
    _
  $region19: #{densenet_forward.39} parent=0 // pred_check_branch
    %19 = sbr.rel (0) target = $region21
  $region20: #{densenet_forward.39} parent=0 // pred_region
    _
  $region21: #{densenet_forward.39} parent=0 // pred_fallthru
    _
  %v21 = vld [vmem:[%s0] sm:$0xf]
  %v22 = vunpack.c.l.bf16 %v21
  %v23 = vld [vmem:[%s2] sm:$0x1]
  %v25 = vlaneseq
  %v26 = vshrl.u32 %v25, 7
  %v27 = vsub.s32 0, %v26
  %v28 = vrot.slane %v23, %v27
  %v30 = vmul.f32 %v22, %v28
  %v31 = vld [vmem:[%s3] sm:$0x1]
  %v33 = vlaneseq
  %v34 = vshrl.u32 %v33, 7
  %v35 = vsub.s32 0, %v34
  %v36 = vrot.slane %v31, %v35
  %v38 = vadd.f32 %v30, %v36
  %v39 = vmax.f32 %v38, 0.0
  %v40 = vpack.c.bf16 %v39, %v39
  %v41 = vld [vmem:[%s1] sm:$0xf]
  %v42 = vld [vmem:[%s1 + $0x4] sm:$0xf]
  %v43 = vld [vmem:[%s1 + $0x8] sm:$0xf]
  %v44 = vld [vmem:[%s1 + $0xc] sm:$0xf]
  %v45 = vld [vmem:[%s1 + $0x10] sm:$0xf]
  %v46 = vld [vmem:[%s1 + $0x14] sm:$0xf]
  %v47 = vld [vmem:[%s1 + $0x18] sm:$0xf]
  %v48 = vld [vmem:[%s1 + $0x1c] sm:$0xf]
  %v49 = vld [vmem:[%s1 + $0x20] sm:$0xf]
  %v50 = vld [vmem:[%s1 + $0x24] sm:$0xf]
  %v51 = vld [vmem:[%s1 + $0x28] sm:$0xf]
  %v52 = vld [vmem:[%s1 + $0x2c] sm:$0xf]
  %v53 = vld [vmem:[%s1 + $0x30] sm:$0xf]
  %v54 = vld [vmem:[%s1 + $0x34] sm:$0xf]
  %v55 = vld [vmem:[%s1 + $0x38] sm:$0xf]
  %v56 = vld [vmem:[%s1 + $0x3c] sm:$0xf]
  %v57 = vld [vmem:[%s4] sm:$0x1]
  %v59 = vlaneseq
  %v60 = vshrl.u32 %v59, 7
  %v61 = vsub.s32 0, %v60
  %v62 = vrot.slane %v57, %v61
  %v80 = vunpack.c.l.b16 %v41
  %v81 = vunpack.c.l.b16 %v42
  %v82 = vunpack.c.l.b16 %v43
  %v83 = vunpack.c.l.b16 %v44
  %v84 = vunpack.c.l.b16 %v45
  %v85 = vunpack.c.l.b16 %v46
  %v86 = vunpack.c.l.b16 %v47
  %v87 = vunpack.c.l.b16 %v48
  %v88 = vunpack.c.l.b16 %v49
  %v89 = vunpack.c.l.b16 %v50
  %v90 = vunpack.c.l.b16 %v51
  %v91 = vunpack.c.l.b16 %v52
  %v92 = vunpack.c.l.b16 %v53
  %v93 = vunpack.c.l.b16 %v54
  %v94 = vunpack.c.l.b16 %v55
  %v95 = vunpack.c.l.b16 %v56
  %v96 = vpack.c.b16 %v81, %v80
  %v97 = vpack.c.b16 %v83, %v82
  %v98 = vpack.c.b16 %v85, %v84
  %v99 = vpack.c.b16 %v87, %v86
  %v100 = vpack.c.b16 %v89, %v88
  %v101 = vpack.c.b16 %v91, %v90
  %v102 = vpack.c.b16 %v93, %v92
  %v103 = vpack.c.b16 %v95, %v94
  %112 = vmatprep.subr.bf16.mxu0 0
  %113 = vmatpush1.bf16.msra.mxu0 %v103
  %114 = vmatprep.subr.bf16.mxu0 0
  %115 = vmatpush1.bf16.msra.mxu0 %v102
  %116 = vmatprep.subr.bf16.mxu0 0
  %117 = vmatpush1.bf16.msra.mxu0 %v101
  %118 = vmatprep.subr.bf16.mxu0 0
  %119 = vmatpush1.bf16.msra.mxu0 %v100
  %120 = vmatprep.subr.bf16.mxu0 0
  %121 = vmatpush1.bf16.msra.mxu0 %v99
  %122 = vmatprep.subr.bf16.mxu0 0
  %123 = vmatpush1.bf16.msra.mxu0 %v98
  %124 = vmatprep.subr.bf16.mxu0 0
  %125 = vmatpush1.bf16.msra.mxu0 %v97
  %126 = vmatprep.subr.bf16.mxu0 0
  %127 = vmatpush1.bf16.msra.mxu0 %v96
  %128 = vmatprep.subr.bf16.mxu0 0
  %129 = vmatpush2.bf16.msra.mxu0 0
  %130 = vmatprep.subr.bf16.mxu0 0
  %131 = vmatpush2.bf16.msra.mxu0 0
  %132 = vmatprep.subr.bf16.mxu0 0
  %133 = vmatpush2.bf16.msra.mxu0 0
  %134 = vmatprep.subr.bf16.mxu0 0
  %135 = vmatpush2.bf16.msra.mxu0 0
  %136 = vmatprep.subr.bf16.mxu0 0
  %137 = vmatpush2.bf16.msra.mxu0 0
  %138 = vmatprep.subr.bf16.mxu0 0
  %139 = vmatpush2.bf16.msra.mxu0 0
  %140 = vmatprep.subr.bf16.mxu0 0
  %141 = vmatpush2.bf16.msra.mxu0 0
  %142 = vmatprep.subr.bf16.mxu0 0
  %143 = vmatpush2.bf16.msra.mxu0 0
  %144 = vmatprep.mubr.bf16.mxu0 0
  %145 = vmatmul.mubr.bf16.gmra.mxu0 %v40
  %v146 = vpop.f32.mrf.mxu0
  %v147 = vadd.f32 %v62, %v146
  %v148 = vpop.f32.mrf.mxu0
  %v149 = vpop.f32.mrf.mxu0
  %v150 = vpop.f32.mrf.mxu0
  %151 = vdwg.mxu0
  %v152 = vmax.f32 %v147, 0.0
  %v153 = vpack.c.bf16 %v152, %v152
  %154 = vst [vmem:[%s5] sm:$0xf] %v153
  // Predicated region
  $region22: #{densenet_forward.39} parent=0 // pred_check
    _
  $region23: #{densenet_forward.39} parent=0 // pred_check_branch
    %156 = sbr.rel (0) target = $region25
  $region24: #{densenet_forward.39} parent=0 // pred_region
    _
  $region25: #{densenet_forward.39} parent=0 // pred_fallthru
    _
  // Predicated region
  $region26: #{densenet_forward.39} parent=0 // pred_check
    _
  $region27: #{densenet_forward.39} parent=0 // pred_check_branch
    %158 = sbr.rel (0) target = $region29
  $region28: #{densenet_forward.39} parent=0 // pred_region
    _
  $region29: #{densenet_forward.39} parent=0 // pred_fallthru
    _

// kernel: densenet_forward.44
$region0: #{densenet_forward.44}
  #allocation0 [shape = 'u32[]', space=smem, size = 0x4, offset = 0x4, fixed_abs, tag = 'smem constant byte address 0x4 - core index']
  #allocation1 [shape = 'u32[144,128]{1,0:T(1,128)}', space=vmem, size = 0x12000, scoped, tag = 'internal scratch']
  %s0 = inlined_call_operand.vmem [shape: bf16[4,2,16], index: 0, kind: input, shape index: {}]
  %s1 = inlined_call_operand.vmem [shape: bf16[2,16], index: 1, kind: output, shape index: {}]
  %s2 = sld [smem:[#allocation0]]
  $region14: #{densenet_forward.44} parent=0
    _
  %s4 = ssub.s32 1, %s2
  %s5 = scalar_select 0, %s4, %s2
  // Predicated region
  $region2: #{densenet_forward.44} parent=0 // pred_check
    _
  $region3: #{densenet_forward.44} parent=0 // pred_check_branch
    %7 = sbr.rel (0) target = $region5
  $region4: #{densenet_forward.44} parent=0 // pred_region
    _
  $region5: #{densenet_forward.44} parent=0 // pred_fallthru
    _
  %v8 = vld [vmem:[%s0] sm:$0x1]
  %v9 = vld [vmem:[%s0 + $0x1] sm:$0x1]
  %v10 = vld [vmem:[%s0 + $0x2] sm:$0x1]
  %v11 = vld [vmem:[%s0 + $0x3] sm:$0x1]
  %v12 = vunpack.c.l.bf16 %v8
  %v13 = vunpack.c.l.bf16 %v9
  %v14 = vunpack.c.l.bf16 %v10
  %v15 = vunpack.c.l.bf16 %v11
  %vm16 = vcmask 123904
  %v17 = vsel %vm16, %v12, 0.0
  %v18 = vsel %vm16, %v13, 0.0
  %v19 = vadd.f32 %v17, %v18
  %v20 = vsel %vm16, %v14, 0.0
  %v21 = vadd.f32 %v19, %v20
  %v22 = vsel %vm16, %v15, 0.0
  %v23 = vadd.f32 %v21, %v22
  %v24 = vmul.f32 %v23, 0.25
  %v25 = vpack.c.bf16 %v24, %v24
  %vm26 = vcmask 122880
  %27 = vst.msk [vmem:[%s1] sm:$0x1] %vm26, %v25
  // Predicated region
  $region6: #{densenet_forward.44} parent=0 // pred_check
    _
  $region7: #{densenet_forward.44} parent=0 // pred_check_branch
    %29 = sbr.rel (0) target = $region9
  $region8: #{densenet_forward.44} parent=0 // pred_region
    _
  $region9: #{densenet_forward.44} parent=0 // pred_fallthru
    _
  // Predicated region
  $region10: #{densenet_forward.44} parent=0 // pred_check
    _
  $region11: #{densenet_forward.44} parent=0 // pred_check_branch
    %31 = sbr.rel (0) target = $region13
  $region12: #{densenet_forward.44} parent=0 // pred_region
    _
  $region13: #{densenet_forward.44} parent=0 // pred_fallthru
    _

// kernel: densenet_forward.43
$region0: #{densenet_forward.43}
  #allocation0 [shape = 'u32[]', space=smem, size = 0x4, offset = 0x4, fixed_abs, tag = 'smem constant byte address 0x4 - core index']
  #allocation1 [shape = 'u32[144,128]{1,0:T(1,128)}', space=vmem, size = 0x12000, scoped, tag = 'internal scratch']
  %s0 = inlined_call_operand.vmem [shape: bf16[8,128], index: 0, kind: input, shape index: {}]
  %s1 = inlined_call_operand.vmem [shape: bf16[128,128], index: 1, kind: input, shape index: {}]
  %s2 = inlined_call_operand.vmem [shape: f32[1,128], index: 2, kind: input, shape index: {}]
  %s3 = inlined_call_operand.vmem [shape: f32[1,128], index: 3, kind: input, shape index: {}]
  %s4 = inlined_call_operand.vmem [shape: bf16[8,128], index: 4, kind: output, shape index: {}]
  %s5 = sld [smem:[#allocation0]]
  $region26: #{densenet_forward.43} parent=0
    _
  %s7 = ssub.s32 1, %s5
  %s8 = scalar_select 0, %s7, %s5
  // Predicated region
  $region2: #{densenet_forward.43} parent=0 // pred_check
    _
  $region3: #{densenet_forward.43} parent=0 // pred_check_branch
    %10 = sbr.rel (0) target = $region5
  $region4: #{densenet_forward.43} parent=0 // pred_region
    _
  $region5: #{densenet_forward.43} parent=0 // pred_fallthru
    _
  // Predicated region
  $region6: #{densenet_forward.43} parent=0 // pred_check
    _
  $region7: #{densenet_forward.43} parent=0 // pred_check_branch
    %12 = sbr.rel (0) target = $region9
  $region8: #{densenet_forward.43} parent=0 // pred_region
    _
  $region9: #{densenet_forward.43} parent=0 // pred_fallthru
    _
  // Predicated region
  $region10: #{densenet_forward.43} parent=0 // pred_check
    _
  $region11: #{densenet_forward.43} parent=0 // pred_check_branch
    %14 = sbr.rel (0) target = $region13
  $region12: #{densenet_forward.43} parent=0 // pred_region
    _
  $region13: #{densenet_forward.43} parent=0 // pred_fallthru
    _
  // Predicated region
  $region14: #{densenet_forward.43} parent=0 // pred_check
    _
  $region15: #{densenet_forward.43} parent=0 // pred_check_branch
    %16 = sbr.rel (0) target = $region17
  $region16: #{densenet_forward.43} parent=0 // pred_region
    _
  $region17: #{densenet_forward.43} parent=0 // pred_fallthru
    _
  %v18 = vld [vmem:[%s0] sm:$0xf]
  %v19 = vunpack.c.l.bf16 %v18
  %v20 = vld [vmem:[%s2] sm:$0x1]
  %v22 = vlaneseq
  %v23 = vshrl.u32 %v22, 7
  %v24 = vsub.s32 0, %v23
  %v25 = vrot.slane %v20, %v24
  %v27 = vmul.f32 %v19, %v25
  %v28 = vld [vmem:[%s3] sm:$0x1]
  %v30 = vlaneseq
  %v31 = vshrl.u32 %v30, 7
  %v32 = vsub.s32 0, %v31
  %v33 = vrot.slane %v28, %v32
  %v35 = vadd.f32 %v27, %v33
  %v36 = vmax.f32 %v35, 0.0
  %v37 = vpack.c.bf16 %v36, %v36
  %v38 = vld [vmem:[%s1] sm:$0xf]
  %v39 = vld [vmem:[%s1 + $0x4] sm:$0xf]
  %v40 = vld [vmem:[%s1 + $0x8] sm:$0xf]
  %v41 = vld [vmem:[%s1 + $0xc] sm:$0xf]
  %v42 = vld [vmem:[%s1 + $0x10] sm:$0xf]
  %v43 = vld [vmem:[%s1 + $0x14] sm:$0xf]
  %v44 = vld [vmem:[%s1 + $0x18] sm:$0xf]
  %v45 = vld [vmem:[%s1 + $0x1c] sm:$0xf]
  %v46 = vld [vmem:[%s1 + $0x20] sm:$0xf]
  %v47 = vld [vmem:[%s1 + $0x24] sm:$0xf]
  %v48 = vld [vmem:[%s1 + $0x28] sm:$0xf]
  %v49 = vld [vmem:[%s1 + $0x2c] sm:$0xf]
  %v50 = vld [vmem:[%s1 + $0x30] sm:$0xf]
  %v51 = vld [vmem:[%s1 + $0x34] sm:$0xf]
  %v52 = vld [vmem:[%s1 + $0x38] sm:$0xf]
  %v53 = vld [vmem:[%s1 + $0x3c] sm:$0xf]
  %v70 = vunpack.c.l.b16 %v38
  %v71 = vunpack.c.l.b16 %v39
  %v72 = vunpack.c.l.b16 %v40
  %v73 = vunpack.c.l.b16 %v41
  %v74 = vunpack.c.l.b16 %v42
  %v75 = vunpack.c.l.b16 %v43
  %v76 = vunpack.c.l.b16 %v44
  %v77 = vunpack.c.l.b16 %v45
  %v78 = vunpack.c.l.b16 %v46
  %v79 = vunpack.c.l.b16 %v47
  %v80 = vunpack.c.l.b16 %v48
  %v81 = vunpack.c.l.b16 %v49
  %v82 = vunpack.c.l.b16 %v50
  %v83 = vunpack.c.l.b16 %v51
  %v84 = vunpack.c.l.b16 %v52
  %v85 = vunpack.c.l.b16 %v53
  %v86 = vpack.c.b16 %v71, %v70
  %v87 = vpack.c.b16 %v73, %v72
  %v88 = vpack.c.b16 %v75, %v74
  %v89 = vpack.c.b16 %v77, %v76
  %v90 = vpack.c.b16 %v79, %v78
  %v91 = vpack.c.b16 %v81, %v80
  %v92 = vpack.c.b16 %v83, %v82
  %v93 = vpack.c.b16 %v85, %v84
  %102 = vmatprep.subr.bf16.mxu0 0
  %103 = vmatpush1.bf16.msra.mxu0 %v93
  %104 = vmatprep.subr.bf16.mxu0 0
  %105 = vmatpush1.bf16.msra.mxu0 %v92
  %106 = vmatprep.subr.bf16.mxu0 0
  %107 = vmatpush1.bf16.msra.mxu0 %v91
  %108 = vmatprep.subr.bf16.mxu0 0
  %109 = vmatpush1.bf16.msra.mxu0 %v90
  %110 = vmatprep.subr.bf16.mxu0 0
  %111 = vmatpush1.bf16.msra.mxu0 %v89
  %112 = vmatprep.subr.bf16.mxu0 0
  %113 = vmatpush1.bf16.msra.mxu0 %v88
  %114 = vmatprep.subr.bf16.mxu0 0
  %115 = vmatpush1.bf16.msra.mxu0 %v87
  %116 = vmatprep.subr.bf16.mxu0 0
  %117 = vmatpush1.bf16.msra.mxu0 %v86
  %118 = vmatprep.subr.bf16.mxu0 0
  %119 = vmatpush2.bf16.msra.mxu0 0
  %120 = vmatprep.subr.bf16.mxu0 0
  %121 = vmatpush2.bf16.msra.mxu0 0
  %122 = vmatprep.subr.bf16.mxu0 0
  %123 = vmatpush2.bf16.msra.mxu0 0
  %124 = vmatprep.subr.bf16.mxu0 0
  %125 = vmatpush2.bf16.msra.mxu0 0
  %126 = vmatprep.subr.bf16.mxu0 0
  %127 = vmatpush2.bf16.msra.mxu0 0
  %128 = vmatprep.subr.bf16.mxu0 0
  %129 = vmatpush2.bf16.msra.mxu0 0
  %130 = vmatprep.subr.bf16.mxu0 0
  %131 = vmatpush2.bf16.msra.mxu0 0
  %132 = vmatprep.subr.bf16.mxu0 0
  %133 = vmatpush2.bf16.msra.mxu0 0
  %134 = vmatprep.mubr.bf16.mxu0 0
  %135 = vmatmul.mubr.bf16.gmra.mxu0 %v37
  %v136 = vpop.f32.mrf.mxu0
  %v137 = vadd.f32 0.0, %v136
  %v138 = vpop.f32.mrf.mxu0
  %v139 = vpop.f32.mrf.mxu0
  %v140 = vpop.f32.mrf.mxu0
  %141 = vdwg.mxu0
  %v142 = vpack.c.bf16 %v137, %v137
  %143 = vst [vmem:[%s4] sm:$0xf] %v142
  // Predicated region
  $region18: #{densenet_forward.43} parent=0 // pred_check
    _
  $region19: #{densenet_forward.43} parent=0 // pred_check_branch
    %145 = sbr.rel (0) target = $region21
  $region20: #{densenet_forward.43} parent=0 // pred_region
    _
  $region21: #{densenet_forward.43} parent=0 // pred_fallthru
    _
  // Predicated region
  $region22: #{densenet_forward.43} parent=0 // pred_check
    _
  $region23: #{densenet_forward.43} parent=0 // pred_check_branch
    %147 = sbr.rel (0) target = $region25
  $region24: #{densenet_forward.43} parent=0 // pred_region
    _
  $region25: #{densenet_forward.43} parent=0 // pred_fallthru
    _

// kernel: densenet_forward.40
$region0: #{densenet_forward.40}
  #allocation0 [shape = 'u32[]', space=smem, size = 0x4, offset = 0x4, fixed_abs, tag = 'smem constant byte address 0x4 - core index']
  #allocation1 [shape = 'u32[144,128]{1,0:T(1,128)}', space=vmem, size = 0x12000, scoped, tag = 'internal scratch']
  %s0 = inlined_call_operand.vmem [shape: bf16[2,20,128], index: 0, kind: input, shape index: {}]
  %s1 = inlined_call_operand.vmem [shape: bf16[1152,8], index: 1, kind: input, shape index: {}]
  %s2 = inlined_call_operand.vmem [shape: bf16[2,8,8], index: 2, kind: output, shape index: {}]
  %s3 = sld [smem:[#allocation0]]
  $region41: #{densenet_forward.40} parent=0
    _
  %s5 = ssub.s32 1, %s3
  %s6 = scalar_select 0, %s5, %s3
  loop: start=0, step=1, limit=4
  $region2: #{densenet_forward.40} parent=0 // loop_pre_header
    _
  $region3: #{densenet_forward.40} parent=0 // loop_header
    %s8 = sphi 0, %s12
    %p9 = scmp.ge.s32.totalorder %s8, 4
    %s18 = sphi 0, %s20
    %s21 = sphi 0, %s18
    %s22 = sphi 0, %s21
    %s38 = sphi 0, %s22
    %s42 = sphi 0, %s42
    %s44 = sphi 0, %s42
    %s45 = sphi 0, %s44
    %s59 = sphi 0, %s45
    %s65 = sphi 0, %s67
    %s68 = sphi 0, %s65
    %s69 = sphi 0, %s68
    %s85 = sphi 0, %s69
  $region4: #{densenet_forward.40} parent=0 // loop_header_branch
    %11 = sbr.rel (%p9) target = $region8
  $region5: #{densenet_forward.40} parent=0 // loop_body
    %s13 = ssub.s32 %s8, 1
    %s14 = ssub.s32 %s8, 2
    %s15 = sadd.s32 %s8, 1
    %s16 = ssub.s32 %s8, %s15
    %p17 = scmp.eq.s32.totalorder %s16, 0
    %s19 = sadd.s32 %s18, 1
    %s20 = scalar_select %p17, %s18, %s19
    %p23 = pneg %p17
    %p24 = scmp.eq.s32.totalorder %s8, 1
    %p25 = por %p23, %p24
    %p26 = scmp.ne.s32.totalorder %s18, %s21
    %p27 = scmp.eq.s32.totalorder %s8, 0
    %p28 = por %p26, %p27
    %p29 = scmp.ne.s32.totalorder %s18, %s21
    %p30 = scmp.eq.s32.totalorder %s13, 1
    %p31 = por %p29, %p30
    %p32 = scmp.ne.s32.totalorder %s21, %s22
    %p33 = scmp.eq.s32.totalorder %s13, 0
    %p34 = por %p32, %p33
    %p35 = scmp.ne.s32.totalorder %s21, %s22
    %p36 = scmp.eq.s32.totalorder %s14, 1
    %p37 = por %p35, %p36
    %p39 = scmp.ne.s32.totalorder %s22, %s38
    %p40 = scmp.eq.s32.totalorder %s14, 0
    %p41 = por %p39, %p40
    %s43 = sadd.s32 %s42, 1
    %p46 = scmp.eq.s32.totalorder %s8, 1
    %p47 = scmp.ne.s32.totalorder %s42, %s44
    %p48 = scmp.eq.s32.totalorder %s8, 0
    %p49 = por %p47, %p48
    %p50 = scmp.ne.s32.totalorder %s42, %s44
    %p51 = scmp.eq.s32.totalorder %s13, 1
    %p52 = por %p50, %p51
    %p53 = scmp.ne.s32.totalorder %s44, %s45
    %p54 = scmp.eq.s32.totalorder %s13, 0
    %p55 = por %p53, %p54
    %p56 = scmp.ne.s32.totalorder %s44, %s45
    %p57 = scmp.eq.s32.totalorder %s14, 1
    %p58 = por %p56, %p57
    %p60 = scmp.ne.s32.totalorder %s45, %s59
    %p61 = scmp.eq.s32.totalorder %s14, 0
    %p62 = por %p60, %p61
    %s63 = ssub.s32 %s8, %s15
    %p64 = scmp.eq.s32.totalorder %s63, 0
    %s66 = sadd.s32 %s65, 1
    %s67 = scalar_select %p64, %s65, %s66
    %p70 = pneg %p64
    %p71 = scmp.eq.s32.totalorder %s8, 1
    %p72 = por %p70, %p71
    %p73 = scmp.ne.s32.totalorder %s65, %s68
    %p74 = scmp.eq.s32.totalorder %s8, 0
    %p75 = por %p73, %p74
    %p76 = scmp.ne.s32.totalorder %s65, %s68
    %p77 = scmp.eq.s32.totalorder %s13, 1
    %p78 = por %p76, %p77
    %p79 = scmp.ne.s32.totalorder %s68, %s69
    %p80 = scmp.eq.s32.totalorder %s13, 0
    %p81 = por %p79, %p80
    %p82 = scmp.ne.s32.totalorder %s68, %s69
    %p83 = scmp.eq.s32.totalorder %s14, 1
    %p84 = por %p82, %p83
    %p86 = scmp.ne.s32.totalorder %s69, %s85
    %p87 = scmp.eq.s32.totalorder %s14, 0
    %p88 = por %p86, %p87
    %p89 = scmp.le.s32.totalorder 1, %s8
    %p90 = scmp.lt.s32.totalorder %s8, 3
    %p91 = pnand %p89, %p90
    %p92 = pneg %p91
    // Predicated region
    $region9: #{densenet_forward.40} parent=5 // pred_check
      _
    $region10: #{densenet_forward.40} parent=5 // pred_check_branch
      %94 = sbr.rel (%p91) target = $region12
    $region11: #{densenet_forward.40} parent=5 // pred_region
      %s95 = ssub.s32 %s8, 1
      // Predicated region
      $region13: #{densenet_forward.40} parent=11 // pred_check
        %p96 = pneg %p55
      $region14: #{densenet_forward.40} parent=11 // pred_check_branch
        %98 = sbr.rel (%p96) target = $region16
      $region15: #{densenet_forward.40} parent=11 // pred_region
        _
      $region16: #{densenet_forward.40} parent=11 // pred_fallthru
        _
    $region12: #{densenet_forward.40} parent=5 // pred_fallthru
      _
    %p99 = scmp.lt.s32.totalorder %s8, 2
    // Predicated region
    $region17: #{densenet_forward.40} parent=5 // pred_check
      %p100 = pneg %p99
    $region18: #{densenet_forward.40} parent=5 // pred_check_branch
      %102 = sbr.rel (%p100) target = $region20
    $region19: #{densenet_forward.40} parent=5 // pred_region
      // Predicated region
      $region21: #{densenet_forward.40} parent=19 // pred_check
        %p103 = pneg %p28
      $region22: #{densenet_forward.40} parent=19 // pred_check_branch
        %105 = sbr.rel (%p103) target = $region24
      $region23: #{densenet_forward.40} parent=19 // pred_region
        %p106 = scmp.lt.s32.totalorder %s8, 1
        %s107 = scalar_select %p106, %s8, 1
        %s108 = smul.addr %s107, 3
        %s109 = smul.addr %s108, 4
        %s110 = scalar_lea.vmem %s0, %s109
      $region24: #{densenet_forward.40} parent=19 // pred_fallthru
        _
    $region20: #{densenet_forward.40} parent=5 // pred_fallthru
      _
    %p111 = scmp.le.s32.totalorder 1, %s8
    %p112 = scmp.lt.s32.totalorder %s8, 3
    %p113 = pnand %p111, %p112
    %p114 = pneg %p113
    // Predicated region
    $region25: #{densenet_forward.40} parent=5 // pred_check
      _
    $region26: #{densenet_forward.40} parent=5 // pred_check_branch
      %116 = sbr.rel (%p113) target = $region28
    $region27: #{densenet_forward.40} parent=5 // pred_region
      %s117 = ssub.s32 %s8, 1
      %p118 = scmp.lt.s32.totalorder %s13, 1
      %s119 = scalar_select %p118, %s13, 1
      %s120 = smul.addr %s119, 3
      %s121 = smul.addr %s120, 4
      %s122 = scalar_lea.vmem %s0, %s121
      %p123 = pneg %p34
      %p124 = pneg %p31
      %p125 = pneg %p55
      %p126 = pneg %p52
      %p127 = pneg %p81
      %p128 = pneg %p78
      %p129 = scmp.lt.s32.totalorder %s13, 1
      %s130 = scalar_select %p129, %s13, 1
      %s131 = smul.addr %s130, 4
      %s132 = scalar_lea.vmem %s2, %s131
      %p133 = scmp.lt.s32.totalorder %s13, 1
      %s134 = scalar_select %p133, %s13, 1
      %s135 = smul.addr %s134, 3
      %s136 = smul.addr %s135, 4
      %s137 = scalar_lea.vmem %s0, %s136
      %p138 = scmp.lt.s32.totalorder %s13, 1
      %s139 = scalar_select %p138, %s13, 1
      %s140 = smul.addr %s139, 4
      %s141 = scalar_lea.vmem %s2, %s140
      %v143 = vld [vmem:[%s137] sm:$0xf]
      %v144 = vld [vmem:[%s1] sm:$0xf]
      %v145 = vld [vmem:[%s1 + $0x4] sm:$0xf]
      %v146 = vld [vmem:[%s1 + $0x8] sm:$0xf]
      %v147 = vld [vmem:[%s1 + $0xc] sm:$0xf]
      %v148 = vld [vmem:[%s1 + $0x10] sm:$0xf]
      %v149 = vld [vmem:[%s1 + $0x14] sm:$0xf]
      %v150 = vld [vmem:[%s1 + $0x18] sm:$0xf]
      %v151 = vld [vmem:[%s1 + $0x1c] sm:$0xf]
      %v152 = vld [vmem:[%s1 + $0x20] sm:$0xf]
      %v153 = vld [vmem:[%s1 + $0x24] sm:$0xf]
      %v154 = vld [vmem:[%s1 + $0x28] sm:$0xf]
      %v155 = vld [vmem:[%s1 + $0x2c] sm:$0xf]
      %v156 = vld [vmem:[%s1 + $0x30] sm:$0xf]
      %v157 = vld [vmem:[%s1 + $0x34] sm:$0xf]
      %v158 = vld [vmem:[%s1 + $0x38] sm:$0xf]
      %v159 = vld [vmem:[%s1 + $0x3c] sm:$0xf]
      %v160 = vld [vmem:[%s137 + $0x4] sm:$0x1]
      %v161 = vld [vmem:[%s1 + $0x40] sm:$0xf]
      %v162 = vld [vmem:[%s1 + $0x44] sm:$0xf]
      %v163 = vld [vmem:[%s1 + $0x48] sm:$0xf]
      %v164 = vld [vmem:[%s1 + $0x4c] sm:$0xf]
      %v165 = vld [vmem:[%s1 + $0x50] sm:$0xf]
      %v166 = vld [vmem:[%s1 + $0x54] sm:$0xf]
      %v167 = vld [vmem:[%s1 + $0x58] sm:$0xf]
      %v168 = vld [vmem:[%s1 + $0x5c] sm:$0xf]
      %v169 = vld [vmem:[%s1 + $0x60] sm:$0xf]
      %v170 = vld [vmem:[%s1 + $0x64] sm:$0xf]
      %v171 = vld [vmem:[%s1 + $0x68] sm:$0xf]
      %v172 = vld [vmem:[%s1 + $0x6c] sm:$0xf]
      %v173 = vld [vmem:[%s1 + $0x70] sm:$0xf]
      %v174 = vld [vmem:[%s1 + $0x74] sm:$0xf]
      %v175 = vld [vmem:[%s1 + $0x78] sm:$0xf]
      %v176 = vld [vmem:[%s1 + $0x7c] sm:$0xf]
      %v179 = vunpack.c.l.b16 %v143
      %v180 = vunpack.c.l.b16 %v160
      %v181 = vpack.c.b16 %v180, %v179
      %v183 = vshrl.u32 %v181, 16
      %v185 = vshll.u32 %v181, 16
      %v187 = vrot.slane %v185, 1
      %v188 = vor.u32 %v183, %v187
      %v206 = vunpack.c.l.b16 %v161
      %v207 = vunpack.c.l.b16 %v162
      %v208 = vunpack.c.l.b16 %v163
      %v209 = vunpack.c.l.b16 %v164
      %v210 = vunpack.c.l.b16 %v165
      %v211 = vunpack.c.l.b16 %v166
      %v212 = vunpack.c.l.b16 %v167
      %v213 = vunpack.c.l.b16 %v168
      %v214 = vunpack.c.l.b16 %v169
      %v215 = vunpack.c.l.b16 %v170
      %v216 = vunpack.c.l.b16 %v171
      %v217 = vunpack.c.l.b16 %v172
      %v218 = vunpack.c.l.b16 %v173
      %v219 = vunpack.c.l.b16 %v174
      %v220 = vunpack.c.l.b16 %v175
      %v221 = vunpack.c.l.b16 %v176
      %v222 = vpack.c.b16 %v207, %v206
      %v223 = vpack.c.b16 %v209, %v208
      %v224 = vpack.c.b16 %v211, %v210
      %v225 = vpack.c.b16 %v213, %v212
      %v226 = vpack.c.b16 %v215, %v214
      %v227 = vpack.c.b16 %v217, %v216
      %v228 = vpack.c.b16 %v219, %v218
      %v229 = vpack.c.b16 %v221, %v220
      %238 = vmatprep.subr.bf16.mxu0 0
      %239 = vmatpush1.bf16.msra.mxu0 %v229
      %240 = vmatprep.subr.bf16.mxu0 0
      %241 = vmatpush1.bf16.msra.mxu0 %v228
      %242 = vmatprep.subr.bf16.mxu0 0
      %243 = vmatpush1.bf16.msra.mxu0 %v227
      %244 = vmatprep.subr.bf16.mxu0 0
      %245 = vmatpush1.bf16.msra.mxu0 %v226
      %246 = vmatprep.subr.bf16.mxu0 0
      %247 = vmatpush1.bf16.msra.mxu0 %v225
      %248 = vmatprep.subr.bf16.mxu0 0
      %249 = vmatpush1.bf16.msra.mxu0 %v224
      %250 = vmatprep.subr.bf16.mxu0 0
      %251 = vmatpush1.bf16.msra.mxu0 %v223
      %252 = vmatprep.subr.bf16.mxu0 0
      %253 = vmatpush1.bf16.msra.mxu0 %v222
      %254 = vmatprep.subr.bf16.mxu0 0
      %255 = vmatpush2.bf16.msra.mxu0 0
      %256 = vmatprep.subr.bf16.mxu0 0
      %257 = vmatpush2.bf16.msra.mxu0 0
      %258 = vmatprep.subr.bf16.mxu0 0
      %259 = vmatpush2.bf16.msra.mxu0 0
      %260 = vmatprep.subr.bf16.mxu0 0
      %261 = vmatpush2.bf16.msra.mxu0 0
      %262 = vmatprep.subr.bf16.mxu0 0
      %263 = vmatpush2.bf16.msra.mxu0 0
      %264 = vmatprep.subr.bf16.mxu0 0
      %265 = vmatpush2.bf16.msra.mxu0 0
      %266 = vmatprep.subr.bf16.mxu0 0
      %267 = vmatpush2.bf16.msra.mxu0 0
      %268 = vmatprep.subr.bf16.mxu0 0
      %269 = vmatpush2.bf16.msra.mxu0 0
      %270 = vmatprep.mubr.bf16.mxu0 0
      %271 = vmatmul.mubr.bf16.gmra.mxu0 %v188
      %v272 = vpop.f32.mrf.mxu0
      %v273 = vadd.f32 0.0, %v272
      %v274 = vpop.f32.mrf.mxu0
      %v275 = vpop.f32.mrf.mxu0
      %v276 = vpop.f32.mrf.mxu0
      %277 = vdwg.mxu0
      %v294 = vunpack.c.l.b16 %v144
      %v295 = vunpack.c.l.b16 %v145
      %v296 = vunpack.c.l.b16 %v146
      %v297 = vunpack.c.l.b16 %v147
      %v298 = vunpack.c.l.b16 %v148
      %v299 = vunpack.c.l.b16 %v149
      %v300 = vunpack.c.l.b16 %v150
      %v301 = vunpack.c.l.b16 %v151
      %v302 = vunpack.c.l.b16 %v152
      %v303 = vunpack.c.l.b16 %v153
      %v304 = vunpack.c.l.b16 %v154
      %v305 = vunpack.c.l.b16 %v155
      %v306 = vunpack.c.l.b16 %v156
      %v307 = vunpack.c.l.b16 %v157
      %v308 = vunpack.c.l.b16 %v158
      %v309 = vunpack.c.l.b16 %v159
      %v310 = vpack.c.b16 %v295, %v294
      %v311 = vpack.c.b16 %v297, %v296
      %v312 = vpack.c.b16 %v299, %v298
      %v313 = vpack.c.b16 %v301, %v300
      %v314 = vpack.c.b16 %v303, %v302
      %v315 = vpack.c.b16 %v305, %v304
      %v316 = vpack.c.b16 %v307, %v306
      %v317 = vpack.c.b16 %v309, %v308
      %326 = vmatprep.subr.bf16.mxu0 0
      %327 = vmatpush1.bf16.msra.mxu0 %v317
      %328 = vmatprep.subr.bf16.mxu0 0
      %329 = vmatpush1.bf16.msra.mxu0 %v316
      %330 = vmatprep.subr.bf16.mxu0 0
      %331 = vmatpush1.bf16.msra.mxu0 %v315
      %332 = vmatprep.subr.bf16.mxu0 0
      %333 = vmatpush1.bf16.msra.mxu0 %v314
      %334 = vmatprep.subr.bf16.mxu0 0
      %335 = vmatpush1.bf16.msra.mxu0 %v313
      %336 = vmatprep.subr.bf16.mxu0 0
      %337 = vmatpush1.bf16.msra.mxu0 %v312
      %338 = vmatprep.subr.bf16.mxu0 0
      %339 = vmatpush1.bf16.msra.mxu0 %v311
      %340 = vmatprep.subr.bf16.mxu0 0
      %341 = vmatpush1.bf16.msra.mxu0 %v310
      %342 = vmatprep.subr.bf16.mxu0 0
      %343 = vmatpush2.bf16.msra.mxu0 0
      %344 = vmatprep.subr.bf16.mxu0 0
      %345 = vmatpush2.bf16.msra.mxu0 0
      %346 = vmatprep.subr.bf16.mxu0 0
      %347 = vmatpush2.bf16.msra.mxu0 0
      %348 = vmatprep.subr.bf16.mxu0 0
      %349 = vmatpush2.bf16.msra.mxu0 0
      %350 = vmatprep.subr.bf16.mxu0 0
      %351 = vmatpush2.bf16.msra.mxu0 0
      %352 = vmatprep.subr.bf16.mxu0 0
      %353 = vmatpush2.bf16.msra.mxu0 0
      %354 = vmatprep.subr.bf16.mxu0 0
      %355 = vmatpush2.bf16.msra.mxu0 0
      %356 = vmatprep.subr.bf16.mxu0 0
      %357 = vmatpush2.bf16.msra.mxu0 0
      %358 = vmatprep.mubr.bf16.mxu0 0
      %359 = vmatmul.mubr.bf16.gmra.mxu0 %v143
      %v360 = vpop.f32.mrf.mxu0
      %v361 = vadd.f32 %v273, %v360
      %v362 = vpop.f32.mrf.mxu0
      %v363 = vpop.f32.mrf.mxu0
      %v364 = vpop.f32.mrf.mxu0
      %365 = vdwg.mxu0
      %v366 = vld [vmem:[%s137] sm:$0xe]
      %v367 = vld [vmem:[%s1 + $0x80] sm:$0xf]
      %v368 = vld [vmem:[%s1 + $0x84] sm:$0xf]
      %v369 = vld [vmem:[%s1 + $0x88] sm:$0xf]
      %v370 = vld [vmem:[%s1 + $0x8c] sm:$0xf]
      %v371 = vld [vmem:[%s1 + $0x90] sm:$0xf]
      %v372 = vld [vmem:[%s1 + $0x94] sm:$0xf]
      %v373 = vld [vmem:[%s1 + $0x98] sm:$0xf]
      %v374 = vld [vmem:[%s1 + $0x9c] sm:$0xf]
      %v375 = vld [vmem:[%s1 + $0xa0] sm:$0xf]
      %v376 = vld [vmem:[%s1 + $0xa4] sm:$0xf]
      %v377 = vld [vmem:[%s1 + $0xa8] sm:$0xf]
      %v378 = vld [vmem:[%s1 + $0xac] sm:$0xf]
      %v379 = vld [vmem:[%s1 + $0xb0] sm:$0xf]
      %v380 = vld [vmem:[%s1 + $0xb4] sm:$0xf]
      %v381 = vld [vmem:[%s1 + $0xb8] sm:$0xf]
      %v382 = vld [vmem:[%s1 + $0xbc] sm:$0xf]
      %v384 = vunpack.c.l.b16 %v366
      %v385 = vpack.c.b16 %v180, %v384
      %v386 = vrot.slane %v385, 1
      %v404 = vunpack.c.l.b16 %v367
      %v405 = vunpack.c.l.b16 %v368
      %v406 = vunpack.c.l.b16 %v369
      %v407 = vunpack.c.l.b16 %v370
      %v408 = vunpack.c.l.b16 %v371
      %v409 = vunpack.c.l.b16 %v372
      %v410 = vunpack.c.l.b16 %v373
      %v411 = vunpack.c.l.b16 %v374
      %v412 = vunpack.c.l.b16 %v375
      %v413 = vunpack.c.l.b16 %v376
      %v414 = vunpack.c.l.b16 %v377
      %v415 = vunpack.c.l.b16 %v378
      %v416 = vunpack.c.l.b16 %v379
      %v417 = vunpack.c.l.b16 %v380
      %v418 = vunpack.c.l.b16 %v381
      %v419 = vunpack.c.l.b16 %v382
      %v420 = vpack.c.b16 %v405, %v404
      %v421 = vpack.c.b16 %v407, %v406
      %v422 = vpack.c.b16 %v409, %v408
      %v423 = vpack.c.b16 %v411, %v410
      %v424 = vpack.c.b16 %v413, %v412
      %v425 = vpack.c.b16 %v415, %v414
      %v426 = vpack.c.b16 %v417, %v416
      %v427 = vpack.c.b16 %v419, %v418
      %436 = vmatprep.subr.bf16.mxu0 0
      %437 = vmatpush1.bf16.msra.mxu0 %v427
      %438 = vmatprep.subr.bf16.mxu0 0
      %439 = vmatpush1.bf16.msra.mxu0 %v426
      %440 = vmatprep.subr.bf16.mxu0 0
      %441 = vmatpush1.bf16.msra.mxu0 %v425
      %442 = vmatprep.subr.bf16.mxu0 0
      %443 = vmatpush1.bf16.msra.mxu0 %v424
      %444 = vmatprep.subr.bf16.mxu0 0
      %445 = vmatpush1.bf16.msra.mxu0 %v423
      %446 = vmatprep.subr.bf16.mxu0 0
      %447 = vmatpush1.bf16.msra.mxu0 %v422
      %448 = vmatprep.subr.bf16.mxu0 0
      %449 = vmatpush1.bf16.msra.mxu0 %v421
      %450 = vmatprep.subr.bf16.mxu0 0
      %451 = vmatpush1.bf16.msra.mxu0 %v420
      %452 = vmatprep.subr.bf16.mxu0 0
      %453 = vmatpush2.bf16.msra.mxu0 0
      %454 = vmatprep.subr.bf16.mxu0 0
      %455 = vmatpush2.bf16.msra.mxu0 0
      %456 = vmatprep.subr.bf16.mxu0 0
      %457 = vmatpush2.bf16.msra.mxu0 0
      %458 = vmatprep.subr.bf16.mxu0 0
      %459 = vmatpush2.bf16.msra.mxu0 0
      %460 = vmatprep.subr.bf16.mxu0 0
      %461 = vmatpush2.bf16.msra.mxu0 0
      %462 = vmatprep.subr.bf16.mxu0 0
      %463 = vmatpush2.bf16.msra.mxu0 0
      %464 = vmatprep.subr.bf16.mxu0 0
      %465 = vmatpush2.bf16.msra.mxu0 0
      %466 = vmatprep.subr.bf16.mxu0 0
      %467 = vmatpush2.bf16.msra.mxu0 0
      %468 = vmatprep.mubr.bf16.mxu0 0
      %469 = vmatmul.mubr.bf16.gmra.mxu0 %v386
      %v470 = vpop.f32.mrf.mxu0
      %v471 = vadd.f32 0.0, %v470
      %v472 = vpop.f32.mrf.mxu0
      %v473 = vpop.f32.mrf.mxu0
      %v474 = vpop.f32.mrf.mxu0
      %475 = vdwg.mxu0
      %v476 = vadd.f32 %v361, %v471
      %v477 = vld [vmem:[%s137] sm:$0xc]
      %v478 = vld [vmem:[%s137 + $0x4] sm:$0x3]
      %v479 = vld [vmem:[%s1 + $0xc0] sm:$0xf]
      %v480 = vld [vmem:[%s1 + $0xc4] sm:$0xf]
      %v481 = vld [vmem:[%s1 + $0xc8] sm:$0xf]
      %v482 = vld [vmem:[%s1 + $0xcc] sm:$0xf]
      %v483 = vld [vmem:[%s1 + $0xd0] sm:$0xf]
      %v484 = vld [vmem:[%s1 + $0xd4] sm:$0xf]
      %v485 = vld [vmem:[%s1 + $0xd8] sm:$0xf]
      %v486 = vld [vmem:[%s1 + $0xdc] sm:$0xf]
      %v487 = vld [vmem:[%s1 + $0xe0] sm:$0xf]
      %v488 = vld [vmem:[%s1 + $0xe4] sm:$0xf]
      %v489 = vld [vmem:[%s1 + $0xe8] sm:$0xf]
      %v490 = vld [vmem:[%s1 + $0xec] sm:$0xf]
      %v491 = vld [vmem:[%s1 + $0xf0] sm:$0xf]
      %v492 = vld [vmem:[%s1 + $0xf4] sm:$0xf]
      %v493 = vld [vmem:[%s1 + $0xf8] sm:$0xf]
      %v494 = vld [vmem:[%s1 + $0xfc] sm:$0xf]
      %v497 = vunpack.c.l.b16 %v477
      %v498 = vunpack.c.l.b16 %v478
      %v499 = vpack.c.b16 %v498, %v497
      %v500 = vrot.slane %v499, 2
      %v518 = vunpack.c.l.b16 %v479
      %v519 = vunpack.c.l.b16 %v480
      %v520 = vunpack.c.l.b16 %v481
      %v521 = vunpack.c.l.b16 %v482
      %v522 = vunpack.c.l.b16 %v483
      %v523 = vunpack.c.l.b16 %v484
      %v524 = vunpack.c.l.b16 %v485
      %v525 = vunpack.c.l.b16 %v486
      %v526 = vunpack.c.l.b16 %v487
      %v527 = vunpack.c.l.b16 %v488
      %v528 = vunpack.c.l.b16 %v489
      %v529 = vunpack.c.l.b16 %v490
      %v530 = vunpack.c.l.b16 %v491
      %v531 = vunpack.c.l.b16 %v492
      %v532 = vunpack.c.l.b16 %v493
      %v533 = vunpack.c.l.b16 %v494
      %v534 = vpack.c.b16 %v519, %v518
      %v535 = vpack.c.b16 %v521, %v520
      %v536 = vpack.c.b16 %v523, %v522
      %v537 = vpack.c.b16 %v525, %v524
      %v538 = vpack.c.b16 %v527, %v526
      %v539 = vpack.c.b16 %v529, %v528
      %v540 = vpack.c.b16 %v531, %v530
      %v541 = vpack.c.b16 %v533, %v532
      %550 = vmatprep.subr.bf16.mxu0 0
      %551 = vmatpush1.bf16.msra.mxu0 %v541
      %552 = vmatprep.subr.bf16.mxu0 0
      %553 = vmatpush1.bf16.msra.mxu0 %v540
      %554 = vmatprep.subr.bf16.mxu0 0
      %555 = vmatpush1.bf16.msra.mxu0 %v539
      %556 = vmatprep.subr.bf16.mxu0 0
      %557 = vmatpush1.bf16.msra.mxu0 %v538
      %558 = vmatprep.subr.bf16.mxu0 0
      %559 = vmatpush1.bf16.msra.mxu0 %v537
      %560 = vmatprep.subr.bf16.mxu0 0
      %561 = vmatpush1.bf16.msra.mxu0 %v536
      %562 = vmatprep.subr.bf16.mxu0 0
      %563 = vmatpush1.bf16.msra.mxu0 %v535
      %564 = vmatprep.subr.bf16.mxu0 0
      %565 = vmatpush1.bf16.msra.mxu0 %v534
      %566 = vmatprep.subr.bf16.mxu0 0
      %567 = vmatpush2.bf16.msra.mxu0 0
      %568 = vmatprep.subr.bf16.mxu0 0
      %569 = vmatpush2.bf16.msra.mxu0 0
      %570 = vmatprep.subr.bf16.mxu0 0
      %571 = vmatpush2.bf16.msra.mxu0 0
      %572 = vmatprep.subr.bf16.mxu0 0
      %573 = vmatpush2.bf16.msra.mxu0 0
      %574 = vmatprep.subr.bf16.mxu0 0
      %575 = vmatpush2.bf16.msra.mxu0 0
      %576 = vmatprep.subr.bf16.mxu0 0
      %577 = vmatpush2.bf16.msra.mxu0 0
      %578 = vmatprep.subr.bf16.mxu0 0
      %579 = vmatpush2.bf16.msra.mxu0 0
      %580 = vmatprep.subr.bf16.mxu0 0
      %581 = vmatpush2.bf16.msra.mxu0 0
      %582 = vmatprep.mubr.bf16.mxu0 0
      %583 = vmatmul.mubr.bf16.gmra.mxu0 %v500
      %v584 = vpop.f32.mrf.mxu0
      %v585 = vadd.f32 0.0, %v584
      %v586 = vpop.f32.mrf.mxu0
      %v587 = vpop.f32.mrf.mxu0
      %v588 = vpop.f32.mrf.mxu0
      %589 = vdwg.mxu0
      %v590 = vadd.f32 %v476, %v585
      %v591 = vld [vmem:[%s137 + $0x4] sm:$0x7]
      %v592 = vld [vmem:[%s1 + $0x100] sm:$0xf]
      %v593 = vld [vmem:[%s1 + $0x104] sm:$0xf]
      %v594 = vld [vmem:[%s1 + $0x108] sm:$0xf]
      %v595 = vld [vmem:[%s1 + $0x10c] sm:$0xf]
      %v596 = vld [vmem:[%s1 + $0x110] sm:$0xf]
      %v597 = vld [vmem:[%s1 + $0x114] sm:$0xf]
      %v598 = vld [vmem:[%s1 + $0x118] sm:$0xf]
      %v599 = vld [vmem:[%s1 + $0x11c] sm:$0xf]
      %v600 = vld [vmem:[%s1 + $0x120] sm:$0xf]
      %v601 = vld [vmem:[%s1 + $0x124] sm:$0xf]
      %v602 = vld [vmem:[%s1 + $0x128] sm:$0xf]
      %v603 = vld [vmem:[%s1 + $0x12c] sm:$0xf]
      %v604 = vld [vmem:[%s1 + $0x130] sm:$0xf]
      %v605 = vld [vmem:[%s1 + $0x134] sm:$0xf]
      %v606 = vld [vmem:[%s1 + $0x138] sm:$0xf]
      %v607 = vld [vmem:[%s1 + $0x13c] sm:$0xf]
      %v609 = vunpack.c.l.b16 %v591
      %v610 = vpack.c.b16 %v609, %v497
      %v612 = vshrl.u32 %v610, 16
      %v614 = vrot.slane %v612, 2
      %v615 = vshll.u32 %v610, 16
      %v617 = vrot.slane %v615, 3
      %v618 = vor.u32 %v614, %v617
      %v636 = vunpack.c.l.b16 %v592
      %v637 = vunpack.c.l.b16 %v593
      %v638 = vunpack.c.l.b16 %v594
      %v639 = vunpack.c.l.b16 %v595
      %v640 = vunpack.c.l.b16 %v596
      %v641 = vunpack.c.l.b16 %v597
      %v642 = vunpack.c.l.b16 %v598
      %v643 = vunpack.c.l.b16 %v599
      %v644 = vunpack.c.l.b16 %v600
      %v645 = vunpack.c.l.b16 %v601
      %v646 = vunpack.c.l.b16 %v602
      %v647 = vunpack.c.l.b16 %v603
      %v648 = vunpack.c.l.b16 %v604
      %v649 = vunpack.c.l.b16 %v605
      %v650 = vunpack.c.l.b16 %v606
      %v651 = vunpack.c.l.b16 %v607
      %v652 = vpack.c.b16 %v637, %v636
      %v653 = vpack.c.b16 %v639, %v638
      %v654 = vpack.c.b16 %v641, %v640
      %v655 = vpack.c.b16 %v643, %v642
      %v656 = vpack.c.b16 %v645, %v644
      %v657 = vpack.c.b16 %v647, %v646
      %v658 = vpack.c.b16 %v649, %v648
      %v659 = vpack.c.b16 %v651, %v650
      %668 = vmatprep.subr.bf16.mxu0 0
      %669 = vmatpush1.bf16.msra.mxu0 %v659
      %670 = vmatprep.subr.bf16.mxu0 0
      %671 = vmatpush1.bf16.msra.mxu0 %v658
      %672 = vmatprep.subr.bf16.mxu0 0
      %673 = vmatpush1.bf16.msra.mxu0 %v657
      %674 = vmatprep.subr.bf16.mxu0 0
      %675 = vmatpush1.bf16.msra.mxu0 %v656
      %676 = vmatprep.subr.bf16.mxu0 0
      %677 = vmatpush1.bf16.msra.mxu0 %v655
      %678 = vmatprep.subr.bf16.mxu0 0
      %679 = vmatpush1.bf16.msra.mxu0 %v654
      %680 = vmatprep.subr.bf16.mxu0 0
      %681 = vmatpush1.bf16.msra.mxu0 %v653
      %682 = vmatprep.subr.bf16.mxu0 0
      %683 = vmatpush1.bf16.msra.mxu0 %v652
      %684 = vmatprep.subr.bf16.mxu0 0
      %685 = vmatpush2.bf16.msra.mxu0 0
      %686 = vmatprep.subr.bf16.mxu0 0
      %687 = vmatpush2.bf16.msra.mxu0 0
      %688 = vmatprep.subr.bf16.mxu0 0
      %689 = vmatpush2.bf16.msra.mxu0 0
      %690 = vmatprep.subr.bf16.mxu0 0
      %691 = vmatpush2.bf16.msra.mxu0 0
      %692 = vmatprep.subr.bf16.mxu0 0
      %693 = vmatpush2.bf16.msra.mxu0 0
      %694 = vmatprep.subr.bf16.mxu0 0
      %695 = vmatpush2.bf16.msra.mxu0 0
      %696 = vmatprep.subr.bf16.mxu0 0
      %697 = vmatpush2.bf16.msra.mxu0 0
      %698 = vmatprep.subr.bf16.mxu0 0
      %699 = vmatpush2.bf16.msra.mxu0 0
      %700 = vmatprep.mubr.bf16.mxu0 0
      %701 = vmatmul.mubr.bf16.gmra.mxu0 %v618
      %v702 = vpop.f32.mrf.mxu0
      %v703 = vadd.f32 0.0, %v702
      %v704 = vpop.f32.mrf.mxu0
      %v705 = vpop.f32.mrf.mxu0
      %v706 = vpop.f32.mrf.mxu0
      %707 = vdwg.mxu0
      %v708 = vadd.f32 %v590, %v703
      %v709 = vld [vmem:[%s137] sm:$0x8]
      %v710 = vld [vmem:[%s1 + $0x140] sm:$0xf]
      %v711 = vld [vmem:[%s1 + $0x144] sm:$0xf]
      %v712 = vld [vmem:[%s1 + $0x148] sm:$0xf]
      %v713 = vld [vmem:[%s1 + $0x14c] sm:$0xf]
      %v714 = vld [vmem:[%s1 + $0x150] sm:$0xf]
      %v715 = vld [vmem:[%s1 + $0x154] sm:$0xf]
      %v716 = vld [vmem:[%s1 + $0x158] sm:$0xf]
      %v717 = vld [vmem:[%s1 + $0x15c] sm:$0xf]
      %v718 = vld [vmem:[%s1 + $0x160] sm:$0xf]
      %v719 = vld [vmem:[%s1 + $0x164] sm:$0xf]
      %v720 = vld [vmem:[%s1 + $0x168] sm:$0xf]
      %v721 = vld [vmem:[%s1 + $0x16c] sm:$0xf]
      %v722 = vld [vmem:[%s1 + $0x170] sm:$0xf]
      %v723 = vld [vmem:[%s1 + $0x174] sm:$0xf]
      %v724 = vld [vmem:[%s1 + $0x178] sm:$0xf]
      %v725 = vld [vmem:[%s1 + $0x17c] sm:$0xf]
      %v727 = vunpack.c.l.b16 %v709
      %v728 = vpack.c.b16 %v609, %v727
      %v729 = vrot.slane %v728, 3
      %v747 = vunpack.c.l.b16 %v710
      %v748 = vunpack.c.l.b16 %v711
      %v749 = vunpack.c.l.b16 %v712
      %v750 = vunpack.c.l.b16 %v713
      %v751 = vunpack.c.l.b16 %v714
      %v752 = vunpack.c.l.b16 %v715
      %v753 = vunpack.c.l.b16 %v716
      %v754 = vunpack.c.l.b16 %v717
      %v755 = vunpack.c.l.b16 %v718
      %v756 = vunpack.c.l.b16 %v719
      %v757 = vunpack.c.l.b16 %v720
      %v758 = vunpack.c.l.b16 %v721
      %v759 = vunpack.c.l.b16 %v722
      %v760 = vunpack.c.l.b16 %v723
      %v761 = vunpack.c.l.b16 %v724
      %v762 = vunpack.c.l.b16 %v725
      %v763 = vpack.c.b16 %v748, %v747
      %v764 = vpack.c.b16 %v750, %v749
      %v765 = vpack.c.b16 %v752, %v751
      %v766 = vpack.c.b16 %v754, %v753
      %v767 = vpack.c.b16 %v756, %v755
      %v768 = vpack.c.b16 %v758, %v757
      %v769 = vpack.c.b16 %v760, %v759
      %v770 = vpack.c.b16 %v762, %v761
      %779 = vmatprep.subr.bf16.mxu0 0
      %780 = vmatpush1.bf16.msra.mxu0 %v770
      %781 = vmatprep.subr.bf16.mxu0 0
      %782 = vmatpush1.bf16.msra.mxu0 %v769
      %783 = vmatprep.subr.bf16.mxu0 0
      %784 = vmatpush1.bf16.msra.mxu0 %v768
      %785 = vmatprep.subr.bf16.mxu0 0
      %786 = vmatpush1.bf16.msra.mxu0 %v767
      %787 = vmatprep.subr.bf16.mxu0 0
      %788 = vmatpush1.bf16.msra.mxu0 %v766
      %789 = vmatprep.subr.bf16.mxu0 0
      %790 = vmatpush1.bf16.msra.mxu0 %v765
      %791 = vmatprep.subr.bf16.mxu0 0
      %792 = vmatpush1.bf16.msra.mxu0 %v764
      %793 = vmatprep.subr.bf16.mxu0 0
      %794 = vmatpush1.bf16.msra.mxu0 %v763
      %795 = vmatprep.subr.bf16.mxu0 0
      %796 = vmatpush2.bf16.msra.mxu0 0
      %797 = vmatprep.subr.bf16.mxu0 0
      %798 = vmatpush2.bf16.msra.mxu0 0
      %799 = vmatprep.subr.bf16.mxu0 0
      %800 = vmatpush2.bf16.msra.mxu0 0
      %801 = vmatprep.subr.bf16.mxu0 0
      %802 = vmatpush2.bf16.msra.mxu0 0
      %803 = vmatprep.subr.bf16.mxu0 0
      %804 = vmatpush2.bf16.msra.mxu0 0
      %805 = vmatprep.subr.bf16.mxu0 0
      %806 = vmatpush2.bf16.msra.mxu0 0
      %807 = vmatprep.subr.bf16.mxu0 0
      %808 = vmatpush2.bf16.msra.mxu0 0
      %809 = vmatprep.subr.bf16.mxu0 0
      %810 = vmatpush2.bf16.msra.mxu0 0
      %811 = vmatprep.mubr.bf16.mxu0 0
      %812 = vmatmul.mubr.bf16.gmra.mxu0 %v729
      %v813 = vpop.f32.mrf.mxu0
      %v814 = vadd.f32 0.0, %v813
      %v815 = vpop.f32.mrf.mxu0
      %v816 = vpop.f32.mrf.mxu0
      %v817 = vpop.f32.mrf.mxu0
      %818 = vdwg.mxu0
      %v819 = vadd.f32 %v708, %v814
      %v820 = vld [vmem:[%s137 + $0x4] sm:$0xf]
      %v821 = vld [vmem:[%s1 + $0x180] sm:$0xf]
      %v822 = vld [vmem:[%s1 + $0x184] sm:$0xf]
      %v823 = vld [vmem:[%s1 + $0x188] sm:$0xf]
      %v824 = vld [vmem:[%s1 + $0x18c] sm:$0xf]
      %v825 = vld [vmem:[%s1 + $0x190] sm:$0xf]
      %v826 = vld [vmem:[%s1 + $0x194] sm:$0xf]
      %v827 = vld [vmem:[%s1 + $0x198] sm:$0xf]
      %v828 = vld [vmem:[%s1 + $0x19c] sm:$0xf]
      %v829 = vld [vmem:[%s1 + $0x1a0] sm:$0xf]
      %v830 = vld [vmem:[%s1 + $0x1a4] sm:$0xf]
      %v831 = vld [vmem:[%s1 + $0x1a8] sm:$0xf]
      %v832 = vld [vmem:[%s1 + $0x1ac] sm:$0xf]
      %v833 = vld [vmem:[%s1 + $0x1b0] sm:$0xf]
      %v834 = vld [vmem:[%s1 + $0x1b4] sm:$0xf]
      %v835 = vld [vmem:[%s1 + $0x1b8] sm:$0xf]
      %v836 = vld [vmem:[%s1 + $0x1bc] sm:$0xf]
      %v853 = vunpack.c.l.b16 %v821
      %v854 = vunpack.c.l.b16 %v822
      %v855 = vunpack.c.l.b16 %v823
      %v856 = vunpack.c.l.b16 %v824
      %v857 = vunpack.c.l.b16 %v825
      %v858 = vunpack.c.l.b16 %v826
      %v859 = vunpack.c.l.b16 %v827
      %v860 = vunpack.c.l.b16 %v828
      %v861 = vunpack.c.l.b16 %v829
      %v862 = vunpack.c.l.b16 %v830
      %v863 = vunpack.c.l.b16 %v831
      %v864 = vunpack.c.l.b16 %v832
      %v865 = vunpack.c.l.b16 %v833
      %v866 = vunpack.c.l.b16 %v834
      %v867 = vunpack.c.l.b16 %v835
      %v868 = vunpack.c.l.b16 %v836
      %v869 = vpack.c.b16 %v854, %v853
      %v870 = vpack.c.b16 %v856, %v855
      %v871 = vpack.c.b16 %v858, %v857
      %v872 = vpack.c.b16 %v860, %v859
      %v873 = vpack.c.b16 %v862, %v861
      %v874 = vpack.c.b16 %v864, %v863
      %v875 = vpack.c.b16 %v866, %v865
      %v876 = vpack.c.b16 %v868, %v867
      %885 = vmatprep.subr.bf16.mxu0 0
      %886 = vmatpush1.bf16.msra.mxu0 %v876
      %887 = vmatprep.subr.bf16.mxu0 0
      %888 = vmatpush1.bf16.msra.mxu0 %v875
      %889 = vmatprep.subr.bf16.mxu0 0
      %890 = vmatpush1.bf16.msra.mxu0 %v874
      %891 = vmatprep.subr.bf16.mxu0 0
      %892 = vmatpush1.bf16.msra.mxu0 %v873
      %893 = vmatprep.subr.bf16.mxu0 0
      %894 = vmatpush1.bf16.msra.mxu0 %v872
      %895 = vmatprep.subr.bf16.mxu0 0
      %896 = vmatpush1.bf16.msra.mxu0 %v871
      %897 = vmatprep.subr.bf16.mxu0 0
      %898 = vmatpush1.bf16.msra.mxu0 %v870
      %899 = vmatprep.subr.bf16.mxu0 0
      %900 = vmatpush1.bf16.msra.mxu0 %v869
      %901 = vmatprep.subr.bf16.mxu0 0
      %902 = vmatpush2.bf16.msra.mxu0 0
      %903 = vmatprep.subr.bf16.mxu0 0
      %904 = vmatpush2.bf16.msra.mxu0 0
      %905 = vmatprep.subr.bf16.mxu0 0
      %906 = vmatpush2.bf16.msra.mxu0 0
      %907 = vmatprep.subr.bf16.mxu0 0
      %908 = vmatpush2.bf16.msra.mxu0 0
      %909 = vmatprep.subr.bf16.mxu0 0
      %910 = vmatpush2.bf16.msra.mxu0 0
      %911 = vmatprep.subr.bf16.mxu0 0
      %912 = vmatpush2.bf16.msra.mxu0 0
      %913 = vmatprep.subr.bf16.mxu0 0
      %914 = vmatpush2.bf16.msra.mxu0 0
      %915 = vmatprep.subr.bf16.mxu0 0
      %916 = vmatpush2.bf16.msra.mxu0 0
      %917 = vmatprep.mubr.bf16.mxu0 0
      %918 = vmatmul.mubr.bf16.gmra.mxu0 %v820
      %v919 = vpop.f32.mrf.mxu0
      %v920 = vadd.f32 0.0, %v919
      %v921 = vpop.f32.mrf.mxu0
      %v922 = vpop.f32.mrf.mxu0
      %v923 = vpop.f32.mrf.mxu0
      %924 = vdwg.mxu0
      %v925 = vadd.f32 %v819, %v920
      %v926 = vld [vmem:[%s137 + $0x4] sm:$0xf]
      %v927 = vld [vmem:[%s137 + $0x8] sm:$0x1]
      %v928 = vld [vmem:[%s1 + $0x1c0] sm:$0xf]
      %v929 = vld [vmem:[%s1 + $0x1c4] sm:$0xf]
      %v930 = vld [vmem:[%s1 + $0x1c8] sm:$0xf]
      %v931 = vld [vmem:[%s1 + $0x1cc] sm:$0xf]
      %v932 = vld [vmem:[%s1 + $0x1d0] sm:$0xf]
      %v933 = vld [vmem:[%s1 + $0x1d4] sm:$0xf]
      %v934 = vld [vmem:[%s1 + $0x1d8] sm:$0xf]
      %v935 = vld [vmem:[%s1 + $0x1dc] sm:$0xf]
      %v936 = vld [vmem:[%s1 + $0x1e0] sm:$0xf]
      %v937 = vld [vmem:[%s1 + $0x1e4] sm:$0xf]
      %v938 = vld [vmem:[%s1 + $0x1e8] sm:$0xf]
      %v939 = vld [vmem:[%s1 + $0x1ec] sm:$0xf]
      %v940 = vld [vmem:[%s1 + $0x1f0] sm:$0xf]
      %v941 = vld [vmem:[%s1 + $0x1f4] sm:$0xf]
      %v942 = vld [vmem:[%s1 + $0x1f8] sm:$0xf]
      %v943 = vld [vmem:[%s1 + $0x1fc] sm:$0xf]
      %v946 = vunpack.c.l.b16 %v926
      %v947 = vunpack.c.l.b16 %v927
      %v948 = vpack.c.b16 %v947, %v946
      %v950 = vshrl.u32 %v948, 16
      %v952 = vshll.u32 %v948, 16
      %v954 = vrot.slane %v952, 1
      %v955 = vor.u32 %v950, %v954
      %v973 = vunpack.c.l.b16 %v928
      %v974 = vunpack.c.l.b16 %v929
      %v975 = vunpack.c.l.b16 %v930
      %v976 = vunpack.c.l.b16 %v931
      %v977 = vunpack.c.l.b16 %v932
      %v978 = vunpack.c.l.b16 %v933
      %v979 = vunpack.c.l.b16 %v934
      %v980 = vunpack.c.l.b16 %v935
      %v981 = vunpack.c.l.b16 %v936
      %v982 = vunpack.c.l.b16 %v937
      %v983 = vunpack.c.l.b16 %v938
      %v984 = vunpack.c.l.b16 %v939
      %v985 = vunpack.c.l.b16 %v940
      %v986 = vunpack.c.l.b16 %v941
      %v987 = vunpack.c.l.b16 %v942
      %v988 = vunpack.c.l.b16 %v943
      %v989 = vpack.c.b16 %v974, %v973
      %v990 = vpack.c.b16 %v976, %v975
      %v991 = vpack.c.b16 %v978, %v977
      %v992 = vpack.c.b16 %v980, %v979
      %v993 = vpack.c.b16 %v982, %v981
      %v994 = vpack.c.b16 %v984, %v983
      %v995 = vpack.c.b16 %v986, %v985
      %v996 = vpack.c.b16 %v988, %v987
      %1005 = vmatprep.subr.bf16.mxu0 0
      %1006 = vmatpush1.bf16.msra.mxu0 %v996
      %1007 = vmatprep.subr.bf16.mxu0 0
      %1008 = vmatpush1.bf16.msra.mxu0 %v995
      %1009 = vmatprep.subr.bf16.mxu0 0
      %1010 = vmatpush1.bf16.msra.mxu0 %v994
      %1011 = vmatprep.subr.bf16.mxu0 0
      %1012 = vmatpush1.bf16.msra.mxu0 %v993
      %1013 = vmatprep.subr.bf16.mxu0 0
      %1014 = vmatpush1.bf16.msra.mxu0 %v992
      %1015 = vmatprep.subr.bf16.mxu0 0
      %1016 = vmatpush1.bf16.msra.mxu0 %v991
      %1017 = vmatprep.subr.bf16.mxu0 0
      %1018 = vmatpush1.bf16.msra.mxu0 %v990
      %1019 = vmatprep.subr.bf16.mxu0 0
      %1020 = vmatpush1.bf16.msra.mxu0 %v989
      %1021 = vmatprep.subr.bf16.mxu0 0
      %1022 = vmatpush2.bf16.msra.mxu0 0
      %1023 = vmatprep.subr.bf16.mxu0 0
      %1024 = vmatpush2.bf16.msra.mxu0 0
      %1025 = vmatprep.subr.bf16.mxu0 0
      %1026 = vmatpush2.bf16.msra.mxu0 0
      %1027 = vmatprep.subr.bf16.mxu0 0
      %1028 = vmatpush2.bf16.msra.mxu0 0
      %1029 = vmatprep.subr.bf16.mxu0 0
      %1030 = vmatpush2.bf16.msra.mxu0 0
      %1031 = vmatprep.subr.bf16.mxu0 0
      %1032 = vmatpush2.bf16.msra.mxu0 0
      %1033 = vmatprep.subr.bf16.mxu0 0
      %1034 = vmatpush2.bf16.msra.mxu0 0
      %1035 = vmatprep.subr.bf16.mxu0 0
      %1036 = vmatpush2.bf16.msra.mxu0 0
      %1037 = vmatprep.mubr.bf16.mxu0 0
      %1038 = vmatmul.mubr.bf16.gmra.mxu0 %v955
      %v1039 = vpop.f32.mrf.mxu0
      %v1040 = vadd.f32 0.0, %v1039
      %v1041 = vpop.f32.mrf.mxu0
      %v1042 = vpop.f32.mrf.mxu0
      %v1043 = vpop.f32.mrf.mxu0
      %1044 = vdwg.mxu0
      %v1045 = vadd.f32 %v925, %v1040
      %v1046 = vld [vmem:[%s137 + $0x4] sm:$0xe]
      %v1047 = vld [vmem:[%s1 + $0x200] sm:$0xf]
      %v1048 = vld [vmem:[%s1 + $0x204] sm:$0xf]
      %v1049 = vld [vmem:[%s1 + $0x208] sm:$0xf]
      %v1050 = vld [vmem:[%s1 + $0x20c] sm:$0xf]
      %v1051 = vld [vmem:[%s1 + $0x210] sm:$0xf]
      %v1052 = vld [vmem:[%s1 + $0x214] sm:$0xf]
      %v1053 = vld [vmem:[%s1 + $0x218] sm:$0xf]
      %v1054 = vld [vmem:[%s1 + $0x21c] sm:$0xf]
      %v1055 = vld [vmem:[%s1 + $0x220] sm:$0xf]
      %v1056 = vld [vmem:[%s1 + $0x224] sm:$0xf]
      %v1057 = vld [vmem:[%s1 + $0x228] sm:$0xf]
      %v1058 = vld [vmem:[%s1 + $0x22c] sm:$0xf]
      %v1059 = vld [vmem:[%s1 + $0x230] sm:$0xf]
      %v1060 = vld [vmem:[%s1 + $0x234] sm:$0xf]
      %v1061 = vld [vmem:[%s1 + $0x238] sm:$0xf]
      %v1062 = vld [vmem:[%s1 + $0x23c] sm:$0xf]
      %v1064 = vunpack.c.l.b16 %v1046
      %v1065 = vpack.c.b16 %v947, %v1064
      %v1066 = vrot.slane %v1065, 1
      %v1084 = vunpack.c.l.b16 %v1047
      %v1085 = vunpack.c.l.b16 %v1048
      %v1086 = vunpack.c.l.b16 %v1049
      %v1087 = vunpack.c.l.b16 %v1050
      %v1088 = vunpack.c.l.b16 %v1051
      %v1089 = vunpack.c.l.b16 %v1052
      %v1090 = vunpack.c.l.b16 %v1053
      %v1091 = vunpack.c.l.b16 %v1054
      %v1092 = vunpack.c.l.b16 %v1055
      %v1093 = vunpack.c.l.b16 %v1056
      %v1094 = vunpack.c.l.b16 %v1057
      %v1095 = vunpack.c.l.b16 %v1058
      %v1096 = vunpack.c.l.b16 %v1059
      %v1097 = vunpack.c.l.b16 %v1060
      %v1098 = vunpack.c.l.b16 %v1061
      %v1099 = vunpack.c.l.b16 %v1062
      %v1100 = vpack.c.b16 %v1085, %v1084
      %v1101 = vpack.c.b16 %v1087, %v1086
      %v1102 = vpack.c.b16 %v1089, %v1088
      %v1103 = vpack.c.b16 %v1091, %v1090
      %v1104 = vpack.c.b16 %v1093, %v1092
      %v1105 = vpack.c.b16 %v1095, %v1094
      %v1106 = vpack.c.b16 %v1097, %v1096
      %v1107 = vpack.c.b16 %v1099, %v1098
      %1116 = vmatprep.subr.bf16.mxu0 0
      %1117 = vmatpush1.bf16.msra.mxu0 %v1107
      %1118 = vmatprep.subr.bf16.mxu0 0
      %1119 = vmatpush1.bf16.msra.mxu0 %v1106
      %1120 = vmatprep.subr.bf16.mxu0 0
      %1121 = vmatpush1.bf16.msra.mxu0 %v1105
      %1122 = vmatprep.subr.bf16.mxu0 0
      %1123 = vmatpush1.bf16.msra.mxu0 %v1104
      %1124 = vmatprep.subr.bf16.mxu0 0
      %1125 = vmatpush1.bf16.msra.mxu0 %v1103
      %1126 = vmatprep.subr.bf16.mxu0 0
      %1127 = vmatpush1.bf16.msra.mxu0 %v1102
      %1128 = vmatprep.subr.bf16.mxu0 0
      %1129 = vmatpush1.bf16.msra.mxu0 %v1101
      %1130 = vmatprep.subr.bf16.mxu0 0
      %1131 = vmatpush1.bf16.msra.mxu0 %v1100
      %1132 = vmatprep.subr.bf16.mxu0 0
      %1133 = vmatpush2.bf16.msra.mxu0 0
      %1134 = vmatprep.subr.bf16.mxu0 0
      %1135 = vmatpush2.bf16.msra.mxu0 0
      %1136 = vmatprep.subr.bf16.mxu0 0
      %1137 = vmatpush2.bf16.msra.mxu0 0
      %1138 = vmatprep.subr.bf16.mxu0 0
      %1139 = vmatpush2.bf16.msra.mxu0 0
      %1140 = vmatprep.subr.bf16.mxu0 0
      %1141 = vmatpush2.bf16.msra.mxu0 0
      %1142 = vmatprep.subr.bf16.mxu0 0
      %1143 = vmatpush2.bf16.msra.mxu0 0
      %1144 = vmatprep.subr.bf16.mxu0 0
      %1145 = vmatpush2.bf16.msra.mxu0 0
      %1146 = vmatprep.subr.bf16.mxu0 0
      %1147 = vmatpush2.bf16.msra.mxu0 0
      %1148 = vmatprep.mubr.bf16.mxu0 0
      %1149 = vmatmul.mubr.bf16.gmra.mxu0 %v1066
      %v1150 = vpop.f32.mrf.mxu0
      %v1151 = vadd.f32 0.0, %v1150
      %v1152 = vpop.f32.mrf.mxu0
      %v1153 = vpop.f32.mrf.mxu0
      %v1154 = vpop.f32.mrf.mxu0
      %1155 = vdwg.mxu0
      %v1156 = vadd.f32 %v1045, %v1151
      %v1157 = vpack.c.bf16 %v1156, %v1156
      %vm1158 = vcmask 60416
      %1159 = vst.msk [vmem:[%s141] sm:$0xf] %vm1158, %v1157
      %p1160 = scmp.lt.s32.totalorder %s13, 1
      %s1161 = scalar_select %p1160, %s13, 1
      %s1162 = smul.addr %s1161, 4
      %s1163 = scalar_lea.vmem %s2, %s1162
      // Predicated region
      $region29: #{densenet_forward.40} parent=27 // pred_check
        %p1164 = pneg %p78
      $region30: #{densenet_forward.40} parent=27 // pred_check_branch
        %1166 = sbr.rel (%p1164) target = $region32
      $region31: #{densenet_forward.40} parent=27 // pred_region
        _
      $region32: #{densenet_forward.40} parent=27 // pred_fallthru
        _
    $region28: #{densenet_forward.40} parent=5 // pred_fallthru
      _
    %p1167 = scmp.le.s32.totalorder 2, %s8
    // Predicated region
    $region33: #{densenet_forward.40} parent=5 // pred_check
      %p1168 = pneg %p1167
    $region34: #{densenet_forward.40} parent=5 // pred_check_branch
      %1170 = sbr.rel (%p1168) target = $region36
    $region35: #{densenet_forward.40} parent=5 // pred_region
      %s1171 = ssub.s32 %s8, 2
      // Predicated region
      $region37: #{densenet_forward.40} parent=35 // pred_check
        %p1172 = pneg %p84
      $region38: #{densenet_forward.40} parent=35 // pred_check_branch
        %1174 = sbr.rel (%p1172) target = $region40
      $region39: #{densenet_forward.40} parent=35 // pred_region
        %p1175 = scmp.lt.s32.totalorder %s14, 1
        %s1176 = scalar_select %p1175, %s14, 1
        %s1177 = smul.addr %s1176, 4
        %s1178 = scalar_lea.vmem %s2, %s1177
      $region40: #{densenet_forward.40} parent=35 // pred_fallthru
        _
    $region36: #{densenet_forward.40} parent=5 // pred_fallthru
      _
  $region6: #{densenet_forward.40} parent=0 // loop_footer
    %s12 = sadd.s32 1, %s8
  $region7: #{densenet_forward.40} parent=0 // loop_footer_branch
    %7 = sbr.rel target = $region3
  $region8: #{densenet_forward.40} parent=0 // loop_exit
    _

// kernel: densenet_forward.49
$region0: #{densenet_forward.49}
  #allocation0 [shape = 'u32[]', space=smem, size = 0x4, offset = 0x4, fixed_abs, tag = 'smem constant byte address 0x4 - core index']
  #allocation1 [shape = 'u32[144,128]{1,0:T(1,128)}', space=vmem, size = 0x12000, scoped, tag = 'internal scratch']
  %s0 = inlined_call_operand.vmem [shape: bf16[2,1,32], index: 0, kind: input, shape index: {}]
  %s1 = inlined_call_operand.vmem [shape: f32[1,1,32], index: 1, kind: input, shape index: {}]
  %s2 = inlined_call_operand.vmem [shape: f32[1,1,32], index: 2, kind: input, shape index: {}]
  %s3 = inlined_call_operand.vmem [shape: bf16[32,3], index: 3, kind: input, shape index: {}]
  %s4 = inlined_call_operand.vmem [shape: f32[1,3], index: 4, kind: input, shape index: {}]
  %s5 = inlined_call_operand.hbm [shape: f32[2,3], index: 5, kind: output, shape index: {}]
  %s6 = sld [smem:[#allocation0]]
  $region30: #{densenet_forward.49} parent=0
    _
  %s8 = ssub.s32 1, %s6
  %s9 = scalar_select 0, %s8, %s6
  $region1: #{densenet_forward.49} parent=0
    #allocation2 [shape = 'u8[1024]{0}', space=vmem, size = 0x400, scoped, tag = 'output window, operand 0, single buffered']
    #allocation3 [shape = 's32[1]{0}', space=sflag, size = 0x4, scoped, tag = 'scoped memory for densenet_forward.49']
    %10 = vsyncpa [#allocation3], 0
    // Predicated region
    $region2: #{densenet_forward.49} parent=1 // pred_check
      _
    $region3: #{densenet_forward.49} parent=1 // pred_check_branch
      %12 = sbr.rel (0) target = $region5
    $region4: #{densenet_forward.49} parent=1 // pred_region
      _
    $region5: #{densenet_forward.49} parent=1 // pred_fallthru
      _
    // Predicated region
    $region6: #{densenet_forward.49} parent=1 // pred_check
      _
    $region7: #{densenet_forward.49} parent=1 // pred_check_branch
      %14 = sbr.rel (0) target = $region9
    $region8: #{densenet_forward.49} parent=1 // pred_region
      _
    $region9: #{densenet_forward.49} parent=1 // pred_fallthru
      _
    // Predicated region
    $region10: #{densenet_forward.49} parent=1 // pred_check
      _
    $region11: #{densenet_forward.49} parent=1 // pred_check_branch
      %16 = sbr.rel (0) target = $region13
    $region12: #{densenet_forward.49} parent=1 // pred_region
      _
    $region13: #{densenet_forward.49} parent=1 // pred_fallthru
      _
    // Predicated region
    $region14: #{densenet_forward.49} parent=1 // pred_check
      _
    $region15: #{densenet_forward.49} parent=1 // pred_check_branch
      %18 = sbr.rel (0) target = $region17
    $region16: #{densenet_forward.49} parent=1 // pred_region
      _
    $region17: #{densenet_forward.49} parent=1 // pred_fallthru
      _
    // Predicated region
    $region18: #{densenet_forward.49} parent=1 // pred_check
      _
    $region19: #{densenet_forward.49} parent=1 // pred_check_branch
      %20 = sbr.rel (0) target = $region21
    $region20: #{densenet_forward.49} parent=1 // pred_region
      _
    $region21: #{densenet_forward.49} parent=1 // pred_fallthru
      _
    %v22 = vld [vmem:[%s0] sm:$0x1]
    %v23 = vld [vmem:[%s0 + $0x1] sm:$0x1]
    %v24 = vunpack.c.l.bf16 %v22
    %v25 = vunpack.c.l.bf16 %v23
    %v26 = vld [vmem:[%s1] sm:$0x1]
    %v27 = vmul.f32 %v24, %v26
    %v28 = vmul.f32 %v25, %v26
    %v29 = vld [vmem:[%s2] sm:$0x1]
    %v30 = vadd.f32 %v27, %v29
    %v31 = vadd.f32 %v28, %v29
    %v32 = vmax.f32 %v30, 0.0
    %v33 = vmax.f32 %v31, 0.0
    %v34 = vadd.f32 %v32, 0.0
    %v35 = vadd.f32 %v33, 0.0
    %v36 = vpack.c.bf16 %v34, %v34
    %v37 = vpack.c.bf16 %v35, %v35
    %v38 = vld [vmem:[%s3] sm:$0xf]
    %v39 = vld [vmem:[%s3 + $0x4] sm:$0xf]
    %v40 = vld [vmem:[%s3 + $0x8] sm:$0xf]
    %v41 = vld [vmem:[%s3 + $0xc] sm:$0xf]
    %v42 = vld [vmem:[%s4] sm:$0x1]
    %v44 = vlaneseq
    %v45 = vshrl.u32 %v44, 7
    %v46 = vsub.s32 0, %v45
    %v47 = vrot.slane %v42, %v46
    %v51 = vunpack.c.l.b16 %v36
    %v52 = vunpack.c.l.b16 %v37
    %v53 = vrot.slane %v52, 7
    %vm54 = vcmask 1041409
    %v55 = vsel %vm54, %v53, %v51
    %v56 = vpack.c.b16 %v55, %v55
    %v61 = vunpack.c.l.b16 %v38
    %v62 = vunpack.c.l.b16 %v39
    %v63 = vunpack.c.l.b16 %v40
    %v64 = vunpack.c.l.b16 %v41
    %v65 = vpack.c.b16 %v62, %v61
    %v66 = vpack.c.b16 %v64, %v63
    %vm69 = vcmask 261120
    %v71 = vsel %vm69, %v56, 0
    %73 = vmatprep.subr.bf16.mxu0 0
    %74 = vmatpush1.bf16.msra.mxu0 0
    %75 = vmatprep.subr.bf16.mxu0 0
    %76 = vmatpush1.bf16.msra.mxu0 0
    %77 = vmatprep.subr.bf16.mxu0 0
    %78 = vmatpush1.bf16.msra.mxu0 0
    %79 = vmatprep.subr.bf16.mxu0 0
    %80 = vmatpush1.bf16.msra.mxu0 0
    %81 = vmatprep.subr.bf16.mxu0 0
    %82 = vmatpush1.bf16.msra.mxu0 0
    %83 = vmatprep.subr.bf16.mxu0 0
    %84 = vmatpush1.bf16.msra.mxu0 0
    %85 = vmatprep.subr.bf16.mxu0 0
    %86 = vmatpush1.bf16.msra.mxu0 %v66
    %87 = vmatprep.subr.bf16.mxu0 0
    %88 = vmatpush1.bf16.msra.mxu0 %v65
    %89 = vmatprep.subr.bf16.mxu0 0
    %90 = vmatpush2.bf16.msra.mxu0 0
    %91 = vmatprep.subr.bf16.mxu0 0
    %92 = vmatpush2.bf16.msra.mxu0 0
    %93 = vmatprep.subr.bf16.mxu0 0
    %94 = vmatpush2.bf16.msra.mxu0 0
    %95 = vmatprep.subr.bf16.mxu0 0
    %96 = vmatpush2.bf16.msra.mxu0 0
    %97 = vmatprep.subr.bf16.mxu0 0
    %98 = vmatpush2.bf16.msra.mxu0 0
    %99 = vmatprep.subr.bf16.mxu0 0
    %100 = vmatpush2.bf16.msra.mxu0 0
    %101 = vmatprep.subr.bf16.mxu0 0
    %102 = vmatpush2.bf16.msra.mxu0 0
    %103 = vmatprep.subr.bf16.mxu0 0
    %104 = vmatpush2.bf16.msra.mxu0 0
    %105 = vmatprep.mubr.bf16.mxu0 0
    %106 = vmatmul.mubr.bf16.gmra.mxu0 %v71
    %v107 = vpop.f32.mrf.mxu0
    %v108 = vadd.f32 %v47, %v107
    %v109 = vpop.f32.mrf.mxu0
    %v110 = vpop.f32.mrf.mxu0
    %v111 = vpop.f32.mrf.mxu0
    %112 = vdwg.mxu0
    %vm113 = vcmask 17408
    %114 = vst.msk [vmem:[#allocation2] sm:$0x3] %vm113, %v108
    // Predicated region
    $region22: #{densenet_forward.49} parent=1 // pred_check
      _
    $region23: #{densenet_forward.49} parent=1 // pred_check_branch
      %116 = sbr.rel (0) target = $region25
    $region24: #{densenet_forward.49} parent=1 // pred_region
      %s118 = ssub.s32 32, 32
      %119 = vsyncadd [#allocation3], %s118
      %s121 = sshll.u32 [#allocation2], 4
      %s122 = int_to_ptr.vmem [resolvable:$true] %s121
      %124 = dma.vmem_to_hbm [thread:$0]  %s122, 32, %s5, [#allocation3]
    $region25: #{densenet_forward.49} parent=1 // pred_fallthru
      _
    // Predicated region
    $region26: #{densenet_forward.49} parent=1 // pred_check
      _
    $region27: #{densenet_forward.49} parent=1 // pred_check_branch
      %126 = sbr.rel (0) target = $region29
    $region28: #{densenet_forward.49} parent=1 // pred_region
      %127 = dma.done [#allocation3], 32
    $region29: #{densenet_forward.49} parent=1 // pred_fallthru
      _
    %128 = vsyncpa [#allocation3], 1

// kernel: densenet_forward.46
$region0: #{densenet_forward.46}
  #allocation0 [shape = 'u32[]', space=smem, size = 0x4, offset = 0x4, fixed_abs, tag = 'smem constant byte address 0x4 - core index']
  #allocation1 [shape = 'u32[144,128]{1,0:T(1,128)}', space=vmem, size = 0x12000, scoped, tag = 'internal scratch']
  %s0 = inlined_call_operand.vmem [shape: bf16[2,12,128], index: 0, kind: input, shape index: {}]
  %s1 = inlined_call_operand.vmem [shape: bf16[1152,8], index: 1, kind: input, shape index: {}]
  %s2 = inlined_call_operand.vmem [shape: bf16[2,3,8], index: 2, kind: output, shape index: {}]
  %s3 = sld [smem:[#allocation0]]
  $region41: #{densenet_forward.46} parent=0
    _
  %s5 = ssub.s32 1, %s3
  %s6 = scalar_select 0, %s5, %s3
  loop: start=0, step=1, limit=4
  $region2: #{densenet_forward.46} parent=0 // loop_pre_header
    _
  $region3: #{densenet_forward.46} parent=0 // loop_header
    %s8 = sphi 0, %s12
    %p9 = scmp.ge.s32.totalorder %s8, 4
    %s18 = sphi 0, %s20
    %s21 = sphi 0, %s18
    %s22 = sphi 0, %s21
    %s38 = sphi 0, %s22
    %s42 = sphi 0, %s42
    %s44 = sphi 0, %s42
    %s45 = sphi 0, %s44
    %s59 = sphi 0, %s45
    %s65 = sphi 0, %s67
    %s68 = sphi 0, %s65
    %s69 = sphi 0, %s68
    %s85 = sphi 0, %s69
  $region4: #{densenet_forward.46} parent=0 // loop_header_branch
    %11 = sbr.rel (%p9) target = $region8
  $region5: #{densenet_forward.46} parent=0 // loop_body
    %s13 = ssub.s32 %s8, 1
    %s14 = ssub.s32 %s8, 2
    %s15 = sadd.s32 %s8, 1
    %s16 = ssub.s32 %s8, %s15
    %p17 = scmp.eq.s32.totalorder %s16, 0
    %s19 = sadd.s32 %s18, 1
    %s20 = scalar_select %p17, %s18, %s19
    %p23 = pneg %p17
    %p24 = scmp.eq.s32.totalorder %s8, 1
    %p25 = por %p23, %p24
    %p26 = scmp.ne.s32.totalorder %s18, %s21
    %p27 = scmp.eq.s32.totalorder %s8, 0
    %p28 = por %p26, %p27
    %p29 = scmp.ne.s32.totalorder %s18, %s21
    %p30 = scmp.eq.s32.totalorder %s13, 1
    %p31 = por %p29, %p30
    %p32 = scmp.ne.s32.totalorder %s21, %s22
    %p33 = scmp.eq.s32.totalorder %s13, 0
    %p34 = por %p32, %p33
    %p35 = scmp.ne.s32.totalorder %s21, %s22
    %p36 = scmp.eq.s32.totalorder %s14, 1
    %p37 = por %p35, %p36
    %p39 = scmp.ne.s32.totalorder %s22, %s38
    %p40 = scmp.eq.s32.totalorder %s14, 0
    %p41 = por %p39, %p40
    %s43 = sadd.s32 %s42, 1
    %p46 = scmp.eq.s32.totalorder %s8, 1
    %p47 = scmp.ne.s32.totalorder %s42, %s44
    %p48 = scmp.eq.s32.totalorder %s8, 0
    %p49 = por %p47, %p48
    %p50 = scmp.ne.s32.totalorder %s42, %s44
    %p51 = scmp.eq.s32.totalorder %s13, 1
    %p52 = por %p50, %p51
    %p53 = scmp.ne.s32.totalorder %s44, %s45
    %p54 = scmp.eq.s32.totalorder %s13, 0
    %p55 = por %p53, %p54
    %p56 = scmp.ne.s32.totalorder %s44, %s45
    %p57 = scmp.eq.s32.totalorder %s14, 1
    %p58 = por %p56, %p57
    %p60 = scmp.ne.s32.totalorder %s45, %s59
    %p61 = scmp.eq.s32.totalorder %s14, 0
    %p62 = por %p60, %p61
    %s63 = ssub.s32 %s8, %s15
    %p64 = scmp.eq.s32.totalorder %s63, 0
    %s66 = sadd.s32 %s65, 1
    %s67 = scalar_select %p64, %s65, %s66
    %p70 = pneg %p64
    %p71 = scmp.eq.s32.totalorder %s8, 1
    %p72 = por %p70, %p71
    %p73 = scmp.ne.s32.totalorder %s65, %s68
    %p74 = scmp.eq.s32.totalorder %s8, 0
    %p75 = por %p73, %p74
    %p76 = scmp.ne.s32.totalorder %s65, %s68
    %p77 = scmp.eq.s32.totalorder %s13, 1
    %p78 = por %p76, %p77
    %p79 = scmp.ne.s32.totalorder %s68, %s69
    %p80 = scmp.eq.s32.totalorder %s13, 0
    %p81 = por %p79, %p80
    %p82 = scmp.ne.s32.totalorder %s68, %s69
    %p83 = scmp.eq.s32.totalorder %s14, 1
    %p84 = por %p82, %p83
    %p86 = scmp.ne.s32.totalorder %s69, %s85
    %p87 = scmp.eq.s32.totalorder %s14, 0
    %p88 = por %p86, %p87
    %p89 = scmp.le.s32.totalorder 1, %s8
    %p90 = scmp.lt.s32.totalorder %s8, 3
    %p91 = pnand %p89, %p90
    %p92 = pneg %p91
    // Predicated region
    $region9: #{densenet_forward.46} parent=5 // pred_check
      _
    $region10: #{densenet_forward.46} parent=5 // pred_check_branch
      %94 = sbr.rel (%p91) target = $region12
    $region11: #{densenet_forward.46} parent=5 // pred_region
      %s95 = ssub.s32 %s8, 1
      // Predicated region
      $region13: #{densenet_forward.46} parent=11 // pred_check
        %p96 = pneg %p55
      $region14: #{densenet_forward.46} parent=11 // pred_check_branch
        %98 = sbr.rel (%p96) target = $region16
      $region15: #{densenet_forward.46} parent=11 // pred_region
        _
      $region16: #{densenet_forward.46} parent=11 // pred_fallthru
        _
    $region12: #{densenet_forward.46} parent=5 // pred_fallthru
      _
    %p99 = scmp.lt.s32.totalorder %s8, 2
    // Predicated region
    $region17: #{densenet_forward.46} parent=5 // pred_check
      %p100 = pneg %p99
    $region18: #{densenet_forward.46} parent=5 // pred_check_branch
      %102 = sbr.rel (%p100) target = $region20
    $region19: #{densenet_forward.46} parent=5 // pred_region
      // Predicated region
      $region21: #{densenet_forward.46} parent=19 // pred_check
        %p103 = pneg %p28
      $region22: #{densenet_forward.46} parent=19 // pred_check_branch
        %105 = sbr.rel (%p103) target = $region24
      $region23: #{densenet_forward.46} parent=19 // pred_region
        %p106 = scmp.lt.s32.totalorder %s8, 1
        %s107 = scalar_select %p106, %s8, 1
        %s108 = smul.addr %s107, 2
        %s109 = smul.addr %s108, 4
        %s110 = scalar_lea.vmem %s0, %s109
      $region24: #{densenet_forward.46} parent=19 // pred_fallthru
        _
    $region20: #{densenet_forward.46} parent=5 // pred_fallthru
      _
    %p111 = scmp.le.s32.totalorder 1, %s8
    %p112 = scmp.lt.s32.totalorder %s8, 3
    %p113 = pnand %p111, %p112
    %p114 = pneg %p113
    // Predicated region
    $region25: #{densenet_forward.46} parent=5 // pred_check
      _
    $region26: #{densenet_forward.46} parent=5 // pred_check_branch
      %116 = sbr.rel (%p113) target = $region28
    $region27: #{densenet_forward.46} parent=5 // pred_region
      %s117 = ssub.s32 %s8, 1
      %p118 = scmp.lt.s32.totalorder %s13, 1
      %s119 = scalar_select %p118, %s13, 1
      %s120 = smul.addr %s119, 2
      %s121 = smul.addr %s120, 4
      %s122 = scalar_lea.vmem %s0, %s121
      %p123 = pneg %p34
      %p124 = pneg %p31
      %p125 = pneg %p55
      %p126 = pneg %p52
      %p127 = pneg %p81
      %p128 = pneg %p78
      %p129 = scmp.lt.s32.totalorder %s13, 1
      %s130 = scalar_select %p129, %s13, 1
      %s131 = smul.addr %s130, 2
      %s132 = scalar_lea.vmem %s2, %s131
      %p133 = scmp.lt.s32.totalorder %s13, 1
      %s134 = scalar_select %p133, %s13, 1
      %s135 = smul.addr %s134, 2
      %s136 = smul.addr %s135, 4
      %s137 = scalar_lea.vmem %s0, %s136
      %p138 = scmp.lt.s32.totalorder %s13, 1
      %s139 = scalar_select %p138, %s13, 1
      %s140 = smul.addr %s139, 2
      %s141 = scalar_lea.vmem %s2, %s140
      %v143 = vld [vmem:[%s137] sm:$0x3]
      %v144 = vld [vmem:[%s1] sm:$0xf]
      %v145 = vld [vmem:[%s1 + $0x4] sm:$0xf]
      %v146 = vld [vmem:[%s1 + $0x8] sm:$0xf]
      %v147 = vld [vmem:[%s1 + $0xc] sm:$0xf]
      %v148 = vld [vmem:[%s1 + $0x10] sm:$0xf]
      %v149 = vld [vmem:[%s1 + $0x14] sm:$0xf]
      %v150 = vld [vmem:[%s1 + $0x18] sm:$0xf]
      %v151 = vld [vmem:[%s1 + $0x1c] sm:$0xf]
      %v152 = vld [vmem:[%s1 + $0x20] sm:$0xf]
      %v153 = vld [vmem:[%s1 + $0x24] sm:$0xf]
      %v154 = vld [vmem:[%s1 + $0x28] sm:$0xf]
      %v155 = vld [vmem:[%s1 + $0x2c] sm:$0xf]
      %v156 = vld [vmem:[%s1 + $0x30] sm:$0xf]
      %v157 = vld [vmem:[%s1 + $0x34] sm:$0xf]
      %v158 = vld [vmem:[%s1 + $0x38] sm:$0xf]
      %v159 = vld [vmem:[%s1 + $0x3c] sm:$0xf]
      %v160 = vld [vmem:[%s1 + $0x40] sm:$0xf]
      %v161 = vld [vmem:[%s1 + $0x44] sm:$0xf]
      %v162 = vld [vmem:[%s1 + $0x48] sm:$0xf]
      %v163 = vld [vmem:[%s1 + $0x4c] sm:$0xf]
      %v164 = vld [vmem:[%s1 + $0x50] sm:$0xf]
      %v165 = vld [vmem:[%s1 + $0x54] sm:$0xf]
      %v166 = vld [vmem:[%s1 + $0x58] sm:$0xf]
      %v167 = vld [vmem:[%s1 + $0x5c] sm:$0xf]
      %v168 = vld [vmem:[%s1 + $0x60] sm:$0xf]
      %v169 = vld [vmem:[%s1 + $0x64] sm:$0xf]
      %v170 = vld [vmem:[%s1 + $0x68] sm:$0xf]
      %v171 = vld [vmem:[%s1 + $0x6c] sm:$0xf]
      %v172 = vld [vmem:[%s1 + $0x70] sm:$0xf]
      %v173 = vld [vmem:[%s1 + $0x74] sm:$0xf]
      %v174 = vld [vmem:[%s1 + $0x78] sm:$0xf]
      %v175 = vld [vmem:[%s1 + $0x7c] sm:$0xf]
      %v177 = vunpack.c.l.b16 %v143
      %v178 = vpack.c.b16 %v177, %v177
      %v180 = vshrl.u32 %v178, 16
      %v182 = vshll.u32 %v178, 16
      %v184 = vrot.slane %v182, 1
      %v185 = vor.u32 %v180, %v184
      %v203 = vunpack.c.l.b16 %v160
      %v204 = vunpack.c.l.b16 %v161
      %v205 = vunpack.c.l.b16 %v162
      %v206 = vunpack.c.l.b16 %v163
      %v207 = vunpack.c.l.b16 %v164
      %v208 = vunpack.c.l.b16 %v165
      %v209 = vunpack.c.l.b16 %v166
      %v210 = vunpack.c.l.b16 %v167
      %v211 = vunpack.c.l.b16 %v168
      %v212 = vunpack.c.l.b16 %v169
      %v213 = vunpack.c.l.b16 %v170
      %v214 = vunpack.c.l.b16 %v171
      %v215 = vunpack.c.l.b16 %v172
      %v216 = vunpack.c.l.b16 %v173
      %v217 = vunpack.c.l.b16 %v174
      %v218 = vunpack.c.l.b16 %v175
      %v219 = vpack.c.b16 %v204, %v203
      %v220 = vpack.c.b16 %v206, %v205
      %v221 = vpack.c.b16 %v208, %v207
      %v222 = vpack.c.b16 %v210, %v209
      %v223 = vpack.c.b16 %v212, %v211
      %v224 = vpack.c.b16 %v214, %v213
      %v225 = vpack.c.b16 %v216, %v215
      %v226 = vpack.c.b16 %v218, %v217
      %235 = vmatprep.subr.bf16.mxu0 0
      %236 = vmatpush1.bf16.msra.mxu0 %v226
      %237 = vmatprep.subr.bf16.mxu0 0
      %238 = vmatpush1.bf16.msra.mxu0 %v225
      %239 = vmatprep.subr.bf16.mxu0 0
      %240 = vmatpush1.bf16.msra.mxu0 %v224
      %241 = vmatprep.subr.bf16.mxu0 0
      %242 = vmatpush1.bf16.msra.mxu0 %v223
      %243 = vmatprep.subr.bf16.mxu0 0
      %244 = vmatpush1.bf16.msra.mxu0 %v222
      %245 = vmatprep.subr.bf16.mxu0 0
      %246 = vmatpush1.bf16.msra.mxu0 %v221
      %247 = vmatprep.subr.bf16.mxu0 0
      %248 = vmatpush1.bf16.msra.mxu0 %v220
      %249 = vmatprep.subr.bf16.mxu0 0
      %250 = vmatpush1.bf16.msra.mxu0 %v219
      %251 = vmatprep.subr.bf16.mxu0 0
      %252 = vmatpush2.bf16.msra.mxu0 0
      %253 = vmatprep.subr.bf16.mxu0 0
      %254 = vmatpush2.bf16.msra.mxu0 0
      %255 = vmatprep.subr.bf16.mxu0 0
      %256 = vmatpush2.bf16.msra.mxu0 0
      %257 = vmatprep.subr.bf16.mxu0 0
      %258 = vmatpush2.bf16.msra.mxu0 0
      %259 = vmatprep.subr.bf16.mxu0 0
      %260 = vmatpush2.bf16.msra.mxu0 0
      %261 = vmatprep.subr.bf16.mxu0 0
      %262 = vmatpush2.bf16.msra.mxu0 0
      %263 = vmatprep.subr.bf16.mxu0 0
      %264 = vmatpush2.bf16.msra.mxu0 0
      %265 = vmatprep.subr.bf16.mxu0 0
      %266 = vmatpush2.bf16.msra.mxu0 0
      %267 = vmatprep.mubr.bf16.mxu0 0
      %268 = vmatmul.mubr.bf16.gmra.mxu0 %v185
      %v269 = vpop.f32.mrf.mxu0
      %v270 = vadd.f32 0.0, %v269
      %v271 = vpop.f32.mrf.mxu0
      %v272 = vpop.f32.mrf.mxu0
      %v273 = vpop.f32.mrf.mxu0
      %274 = vdwg.mxu0
      %v291 = vunpack.c.l.b16 %v144
      %v292 = vunpack.c.l.b16 %v145
      %v293 = vunpack.c.l.b16 %v146
      %v294 = vunpack.c.l.b16 %v147
      %v295 = vunpack.c.l.b16 %v148
      %v296 = vunpack.c.l.b16 %v149
      %v297 = vunpack.c.l.b16 %v150
      %v298 = vunpack.c.l.b16 %v151
      %v299 = vunpack.c.l.b16 %v152
      %v300 = vunpack.c.l.b16 %v153
      %v301 = vunpack.c.l.b16 %v154
      %v302 = vunpack.c.l.b16 %v155
      %v303 = vunpack.c.l.b16 %v156
      %v304 = vunpack.c.l.b16 %v157
      %v305 = vunpack.c.l.b16 %v158
      %v306 = vunpack.c.l.b16 %v159
      %v307 = vpack.c.b16 %v292, %v291
      %v308 = vpack.c.b16 %v294, %v293
      %v309 = vpack.c.b16 %v296, %v295
      %v310 = vpack.c.b16 %v298, %v297
      %v311 = vpack.c.b16 %v300, %v299
      %v312 = vpack.c.b16 %v302, %v301
      %v313 = vpack.c.b16 %v304, %v303
      %v314 = vpack.c.b16 %v306, %v305
      %323 = vmatprep.subr.bf16.mxu0 0
      %324 = vmatpush1.bf16.msra.mxu0 %v314
      %325 = vmatprep.subr.bf16.mxu0 0
      %326 = vmatpush1.bf16.msra.mxu0 %v313
      %327 = vmatprep.subr.bf16.mxu0 0
      %328 = vmatpush1.bf16.msra.mxu0 %v312
      %329 = vmatprep.subr.bf16.mxu0 0
      %330 = vmatpush1.bf16.msra.mxu0 %v311
      %331 = vmatprep.subr.bf16.mxu0 0
      %332 = vmatpush1.bf16.msra.mxu0 %v310
      %333 = vmatprep.subr.bf16.mxu0 0
      %334 = vmatpush1.bf16.msra.mxu0 %v309
      %335 = vmatprep.subr.bf16.mxu0 0
      %336 = vmatpush1.bf16.msra.mxu0 %v308
      %337 = vmatprep.subr.bf16.mxu0 0
      %338 = vmatpush1.bf16.msra.mxu0 %v307
      %339 = vmatprep.subr.bf16.mxu0 0
      %340 = vmatpush2.bf16.msra.mxu0 0
      %341 = vmatprep.subr.bf16.mxu0 0
      %342 = vmatpush2.bf16.msra.mxu0 0
      %343 = vmatprep.subr.bf16.mxu0 0
      %344 = vmatpush2.bf16.msra.mxu0 0
      %345 = vmatprep.subr.bf16.mxu0 0
      %346 = vmatpush2.bf16.msra.mxu0 0
      %347 = vmatprep.subr.bf16.mxu0 0
      %348 = vmatpush2.bf16.msra.mxu0 0
      %349 = vmatprep.subr.bf16.mxu0 0
      %350 = vmatpush2.bf16.msra.mxu0 0
      %351 = vmatprep.subr.bf16.mxu0 0
      %352 = vmatpush2.bf16.msra.mxu0 0
      %353 = vmatprep.subr.bf16.mxu0 0
      %354 = vmatpush2.bf16.msra.mxu0 0
      %355 = vmatprep.mubr.bf16.mxu0 0
      %356 = vmatmul.mubr.bf16.gmra.mxu0 %v143
      %v357 = vpop.f32.mrf.mxu0
      %v358 = vadd.f32 %v270, %v357
      %v359 = vpop.f32.mrf.mxu0
      %v360 = vpop.f32.mrf.mxu0
      %v361 = vpop.f32.mrf.mxu0
      %362 = vdwg.mxu0
      %v363 = vld [vmem:[%s137] sm:$0x6]
      %v364 = vld [vmem:[%s1 + $0x80] sm:$0xf]
      %v365 = vld [vmem:[%s1 + $0x84] sm:$0xf]
      %v366 = vld [vmem:[%s1 + $0x88] sm:$0xf]
      %v367 = vld [vmem:[%s1 + $0x8c] sm:$0xf]
      %v368 = vld [vmem:[%s1 + $0x90] sm:$0xf]
      %v369 = vld [vmem:[%s1 + $0x94] sm:$0xf]
      %v370 = vld [vmem:[%s1 + $0x98] sm:$0xf]
      %v371 = vld [vmem:[%s1 + $0x9c] sm:$0xf]
      %v372 = vld [vmem:[%s1 + $0xa0] sm:$0xf]
      %v373 = vld [vmem:[%s1 + $0xa4] sm:$0xf]
      %v374 = vld [vmem:[%s1 + $0xa8] sm:$0xf]
      %v375 = vld [vmem:[%s1 + $0xac] sm:$0xf]
      %v376 = vld [vmem:[%s1 + $0xb0] sm:$0xf]
      %v377 = vld [vmem:[%s1 + $0xb4] sm:$0xf]
      %v378 = vld [vmem:[%s1 + $0xb8] sm:$0xf]
      %v379 = vld [vmem:[%s1 + $0xbc] sm:$0xf]
      %v381 = vunpack.c.l.b16 %v363
      %v382 = vpack.c.b16 %v381, %v381
      %v383 = vrot.slane %v382, 1
      %v401 = vunpack.c.l.b16 %v364
      %v402 = vunpack.c.l.b16 %v365
      %v403 = vunpack.c.l.b16 %v366
      %v404 = vunpack.c.l.b16 %v367
      %v405 = vunpack.c.l.b16 %v368
      %v406 = vunpack.c.l.b16 %v369
      %v407 = vunpack.c.l.b16 %v370
      %v408 = vunpack.c.l.b16 %v371
      %v409 = vunpack.c.l.b16 %v372
      %v410 = vunpack.c.l.b16 %v373
      %v411 = vunpack.c.l.b16 %v374
      %v412 = vunpack.c.l.b16 %v375
      %v413 = vunpack.c.l.b16 %v376
      %v414 = vunpack.c.l.b16 %v377
      %v415 = vunpack.c.l.b16 %v378
      %v416 = vunpack.c.l.b16 %v379
      %v417 = vpack.c.b16 %v402, %v401
      %v418 = vpack.c.b16 %v404, %v403
      %v419 = vpack.c.b16 %v406, %v405
      %v420 = vpack.c.b16 %v408, %v407
      %v421 = vpack.c.b16 %v410, %v409
      %v422 = vpack.c.b16 %v412, %v411
      %v423 = vpack.c.b16 %v414, %v413
      %v424 = vpack.c.b16 %v416, %v415
      %433 = vmatprep.subr.bf16.mxu0 0
      %434 = vmatpush1.bf16.msra.mxu0 %v424
      %435 = vmatprep.subr.bf16.mxu0 0
      %436 = vmatpush1.bf16.msra.mxu0 %v423
      %437 = vmatprep.subr.bf16.mxu0 0
      %438 = vmatpush1.bf16.msra.mxu0 %v422
      %439 = vmatprep.subr.bf16.mxu0 0
      %440 = vmatpush1.bf16.msra.mxu0 %v421
      %441 = vmatprep.subr.bf16.mxu0 0
      %442 = vmatpush1.bf16.msra.mxu0 %v420
      %443 = vmatprep.subr.bf16.mxu0 0
      %444 = vmatpush1.bf16.msra.mxu0 %v419
      %445 = vmatprep.subr.bf16.mxu0 0
      %446 = vmatpush1.bf16.msra.mxu0 %v418
      %447 = vmatprep.subr.bf16.mxu0 0
      %448 = vmatpush1.bf16.msra.mxu0 %v417
      %449 = vmatprep.subr.bf16.mxu0 0
      %450 = vmatpush2.bf16.msra.mxu0 0
      %451 = vmatprep.subr.bf16.mxu0 0
      %452 = vmatpush2.bf16.msra.mxu0 0
      %453 = vmatprep.subr.bf16.mxu0 0
      %454 = vmatpush2.bf16.msra.mxu0 0
      %455 = vmatprep.subr.bf16.mxu0 0
      %456 = vmatpush2.bf16.msra.mxu0 0
      %457 = vmatprep.subr.bf16.mxu0 0
      %458 = vmatpush2.bf16.msra.mxu0 0
      %459 = vmatprep.subr.bf16.mxu0 0
      %460 = vmatpush2.bf16.msra.mxu0 0
      %461 = vmatprep.subr.bf16.mxu0 0
      %462 = vmatpush2.bf16.msra.mxu0 0
      %463 = vmatprep.subr.bf16.mxu0 0
      %464 = vmatpush2.bf16.msra.mxu0 0
      %465 = vmatprep.mubr.bf16.mxu0 0
      %466 = vmatmul.mubr.bf16.gmra.mxu0 %v383
      %v467 = vpop.f32.mrf.mxu0
      %v468 = vadd.f32 0.0, %v467
      %v469 = vpop.f32.mrf.mxu0
      %v470 = vpop.f32.mrf.mxu0
      %v471 = vpop.f32.mrf.mxu0
      %472 = vdwg.mxu0
      %v473 = vadd.f32 %v358, %v468
      %v474 = vld [vmem:[%s1 + $0xc0] sm:$0xf]
      %v475 = vld [vmem:[%s1 + $0xc4] sm:$0xf]
      %v476 = vld [vmem:[%s1 + $0xc8] sm:$0xf]
      %v477 = vld [vmem:[%s1 + $0xcc] sm:$0xf]
      %v478 = vld [vmem:[%s1 + $0xd0] sm:$0xf]
      %v479 = vld [vmem:[%s1 + $0xd4] sm:$0xf]
      %v480 = vld [vmem:[%s1 + $0xd8] sm:$0xf]
      %v481 = vld [vmem:[%s1 + $0xdc] sm:$0xf]
      %v482 = vld [vmem:[%s1 + $0xe0] sm:$0xf]
      %v483 = vld [vmem:[%s1 + $0xe4] sm:$0xf]
      %v484 = vld [vmem:[%s1 + $0xe8] sm:$0xf]
      %v485 = vld [vmem:[%s1 + $0xec] sm:$0xf]
      %v486 = vld [vmem:[%s1 + $0xf0] sm:$0xf]
      %v487 = vld [vmem:[%s1 + $0xf4] sm:$0xf]
      %v488 = vld [vmem:[%s1 + $0xf8] sm:$0xf]
      %v489 = vld [vmem:[%s1 + $0xfc] sm:$0xf]
      %v491 = vshrl.u32 %v382, 16
      %v493 = vrot.slane %v491, 1
      %v494 = vshll.u32 %v382, 16
      %v496 = vrot.slane %v494, 2
      %v497 = vor.u32 %v493, %v496
      %v515 = vunpack.c.l.b16 %v474
      %v516 = vunpack.c.l.b16 %v475
      %v517 = vunpack.c.l.b16 %v476
      %v518 = vunpack.c.l.b16 %v477
      %v519 = vunpack.c.l.b16 %v478
      %v520 = vunpack.c.l.b16 %v479
      %v521 = vunpack.c.l.b16 %v480
      %v522 = vunpack.c.l.b16 %v481
      %v523 = vunpack.c.l.b16 %v482
      %v524 = vunpack.c.l.b16 %v483
      %v525 = vunpack.c.l.b16 %v484
      %v526 = vunpack.c.l.b16 %v485
      %v527 = vunpack.c.l.b16 %v486
      %v528 = vunpack.c.l.b16 %v487
      %v529 = vunpack.c.l.b16 %v488
      %v530 = vunpack.c.l.b16 %v489
      %v531 = vpack.c.b16 %v516, %v515
      %v532 = vpack.c.b16 %v518, %v517
      %v533 = vpack.c.b16 %v520, %v519
      %v534 = vpack.c.b16 %v522, %v521
      %v535 = vpack.c.b16 %v524, %v523
      %v536 = vpack.c.b16 %v526, %v525
      %v537 = vpack.c.b16 %v528, %v527
      %v538 = vpack.c.b16 %v530, %v529
      %547 = vmatprep.subr.bf16.mxu0 0
      %548 = vmatpush1.bf16.msra.mxu0 %v538
      %549 = vmatprep.subr.bf16.mxu0 0
      %550 = vmatpush1.bf16.msra.mxu0 %v537
      %551 = vmatprep.subr.bf16.mxu0 0
      %552 = vmatpush1.bf16.msra.mxu0 %v536
      %553 = vmatprep.subr.bf16.mxu0 0
      %554 = vmatpush1.bf16.msra.mxu0 %v535
      %555 = vmatprep.subr.bf16.mxu0 0
      %556 = vmatpush1.bf16.msra.mxu0 %v534
      %557 = vmatprep.subr.bf16.mxu0 0
      %558 = vmatpush1.bf16.msra.mxu0 %v533
      %559 = vmatprep.subr.bf16.mxu0 0
      %560 = vmatpush1.bf16.msra.mxu0 %v532
      %561 = vmatprep.subr.bf16.mxu0 0
      %562 = vmatpush1.bf16.msra.mxu0 %v531
      %563 = vmatprep.subr.bf16.mxu0 0
      %564 = vmatpush2.bf16.msra.mxu0 0
      %565 = vmatprep.subr.bf16.mxu0 0
      %566 = vmatpush2.bf16.msra.mxu0 0
      %567 = vmatprep.subr.bf16.mxu0 0
      %568 = vmatpush2.bf16.msra.mxu0 0
      %569 = vmatprep.subr.bf16.mxu0 0
      %570 = vmatpush2.bf16.msra.mxu0 0
      %571 = vmatprep.subr.bf16.mxu0 0
      %572 = vmatpush2.bf16.msra.mxu0 0
      %573 = vmatprep.subr.bf16.mxu0 0
      %574 = vmatpush2.bf16.msra.mxu0 0
      %575 = vmatprep.subr.bf16.mxu0 0
      %576 = vmatpush2.bf16.msra.mxu0 0
      %577 = vmatprep.subr.bf16.mxu0 0
      %578 = vmatpush2.bf16.msra.mxu0 0
      %579 = vmatprep.mubr.bf16.mxu0 0
      %580 = vmatmul.mubr.bf16.gmra.mxu0 %v497
      %v581 = vpop.f32.mrf.mxu0
      %v582 = vadd.f32 0.0, %v581
      %v583 = vpop.f32.mrf.mxu0
      %v584 = vpop.f32.mrf.mxu0
      %v585 = vpop.f32.mrf.mxu0
      %586 = vdwg.mxu0
      %v587 = vadd.f32 %v473, %v582
      %v588 = vld [vmem:[%s137] sm:$0xc]
      %v589 = vld [vmem:[%s1 + $0x100] sm:$0xf]
      %v590 = vld [vmem:[%s1 + $0x104] sm:$0xf]
      %v591 = vld [vmem:[%s1 + $0x108] sm:$0xf]
      %v592 = vld [vmem:[%s1 + $0x10c] sm:$0xf]
      %v593 = vld [vmem:[%s1 + $0x110] sm:$0xf]
      %v594 = vld [vmem:[%s1 + $0x114] sm:$0xf]
      %v595 = vld [vmem:[%s1 + $0x118] sm:$0xf]
      %v596 = vld [vmem:[%s1 + $0x11c] sm:$0xf]
      %v597 = vld [vmem:[%s1 + $0x120] sm:$0xf]
      %v598 = vld [vmem:[%s1 + $0x124] sm:$0xf]
      %v599 = vld [vmem:[%s1 + $0x128] sm:$0xf]
      %v600 = vld [vmem:[%s1 + $0x12c] sm:$0xf]
      %v601 = vld [vmem:[%s1 + $0x130] sm:$0xf]
      %v602 = vld [vmem:[%s1 + $0x134] sm:$0xf]
      %v603 = vld [vmem:[%s1 + $0x138] sm:$0xf]
      %v604 = vld [vmem:[%s1 + $0x13c] sm:$0xf]
      %v606 = vunpack.c.l.b16 %v588
      %v607 = vpack.c.b16 %v606, %v606
      %v608 = vrot.slane %v607, 2
      %v626 = vunpack.c.l.b16 %v589
      %v627 = vunpack.c.l.b16 %v590
      %v628 = vunpack.c.l.b16 %v591
      %v629 = vunpack.c.l.b16 %v592
      %v630 = vunpack.c.l.b16 %v593
      %v631 = vunpack.c.l.b16 %v594
      %v632 = vunpack.c.l.b16 %v595
      %v633 = vunpack.c.l.b16 %v596
      %v634 = vunpack.c.l.b16 %v597
      %v635 = vunpack.c.l.b16 %v598
      %v636 = vunpack.c.l.b16 %v599
      %v637 = vunpack.c.l.b16 %v600
      %v638 = vunpack.c.l.b16 %v601
      %v639 = vunpack.c.l.b16 %v602
      %v640 = vunpack.c.l.b16 %v603
      %v641 = vunpack.c.l.b16 %v604
      %v642 = vpack.c.b16 %v627, %v626
      %v643 = vpack.c.b16 %v629, %v628
      %v644 = vpack.c.b16 %v631, %v630
      %v645 = vpack.c.b16 %v633, %v632
      %v646 = vpack.c.b16 %v635, %v634
      %v647 = vpack.c.b16 %v637, %v636
      %v648 = vpack.c.b16 %v639, %v638
      %v649 = vpack.c.b16 %v641, %v640
      %658 = vmatprep.subr.bf16.mxu0 0
      %659 = vmatpush1.bf16.msra.mxu0 %v649
      %660 = vmatprep.subr.bf16.mxu0 0
      %661 = vmatpush1.bf16.msra.mxu0 %v648
      %662 = vmatprep.subr.bf16.mxu0 0
      %663 = vmatpush1.bf16.msra.mxu0 %v647
      %664 = vmatprep.subr.bf16.mxu0 0
      %665 = vmatpush1.bf16.msra.mxu0 %v646
      %666 = vmatprep.subr.bf16.mxu0 0
      %667 = vmatpush1.bf16.msra.mxu0 %v645
      %668 = vmatprep.subr.bf16.mxu0 0
      %669 = vmatpush1.bf16.msra.mxu0 %v644
      %670 = vmatprep.subr.bf16.mxu0 0
      %671 = vmatpush1.bf16.msra.mxu0 %v643
      %672 = vmatprep.subr.bf16.mxu0 0
      %673 = vmatpush1.bf16.msra.mxu0 %v642
      %674 = vmatprep.subr.bf16.mxu0 0
      %675 = vmatpush2.bf16.msra.mxu0 0
      %676 = vmatprep.subr.bf16.mxu0 0
      %677 = vmatpush2.bf16.msra.mxu0 0
      %678 = vmatprep.subr.bf16.mxu0 0
      %679 = vmatpush2.bf16.msra.mxu0 0
      %680 = vmatprep.subr.bf16.mxu0 0
      %681 = vmatpush2.bf16.msra.mxu0 0
      %682 = vmatprep.subr.bf16.mxu0 0
      %683 = vmatpush2.bf16.msra.mxu0 0
      %684 = vmatprep.subr.bf16.mxu0 0
      %685 = vmatpush2.bf16.msra.mxu0 0
      %686 = vmatprep.subr.bf16.mxu0 0
      %687 = vmatpush2.bf16.msra.mxu0 0
      %688 = vmatprep.subr.bf16.mxu0 0
      %689 = vmatpush2.bf16.msra.mxu0 0
      %690 = vmatprep.mubr.bf16.mxu0 0
      %691 = vmatmul.mubr.bf16.gmra.mxu0 %v608
      %v692 = vpop.f32.mrf.mxu0
      %v693 = vadd.f32 0.0, %v692
      %v694 = vpop.f32.mrf.mxu0
      %v695 = vpop.f32.mrf.mxu0
      %v696 = vpop.f32.mrf.mxu0
      %697 = vdwg.mxu0
      %v698 = vadd.f32 %v587, %v693
      %v699 = vld [vmem:[%s1 + $0x140] sm:$0xf]
      %v700 = vld [vmem:[%s1 + $0x144] sm:$0xf]
      %v701 = vld [vmem:[%s1 + $0x148] sm:$0xf]
      %v702 = vld [vmem:[%s1 + $0x14c] sm:$0xf]
      %v703 = vld [vmem:[%s1 + $0x150] sm:$0xf]
      %v704 = vld [vmem:[%s1 + $0x154] sm:$0xf]
      %v705 = vld [vmem:[%s1 + $0x158] sm:$0xf]
      %v706 = vld [vmem:[%s1 + $0x15c] sm:$0xf]
      %v707 = vld [vmem:[%s1 + $0x160] sm:$0xf]
      %v708 = vld [vmem:[%s1 + $0x164] sm:$0xf]
      %v709 = vld [vmem:[%s1 + $0x168] sm:$0xf]
      %v710 = vld [vmem:[%s1 + $0x16c] sm:$0xf]
      %v711 = vld [vmem:[%s1 + $0x170] sm:$0xf]
      %v712 = vld [vmem:[%s1 + $0x174] sm:$0xf]
      %v713 = vld [vmem:[%s1 + $0x178] sm:$0xf]
      %v714 = vld [vmem:[%s1 + $0x17c] sm:$0xf]
      %v716 = vshrl.u32 %v607, 16
      %v718 = vrot.slane %v716, 2
      %v719 = vshll.u32 %v607, 16
      %v721 = vrot.slane %v719, 3
      %v722 = vor.u32 %v718, %v721
      %v740 = vunpack.c.l.b16 %v699
      %v741 = vunpack.c.l.b16 %v700
      %v742 = vunpack.c.l.b16 %v701
      %v743 = vunpack.c.l.b16 %v702
      %v744 = vunpack.c.l.b16 %v703
      %v745 = vunpack.c.l.b16 %v704
      %v746 = vunpack.c.l.b16 %v705
      %v747 = vunpack.c.l.b16 %v706
      %v748 = vunpack.c.l.b16 %v707
      %v749 = vunpack.c.l.b16 %v708
      %v750 = vunpack.c.l.b16 %v709
      %v751 = vunpack.c.l.b16 %v710
      %v752 = vunpack.c.l.b16 %v711
      %v753 = vunpack.c.l.b16 %v712
      %v754 = vunpack.c.l.b16 %v713
      %v755 = vunpack.c.l.b16 %v714
      %v756 = vpack.c.b16 %v741, %v740
      %v757 = vpack.c.b16 %v743, %v742
      %v758 = vpack.c.b16 %v745, %v744
      %v759 = vpack.c.b16 %v747, %v746
      %v760 = vpack.c.b16 %v749, %v748
      %v761 = vpack.c.b16 %v751, %v750
      %v762 = vpack.c.b16 %v753, %v752
      %v763 = vpack.c.b16 %v755, %v754
      %772 = vmatprep.subr.bf16.mxu0 0
      %773 = vmatpush1.bf16.msra.mxu0 %v763
      %774 = vmatprep.subr.bf16.mxu0 0
      %775 = vmatpush1.bf16.msra.mxu0 %v762
      %776 = vmatprep.subr.bf16.mxu0 0
      %777 = vmatpush1.bf16.msra.mxu0 %v761
      %778 = vmatprep.subr.bf16.mxu0 0
      %779 = vmatpush1.bf16.msra.mxu0 %v760
      %780 = vmatprep.subr.bf16.mxu0 0
      %781 = vmatpush1.bf16.msra.mxu0 %v759
      %782 = vmatprep.subr.bf16.mxu0 0
      %783 = vmatpush1.bf16.msra.mxu0 %v758
      %784 = vmatprep.subr.bf16.mxu0 0
      %785 = vmatpush1.bf16.msra.mxu0 %v757
      %786 = vmatprep.subr.bf16.mxu0 0
      %787 = vmatpush1.bf16.msra.mxu0 %v756
      %788 = vmatprep.subr.bf16.mxu0 0
      %789 = vmatpush2.bf16.msra.mxu0 0
      %790 = vmatprep.subr.bf16.mxu0 0
      %791 = vmatpush2.bf16.msra.mxu0 0
      %792 = vmatprep.subr.bf16.mxu0 0
      %793 = vmatpush2.bf16.msra.mxu0 0
      %794 = vmatprep.subr.bf16.mxu0 0
      %795 = vmatpush2.bf16.msra.mxu0 0
      %796 = vmatprep.subr.bf16.mxu0 0
      %797 = vmatpush2.bf16.msra.mxu0 0
      %798 = vmatprep.subr.bf16.mxu0 0
      %799 = vmatpush2.bf16.msra.mxu0 0
      %800 = vmatprep.subr.bf16.mxu0 0
      %801 = vmatpush2.bf16.msra.mxu0 0
      %802 = vmatprep.subr.bf16.mxu0 0
      %803 = vmatpush2.bf16.msra.mxu0 0
      %804 = vmatprep.mubr.bf16.mxu0 0
      %805 = vmatmul.mubr.bf16.gmra.mxu0 %v722
      %v806 = vpop.f32.mrf.mxu0
      %v807 = vadd.f32 0.0, %v806
      %v808 = vpop.f32.mrf.mxu0
      %v809 = vpop.f32.mrf.mxu0
      %v810 = vpop.f32.mrf.mxu0
      %811 = vdwg.mxu0
      %v812 = vadd.f32 %v698, %v807
      %v813 = vld [vmem:[%s137] sm:$0x8]
      %v814 = vld [vmem:[%s137 + $0x4] sm:$0x1]
      %v815 = vld [vmem:[%s1 + $0x180] sm:$0xf]
      %v816 = vld [vmem:[%s1 + $0x184] sm:$0xf]
      %v817 = vld [vmem:[%s1 + $0x188] sm:$0xf]
      %v818 = vld [vmem:[%s1 + $0x18c] sm:$0xf]
      %v819 = vld [vmem:[%s1 + $0x190] sm:$0xf]
      %v820 = vld [vmem:[%s1 + $0x194] sm:$0xf]
      %v821 = vld [vmem:[%s1 + $0x198] sm:$0xf]
      %v822 = vld [vmem:[%s1 + $0x19c] sm:$0xf]
      %v823 = vld [vmem:[%s1 + $0x1a0] sm:$0xf]
      %v824 = vld [vmem:[%s1 + $0x1a4] sm:$0xf]
      %v825 = vld [vmem:[%s1 + $0x1a8] sm:$0xf]
      %v826 = vld [vmem:[%s1 + $0x1ac] sm:$0xf]
      %v827 = vld [vmem:[%s1 + $0x1b0] sm:$0xf]
      %v828 = vld [vmem:[%s1 + $0x1b4] sm:$0xf]
      %v829 = vld [vmem:[%s1 + $0x1b8] sm:$0xf]
      %v830 = vld [vmem:[%s1 + $0x1bc] sm:$0xf]
      %v833 = vunpack.c.l.b16 %v813
      %v834 = vunpack.c.l.b16 %v814
      %v835 = vpack.c.b16 %v834, %v833
      %v836 = vrot.slane %v835, 3
      %v854 = vunpack.c.l.b16 %v815
      %v855 = vunpack.c.l.b16 %v816
      %v856 = vunpack.c.l.b16 %v817
      %v857 = vunpack.c.l.b16 %v818
      %v858 = vunpack.c.l.b16 %v819
      %v859 = vunpack.c.l.b16 %v820
      %v860 = vunpack.c.l.b16 %v821
      %v861 = vunpack.c.l.b16 %v822
      %v862 = vunpack.c.l.b16 %v823
      %v863 = vunpack.c.l.b16 %v824
      %v864 = vunpack.c.l.b16 %v825
      %v865 = vunpack.c.l.b16 %v826
      %v866 = vunpack.c.l.b16 %v827
      %v867 = vunpack.c.l.b16 %v828
      %v868 = vunpack.c.l.b16 %v829
      %v869 = vunpack.c.l.b16 %v830
      %v870 = vpack.c.b16 %v855, %v854
      %v871 = vpack.c.b16 %v857, %v856
      %v872 = vpack.c.b16 %v859, %v858
      %v873 = vpack.c.b16 %v861, %v860
      %v874 = vpack.c.b16 %v863, %v862
      %v875 = vpack.c.b16 %v865, %v864
      %v876 = vpack.c.b16 %v867, %v866
      %v877 = vpack.c.b16 %v869, %v868
      %886 = vmatprep.subr.bf16.mxu0 0
      %887 = vmatpush1.bf16.msra.mxu0 %v877
      %888 = vmatprep.subr.bf16.mxu0 0
      %889 = vmatpush1.bf16.msra.mxu0 %v876
      %890 = vmatprep.subr.bf16.mxu0 0
      %891 = vmatpush1.bf16.msra.mxu0 %v875
      %892 = vmatprep.subr.bf16.mxu0 0
      %893 = vmatpush1.bf16.msra.mxu0 %v874
      %894 = vmatprep.subr.bf16.mxu0 0
      %895 = vmatpush1.bf16.msra.mxu0 %v873
      %896 = vmatprep.subr.bf16.mxu0 0
      %897 = vmatpush1.bf16.msra.mxu0 %v872
      %898 = vmatprep.subr.bf16.mxu0 0
      %899 = vmatpush1.bf16.msra.mxu0 %v871
      %900 = vmatprep.subr.bf16.mxu0 0
      %901 = vmatpush1.bf16.msra.mxu0 %v870
      %902 = vmatprep.subr.bf16.mxu0 0
      %903 = vmatpush2.bf16.msra.mxu0 0
      %904 = vmatprep.subr.bf16.mxu0 0
      %905 = vmatpush2.bf16.msra.mxu0 0
      %906 = vmatprep.subr.bf16.mxu0 0
      %907 = vmatpush2.bf16.msra.mxu0 0
      %908 = vmatprep.subr.bf16.mxu0 0
      %909 = vmatpush2.bf16.msra.mxu0 0
      %910 = vmatprep.subr.bf16.mxu0 0
      %911 = vmatpush2.bf16.msra.mxu0 0
      %912 = vmatprep.subr.bf16.mxu0 0
      %913 = vmatpush2.bf16.msra.mxu0 0
      %914 = vmatprep.subr.bf16.mxu0 0
      %915 = vmatpush2.bf16.msra.mxu0 0
      %916 = vmatprep.subr.bf16.mxu0 0
      %917 = vmatpush2.bf16.msra.mxu0 0
      %918 = vmatprep.mubr.bf16.mxu0 0
      %919 = vmatmul.mubr.bf16.gmra.mxu0 %v836
      %v920 = vpop.f32.mrf.mxu0
      %v921 = vadd.f32 0.0, %v920
      %v922 = vpop.f32.mrf.mxu0
      %v923 = vpop.f32.mrf.mxu0
      %v924 = vpop.f32.mrf.mxu0
      %925 = vdwg.mxu0
      %v926 = vadd.f32 %v812, %v921
      %v927 = vld [vmem:[%s1 + $0x1c0] sm:$0xf]
      %v928 = vld [vmem:[%s1 + $0x1c4] sm:$0xf]
      %v929 = vld [vmem:[%s1 + $0x1c8] sm:$0xf]
      %v930 = vld [vmem:[%s1 + $0x1cc] sm:$0xf]
      %v931 = vld [vmem:[%s1 + $0x1d0] sm:$0xf]
      %v932 = vld [vmem:[%s1 + $0x1d4] sm:$0xf]
      %v933 = vld [vmem:[%s1 + $0x1d8] sm:$0xf]
      %v934 = vld [vmem:[%s1 + $0x1dc] sm:$0xf]
      %v935 = vld [vmem:[%s1 + $0x1e0] sm:$0xf]
      %v936 = vld [vmem:[%s1 + $0x1e4] sm:$0xf]
      %v937 = vld [vmem:[%s1 + $0x1e8] sm:$0xf]
      %v938 = vld [vmem:[%s1 + $0x1ec] sm:$0xf]
      %v939 = vld [vmem:[%s1 + $0x1f0] sm:$0xf]
      %v940 = vld [vmem:[%s1 + $0x1f4] sm:$0xf]
      %v941 = vld [vmem:[%s1 + $0x1f8] sm:$0xf]
      %v942 = vld [vmem:[%s1 + $0x1fc] sm:$0xf]
      %v944 = vshrl.u32 %v835, 16
      %v946 = vrot.slane %v944, 3
      %v947 = vshll.u32 %v835, 16
      %v949 = vrot.slane %v947, 4
      %v950 = vor.u32 %v946, %v949
      %v968 = vunpack.c.l.b16 %v927
      %v969 = vunpack.c.l.b16 %v928
      %v970 = vunpack.c.l.b16 %v929
      %v971 = vunpack.c.l.b16 %v930
      %v972 = vunpack.c.l.b16 %v931
      %v973 = vunpack.c.l.b16 %v932
      %v974 = vunpack.c.l.b16 %v933
      %v975 = vunpack.c.l.b16 %v934
      %v976 = vunpack.c.l.b16 %v935
      %v977 = vunpack.c.l.b16 %v936
      %v978 = vunpack.c.l.b16 %v937
      %v979 = vunpack.c.l.b16 %v938
      %v980 = vunpack.c.l.b16 %v939
      %v981 = vunpack.c.l.b16 %v940
      %v982 = vunpack.c.l.b16 %v941
      %v983 = vunpack.c.l.b16 %v942
      %v984 = vpack.c.b16 %v969, %v968
      %v985 = vpack.c.b16 %v971, %v970
      %v986 = vpack.c.b16 %v973, %v972
      %v987 = vpack.c.b16 %v975, %v974
      %v988 = vpack.c.b16 %v977, %v976
      %v989 = vpack.c.b16 %v979, %v978
      %v990 = vpack.c.b16 %v981, %v980
      %v991 = vpack.c.b16 %v983, %v982
      %1000 = vmatprep.subr.bf16.mxu0 0
      %1001 = vmatpush1.bf16.msra.mxu0 %v991
      %1002 = vmatprep.subr.bf16.mxu0 0
      %1003 = vmatpush1.bf16.msra.mxu0 %v990
      %1004 = vmatprep.subr.bf16.mxu0 0
      %1005 = vmatpush1.bf16.msra.mxu0 %v989
      %1006 = vmatprep.subr.bf16.mxu0 0
      %1007 = vmatpush1.bf16.msra.mxu0 %v988
      %1008 = vmatprep.subr.bf16.mxu0 0
      %1009 = vmatpush1.bf16.msra.mxu0 %v987
      %1010 = vmatprep.subr.bf16.mxu0 0
      %1011 = vmatpush1.bf16.msra.mxu0 %v986
      %1012 = vmatprep.subr.bf16.mxu0 0
      %1013 = vmatpush1.bf16.msra.mxu0 %v985
      %1014 = vmatprep.subr.bf16.mxu0 0
      %1015 = vmatpush1.bf16.msra.mxu0 %v984
      %1016 = vmatprep.subr.bf16.mxu0 0
      %1017 = vmatpush2.bf16.msra.mxu0 0
      %1018 = vmatprep.subr.bf16.mxu0 0
      %1019 = vmatpush2.bf16.msra.mxu0 0
      %1020 = vmatprep.subr.bf16.mxu0 0
      %1021 = vmatpush2.bf16.msra.mxu0 0
      %1022 = vmatprep.subr.bf16.mxu0 0
      %1023 = vmatpush2.bf16.msra.mxu0 0
      %1024 = vmatprep.subr.bf16.mxu0 0
      %1025 = vmatpush2.bf16.msra.mxu0 0
      %1026 = vmatprep.subr.bf16.mxu0 0
      %1027 = vmatpush2.bf16.msra.mxu0 0
      %1028 = vmatprep.subr.bf16.mxu0 0
      %1029 = vmatpush2.bf16.msra.mxu0 0
      %1030 = vmatprep.subr.bf16.mxu0 0
      %1031 = vmatpush2.bf16.msra.mxu0 0
      %1032 = vmatprep.mubr.bf16.mxu0 0
      %1033 = vmatmul.mubr.bf16.gmra.mxu0 %v950
      %v1034 = vpop.f32.mrf.mxu0
      %v1035 = vadd.f32 0.0, %v1034
      %v1036 = vpop.f32.mrf.mxu0
      %v1037 = vpop.f32.mrf.mxu0
      %v1038 = vpop.f32.mrf.mxu0
      %1039 = vdwg.mxu0
      %v1040 = vadd.f32 %v926, %v1035
      %v1041 = vld [vmem:[%s137 + $0x4] sm:$0x3]
      %v1042 = vld [vmem:[%s1 + $0x200] sm:$0xf]
      %v1043 = vld [vmem:[%s1 + $0x204] sm:$0xf]
      %v1044 = vld [vmem:[%s1 + $0x208] sm:$0xf]
      %v1045 = vld [vmem:[%s1 + $0x20c] sm:$0xf]
      %v1046 = vld [vmem:[%s1 + $0x210] sm:$0xf]
      %v1047 = vld [vmem:[%s1 + $0x214] sm:$0xf]
      %v1048 = vld [vmem:[%s1 + $0x218] sm:$0xf]
      %v1049 = vld [vmem:[%s1 + $0x21c] sm:$0xf]
      %v1050 = vld [vmem:[%s1 + $0x220] sm:$0xf]
      %v1051 = vld [vmem:[%s1 + $0x224] sm:$0xf]
      %v1052 = vld [vmem:[%s1 + $0x228] sm:$0xf]
      %v1053 = vld [vmem:[%s1 + $0x22c] sm:$0xf]
      %v1054 = vld [vmem:[%s1 + $0x230] sm:$0xf]
      %v1055 = vld [vmem:[%s1 + $0x234] sm:$0xf]
      %v1056 = vld [vmem:[%s1 + $0x238] sm:$0xf]
      %v1057 = vld [vmem:[%s1 + $0x23c] sm:$0xf]
      %v1074 = vunpack.c.l.b16 %v1042
      %v1075 = vunpack.c.l.b16 %v1043
      %v1076 = vunpack.c.l.b16 %v1044
      %v1077 = vunpack.c.l.b16 %v1045
      %v1078 = vunpack.c.l.b16 %v1046
      %v1079 = vunpack.c.l.b16 %v1047
      %v1080 = vunpack.c.l.b16 %v1048
      %v1081 = vunpack.c.l.b16 %v1049
      %v1082 = vunpack.c.l.b16 %v1050
      %v1083 = vunpack.c.l.b16 %v1051
      %v1084 = vunpack.c.l.b16 %v1052
      %v1085 = vunpack.c.l.b16 %v1053
      %v1086 = vunpack.c.l.b16 %v1054
      %v1087 = vunpack.c.l.b16 %v1055
      %v1088 = vunpack.c.l.b16 %v1056
      %v1089 = vunpack.c.l.b16 %v1057
      %v1090 = vpack.c.b16 %v1075, %v1074
      %v1091 = vpack.c.b16 %v1077, %v1076
      %v1092 = vpack.c.b16 %v1079, %v1078
      %v1093 = vpack.c.b16 %v1081, %v1080
      %v1094 = vpack.c.b16 %v1083, %v1082
      %v1095 = vpack.c.b16 %v1085, %v1084
      %v1096 = vpack.c.b16 %v1087, %v1086
      %v1097 = vpack.c.b16 %v1089, %v1088
      %1106 = vmatprep.subr.bf16.mxu0 0
      %1107 = vmatpush1.bf16.msra.mxu0 %v1097
      %1108 = vmatprep.subr.bf16.mxu0 0
      %1109 = vmatpush1.bf16.msra.mxu0 %v1096
      %1110 = vmatprep.subr.bf16.mxu0 0
      %1111 = vmatpush1.bf16.msra.mxu0 %v1095
      %1112 = vmatprep.subr.bf16.mxu0 0
      %1113 = vmatpush1.bf16.msra.mxu0 %v1094
      %1114 = vmatprep.subr.bf16.mxu0 0
      %1115 = vmatpush1.bf16.msra.mxu0 %v1093
      %1116 = vmatprep.subr.bf16.mxu0 0
      %1117 = vmatpush1.bf16.msra.mxu0 %v1092
      %1118 = vmatprep.subr.bf16.mxu0 0
      %1119 = vmatpush1.bf16.msra.mxu0 %v1091
      %1120 = vmatprep.subr.bf16.mxu0 0
      %1121 = vmatpush1.bf16.msra.mxu0 %v1090
      %1122 = vmatprep.subr.bf16.mxu0 0
      %1123 = vmatpush2.bf16.msra.mxu0 0
      %1124 = vmatprep.subr.bf16.mxu0 0
      %1125 = vmatpush2.bf16.msra.mxu0 0
      %1126 = vmatprep.subr.bf16.mxu0 0
      %1127 = vmatpush2.bf16.msra.mxu0 0
      %1128 = vmatprep.subr.bf16.mxu0 0
      %1129 = vmatpush2.bf16.msra.mxu0 0
      %1130 = vmatprep.subr.bf16.mxu0 0
      %1131 = vmatpush2.bf16.msra.mxu0 0
      %1132 = vmatprep.subr.bf16.mxu0 0
      %1133 = vmatpush2.bf16.msra.mxu0 0
      %1134 = vmatprep.subr.bf16.mxu0 0
      %1135 = vmatpush2.bf16.msra.mxu0 0
      %1136 = vmatprep.subr.bf16.mxu0 0
      %1137 = vmatpush2.bf16.msra.mxu0 0
      %1138 = vmatprep.mubr.bf16.mxu0 0
      %1139 = vmatmul.mubr.bf16.gmra.mxu0 %v1041
      %v1140 = vpop.f32.mrf.mxu0
      %v1141 = vadd.f32 0.0, %v1140
      %v1142 = vpop.f32.mrf.mxu0
      %v1143 = vpop.f32.mrf.mxu0
      %v1144 = vpop.f32.mrf.mxu0
      %1145 = vdwg.mxu0
      %v1146 = vadd.f32 %v1040, %v1141
      %v1147 = vpack.c.bf16 %v1146, %v1146
      %vm1148 = vcmask 58368
      %vm1149 = vsmask.f32 1280
      %vm1150 = vmand %vm1148, %vm1149
      %v1151 = vld [vmem:[%s141] sm:$0x3]
      %v1152 = vsel %vm1150, %v1147, %v1151
      %1153 = vst [vmem:[%s141] sm:$0x3] %v1152
      %p1154 = scmp.lt.s32.totalorder %s13, 1
      %s1155 = scalar_select %p1154, %s13, 1
      %s1156 = smul.addr %s1155, 2
      %s1157 = scalar_lea.vmem %s2, %s1156
      // Predicated region
      $region29: #{densenet_forward.46} parent=27 // pred_check
        %p1158 = pneg %p78
      $region30: #{densenet_forward.46} parent=27 // pred_check_branch
        %1160 = sbr.rel (%p1158) target = $region32
      $region31: #{densenet_forward.46} parent=27 // pred_region
        _
      $region32: #{densenet_forward.46} parent=27 // pred_fallthru
        _
    $region28: #{densenet_forward.46} parent=5 // pred_fallthru
      _
    %p1161 = scmp.le.s32.totalorder 2, %s8
    // Predicated region
    $region33: #{densenet_forward.46} parent=5 // pred_check
      %p1162 = pneg %p1161
    $region34: #{densenet_forward.46} parent=5 // pred_check_branch
      %1164 = sbr.rel (%p1162) target = $region36
    $region35: #{densenet_forward.46} parent=5 // pred_region
      %s1165 = ssub.s32 %s8, 2
      // Predicated region
      $region37: #{densenet_forward.46} parent=35 // pred_check
        %p1166 = pneg %p84
      $region38: #{densenet_forward.46} parent=35 // pred_check_branch
        %1168 = sbr.rel (%p1166) target = $region40
      $region39: #{densenet_forward.46} parent=35 // pred_region
        %p1169 = scmp.lt.s32.totalorder %s14, 1
        %s1170 = scalar_select %p1169, %s14, 1
        %s1171 = smul.addr %s1170, 2
        %s1172 = scalar_lea.vmem %s2, %s1171
      $region40: #{densenet_forward.46} parent=35 // pred_fallthru
        _
    $region36: #{densenet_forward.46} parent=5 // pred_fallthru
      _
  $region6: #{densenet_forward.46} parent=0 // loop_footer
    %s12 = sadd.s32 1, %s8
  $region7: #{densenet_forward.46} parent=0 // loop_footer_branch
    %7 = sbr.rel target = $region3
  $region8: #{densenet_forward.46} parent=0 // loop_exit
    _

</llo_original>
